<compile_context>
chip_gen: v5e
topology: v5e:2x2
jax: 0.10.0
libtpu: 0.0.40
codegen_flags: <defaults>
</compile_context>

<pallas_src>
import jax
import jax.numpy as jnp
from jax.experimental import pallas as pl
from jax.experimental.pallas import tpu as pltpu

IN_DIM = 3 * 32 * 32                 # 3072, matches img.view(len(img), -1)
HIDDEN = [1024, 512, 256, 128]
OUT_DIM = 2
DIMS = [IN_DIM] + HIDDEN + [OUT_DIM]
TB_TARGET = 256                      # batch tile: fills v6e/v7x MXU height
# TODO(synk): training-mode dropout (reg_args==1, p>0) not implemented; the
# reg_args==0 / p=0 path computed here is identical to the PyTorch forward.


def mlp_kernel(x_ref,
               w1_ref, b1_ref, w2_ref, b2_ref, w3_ref, b3_ref,
               w4_ref, b4_ref, w5_ref, b5_ref,
               logits_ref, probas_ref):
    """One batch tile: 4x (Linear+ReLU) + Linear + softmax, weights VMEM-resident."""

    def layer(h, w_ref, b_ref):
        # bf16 x bf16 on the MXU, f32 accumulation; bias add in f32.
        return jnp.dot(h, w_ref[...], preferred_element_type=jnp.float32) + b_ref[...]

    h = x_ref[...]                                                   # (TB, 3072) bf16
    h = jnp.maximum(layer(h, w1_ref, b1_ref), 0.0).astype(jnp.bfloat16)
    h = jnp.maximum(layer(h, w2_ref, b2_ref), 0.0).astype(jnp.bfloat16)
    h = jnp.maximum(layer(h, w3_ref, b3_ref), 0.0).astype(jnp.bfloat16)
    h = jnp.maximum(layer(h, w4_ref, b4_ref), 0.0).astype(jnp.bfloat16)
    logits = layer(h, w5_ref, b5_ref)                                # (TB, 2) f32
    logits_ref[...] = logits

    # softmax over the class axis (dim=1)
    m = jnp.max(logits, axis=-1, keepdims=True)
    e = jnp.exp(logits - m)
    s = jnp.sum(e, axis=-1, keepdims=True)
    probas_ref[...] = e * pl.reciprocal(s, approx=True)


@jax.jit
def mlp_forward(img, params):
    """img: (B, 3, 32, 32) float32 (NCHW). Returns (logits, probas), each (B, 2)."""
    B = img.shape[0]
    x = img.reshape(B, -1).astype(jnp.bfloat16)                      # (B, 3072)

    # Batch tile: 256 for big batches; otherwise the whole (16-rounded) batch.
    tb = TB_TARGET if B >= TB_TARGET else max(16, ((B + 15) // 16) * 16)
    b_pad = ((B + tb - 1) // tb) * tb
    if b_pad != B:
        x = jnp.pad(x, ((0, b_pad - B), (0, 0)))
    grid = (b_pad // tb,)

    ins = [x]
    in_specs = [pl.BlockSpec((tb, IN_DIM), lambda i: (i, 0))]        # streamed per tile
    for (w, b) in params:                                            # w: (in,out) bf16; b: (1,out) f32
        ins += [w, b]
        # Constant index_map -> weights/biases fetched once, stay resident in VMEM.
        in_specs += [pl.BlockSpec(w.shape, lambda i: (0, 0)),
                     pl.BlockSpec(b.shape, lambda i: (0, 0))]

    out_shapes = (jax.ShapeDtypeStruct((b_pad, OUT_DIM), jnp.float32),
                  jax.ShapeDtypeStruct((b_pad, OUT_DIM), jnp.float32))
    out_specs = (pl.BlockSpec((tb, OUT_DIM), lambda i: (i, 0)),
                 pl.BlockSpec((tb, OUT_DIM), lambda i: (i, 0)))

    flops = 2 * b_pad * sum(d_in * d_out for d_in, d_out in zip(DIMS[:-1], DIMS[1:]))
    bytes_accessed = (x.size * x.dtype.itemsize
                      + sum(w.size * w.dtype.itemsize + b.size * b.dtype.itemsize
                            for (w, b) in params)
                      + 2 * b_pad * OUT_DIM * 4)
    cost = pl.CostEstimate(flops=flops,
                           transcendentals=b_pad * OUT_DIM,
                           bytes_accessed=bytes_accessed)

    logits, probas = pl.pallas_call(
        mlp_kernel,
        out_shape=out_shapes,
        grid=grid,
        in_specs=in_specs,
        out_specs=out_specs,
        compiler_params=pltpu.CompilerParams(
            dimension_semantics=("parallel",),       # batch tiles are independent
            vmem_limit_bytes=48 * 1024 * 1024,       # fits v7x's 64 MiB physical VMEM
        ),
        cost_estimate=cost,
    )(*ins)
    return logits[:B], probas[:B]


def init_params(key):
    """PyTorch nn.Linear-style init U(-1/sqrt(fan_in), 1/sqrt(fan_in)), then stored
       pre-transposed (in_dim, out_dim) in bf16 with (1, out_dim) f32 biases so the
       jitted forward does zero per-call layout work."""
    params = []
    for i in range(len(DIMS) - 1):
        fan_in, fan_out = DIMS[i], DIMS[i + 1]
        key, kw, kb = jax.random.split(key, 3)
        bound = 1.0 / (fan_in ** 0.5)
        w = jax.random.uniform(kw, (fan_out, fan_in), jnp.float32, -bound, bound)
        b = jax.random.uniform(kb, (fan_out,), jnp.float32, -bound, bound)
        params.append((w.T.astype(jnp.bfloat16), b.reshape(1, -1).astype(jnp.float32)))
    return params


def mlp_reference(img, params):
    """Pure-JAX reference with the same bf16 operands / f32 accumulation."""
    h = img.reshape(img.shape[0], -1).astype(jnp.bfloat16)
    for i, (w, b) in enumerate(params):
        h = jnp.dot(h, w, preferred_element_type=jnp.float32) + b
        if i < len(params) - 1:
            h = jnp.maximum(h, 0.0).astype(jnp.bfloat16)
    logits = h
    return logits, jax.nn.softmax(logits, axis=-1)


if __name__ == "__main__":
    key = jax.random.PRNGKey(0)
    k_params, k_img = jax.random.split(key)

    params = init_params(k_params)
    img = jax.random.normal(k_img, (2, 3, 32, 32), dtype=jnp.float32)  # small batch

    logits, probas = mlp_forward(img, params)
    jax.block_until_ready((logits, probas))

    assert logits.shape == (2, OUT_DIM) and probas.shape == (2, OUT_DIM)
    assert bool(jnp.all(jnp.isfinite(logits))) and bool(jnp.all(jnp.isfinite(probas)))
    # softmax rows sum to 1 (approx reciprocal -> loose tolerance)
    assert bool(jnp.allclose(jnp.sum(probas, axis=1), 1.0, atol=2e-3))
    # match the pure-JAX reference
    ref_logits, ref_probas = mlp_reference(img, params)
    assert bool(jnp.allclose(logits, ref_logits, atol=2e-2, rtol=2e-2))
    assert bool(jnp.allclose(probas, ref_probas, atol=2e-2, rtol=2e-2))
    print("KERNEL_OK")
</pallas_src>

<mosaic_0001>
module attributes {stable_mosaic.version = 11 : i64} {
  func.func @mlp_kernel(%arg0: i32, %arg1: memref<16x3072xbf16, #tpu.memory_space<vmem>>, %arg2: memref<3072x1024xbf16, #tpu.memory_space<vmem>>, %arg3: memref<1x1024xf32, #tpu.memory_space<vmem>>, %arg4: memref<1024x512xbf16, #tpu.memory_space<vmem>>, %arg5: memref<1x512xf32, #tpu.memory_space<vmem>>, %arg6: memref<512x256xbf16, #tpu.memory_space<vmem>>, %arg7: memref<1x256xf32, #tpu.memory_space<vmem>>, %arg8: memref<256x128xbf16, #tpu.memory_space<vmem>>, %arg9: memref<1x128xf32, #tpu.memory_space<vmem>>, %arg10: memref<128x2xbf16, #tpu.memory_space<vmem>>, %arg11: memref<1x2xf32, #tpu.memory_space<vmem>>, %arg12: memref<16x2xf32, #tpu.memory_space<vmem>>, %arg13: memref<16x2xf32, #tpu.memory_space<vmem>>) attributes {dimension_semantics = [#tpu.dimension_semantics<parallel>], iteration_bounds = array<i64: 1>, scalar_prefetch = 0 : i64, scratch_operands = 0 : i64, tpu.core_type = #tpu.core_type<tc>, window_params = [{transform_indices = @transform_0, window_bounds = array<i64: 16, 3072>}, {pipeline_mode = #tpu.pipeline_mode<synchronous>, transform_indices = @transform_1, window_bounds = array<i64: 3072, 1024>}, {pipeline_mode = #tpu.pipeline_mode<synchronous>, transform_indices = @transform_2, window_bounds = array<i64: 1, 1024>}, {pipeline_mode = #tpu.pipeline_mode<synchronous>, transform_indices = @transform_3, window_bounds = array<i64: 1024, 512>}, {pipeline_mode = #tpu.pipeline_mode<synchronous>, transform_indices = @transform_4, window_bounds = array<i64: 1, 512>}, {pipeline_mode = #tpu.pipeline_mode<synchronous>, transform_indices = @transform_5, window_bounds = array<i64: 512, 256>}, {pipeline_mode = #tpu.pipeline_mode<synchronous>, transform_indices = @transform_6, window_bounds = array<i64: 1, 256>}, {pipeline_mode = #tpu.pipeline_mode<synchronous>, transform_indices = @transform_7, window_bounds = array<i64: 256, 128>}, {pipeline_mode = #tpu.pipeline_mode<synchronous>, transform_indices = @transform_8, window_bounds = array<i64: 1, 128>}, {pipeline_mode = #tpu.pipeline_mode<synchronous>, transform_indices = @transform_9, window_bounds = array<i64: 128, 2>}, {pipeline_mode = #tpu.pipeline_mode<synchronous>, transform_indices = @transform_10, window_bounds = array<i64: 1, 2>}, {transform_indices = @transform_11, window_bounds = array<i64: 16, 2>}, {transform_indices = @transform_12, window_bounds = array<i64: 16, 2>}]} {
    %c0 = arith.constant 0 : index
    %c0_0 = arith.constant 0 : index
    %0 = vector.load %arg1[%c0, %c0_0] : memref<16x3072xbf16, #tpu.memory_space<vmem>>, vector<16x3072xbf16>
    %c0_1 = arith.constant 0 : index
    %c0_2 = arith.constant 0 : index
    %1 = vector.load %arg2[%c0_1, %c0_2] : memref<3072x1024xbf16, #tpu.memory_space<vmem>>, vector<3072x1024xbf16>
    %cst = arith.constant dense<0.000000e+00> : vector<16x1024xf32>
    %2 = tpu.matmul %0, %1, %cst {dimension_numbers = #tpu.dot_dimension_numbers<[1], [0], [0], [1], [0, 0, 1, 1], [], []>} : vector<16x3072xbf16>, vector<3072x1024xbf16>, vector<16x1024xf32> -> vector<16x1024xf32>
    %c0_3 = arith.constant 0 : index
    %c0_4 = arith.constant 0 : index
    %3 = vector.load %arg3[%c0_3, %c0_4] : memref<1x1024xf32, #tpu.memory_space<vmem>>, vector<1x1024xf32>
    %4 = vector.broadcast %3 : vector<1x1024xf32> to vector<16x1024xf32>
    %5 = arith.addf %2, %4 : vector<16x1024xf32>
    %cst_5 = arith.constant 0.000000e+00 : f32
    %6 = vector.broadcast %cst_5 : f32 to vector<16x1024xf32>
    %7 = arith.maximumf %5, %6 : vector<16x1024xf32>
    %8 = arith.truncf %7 : vector<16x1024xf32> to vector<16x1024xbf16>
    %c0_6 = arith.constant 0 : index
    %c0_7 = arith.constant 0 : index
    %9 = vector.load %arg4[%c0_6, %c0_7] : memref<1024x512xbf16, #tpu.memory_space<vmem>>, vector<1024x512xbf16>
    %cst_8 = arith.constant dense<0.000000e+00> : vector<16x512xf32>
    %10 = tpu.matmul %8, %9, %cst_8 {dimension_numbers = #tpu.dot_dimension_numbers<[1], [0], [0], [1], [0, 0, 1, 1], [], []>} : vector<16x1024xbf16>, vector<1024x512xbf16>, vector<16x512xf32> -> vector<16x512xf32>
    %c0_9 = arith.constant 0 : index
    %c0_10 = arith.constant 0 : index
    %11 = vector.load %arg5[%c0_9, %c0_10] : memref<1x512xf32, #tpu.memory_space<vmem>>, vector<1x512xf32>
    %12 = vector.broadcast %11 : vector<1x512xf32> to vector<16x512xf32>
    %13 = arith.addf %10, %12 : vector<16x512xf32>
    %cst_11 = arith.constant 0.000000e+00 : f32
    %14 = vector.broadcast %cst_11 : f32 to vector<16x512xf32>
    %15 = arith.maximumf %13, %14 : vector<16x512xf32>
    %16 = arith.truncf %15 : vector<16x512xf32> to vector<16x512xbf16>
    %c0_12 = arith.constant 0 : index
    %c0_13 = arith.constant 0 : index
    %17 = vector.load %arg6[%c0_12, %c0_13] : memref<512x256xbf16, #tpu.memory_space<vmem>>, vector<512x256xbf16>
    %cst_14 = arith.constant dense<0.000000e+00> : vector<16x256xf32>
    %18 = tpu.matmul %16, %17, %cst_14 {dimension_numbers = #tpu.dot_dimension_numbers<[1], [0], [0], [1], [0, 0, 1, 1], [], []>} : vector<16x512xbf16>, vector<512x256xbf16>, vector<16x256xf32> -> vector<16x256xf32>
    %c0_15 = arith.constant 0 : index
    %c0_16 = arith.constant 0 : index
    %19 = vector.load %arg7[%c0_15, %c0_16] : memref<1x256xf32, #tpu.memory_space<vmem>>, vector<1x256xf32>
    %20 = vector.broadcast %19 : vector<1x256xf32> to vector<16x256xf32>
    %21 = arith.addf %18, %20 : vector<16x256xf32>
    %cst_17 = arith.constant 0.000000e+00 : f32
    %22 = vector.broadcast %cst_17 : f32 to vector<16x256xf32>
    %23 = arith.maximumf %21, %22 : vector<16x256xf32>
    %24 = arith.truncf %23 : vector<16x256xf32> to vector<16x256xbf16>
    %c0_18 = arith.constant 0 : index
    %c0_19 = arith.constant 0 : index
    %25 = vector.load %arg8[%c0_18, %c0_19] : memref<256x128xbf16, #tpu.memory_space<vmem>>, vector<256x128xbf16>
    %cst_20 = arith.constant dense<0.000000e+00> : vector<16x128xf32>
    %26 = tpu.matmul %24, %25, %cst_20 {dimension_numbers = #tpu.dot_dimension_numbers<[1], [0], [0], [1], [0, 0, 1, 1], [], []>} : vector<16x256xbf16>, vector<256x128xbf16>, vector<16x128xf32> -> vector<16x128xf32>
    %c0_21 = arith.constant 0 : index
    %c0_22 = arith.constant 0 : index
    %27 = vector.load %arg9[%c0_21, %c0_22] : memref<1x128xf32, #tpu.memory_space<vmem>>, vector<1x128xf32>
    %28 = vector.broadcast %27 : vector<1x128xf32> to vector<16x128xf32>
    %29 = arith.addf %26, %28 : vector<16x128xf32>
    %cst_23 = arith.constant 0.000000e+00 : f32
    %30 = vector.broadcast %cst_23 : f32 to vector<16x128xf32>
    %31 = arith.maximumf %29, %30 : vector<16x128xf32>
    %32 = arith.truncf %31 : vector<16x128xf32> to vector<16x128xbf16>
    %c0_24 = arith.constant 0 : index
    %c0_25 = arith.constant 0 : index
    %33 = vector.load %arg10[%c0_24, %c0_25] : memref<128x2xbf16, #tpu.memory_space<vmem>>, vector<128x2xbf16>
    %cst_26 = arith.constant dense<0.000000e+00> : vector<16x2xf32>
    %34 = tpu.matmul %32, %33, %cst_26 {dimension_numbers = #tpu.dot_dimension_numbers<[1], [0], [0], [1], [0, 0, 1, 1], [], []>} : vector<16x128xbf16>, vector<128x2xbf16>, vector<16x2xf32> -> vector<16x2xf32>
    %c0_27 = arith.constant 0 : index
    %c0_28 = arith.constant 0 : index
    %35 = vector.load %arg11[%c0_27, %c0_28] : memref<1x2xf32, #tpu.memory_space<vmem>>, vector<1x2xf32>
    %36 = vector.broadcast %35 : vector<1x2xf32> to vector<16x2xf32>
    %37 = arith.addf %34, %36 : vector<16x2xf32>
    %c0_29 = arith.constant 0 : index
    %c0_30 = arith.constant 0 : index
    %38 = vector.load %arg12[%c0_29, %c0_30] : memref<16x2xf32, #tpu.memory_space<vmem>>, vector<16x2xf32>
    tpu.vector_store %arg12[%c0_29, %c0_30], %37 {strides = array<i32>} : memref<16x2xf32, #tpu.memory_space<vmem>>, vector<16x2xf32>,
    %cst_31 = arith.constant dense<0xFF800000> : vector<16xf32>
    %39 = vector.multi_reduction <maximumf>, %37, %cst_31 [1] : vector<16x2xf32> to vector<16xf32>
    %40 = vector.shape_cast %39 : vector<16xf32> to vector<16x1xf32>
    %41 = vector.broadcast %40 : vector<16x1xf32> to vector<16x2xf32>
    %42 = arith.subf %37, %41 : vector<16x2xf32>
    %43 = math.exp %42 : vector<16x2xf32>
    %cst_32 = arith.constant dense<0.000000e+00> : vector<16xf32>
    %44 = vector.multi_reduction <add>, %43, %cst_32 [1] : vector<16x2xf32> to vector<16xf32>
    %45 = vector.shape_cast %44 : vector<16xf32> to vector<16x1xf32>
    %46 = tpu.reciprocal %45 {approx = true} : vector<16x1xf32> -> vector<16x1xf32>
    %47 = vector.broadcast %46 : vector<16x1xf32> to vector<16x2xf32>
    %48 = arith.mulf %43, %47 : vector<16x2xf32>
    %c0_33 = arith.constant 0 : index
    %c0_34 = arith.constant 0 : index
    %49 = vector.load %arg13[%c0_33, %c0_34] : memref<16x2xf32, #tpu.memory_space<vmem>>, vector<16x2xf32>
    tpu.vector_store %arg13[%c0_33, %c0_34], %48 {strides = array<i32>} : memref<16x2xf32, #tpu.memory_space<vmem>>, vector<16x2xf32>,
    return
  }
  func.func @transform_0(%arg0: i32) -> (i32, i32) {
    %c0_i32 = arith.constant 0 : i32
    %c0_i32_0 = arith.constant 0 : i32
    return %arg0, %c0_i32 : i32, i32
  }
  func.func @transform_1(%arg0: i32) -> (i32, i32) {
    %c0_i32 = arith.constant 0 : i32
    %c0_i32_0 = arith.constant 0 : i32
    %c0_i32_1 = arith.constant 0 : i32
    return %c0_i32, %c0_i32_0 : i32, i32
  }
  func.func @transform_2(%arg0: i32) -> (i32, i32) {
    %c0_i32 = arith.constant 0 : i32
    %c0_i32_0 = arith.constant 0 : i32
    %c0_i32_1 = arith.constant 0 : i32
    return %c0_i32, %c0_i32_0 : i32, i32
  }
  func.func @transform_3(%arg0: i32) -> (i32, i32) {
    %c0_i32 = arith.constant 0 : i32
    %c0_i32_0 = arith.constant 0 : i32
    %c0_i32_1 = arith.constant 0 : i32
    return %c0_i32, %c0_i32_0 : i32, i32
  }
  func.func @transform_4(%arg0: i32) -> (i32, i32) {
    %c0_i32 = arith.constant 0 : i32
    %c0_i32_0 = arith.constant 0 : i32
    %c0_i32_1 = arith.constant 0 : i32
    return %c0_i32, %c0_i32_0 : i32, i32
  }
  func.func @transform_5(%arg0: i32) -> (i32, i32) {
    %c0_i32 = arith.constant 0 : i32
    %c0_i32_0 = arith.constant 0 : i32
    %c0_i32_1 = arith.constant 0 : i32
    return %c0_i32, %c0_i32_0 : i32, i32
  }
  func.func @transform_6(%arg0: i32) -> (i32, i32) {
    %c0_i32 = arith.constant 0 : i32
    %c0_i32_0 = arith.constant 0 : i32
    %c0_i32_1 = arith.constant 0 : i32
    return %c0_i32, %c0_i32_0 : i32, i32
  }
  func.func @transform_7(%arg0: i32) -> (i32, i32) {
    %c0_i32 = arith.constant 0 : i32
    %c0_i32_0 = arith.constant 0 : i32
    %c0_i32_1 = arith.constant 0 : i32
    return %c0_i32, %c0_i32_0 : i32, i32
  }
  func.func @transform_8(%arg0: i32) -> (i32, i32) {
    %c0_i32 = arith.constant 0 : i32
    %c0_i32_0 = arith.constant 0 : i32
    %c0_i32_1 = arith.constant 0 : i32
    return %c0_i32, %c0_i32_0 : i32, i32
  }
  func.func @transform_9(%arg0: i32) -> (i32, i32) {
    %c0_i32 = arith.constant 0 : i32
    %c0_i32_0 = arith.constant 0 : i32
    %c0_i32_1 = arith.constant 0 : i32
    return %c0_i32, %c0_i32_0 : i32, i32
  }
  func.func @transform_10(%arg0: i32) -> (i32, i32) {
    %c0_i32 = arith.constant 0 : i32
    %c0_i32_0 = arith.constant 0 : i32
    %c0_i32_1 = arith.constant 0 : i32
    return %c0_i32, %c0_i32_0 : i32, i32
  }
  func.func @transform_11(%arg0: i32) -> (i32, i32) {
    %c0_i32 = arith.constant 0 : i32
    %c0_i32_0 = arith.constant 0 : i32
    return %arg0, %c0_i32 : i32, i32
  }
  func.func @transform_12(%arg0: i32) -> (i32, i32) {
    %c0_i32 = arith.constant 0 : i32
    %c0_i32_0 = arith.constant 0 : i32
    return %arg0, %c0_i32 : i32, i32
  }
}

</mosaic_0001>

<llo_original>
// kernel: mlp_forward.1
$region0: #{mlp_forward.1}
  #allocation0 [shape = 'u32[]', space=smem, size = 0x4, offset = 0x4, fixed_abs, tag = 'smem constant byte address 0x4 - core index']
  #allocation1 [shape = 'u32[72,128]{1,0:T(1,128)}', space=vmem, size = 0x9000, scoped, tag = 'internal scratch']
  %s0 = inlined_call_operand.vmem [shape: bf16[16,3072], index: 0, kind: input, shape index: {}]
  %s1 = inlined_call_operand.hbm [shape: bf16[3072,1024], index: 1, kind: input, shape index: {}]
  %s2 = inlined_call_operand.hbm [shape: f32[1,1024], index: 2, kind: input, shape index: {}]
  %s3 = inlined_call_operand.hbm [shape: bf16[1024,512], index: 3, kind: input, shape index: {}]
  %s4 = inlined_call_operand.hbm [shape: f32[1,512], index: 4, kind: input, shape index: {}]
  %s5 = inlined_call_operand.hbm [shape: bf16[512,256], index: 5, kind: input, shape index: {}]
  %s6 = inlined_call_operand.hbm [shape: f32[1,256], index: 6, kind: input, shape index: {}]
  %s7 = inlined_call_operand.hbm [shape: bf16[256,128], index: 7, kind: input, shape index: {}]
  %s8 = inlined_call_operand.hbm [shape: f32[1,128], index: 8, kind: input, shape index: {}]
  %s9 = inlined_call_operand.vmem [shape: bf16[128,2], index: 9, kind: input, shape index: {}]
  %s10 = inlined_call_operand.hbm [shape: f32[1,2], index: 10, kind: input, shape index: {}]
  %s11 = inlined_call_operand.vmem [shape: f32[16,2], index: 11, kind: output, shape index: {0}]
  %s12 = inlined_call_operand.vmem [shape: f32[16,2], index: 12, kind: output, shape index: {1}]
  %13 = xla_tuple %s11, %s12
  %s14 = sld [smem:[#allocation0]]
  $region98: #{mlp_forward.1} parent=0
    _
  %s16 = ssub.s32 1, %s14
  %s17 = scalar_select 0, %s16, %s14
  $region1: #{mlp_forward.1} parent=0
    #allocation2 [shape = 'u8[6291456]{0}', space=vmem, size = 0x600000, scoped, tag = 'input window, operand 1, single buffered']
    #allocation3 [shape = 's32[1]{0}', space=sflag, size = 0x4, scoped, tag = 'scoped memory for mlp_forward.1']
    #allocation4 [shape = 'u8[4096]{0}', space=vmem, size = 0x1000, scoped, tag = 'input window, operand 2, single buffered']
    #allocation5 [shape = 's32[1]{0}', space=sflag, size = 0x4, scoped, tag = 'scoped memory for mlp_forward.1']
    #allocation6 [shape = 'u8[1048576]{0}', space=vmem, size = 0x100000, scoped, tag = 'input window, operand 3, single buffered']
    #allocation7 [shape = 'u8[2048]{0}', space=vmem, size = 0x800, scoped, tag = 'input window, operand 4, single buffered']
    #allocation8 [shape = 's32[1]{0}', space=sflag, size = 0x4, scoped, tag = 'scoped memory for mlp_forward.1']
    #allocation9 [shape = 'u8[262144]{0}', space=vmem, size = 0x40000, scoped, tag = 'input window, operand 5, single buffered']
    #allocation10 [shape = 'u8[1024]{0}', space=vmem, size = 0x400, scoped, tag = 'input window, operand 6, single buffered']
    #allocation11 [shape = 's32[1]{0}', space=sflag, size = 0x4, scoped, tag = 'scoped memory for mlp_forward.1']
    #allocation12 [shape = 'u8[65536]{0}', space=vmem, size = 0x10000, scoped, tag = 'input window, operand 7, single buffered']
    #allocation13 [shape = 'u8[512]{0}', space=vmem, size = 0x400, scoped, tag = 'input window, operand 8, single buffered']
    #allocation14 [shape = 's32[1]{0}', space=sflag, size = 0x4, scoped, tag = 'scoped memory for mlp_forward.1']
    #allocation15 [shape = 'u8[512]{0}', space=vmem, size = 0x400, scoped, tag = 'input window, operand 10, single buffered']
    %18 = vsyncpa [#allocation3], 0
    %19 = vsyncpa [#allocation5], 0
    %20 = vsyncpa [#allocation8], 0
    %21 = vsyncpa [#allocation11], 0
    %22 = vsyncpa [#allocation14], 0
    // Predicated region
    $region2: #{mlp_forward.1} parent=1 // pred_check
      _
    $region3: #{mlp_forward.1} parent=1 // pred_check_branch
      %24 = sbr.rel (0) target = $region5
    $region4: #{mlp_forward.1} parent=1 // pred_region
      _
    $region5: #{mlp_forward.1} parent=1 // pred_fallthru
      _
    // Predicated region
    $region6: #{mlp_forward.1} parent=1 // pred_check
      _
    $region7: #{mlp_forward.1} parent=1 // pred_check_branch
      %26 = sbr.rel (0) target = $region9
    $region8: #{mlp_forward.1} parent=1 // pred_region
      %28 = vsyncadd [#allocation3], 0
      %s29 = sshll.u32 %s1, 4
      %s30 = int_to_ptr.hbm [resolvable:$true] %s29
      %s31 = sshll.u32 [#allocation2], 4
      %s32 = int_to_ptr.vmem [resolvable:$true] %s31
      %37 = dma.hbm_to_vmem [thread:$0]  %s30, 196608, %s32, [#allocation3], 512, 512, 32
    $region9: #{mlp_forward.1} parent=1 // pred_fallthru
      _
    // Predicated region
    $region10: #{mlp_forward.1} parent=1 // pred_check
      _
    $region11: #{mlp_forward.1} parent=1 // pred_check_branch
      %39 = sbr.rel (0) target = $region13
    $region12: #{mlp_forward.1} parent=1 // pred_region
      %41 = vsyncadd [#allocation5], 0
      %s43 = sshll.u32 %s2, 4
      %s44 = int_to_ptr.hbm [resolvable:$true] %s43
      %s45 = sshll.u32 [#allocation4], 4
      %s46 = int_to_ptr.vmem [resolvable:$true] %s45
      %48 = dma.hbm_to_vmem [thread:$0]  %s44, 128, %s46, [#allocation5]
    $region13: #{mlp_forward.1} parent=1 // pred_fallthru
      _
    // Predicated region
    $region14: #{mlp_forward.1} parent=1 // pred_check
      _
    $region15: #{mlp_forward.1} parent=1 // pred_check_branch
      %50 = sbr.rel (0) target = $region17
    $region16: #{mlp_forward.1} parent=1 // pred_region
      %52 = vsyncadd [#allocation5], 0
      %s53 = sshll.u32 %s3, 4
      %s54 = int_to_ptr.hbm [resolvable:$true] %s53
      %s55 = sshll.u32 [#allocation6], 4
      %s56 = int_to_ptr.vmem [resolvable:$true] %s55
      %61 = dma.hbm_to_vmem [thread:$0]  %s54, 32768, %s56, [#allocation5], 256, 256, 16
    $region17: #{mlp_forward.1} parent=1 // pred_fallthru
      _
    // Predicated region
    $region18: #{mlp_forward.1} parent=1 // pred_check
      _
    $region19: #{mlp_forward.1} parent=1 // pred_check_branch
      %63 = sbr.rel (0) target = $region21
    $region20: #{mlp_forward.1} parent=1 // pred_region
      %65 = vsyncadd [#allocation8], 0
      %s67 = sshll.u32 %s4, 4
      %s68 = int_to_ptr.hbm [resolvable:$true] %s67
      %s69 = sshll.u32 [#allocation7], 4
      %s70 = int_to_ptr.vmem [resolvable:$true] %s69
      %72 = dma.hbm_to_vmem [thread:$0]  %s68, 64, %s70, [#allocation8]
    $region21: #{mlp_forward.1} parent=1 // pred_fallthru
      _
    // Predicated region
    $region22: #{mlp_forward.1} parent=1 // pred_check
      _
    $region23: #{mlp_forward.1} parent=1 // pred_check_branch
      %74 = sbr.rel (0) target = $region25
    $region24: #{mlp_forward.1} parent=1 // pred_region
      %76 = vsyncadd [#allocation8], 0
      %s77 = sshll.u32 %s5, 4
      %s78 = int_to_ptr.hbm [resolvable:$true] %s77
      %s79 = sshll.u32 [#allocation9], 4
      %s80 = int_to_ptr.vmem [resolvable:$true] %s79
      %85 = dma.hbm_to_vmem [thread:$0]  %s78, 8192, %s80, [#allocation8], 128, 128, 8
    $region25: #{mlp_forward.1} parent=1 // pred_fallthru
      _
    // Predicated region
    $region26: #{mlp_forward.1} parent=1 // pred_check
      _
    $region27: #{mlp_forward.1} parent=1 // pred_check_branch
      %87 = sbr.rel (0) target = $region29
    $region28: #{mlp_forward.1} parent=1 // pred_region
      %89 = vsyncadd [#allocation11], 0
      %s91 = sshll.u32 %s6, 4
      %s92 = int_to_ptr.hbm [resolvable:$true] %s91
      %s93 = sshll.u32 [#allocation10], 4
      %s94 = int_to_ptr.vmem [resolvable:$true] %s93
      %96 = dma.hbm_to_vmem [thread:$0]  %s92, 32, %s94, [#allocation11]
    $region29: #{mlp_forward.1} parent=1 // pred_fallthru
      _
    // Predicated region
    $region30: #{mlp_forward.1} parent=1 // pred_check
      _
    $region31: #{mlp_forward.1} parent=1 // pred_check_branch
      %98 = sbr.rel (0) target = $region33
    $region32: #{mlp_forward.1} parent=1 // pred_region
      %100 = vsyncadd [#allocation11], 0
      %s101 = sshll.u32 %s7, 4
      %s102 = int_to_ptr.hbm [resolvable:$true] %s101
      %s103 = sshll.u32 [#allocation12], 4
      %s104 = int_to_ptr.vmem [resolvable:$true] %s103
      %109 = dma.hbm_to_vmem [thread:$0]  %s102, 2048, %s104, [#allocation11], 64, 64, 4
    $region33: #{mlp_forward.1} parent=1 // pred_fallthru
      _
    // Predicated region
    $region34: #{mlp_forward.1} parent=1 // pred_check
      _
    $region35: #{mlp_forward.1} parent=1 // pred_check_branch
      %111 = sbr.rel (0) target = $region37
    $region36: #{mlp_forward.1} parent=1 // pred_region
      %113 = vsyncadd [#allocation14], 0
      %s115 = sshll.u32 %s8, 4
      %s116 = int_to_ptr.hbm [resolvable:$true] %s115
      %s117 = sshll.u32 [#allocation13], 4
      %s118 = int_to_ptr.vmem [resolvable:$true] %s117
      %120 = dma.hbm_to_vmem [thread:$0]  %s116, 16, %s118, [#allocation14]
    $region37: #{mlp_forward.1} parent=1 // pred_fallthru
      _
    // Predicated region
    $region38: #{mlp_forward.1} parent=1 // pred_check
      _
    $region39: #{mlp_forward.1} parent=1 // pred_check_branch
      %122 = sbr.rel (0) target = $region41
    $region40: #{mlp_forward.1} parent=1 // pred_region
      _
    $region41: #{mlp_forward.1} parent=1 // pred_fallthru
      _
    // Predicated region
    $region42: #{mlp_forward.1} parent=1 // pred_check
      _
    $region43: #{mlp_forward.1} parent=1 // pred_check_branch
      %124 = sbr.rel (0) target = $region45
    $region44: #{mlp_forward.1} parent=1 // pred_region
      %126 = vsyncadd [#allocation14], 0
      %s128 = sshll.u32 %s10, 4
      %s129 = int_to_ptr.hbm [resolvable:$true] %s128
      %s130 = sshll.u32 [#allocation15], 4
      %s131 = int_to_ptr.vmem [resolvable:$true] %s130
      %133 = dma.hbm_to_vmem [thread:$0]  %s129, 16, %s131, [#allocation14]
    $region45: #{mlp_forward.1} parent=1 // pred_fallthru
      _
    // Predicated region
    $region46: #{mlp_forward.1} parent=1 // pred_check
      _
    $region47: #{mlp_forward.1} parent=1 // pred_check_branch
      %135 = sbr.rel (0) target = $region49
    $region48: #{mlp_forward.1} parent=1 // pred_region
      %137 = dma.done [#allocation3], 196608
    $region49: #{mlp_forward.1} parent=1 // pred_fallthru
      _
    // Predicated region
    $region50: #{mlp_forward.1} parent=1 // pred_check
      _
    $region51: #{mlp_forward.1} parent=1 // pred_check_branch
      %139 = sbr.rel (0) target = $region53
    $region52: #{mlp_forward.1} parent=1 // pred_region
      %141 = dma.done [#allocation5], 128
    $region53: #{mlp_forward.1} parent=1 // pred_fallthru
      _
    // Predicated region
    $region54: #{mlp_forward.1} parent=1 // pred_check
      _
    $region55: #{mlp_forward.1} parent=1 // pred_check_branch
      %143 = sbr.rel (0) target = $region57
    $region56: #{mlp_forward.1} parent=1 // pred_region
      %145 = dma.done [#allocation5], 32768
    $region57: #{mlp_forward.1} parent=1 // pred_fallthru
      _
    // Predicated region
    $region58: #{mlp_forward.1} parent=1 // pred_check
      _
    $region59: #{mlp_forward.1} parent=1 // pred_check_branch
      %147 = sbr.rel (0) target = $region61
    $region60: #{mlp_forward.1} parent=1 // pred_region
      %149 = dma.done [#allocation8], 64
    $region61: #{mlp_forward.1} parent=1 // pred_fallthru
      _
    // Predicated region
    $region62: #{mlp_forward.1} parent=1 // pred_check
      _
    $region63: #{mlp_forward.1} parent=1 // pred_check_branch
      %151 = sbr.rel (0) target = $region65
    $region64: #{mlp_forward.1} parent=1 // pred_region
      %153 = dma.done [#allocation8], 8192
    $region65: #{mlp_forward.1} parent=1 // pred_fallthru
      _
    // Predicated region
    $region66: #{mlp_forward.1} parent=1 // pred_check
      _
    $region67: #{mlp_forward.1} parent=1 // pred_check_branch
      %155 = sbr.rel (0) target = $region69
    $region68: #{mlp_forward.1} parent=1 // pred_region
      %157 = dma.done [#allocation11], 32
    $region69: #{mlp_forward.1} parent=1 // pred_fallthru
      _
    // Predicated region
    $region70: #{mlp_forward.1} parent=1 // pred_check
      _
    $region71: #{mlp_forward.1} parent=1 // pred_check_branch
      %159 = sbr.rel (0) target = $region73
    $region72: #{mlp_forward.1} parent=1 // pred_region
      %161 = dma.done [#allocation11], 2048
    $region73: #{mlp_forward.1} parent=1 // pred_fallthru
      _
    // Predicated region
    $region74: #{mlp_forward.1} parent=1 // pred_check
      _
    $region75: #{mlp_forward.1} parent=1 // pred_check_branch
      %163 = sbr.rel (0) target = $region77
    $region76: #{mlp_forward.1} parent=1 // pred_region
      %165 = dma.done [#allocation14], 16
    $region77: #{mlp_forward.1} parent=1 // pred_fallthru
      _
    // Predicated region
    $region78: #{mlp_forward.1} parent=1 // pred_check
      _
    $region79: #{mlp_forward.1} parent=1 // pred_check_branch
      %167 = sbr.rel (0) target = $region81
    $region80: #{mlp_forward.1} parent=1 // pred_region
      %169 = dma.done [#allocation14], 16
    $region81: #{mlp_forward.1} parent=1 // pred_fallthru
      _
    %v170 = vld [vmem:[%s0] sm:$0xff]
    %v171 = vld [vmem:[%s0 + $0x8] sm:$0xff]
    %v172 = vld [vmem:[%s0 + $0x10] sm:$0xff]
    %v173 = vld [vmem:[%s0 + $0x18] sm:$0xff]
    %v174 = vld [vmem:[%s0 + $0x20] sm:$0xff]
    %v175 = vld [vmem:[%s0 + $0x28] sm:$0xff]
    %v176 = vld [vmem:[%s0 + $0x30] sm:$0xff]
    %v177 = vld [vmem:[%s0 + $0x38] sm:$0xff]
    %v178 = vld [vmem:[%s0 + $0x40] sm:$0xff]
    %v179 = vld [vmem:[%s0 + $0x48] sm:$0xff]
    %v180 = vld [vmem:[%s0 + $0x50] sm:$0xff]
    %v181 = vld [vmem:[%s0 + $0x58] sm:$0xff]
    %v182 = vld [vmem:[%s0 + $0x60] sm:$0xff]
    %v183 = vld [vmem:[%s0 + $0x68] sm:$0xff]
    %v184 = vld [vmem:[%s0 + $0x70] sm:$0xff]
    %v185 = vld [vmem:[%s0 + $0x78] sm:$0xff]
    %v186 = vld [vmem:[%s0 + $0x80] sm:$0xff]
    %v187 = vld [vmem:[%s0 + $0x88] sm:$0xff]
    %v188 = vld [vmem:[%s0 + $0x90] sm:$0xff]
    %v189 = vld [vmem:[%s0 + $0x98] sm:$0xff]
    %v190 = vld [vmem:[%s0 + $0xa0] sm:$0xff]
    %v191 = vld [vmem:[%s0 + $0xa8] sm:$0xff]
    %v192 = vld [vmem:[%s0 + $0xb0] sm:$0xff]
    %v193 = vld [vmem:[%s0 + $0xb8] sm:$0xff]
    %v194 = vld [vmem:[#allocation2] sm:$0xff]
    %v195 = vld [vmem:[#allocation2 + $0x8] sm:$0xff]
    %v196 = vld [vmem:[#allocation2 + $0x10] sm:$0xff]
    %v197 = vld [vmem:[#allocation2 + $0x18] sm:$0xff]
    %v198 = vld [vmem:[#allocation2 + $0x20] sm:$0xff]
    %v199 = vld [vmem:[#allocation2 + $0x28] sm:$0xff]
    %v200 = vld [vmem:[#allocation2 + $0x30] sm:$0xff]
    %v201 = vld [vmem:[#allocation2 + $0x38] sm:$0xff]
    %v202 = vld [vmem:[#allocation2 + $0x40] sm:$0xff]
    %v203 = vld [vmem:[#allocation2 + $0x48] sm:$0xff]
    %v204 = vld [vmem:[#allocation2 + $0x50] sm:$0xff]
    %v205 = vld [vmem:[#allocation2 + $0x58] sm:$0xff]
    %v206 = vld [vmem:[#allocation2 + $0x60] sm:$0xff]
    %v207 = vld [vmem:[#allocation2 + $0x68] sm:$0xff]
    %v208 = vld [vmem:[#allocation2 + $0x70] sm:$0xff]
    %v209 = vld [vmem:[#allocation2 + $0x78] sm:$0xff]
    %v210 = vld [vmem:[#allocation2 + $0x80] sm:$0xff]
    %v211 = vld [vmem:[#allocation2 + $0x88] sm:$0xff]
    %v212 = vld [vmem:[#allocation2 + $0x90] sm:$0xff]
    %v213 = vld [vmem:[#allocation2 + $0x98] sm:$0xff]
    %v214 = vld [vmem:[#allocation2 + $0xa0] sm:$0xff]
    %v215 = vld [vmem:[#allocation2 + $0xa8] sm:$0xff]
    %v216 = vld [vmem:[#allocation2 + $0xb0] sm:$0xff]
    %v217 = vld [vmem:[#allocation2 + $0xb8] sm:$0xff]
    %v218 = vld [vmem:[#allocation2 + $0xc0] sm:$0xff]
    %v219 = vld [vmem:[#allocation2 + $0xc8] sm:$0xff]
    %v220 = vld [vmem:[#allocation2 + $0xd0] sm:$0xff]
    %v221 = vld [vmem:[#allocation2 + $0xd8] sm:$0xff]
    %v222 = vld [vmem:[#allocation2 + $0xe0] sm:$0xff]
    %v223 = vld [vmem:[#allocation2 + $0xe8] sm:$0xff]
    %v224 = vld [vmem:[#allocation2 + $0xf0] sm:$0xff]
    %v225 = vld [vmem:[#allocation2 + $0xf8] sm:$0xff]
    %v226 = vld [vmem:[#allocation2 + $0x100] sm:$0xff]
    %v227 = vld [vmem:[#allocation2 + $0x108] sm:$0xff]
    %v228 = vld [vmem:[#allocation2 + $0x110] sm:$0xff]
    %v229 = vld [vmem:[#allocation2 + $0x118] sm:$0xff]
    %v230 = vld [vmem:[#allocation2 + $0x120] sm:$0xff]
    %v231 = vld [vmem:[#allocation2 + $0x128] sm:$0xff]
    %v232 = vld [vmem:[#allocation2 + $0x130] sm:$0xff]
    %v233 = vld [vmem:[#allocation2 + $0x138] sm:$0xff]
    %v234 = vld [vmem:[#allocation2 + $0x140] sm:$0xff]
    %v235 = vld [vmem:[#allocation2 + $0x148] sm:$0xff]
    %v236 = vld [vmem:[#allocation2 + $0x150] sm:$0xff]
    %v237 = vld [vmem:[#allocation2 + $0x158] sm:$0xff]
    %v238 = vld [vmem:[#allocation2 + $0x160] sm:$0xff]
    %v239 = vld [vmem:[#allocation2 + $0x168] sm:$0xff]
    %v240 = vld [vmem:[#allocation2 + $0x170] sm:$0xff]
    %v241 = vld [vmem:[#allocation2 + $0x178] sm:$0xff]
    %v242 = vld [vmem:[#allocation2 + $0x180] sm:$0xff]
    %v243 = vld [vmem:[#allocation2 + $0x188] sm:$0xff]
    %v244 = vld [vmem:[#allocation2 + $0x190] sm:$0xff]
    %v245 = vld [vmem:[#allocation2 + $0x198] sm:$0xff]
    %v246 = vld [vmem:[#allocation2 + $0x1a0] sm:$0xff]
    %v247 = vld [vmem:[#allocation2 + $0x1a8] sm:$0xff]
    %v248 = vld [vmem:[#allocation2 + $0x1b0] sm:$0xff]
    %v249 = vld [vmem:[#allocation2 + $0x1b8] sm:$0xff]
    %v250 = vld [vmem:[#allocation2 + $0x1c0] sm:$0xff]
    %v251 = vld [vmem:[#allocation2 + $0x1c8] sm:$0xff]
    %v252 = vld [vmem:[#allocation2 + $0x1d0] sm:$0xff]
    %v253 = vld [vmem:[#allocation2 + $0x1d8] sm:$0xff]
    %v254 = vld [vmem:[#allocation2 + $0x1e0] sm:$0xff]
    %v255 = vld [vmem:[#allocation2 + $0x1e8] sm:$0xff]
    %v256 = vld [vmem:[#allocation2 + $0x1f0] sm:$0xff]
    %v257 = vld [vmem:[#allocation2 + $0x1f8] sm:$0xff]
    %v258 = vld [vmem:[#allocation2 + $0x200] sm:$0xff]
    %v259 = vld [vmem:[#allocation2 + $0x208] sm:$0xff]
    %v260 = vld [vmem:[#allocation2 + $0x210] sm:$0xff]
    %v261 = vld [vmem:[#allocation2 + $0x218] sm:$0xff]
    %v262 = vld [vmem:[#allocation2 + $0x220] sm:$0xff]
    %v263 = vld [vmem:[#allocation2 + $0x228] sm:$0xff]
    %v264 = vld [vmem:[#allocation2 + $0x230] sm:$0xff]
    %v265 = vld [vmem:[#allocation2 + $0x238] sm:$0xff]
    %v266 = vld [vmem:[#allocation2 + $0x240] sm:$0xff]
    %v267 = vld [vmem:[#allocation2 + $0x248] sm:$0xff]
    %v268 = vld [vmem:[#allocation2 + $0x250] sm:$0xff]
    %v269 = vld [vmem:[#allocation2 + $0x258] sm:$0xff]
    %v270 = vld [vmem:[#allocation2 + $0x260] sm:$0xff]
    %v271 = vld [vmem:[#allocation2 + $0x268] sm:$0xff]
    %v272 = vld [vmem:[#allocation2 + $0x270] sm:$0xff]
    %v273 = vld [vmem:[#allocation2 + $0x278] sm:$0xff]
    %v274 = vld [vmem:[#allocation2 + $0x280] sm:$0xff]
    %v275 = vld [vmem:[#allocation2 + $0x288] sm:$0xff]
    %v276 = vld [vmem:[#allocation2 + $0x290] sm:$0xff]
    %v277 = vld [vmem:[#allocation2 + $0x298] sm:$0xff]
    %v278 = vld [vmem:[#allocation2 + $0x2a0] sm:$0xff]
    %v279 = vld [vmem:[#allocation2 + $0x2a8] sm:$0xff]
    %v280 = vld [vmem:[#allocation2 + $0x2b0] sm:$0xff]
    %v281 = vld [vmem:[#allocation2 + $0x2b8] sm:$0xff]
    %v282 = vld [vmem:[#allocation2 + $0x2c0] sm:$0xff]
    %v283 = vld [vmem:[#allocation2 + $0x2c8] sm:$0xff]
    %v284 = vld [vmem:[#allocation2 + $0x2d0] sm:$0xff]
    %v285 = vld [vmem:[#allocation2 + $0x2d8] sm:$0xff]
    %v286 = vld [vmem:[#allocation2 + $0x2e0] sm:$0xff]
    %v287 = vld [vmem:[#allocation2 + $0x2e8] sm:$0xff]
    %v288 = vld [vmem:[#allocation2 + $0x2f0] sm:$0xff]
    %v289 = vld [vmem:[#allocation2 + $0x2f8] sm:$0xff]
    %v290 = vld [vmem:[#allocation2 + $0x300] sm:$0xff]
    %v291 = vld [vmem:[#allocation2 + $0x308] sm:$0xff]
    %v292 = vld [vmem:[#allocation2 + $0x310] sm:$0xff]
    %v293 = vld [vmem:[#allocation2 + $0x318] sm:$0xff]
    %v294 = vld [vmem:[#allocation2 + $0x320] sm:$0xff]
    %v295 = vld [vmem:[#allocation2 + $0x328] sm:$0xff]
    %v296 = vld [vmem:[#allocation2 + $0x330] sm:$0xff]
    %v297 = vld [vmem:[#allocation2 + $0x338] sm:$0xff]
    %v298 = vld [vmem:[#allocation2 + $0x340] sm:$0xff]
    %v299 = vld [vmem:[#allocation2 + $0x348] sm:$0xff]
    %v300 = vld [vmem:[#allocation2 + $0x350] sm:$0xff]
    %v301 = vld [vmem:[#allocation2 + $0x358] sm:$0xff]
    %v302 = vld [vmem:[#allocation2 + $0x360] sm:$0xff]
    %v303 = vld [vmem:[#allocation2 + $0x368] sm:$0xff]
    %v304 = vld [vmem:[#allocation2 + $0x370] sm:$0xff]
    %v305 = vld [vmem:[#allocation2 + $0x378] sm:$0xff]
    %v306 = vld [vmem:[#allocation2 + $0x380] sm:$0xff]
    %v307 = vld [vmem:[#allocation2 + $0x388] sm:$0xff]
    %v308 = vld [vmem:[#allocation2 + $0x390] sm:$0xff]
    %v309 = vld [vmem:[#allocation2 + $0x398] sm:$0xff]
    %v310 = vld [vmem:[#allocation2 + $0x3a0] sm:$0xff]
    %v311 = vld [vmem:[#allocation2 + $0x3a8] sm:$0xff]
    %v312 = vld [vmem:[#allocation2 + $0x3b0] sm:$0xff]
    %v313 = vld [vmem:[#allocation2 + $0x3b8] sm:$0xff]
    %v314 = vld [vmem:[#allocation2 + $0x3c0] sm:$0xff]
    %v315 = vld [vmem:[#allocation2 + $0x3c8] sm:$0xff]
    %v316 = vld [vmem:[#allocation2 + $0x3d0] sm:$0xff]
    %v317 = vld [vmem:[#allocation2 + $0x3d8] sm:$0xff]
    %v318 = vld [vmem:[#allocation2 + $0x3e0] sm:$0xff]
    %v319 = vld [vmem:[#allocation2 + $0x3e8] sm:$0xff]
    %v320 = vld [vmem:[#allocation2 + $0x3f0] sm:$0xff]
    %v321 = vld [vmem:[#allocation2 + $0x3f8] sm:$0xff]
    %v322 = vld [vmem:[#allocation2 + $0x400] sm:$0xff]
    %v323 = vld [vmem:[#allocation2 + $0x408] sm:$0xff]
    %v324 = vld [vmem:[#allocation2 + $0x410] sm:$0xff]
    %v325 = vld [vmem:[#allocation2 + $0x418] sm:$0xff]
    %v326 = vld [vmem:[#allocation2 + $0x420] sm:$0xff]
    %v327 = vld [vmem:[#allocation2 + $0x428] sm:$0xff]
    %v328 = vld [vmem:[#allocation2 + $0x430] sm:$0xff]
    %v329 = vld [vmem:[#allocation2 + $0x438] sm:$0xff]
    %v330 = vld [vmem:[#allocation2 + $0x440] sm:$0xff]
    %v331 = vld [vmem:[#allocation2 + $0x448] sm:$0xff]
    %v332 = vld [vmem:[#allocation2 + $0x450] sm:$0xff]
    %v333 = vld [vmem:[#allocation2 + $0x458] sm:$0xff]
    %v334 = vld [vmem:[#allocation2 + $0x460] sm:$0xff]
    %v335 = vld [vmem:[#allocation2 + $0x468] sm:$0xff]
    %v336 = vld [vmem:[#allocation2 + $0x470] sm:$0xff]
    %v337 = vld [vmem:[#allocation2 + $0x478] sm:$0xff]
    %v338 = vld [vmem:[#allocation2 + $0x480] sm:$0xff]
    %v339 = vld [vmem:[#allocation2 + $0x488] sm:$0xff]
    %v340 = vld [vmem:[#allocation2 + $0x490] sm:$0xff]
    %v341 = vld [vmem:[#allocation2 + $0x498] sm:$0xff]
    %v342 = vld [vmem:[#allocation2 + $0x4a0] sm:$0xff]
    %v343 = vld [vmem:[#allocation2 + $0x4a8] sm:$0xff]
    %v344 = vld [vmem:[#allocation2 + $0x4b0] sm:$0xff]
    %v345 = vld [vmem:[#allocation2 + $0x4b8] sm:$0xff]
    %v346 = vld [vmem:[#allocation2 + $0x4c0] sm:$0xff]
    %v347 = vld [vmem:[#allocation2 + $0x4c8] sm:$0xff]
    %v348 = vld [vmem:[#allocation2 + $0x4d0] sm:$0xff]
    %v349 = vld [vmem:[#allocation2 + $0x4d8] sm:$0xff]
    %v350 = vld [vmem:[#allocation2 + $0x4e0] sm:$0xff]
    %v351 = vld [vmem:[#allocation2 + $0x4e8] sm:$0xff]
    %v352 = vld [vmem:[#allocation2 + $0x4f0] sm:$0xff]
    %v353 = vld [vmem:[#allocation2 + $0x4f8] sm:$0xff]
    %v354 = vld [vmem:[#allocation2 + $0x500] sm:$0xff]
    %v355 = vld [vmem:[#allocation2 + $0x508] sm:$0xff]
    %v356 = vld [vmem:[#allocation2 + $0x510] sm:$0xff]
    %v357 = vld [vmem:[#allocation2 + $0x518] sm:$0xff]
    %v358 = vld [vmem:[#allocation2 + $0x520] sm:$0xff]
    %v359 = vld [vmem:[#allocation2 + $0x528] sm:$0xff]
    %v360 = vld [vmem:[#allocation2 + $0x530] sm:$0xff]
    %v361 = vld [vmem:[#allocation2 + $0x538] sm:$0xff]
    %v362 = vld [vmem:[#allocation2 + $0x540] sm:$0xff]
    %v363 = vld [vmem:[#allocation2 + $0x548] sm:$0xff]
    %v364 = vld [vmem:[#allocation2 + $0x550] sm:$0xff]
    %v365 = vld [vmem:[#allocation2 + $0x558] sm:$0xff]
    %v366 = vld [vmem:[#allocation2 + $0x560] sm:$0xff]
    %v367 = vld [vmem:[#allocation2 + $0x568] sm:$0xff]
    %v368 = vld [vmem:[#allocation2 + $0x570] sm:$0xff]
    %v369 = vld [vmem:[#allocation2 + $0x578] sm:$0xff]
    %v370 = vld [vmem:[#allocation2 + $0x580] sm:$0xff]
    %v371 = vld [vmem:[#allocation2 + $0x588] sm:$0xff]
    %v372 = vld [vmem:[#allocation2 + $0x590] sm:$0xff]
    %v373 = vld [vmem:[#allocation2 + $0x598] sm:$0xff]
    %v374 = vld [vmem:[#allocation2 + $0x5a0] sm:$0xff]
    %v375 = vld [vmem:[#allocation2 + $0x5a8] sm:$0xff]
    %v376 = vld [vmem:[#allocation2 + $0x5b0] sm:$0xff]
    %v377 = vld [vmem:[#allocation2 + $0x5b8] sm:$0xff]
    %v378 = vld [vmem:[#allocation2 + $0x5c0] sm:$0xff]
    %v379 = vld [vmem:[#allocation2 + $0x5c8] sm:$0xff]
    %v380 = vld [vmem:[#allocation2 + $0x5d0] sm:$0xff]
    %v381 = vld [vmem:[#allocation2 + $0x5d8] sm:$0xff]
    %v382 = vld [vmem:[#allocation2 + $0x5e0] sm:$0xff]
    %v383 = vld [vmem:[#allocation2 + $0x5e8] sm:$0xff]
    %v384 = vld [vmem:[#allocation2 + $0x5f0] sm:$0xff]
    %v385 = vld [vmem:[#allocation2 + $0x5f8] sm:$0xff]
    %v386 = vld [vmem:[#allocation2 + $0x600] sm:$0xff]
    %v387 = vld [vmem:[#allocation2 + $0x608] sm:$0xff]
    %v388 = vld [vmem:[#allocation2 + $0x610] sm:$0xff]
    %v389 = vld [vmem:[#allocation2 + $0x618] sm:$0xff]
    %v390 = vld [vmem:[#allocation2 + $0x620] sm:$0xff]
    %v391 = vld [vmem:[#allocation2 + $0x628] sm:$0xff]
    %v392 = vld [vmem:[#allocation2 + $0x630] sm:$0xff]
    %v393 = vld [vmem:[#allocation2 + $0x638] sm:$0xff]
    %v394 = vld [vmem:[#allocation2 + $0x640] sm:$0xff]
    %v395 = vld [vmem:[#allocation2 + $0x648] sm:$0xff]
    %v396 = vld [vmem:[#allocation2 + $0x650] sm:$0xff]
    %v397 = vld [vmem:[#allocation2 + $0x658] sm:$0xff]
    %v398 = vld [vmem:[#allocation2 + $0x660] sm:$0xff]
    %v399 = vld [vmem:[#allocation2 + $0x668] sm:$0xff]
    %v400 = vld [vmem:[#allocation2 + $0x670] sm:$0xff]
    %v401 = vld [vmem:[#allocation2 + $0x678] sm:$0xff]
    %v402 = vld [vmem:[#allocation2 + $0x680] sm:$0xff]
    %v403 = vld [vmem:[#allocation2 + $0x688] sm:$0xff]
    %v404 = vld [vmem:[#allocation2 + $0x690] sm:$0xff]
    %v405 = vld [vmem:[#allocation2 + $0x698] sm:$0xff]
    %v406 = vld [vmem:[#allocation2 + $0x6a0] sm:$0xff]
    %v407 = vld [vmem:[#allocation2 + $0x6a8] sm:$0xff]
    %v408 = vld [vmem:[#allocation2 + $0x6b0] sm:$0xff]
    %v409 = vld [vmem:[#allocation2 + $0x6b8] sm:$0xff]
    %v410 = vld [vmem:[#allocation2 + $0x6c0] sm:$0xff]
    %v411 = vld [vmem:[#allocation2 + $0x6c8] sm:$0xff]
    %v412 = vld [vmem:[#allocation2 + $0x6d0] sm:$0xff]
    %v413 = vld [vmem:[#allocation2 + $0x6d8] sm:$0xff]
    %v414 = vld [vmem:[#allocation2 + $0x6e0] sm:$0xff]
    %v415 = vld [vmem:[#allocation2 + $0x6e8] sm:$0xff]
    %v416 = vld [vmem:[#allocation2 + $0x6f0] sm:$0xff]
    %v417 = vld [vmem:[#allocation2 + $0x6f8] sm:$0xff]
    %v418 = vld [vmem:[#allocation2 + $0x700] sm:$0xff]
    %v419 = vld [vmem:[#allocation2 + $0x708] sm:$0xff]
    %v420 = vld [vmem:[#allocation2 + $0x710] sm:$0xff]
    %v421 = vld [vmem:[#allocation2 + $0x718] sm:$0xff]
    %v422 = vld [vmem:[#allocation2 + $0x720] sm:$0xff]
    %v423 = vld [vmem:[#allocation2 + $0x728] sm:$0xff]
    %v424 = vld [vmem:[#allocation2 + $0x730] sm:$0xff]
    %v425 = vld [vmem:[#allocation2 + $0x738] sm:$0xff]
    %v426 = vld [vmem:[#allocation2 + $0x740] sm:$0xff]
    %v427 = vld [vmem:[#allocation2 + $0x748] sm:$0xff]
    %v428 = vld [vmem:[#allocation2 + $0x750] sm:$0xff]
    %v429 = vld [vmem:[#allocation2 + $0x758] sm:$0xff]
    %v430 = vld [vmem:[#allocation2 + $0x760] sm:$0xff]
    %v431 = vld [vmem:[#allocation2 + $0x768] sm:$0xff]
    %v432 = vld [vmem:[#allocation2 + $0x770] sm:$0xff]
    %v433 = vld [vmem:[#allocation2 + $0x778] sm:$0xff]
    %v434 = vld [vmem:[#allocation2 + $0x780] sm:$0xff]
    %v435 = vld [vmem:[#allocation2 + $0x788] sm:$0xff]
    %v436 = vld [vmem:[#allocation2 + $0x790] sm:$0xff]
    %v437 = vld [vmem:[#allocation2 + $0x798] sm:$0xff]
    %v438 = vld [vmem:[#allocation2 + $0x7a0] sm:$0xff]
    %v439 = vld [vmem:[#allocation2 + $0x7a8] sm:$0xff]
    %v440 = vld [vmem:[#allocation2 + $0x7b0] sm:$0xff]
    %v441 = vld [vmem:[#allocation2 + $0x7b8] sm:$0xff]
    %v442 = vld [vmem:[#allocation2 + $0x7c0] sm:$0xff]
    %v443 = vld [vmem:[#allocation2 + $0x7c8] sm:$0xff]
    %v444 = vld [vmem:[#allocation2 + $0x7d0] sm:$0xff]
    %v445 = vld [vmem:[#allocation2 + $0x7d8] sm:$0xff]
    %v446 = vld [vmem:[#allocation2 + $0x7e0] sm:$0xff]
    %v447 = vld [vmem:[#allocation2 + $0x7e8] sm:$0xff]
    %v448 = vld [vmem:[#allocation2 + $0x7f0] sm:$0xff]
    %v449 = vld [vmem:[#allocation2 + $0x7f8] sm:$0xff]
    %v450 = vld [vmem:[#allocation2 + $0x800] sm:$0xff]
    %v451 = vld [vmem:[#allocation2 + $0x808] sm:$0xff]
    %v452 = vld [vmem:[#allocation2 + $0x810] sm:$0xff]
    %v453 = vld [vmem:[#allocation2 + $0x818] sm:$0xff]
    %v454 = vld [vmem:[#allocation2 + $0x820] sm:$0xff]
    %v455 = vld [vmem:[#allocation2 + $0x828] sm:$0xff]
    %v456 = vld [vmem:[#allocation2 + $0x830] sm:$0xff]
    %v457 = vld [vmem:[#allocation2 + $0x838] sm:$0xff]
    %v458 = vld [vmem:[#allocation2 + $0x840] sm:$0xff]
    %v459 = vld [vmem:[#allocation2 + $0x848] sm:$0xff]
    %v460 = vld [vmem:[#allocation2 + $0x850] sm:$0xff]
    %v461 = vld [vmem:[#allocation2 + $0x858] sm:$0xff]
    %v462 = vld [vmem:[#allocation2 + $0x860] sm:$0xff]
    %v463 = vld [vmem:[#allocation2 + $0x868] sm:$0xff]
    %v464 = vld [vmem:[#allocation2 + $0x870] sm:$0xff]
    %v465 = vld [vmem:[#allocation2 + $0x878] sm:$0xff]
    %v466 = vld [vmem:[#allocation2 + $0x880] sm:$0xff]
    %v467 = vld [vmem:[#allocation2 + $0x888] sm:$0xff]
    %v468 = vld [vmem:[#allocation2 + $0x890] sm:$0xff]
    %v469 = vld [vmem:[#allocation2 + $0x898] sm:$0xff]
    %v470 = vld [vmem:[#allocation2 + $0x8a0] sm:$0xff]
    %v471 = vld [vmem:[#allocation2 + $0x8a8] sm:$0xff]
    %v472 = vld [vmem:[#allocation2 + $0x8b0] sm:$0xff]
    %v473 = vld [vmem:[#allocation2 + $0x8b8] sm:$0xff]
    %v474 = vld [vmem:[#allocation2 + $0x8c0] sm:$0xff]
    %v475 = vld [vmem:[#allocation2 + $0x8c8] sm:$0xff]
    %v476 = vld [vmem:[#allocation2 + $0x8d0] sm:$0xff]
    %v477 = vld [vmem:[#allocation2 + $0x8d8] sm:$0xff]
    %v478 = vld [vmem:[#allocation2 + $0x8e0] sm:$0xff]
    %v479 = vld [vmem:[#allocation2 + $0x8e8] sm:$0xff]
    %v480 = vld [vmem:[#allocation2 + $0x8f0] sm:$0xff]
    %v481 = vld [vmem:[#allocation2 + $0x8f8] sm:$0xff]
    %v482 = vld [vmem:[#allocation2 + $0x900] sm:$0xff]
    %v483 = vld [vmem:[#allocation2 + $0x908] sm:$0xff]
    %v484 = vld [vmem:[#allocation2 + $0x910] sm:$0xff]
    %v485 = vld [vmem:[#allocation2 + $0x918] sm:$0xff]
    %v486 = vld [vmem:[#allocation2 + $0x920] sm:$0xff]
    %v487 = vld [vmem:[#allocation2 + $0x928] sm:$0xff]
    %v488 = vld [vmem:[#allocation2 + $0x930] sm:$0xff]
    %v489 = vld [vmem:[#allocation2 + $0x938] sm:$0xff]
    %v490 = vld [vmem:[#allocation2 + $0x940] sm:$0xff]
    %v491 = vld [vmem:[#allocation2 + $0x948] sm:$0xff]
    %v492 = vld [vmem:[#allocation2 + $0x950] sm:$0xff]
    %v493 = vld [vmem:[#allocation2 + $0x958] sm:$0xff]
    %v494 = vld [vmem:[#allocation2 + $0x960] sm:$0xff]
    %v495 = vld [vmem:[#allocation2 + $0x968] sm:$0xff]
    %v496 = vld [vmem:[#allocation2 + $0x970] sm:$0xff]
    %v497 = vld [vmem:[#allocation2 + $0x978] sm:$0xff]
    %v498 = vld [vmem:[#allocation2 + $0x980] sm:$0xff]
    %v499 = vld [vmem:[#allocation2 + $0x988] sm:$0xff]
    %v500 = vld [vmem:[#allocation2 + $0x990] sm:$0xff]
    %v501 = vld [vmem:[#allocation2 + $0x998] sm:$0xff]
    %v502 = vld [vmem:[#allocation2 + $0x9a0] sm:$0xff]
    %v503 = vld [vmem:[#allocation2 + $0x9a8] sm:$0xff]
    %v504 = vld [vmem:[#allocation2 + $0x9b0] sm:$0xff]
    %v505 = vld [vmem:[#allocation2 + $0x9b8] sm:$0xff]
    %v506 = vld [vmem:[#allocation2 + $0x9c0] sm:$0xff]
    %v507 = vld [vmem:[#allocation2 + $0x9c8] sm:$0xff]
    %v508 = vld [vmem:[#allocation2 + $0x9d0] sm:$0xff]
    %v509 = vld [vmem:[#allocation2 + $0x9d8] sm:$0xff]
    %v510 = vld [vmem:[#allocation2 + $0x9e0] sm:$0xff]
    %v511 = vld [vmem:[#allocation2 + $0x9e8] sm:$0xff]
    %v512 = vld [vmem:[#allocation2 + $0x9f0] sm:$0xff]
    %v513 = vld [vmem:[#allocation2 + $0x9f8] sm:$0xff]
    %v514 = vld [vmem:[#allocation2 + $0xa00] sm:$0xff]
    %v515 = vld [vmem:[#allocation2 + $0xa08] sm:$0xff]
    %v516 = vld [vmem:[#allocation2 + $0xa10] sm:$0xff]
    %v517 = vld [vmem:[#allocation2 + $0xa18] sm:$0xff]
    %v518 = vld [vmem:[#allocation2 + $0xa20] sm:$0xff]
    %v519 = vld [vmem:[#allocation2 + $0xa28] sm:$0xff]
    %v520 = vld [vmem:[#allocation2 + $0xa30] sm:$0xff]
    %v521 = vld [vmem:[#allocation2 + $0xa38] sm:$0xff]
    %v522 = vld [vmem:[#allocation2 + $0xa40] sm:$0xff]
    %v523 = vld [vmem:[#allocation2 + $0xa48] sm:$0xff]
    %v524 = vld [vmem:[#allocation2 + $0xa50] sm:$0xff]
    %v525 = vld [vmem:[#allocation2 + $0xa58] sm:$0xff]
    %v526 = vld [vmem:[#allocation2 + $0xa60] sm:$0xff]
    %v527 = vld [vmem:[#allocation2 + $0xa68] sm:$0xff]
    %v528 = vld [vmem:[#allocation2 + $0xa70] sm:$0xff]
    %v529 = vld [vmem:[#allocation2 + $0xa78] sm:$0xff]
    %v530 = vld [vmem:[#allocation2 + $0xa80] sm:$0xff]
    %v531 = vld [vmem:[#allocation2 + $0xa88] sm:$0xff]
    %v532 = vld [vmem:[#allocation2 + $0xa90] sm:$0xff]
    %v533 = vld [vmem:[#allocation2 + $0xa98] sm:$0xff]
    %v534 = vld [vmem:[#allocation2 + $0xaa0] sm:$0xff]
    %v535 = vld [vmem:[#allocation2 + $0xaa8] sm:$0xff]
    %v536 = vld [vmem:[#allocation2 + $0xab0] sm:$0xff]
    %v537 = vld [vmem:[#allocation2 + $0xab8] sm:$0xff]
    %v538 = vld [vmem:[#allocation2 + $0xac0] sm:$0xff]
    %v539 = vld [vmem:[#allocation2 + $0xac8] sm:$0xff]
    %v540 = vld [vmem:[#allocation2 + $0xad0] sm:$0xff]
    %v541 = vld [vmem:[#allocation2 + $0xad8] sm:$0xff]
    %v542 = vld [vmem:[#allocation2 + $0xae0] sm:$0xff]
    %v543 = vld [vmem:[#allocation2 + $0xae8] sm:$0xff]
    %v544 = vld [vmem:[#allocation2 + $0xaf0] sm:$0xff]
    %v545 = vld [vmem:[#allocation2 + $0xaf8] sm:$0xff]
    %v546 = vld [vmem:[#allocation2 + $0xb00] sm:$0xff]
    %v547 = vld [vmem:[#allocation2 + $0xb08] sm:$0xff]
    %v548 = vld [vmem:[#allocation2 + $0xb10] sm:$0xff]
    %v549 = vld [vmem:[#allocation2 + $0xb18] sm:$0xff]
    %v550 = vld [vmem:[#allocation2 + $0xb20] sm:$0xff]
    %v551 = vld [vmem:[#allocation2 + $0xb28] sm:$0xff]
    %v552 = vld [vmem:[#allocation2 + $0xb30] sm:$0xff]
    %v553 = vld [vmem:[#allocation2 + $0xb38] sm:$0xff]
    %v554 = vld [vmem:[#allocation2 + $0xb40] sm:$0xff]
    %v555 = vld [vmem:[#allocation2 + $0xb48] sm:$0xff]
    %v556 = vld [vmem:[#allocation2 + $0xb50] sm:$0xff]
    %v557 = vld [vmem:[#allocation2 + $0xb58] sm:$0xff]
    %v558 = vld [vmem:[#allocation2 + $0xb60] sm:$0xff]
    %v559 = vld [vmem:[#allocation2 + $0xb68] sm:$0xff]
    %v560 = vld [vmem:[#allocation2 + $0xb70] sm:$0xff]
    %v561 = vld [vmem:[#allocation2 + $0xb78] sm:$0xff]
    %v562 = vld [vmem:[#allocation2 + $0xb80] sm:$0xff]
    %v563 = vld [vmem:[#allocation2 + $0xb88] sm:$0xff]
    %v564 = vld [vmem:[#allocation2 + $0xb90] sm:$0xff]
    %v565 = vld [vmem:[#allocation2 + $0xb98] sm:$0xff]
    %v566 = vld [vmem:[#allocation2 + $0xba0] sm:$0xff]
    %v567 = vld [vmem:[#allocation2 + $0xba8] sm:$0xff]
    %v568 = vld [vmem:[#allocation2 + $0xbb0] sm:$0xff]
    %v569 = vld [vmem:[#allocation2 + $0xbb8] sm:$0xff]
    %v570 = vld [vmem:[#allocation2 + $0xbc0] sm:$0xff]
    %v571 = vld [vmem:[#allocation2 + $0xbc8] sm:$0xff]
    %v572 = vld [vmem:[#allocation2 + $0xbd0] sm:$0xff]
    %v573 = vld [vmem:[#allocation2 + $0xbd8] sm:$0xff]
    %v574 = vld [vmem:[#allocation2 + $0xbe0] sm:$0xff]
    %v575 = vld [vmem:[#allocation2 + $0xbe8] sm:$0xff]
    %v576 = vld [vmem:[#allocation2 + $0xbf0] sm:$0xff]
    %v577 = vld [vmem:[#allocation2 + $0xbf8] sm:$0xff]
    %v578 = vld [vmem:[#allocation2 + $0xc00] sm:$0xff]
    %v579 = vld [vmem:[#allocation2 + $0xc08] sm:$0xff]
    %v580 = vld [vmem:[#allocation2 + $0xc10] sm:$0xff]
    %v581 = vld [vmem:[#allocation2 + $0xc18] sm:$0xff]
    %v582 = vld [vmem:[#allocation2 + $0xc20] sm:$0xff]
    %v583 = vld [vmem:[#allocation2 + $0xc28] sm:$0xff]
    %v584 = vld [vmem:[#allocation2 + $0xc30] sm:$0xff]
    %v585 = vld [vmem:[#allocation2 + $0xc38] sm:$0xff]
    %v586 = vld [vmem:[#allocation2 + $0xc40] sm:$0xff]
    %v587 = vld [vmem:[#allocation2 + $0xc48] sm:$0xff]
    %v588 = vld [vmem:[#allocation2 + $0xc50] sm:$0xff]
    %v589 = vld [vmem:[#allocation2 + $0xc58] sm:$0xff]
    %v590 = vld [vmem:[#allocation2 + $0xc60] sm:$0xff]
    %v591 = vld [vmem:[#allocation2 + $0xc68] sm:$0xff]
    %v592 = vld [vmem:[#allocation2 + $0xc70] sm:$0xff]
    %v593 = vld [vmem:[#allocation2 + $0xc78] sm:$0xff]
    %v594 = vld [vmem:[#allocation2 + $0xc80] sm:$0xff]
    %v595 = vld [vmem:[#allocation2 + $0xc88] sm:$0xff]
    %v596 = vld [vmem:[#allocation2 + $0xc90] sm:$0xff]
    %v597 = vld [vmem:[#allocation2 + $0xc98] sm:$0xff]
    %v598 = vld [vmem:[#allocation2 + $0xca0] sm:$0xff]
    %v599 = vld [vmem:[#allocation2 + $0xca8] sm:$0xff]
    %v600 = vld [vmem:[#allocation2 + $0xcb0] sm:$0xff]
    %v601 = vld [vmem:[#allocation2 + $0xcb8] sm:$0xff]
    %v602 = vld [vmem:[#allocation2 + $0xcc0] sm:$0xff]
    %v603 = vld [vmem:[#allocation2 + $0xcc8] sm:$0xff]
    %v604 = vld [vmem:[#allocation2 + $0xcd0] sm:$0xff]
    %v605 = vld [vmem:[#allocation2 + $0xcd8] sm:$0xff]
    %v606 = vld [vmem:[#allocation2 + $0xce0] sm:$0xff]
    %v607 = vld [vmem:[#allocation2 + $0xce8] sm:$0xff]
    %v608 = vld [vmem:[#allocation2 + $0xcf0] sm:$0xff]
    %v609 = vld [vmem:[#allocation2 + $0xcf8] sm:$0xff]
    %v610 = vld [vmem:[#allocation2 + $0xd00] sm:$0xff]
    %v611 = vld [vmem:[#allocation2 + $0xd08] sm:$0xff]
    %v612 = vld [vmem:[#allocation2 + $0xd10] sm:$0xff]
    %v613 = vld [vmem:[#allocation2 + $0xd18] sm:$0xff]
    %v614 = vld [vmem:[#allocation2 + $0xd20] sm:$0xff]
    %v615 = vld [vmem:[#allocation2 + $0xd28] sm:$0xff]
    %v616 = vld [vmem:[#allocation2 + $0xd30] sm:$0xff]
    %v617 = vld [vmem:[#allocation2 + $0xd38] sm:$0xff]
    %v618 = vld [vmem:[#allocation2 + $0xd40] sm:$0xff]
    %v619 = vld [vmem:[#allocation2 + $0xd48] sm:$0xff]
    %v620 = vld [vmem:[#allocation2 + $0xd50] sm:$0xff]
    %v621 = vld [vmem:[#allocation2 + $0xd58] sm:$0xff]
    %v622 = vld [vmem:[#allocation2 + $0xd60] sm:$0xff]
    %v623 = vld [vmem:[#allocation2 + $0xd68] sm:$0xff]
    %v624 = vld [vmem:[#allocation2 + $0xd70] sm:$0xff]
    %v625 = vld [vmem:[#allocation2 + $0xd78] sm:$0xff]
    %v626 = vld [vmem:[#allocation2 + $0xd80] sm:$0xff]
    %v627 = vld [vmem:[#allocation2 + $0xd88] sm:$0xff]
    %v628 = vld [vmem:[#allocation2 + $0xd90] sm:$0xff]
    %v629 = vld [vmem:[#allocation2 + $0xd98] sm:$0xff]
    %v630 = vld [vmem:[#allocation2 + $0xda0] sm:$0xff]
    %v631 = vld [vmem:[#allocation2 + $0xda8] sm:$0xff]
    %v632 = vld [vmem:[#allocation2 + $0xdb0] sm:$0xff]
    %v633 = vld [vmem:[#allocation2 + $0xdb8] sm:$0xff]
    %v634 = vld [vmem:[#allocation2 + $0xdc0] sm:$0xff]
    %v635 = vld [vmem:[#allocation2 + $0xdc8] sm:$0xff]
    %v636 = vld [vmem:[#allocation2 + $0xdd0] sm:$0xff]
    %v637 = vld [vmem:[#allocation2 + $0xdd8] sm:$0xff]
    %v638 = vld [vmem:[#allocation2 + $0xde0] sm:$0xff]
    %v639 = vld [vmem:[#allocation2 + $0xde8] sm:$0xff]
    %v640 = vld [vmem:[#allocation2 + $0xdf0] sm:$0xff]
    %v641 = vld [vmem:[#allocation2 + $0xdf8] sm:$0xff]
    %v642 = vld [vmem:[#allocation2 + $0xe00] sm:$0xff]
    %v643 = vld [vmem:[#allocation2 + $0xe08] sm:$0xff]
    %v644 = vld [vmem:[#allocation2 + $0xe10] sm:$0xff]
    %v645 = vld [vmem:[#allocation2 + $0xe18] sm:$0xff]
    %v646 = vld [vmem:[#allocation2 + $0xe20] sm:$0xff]
    %v647 = vld [vmem:[#allocation2 + $0xe28] sm:$0xff]
    %v648 = vld [vmem:[#allocation2 + $0xe30] sm:$0xff]
    %v649 = vld [vmem:[#allocation2 + $0xe38] sm:$0xff]
    %v650 = vld [vmem:[#allocation2 + $0xe40] sm:$0xff]
    %v651 = vld [vmem:[#allocation2 + $0xe48] sm:$0xff]
    %v652 = vld [vmem:[#allocation2 + $0xe50] sm:$0xff]
    %v653 = vld [vmem:[#allocation2 + $0xe58] sm:$0xff]
    %v654 = vld [vmem:[#allocation2 + $0xe60] sm:$0xff]
    %v655 = vld [vmem:[#allocation2 + $0xe68] sm:$0xff]
    %v656 = vld [vmem:[#allocation2 + $0xe70] sm:$0xff]
    %v657 = vld [vmem:[#allocation2 + $0xe78] sm:$0xff]
    %v658 = vld [vmem:[#allocation2 + $0xe80] sm:$0xff]
    %v659 = vld [vmem:[#allocation2 + $0xe88] sm:$0xff]
    %v660 = vld [vmem:[#allocation2 + $0xe90] sm:$0xff]
    %v661 = vld [vmem:[#allocation2 + $0xe98] sm:$0xff]
    %v662 = vld [vmem:[#allocation2 + $0xea0] sm:$0xff]
    %v663 = vld [vmem:[#allocation2 + $0xea8] sm:$0xff]
    %v664 = vld [vmem:[#allocation2 + $0xeb0] sm:$0xff]
    %v665 = vld [vmem:[#allocation2 + $0xeb8] sm:$0xff]
    %v666 = vld [vmem:[#allocation2 + $0xec0] sm:$0xff]
    %v667 = vld [vmem:[#allocation2 + $0xec8] sm:$0xff]
    %v668 = vld [vmem:[#allocation2 + $0xed0] sm:$0xff]
    %v669 = vld [vmem:[#allocation2 + $0xed8] sm:$0xff]
    %v670 = vld [vmem:[#allocation2 + $0xee0] sm:$0xff]
    %v671 = vld [vmem:[#allocation2 + $0xee8] sm:$0xff]
    %v672 = vld [vmem:[#allocation2 + $0xef0] sm:$0xff]
    %v673 = vld [vmem:[#allocation2 + $0xef8] sm:$0xff]
    %v674 = vld [vmem:[#allocation2 + $0xf00] sm:$0xff]
    %v675 = vld [vmem:[#allocation2 + $0xf08] sm:$0xff]
    %v676 = vld [vmem:[#allocation2 + $0xf10] sm:$0xff]
    %v677 = vld [vmem:[#allocation2 + $0xf18] sm:$0xff]
    %v678 = vld [vmem:[#allocation2 + $0xf20] sm:$0xff]
    %v679 = vld [vmem:[#allocation2 + $0xf28] sm:$0xff]
    %v680 = vld [vmem:[#allocation2 + $0xf30] sm:$0xff]
    %v681 = vld [vmem:[#allocation2 + $0xf38] sm:$0xff]
    %v682 = vld [vmem:[#allocation2 + $0xf40] sm:$0xff]
    %v683 = vld [vmem:[#allocation2 + $0xf48] sm:$0xff]
    %v684 = vld [vmem:[#allocation2 + $0xf50] sm:$0xff]
    %v685 = vld [vmem:[#allocation2 + $0xf58] sm:$0xff]
    %v686 = vld [vmem:[#allocation2 + $0xf60] sm:$0xff]
    %v687 = vld [vmem:[#allocation2 + $0xf68] sm:$0xff]
    %v688 = vld [vmem:[#allocation2 + $0xf70] sm:$0xff]
    %v689 = vld [vmem:[#allocation2 + $0xf78] sm:$0xff]
    %v690 = vld [vmem:[#allocation2 + $0xf80] sm:$0xff]
    %v691 = vld [vmem:[#allocation2 + $0xf88] sm:$0xff]
    %v692 = vld [vmem:[#allocation2 + $0xf90] sm:$0xff]
    %v693 = vld [vmem:[#allocation2 + $0xf98] sm:$0xff]
    %v694 = vld [vmem:[#allocation2 + $0xfa0] sm:$0xff]
    %v695 = vld [vmem:[#allocation2 + $0xfa8] sm:$0xff]
    %v696 = vld [vmem:[#allocation2 + $0xfb0] sm:$0xff]
    %v697 = vld [vmem:[#allocation2 + $0xfb8] sm:$0xff]
    %v698 = vld [vmem:[#allocation2 + $0xfc0] sm:$0xff]
    %v699 = vld [vmem:[#allocation2 + $0xfc8] sm:$0xff]
    %v700 = vld [vmem:[#allocation2 + $0xfd0] sm:$0xff]
    %v701 = vld [vmem:[#allocation2 + $0xfd8] sm:$0xff]
    %v702 = vld [vmem:[#allocation2 + $0xfe0] sm:$0xff]
    %v703 = vld [vmem:[#allocation2 + $0xfe8] sm:$0xff]
    %v704 = vld [vmem:[#allocation2 + $0xff0] sm:$0xff]
    %v705 = vld [vmem:[#allocation2 + $0xff8] sm:$0xff]
    %v706 = vld [vmem:[#allocation2 + $0x1000] sm:$0xff]
    %v707 = vld [vmem:[#allocation2 + $0x1008] sm:$0xff]
    %v708 = vld [vmem:[#allocation2 + $0x1010] sm:$0xff]
    %v709 = vld [vmem:[#allocation2 + $0x1018] sm:$0xff]
    %v710 = vld [vmem:[#allocation2 + $0x1020] sm:$0xff]
    %v711 = vld [vmem:[#allocation2 + $0x1028] sm:$0xff]
    %v712 = vld [vmem:[#allocation2 + $0x1030] sm:$0xff]
    %v713 = vld [vmem:[#allocation2 + $0x1038] sm:$0xff]
    %v714 = vld [vmem:[#allocation2 + $0x1040] sm:$0xff]
    %v715 = vld [vmem:[#allocation2 + $0x1048] sm:$0xff]
    %v716 = vld [vmem:[#allocation2 + $0x1050] sm:$0xff]
    %v717 = vld [vmem:[#allocation2 + $0x1058] sm:$0xff]
    %v718 = vld [vmem:[#allocation2 + $0x1060] sm:$0xff]
    %v719 = vld [vmem:[#allocation2 + $0x1068] sm:$0xff]
    %v720 = vld [vmem:[#allocation2 + $0x1070] sm:$0xff]
    %v721 = vld [vmem:[#allocation2 + $0x1078] sm:$0xff]
    %v722 = vld [vmem:[#allocation2 + $0x1080] sm:$0xff]
    %v723 = vld [vmem:[#allocation2 + $0x1088] sm:$0xff]
    %v724 = vld [vmem:[#allocation2 + $0x1090] sm:$0xff]
    %v725 = vld [vmem:[#allocation2 + $0x1098] sm:$0xff]
    %v726 = vld [vmem:[#allocation2 + $0x10a0] sm:$0xff]
    %v727 = vld [vmem:[#allocation2 + $0x10a8] sm:$0xff]
    %v728 = vld [vmem:[#allocation2 + $0x10b0] sm:$0xff]
    %v729 = vld [vmem:[#allocation2 + $0x10b8] sm:$0xff]
    %v730 = vld [vmem:[#allocation2 + $0x10c0] sm:$0xff]
    %v731 = vld [vmem:[#allocation2 + $0x10c8] sm:$0xff]
    %v732 = vld [vmem:[#allocation2 + $0x10d0] sm:$0xff]
    %v733 = vld [vmem:[#allocation2 + $0x10d8] sm:$0xff]
    %v734 = vld [vmem:[#allocation2 + $0x10e0] sm:$0xff]
    %v735 = vld [vmem:[#allocation2 + $0x10e8] sm:$0xff]
    %v736 = vld [vmem:[#allocation2 + $0x10f0] sm:$0xff]
    %v737 = vld [vmem:[#allocation2 + $0x10f8] sm:$0xff]
    %v738 = vld [vmem:[#allocation2 + $0x1100] sm:$0xff]
    %v739 = vld [vmem:[#allocation2 + $0x1108] sm:$0xff]
    %v740 = vld [vmem:[#allocation2 + $0x1110] sm:$0xff]
    %v741 = vld [vmem:[#allocation2 + $0x1118] sm:$0xff]
    %v742 = vld [vmem:[#allocation2 + $0x1120] sm:$0xff]
    %v743 = vld [vmem:[#allocation2 + $0x1128] sm:$0xff]
    %v744 = vld [vmem:[#allocation2 + $0x1130] sm:$0xff]
    %v745 = vld [vmem:[#allocation2 + $0x1138] sm:$0xff]
    %v746 = vld [vmem:[#allocation2 + $0x1140] sm:$0xff]
    %v747 = vld [vmem:[#allocation2 + $0x1148] sm:$0xff]
    %v748 = vld [vmem:[#allocation2 + $0x1150] sm:$0xff]
    %v749 = vld [vmem:[#allocation2 + $0x1158] sm:$0xff]
    %v750 = vld [vmem:[#allocation2 + $0x1160] sm:$0xff]
    %v751 = vld [vmem:[#allocation2 + $0x1168] sm:$0xff]
    %v752 = vld [vmem:[#allocation2 + $0x1170] sm:$0xff]
    %v753 = vld [vmem:[#allocation2 + $0x1178] sm:$0xff]
    %v754 = vld [vmem:[#allocation2 + $0x1180] sm:$0xff]
    %v755 = vld [vmem:[#allocation2 + $0x1188] sm:$0xff]
    %v756 = vld [vmem:[#allocation2 + $0x1190] sm:$0xff]
    %v757 = vld [vmem:[#allocation2 + $0x1198] sm:$0xff]
    %v758 = vld [vmem:[#allocation2 + $0x11a0] sm:$0xff]
    %v759 = vld [vmem:[#allocation2 + $0x11a8] sm:$0xff]
    %v760 = vld [vmem:[#allocation2 + $0x11b0] sm:$0xff]
    %v761 = vld [vmem:[#allocation2 + $0x11b8] sm:$0xff]
    %v762 = vld [vmem:[#allocation2 + $0x11c0] sm:$0xff]
    %v763 = vld [vmem:[#allocation2 + $0x11c8] sm:$0xff]
    %v764 = vld [vmem:[#allocation2 + $0x11d0] sm:$0xff]
    %v765 = vld [vmem:[#allocation2 + $0x11d8] sm:$0xff]
    %v766 = vld [vmem:[#allocation2 + $0x11e0] sm:$0xff]
    %v767 = vld [vmem:[#allocation2 + $0x11e8] sm:$0xff]
    %v768 = vld [vmem:[#allocation2 + $0x11f0] sm:$0xff]
    %v769 = vld [vmem:[#allocation2 + $0x11f8] sm:$0xff]
    %v770 = vld [vmem:[#allocation2 + $0x1200] sm:$0xff]
    %v771 = vld [vmem:[#allocation2 + $0x1208] sm:$0xff]
    %v772 = vld [vmem:[#allocation2 + $0x1210] sm:$0xff]
    %v773 = vld [vmem:[#allocation2 + $0x1218] sm:$0xff]
    %v774 = vld [vmem:[#allocation2 + $0x1220] sm:$0xff]
    %v775 = vld [vmem:[#allocation2 + $0x1228] sm:$0xff]
    %v776 = vld [vmem:[#allocation2 + $0x1230] sm:$0xff]
    %v777 = vld [vmem:[#allocation2 + $0x1238] sm:$0xff]
    %v778 = vld [vmem:[#allocation2 + $0x1240] sm:$0xff]
    %v779 = vld [vmem:[#allocation2 + $0x1248] sm:$0xff]
    %v780 = vld [vmem:[#allocation2 + $0x1250] sm:$0xff]
    %v781 = vld [vmem:[#allocation2 + $0x1258] sm:$0xff]
    %v782 = vld [vmem:[#allocation2 + $0x1260] sm:$0xff]
    %v783 = vld [vmem:[#allocation2 + $0x1268] sm:$0xff]
    %v784 = vld [vmem:[#allocation2 + $0x1270] sm:$0xff]
    %v785 = vld [vmem:[#allocation2 + $0x1278] sm:$0xff]
    %v786 = vld [vmem:[#allocation2 + $0x1280] sm:$0xff]
    %v787 = vld [vmem:[#allocation2 + $0x1288] sm:$0xff]
    %v788 = vld [vmem:[#allocation2 + $0x1290] sm:$0xff]
    %v789 = vld [vmem:[#allocation2 + $0x1298] sm:$0xff]
    %v790 = vld [vmem:[#allocation2 + $0x12a0] sm:$0xff]
    %v791 = vld [vmem:[#allocation2 + $0x12a8] sm:$0xff]
    %v792 = vld [vmem:[#allocation2 + $0x12b0] sm:$0xff]
    %v793 = vld [vmem:[#allocation2 + $0x12b8] sm:$0xff]
    %v794 = vld [vmem:[#allocation2 + $0x12c0] sm:$0xff]
    %v795 = vld [vmem:[#allocation2 + $0x12c8] sm:$0xff]
    %v796 = vld [vmem:[#allocation2 + $0x12d0] sm:$0xff]
    %v797 = vld [vmem:[#allocation2 + $0x12d8] sm:$0xff]
    %v798 = vld [vmem:[#allocation2 + $0x12e0] sm:$0xff]
    %v799 = vld [vmem:[#allocation2 + $0x12e8] sm:$0xff]
    %v800 = vld [vmem:[#allocation2 + $0x12f0] sm:$0xff]
    %v801 = vld [vmem:[#allocation2 + $0x12f8] sm:$0xff]
    %v802 = vld [vmem:[#allocation2 + $0x1300] sm:$0xff]
    %v803 = vld [vmem:[#allocation2 + $0x1308] sm:$0xff]
    %v804 = vld [vmem:[#allocation2 + $0x1310] sm:$0xff]
    %v805 = vld [vmem:[#allocation2 + $0x1318] sm:$0xff]
    %v806 = vld [vmem:[#allocation2 + $0x1320] sm:$0xff]
    %v807 = vld [vmem:[#allocation2 + $0x1328] sm:$0xff]
    %v808 = vld [vmem:[#allocation2 + $0x1330] sm:$0xff]
    %v809 = vld [vmem:[#allocation2 + $0x1338] sm:$0xff]
    %v810 = vld [vmem:[#allocation2 + $0x1340] sm:$0xff]
    %v811 = vld [vmem:[#allocation2 + $0x1348] sm:$0xff]
    %v812 = vld [vmem:[#allocation2 + $0x1350] sm:$0xff]
    %v813 = vld [vmem:[#allocation2 + $0x1358] sm:$0xff]
    %v814 = vld [vmem:[#allocation2 + $0x1360] sm:$0xff]
    %v815 = vld [vmem:[#allocation2 + $0x1368] sm:$0xff]
    %v816 = vld [vmem:[#allocation2 + $0x1370] sm:$0xff]
    %v817 = vld [vmem:[#allocation2 + $0x1378] sm:$0xff]
    %v818 = vld [vmem:[#allocation2 + $0x1380] sm:$0xff]
    %v819 = vld [vmem:[#allocation2 + $0x1388] sm:$0xff]
    %v820 = vld [vmem:[#allocation2 + $0x1390] sm:$0xff]
    %v821 = vld [vmem:[#allocation2 + $0x1398] sm:$0xff]
    %v822 = vld [vmem:[#allocation2 + $0x13a0] sm:$0xff]
    %v823 = vld [vmem:[#allocation2 + $0x13a8] sm:$0xff]
    %v824 = vld [vmem:[#allocation2 + $0x13b0] sm:$0xff]
    %v825 = vld [vmem:[#allocation2 + $0x13b8] sm:$0xff]
    %v826 = vld [vmem:[#allocation2 + $0x13c0] sm:$0xff]
    %v827 = vld [vmem:[#allocation2 + $0x13c8] sm:$0xff]
    %v828 = vld [vmem:[#allocation2 + $0x13d0] sm:$0xff]
    %v829 = vld [vmem:[#allocation2 + $0x13d8] sm:$0xff]
    %v830 = vld [vmem:[#allocation2 + $0x13e0] sm:$0xff]
    %v831 = vld [vmem:[#allocation2 + $0x13e8] sm:$0xff]
    %v832 = vld [vmem:[#allocation2 + $0x13f0] sm:$0xff]
    %v833 = vld [vmem:[#allocation2 + $0x13f8] sm:$0xff]
    %v834 = vld [vmem:[#allocation2 + $0x1400] sm:$0xff]
    %v835 = vld [vmem:[#allocation2 + $0x1408] sm:$0xff]
    %v836 = vld [vmem:[#allocation2 + $0x1410] sm:$0xff]
    %v837 = vld [vmem:[#allocation2 + $0x1418] sm:$0xff]
    %v838 = vld [vmem:[#allocation2 + $0x1420] sm:$0xff]
    %v839 = vld [vmem:[#allocation2 + $0x1428] sm:$0xff]
    %v840 = vld [vmem:[#allocation2 + $0x1430] sm:$0xff]
    %v841 = vld [vmem:[#allocation2 + $0x1438] sm:$0xff]
    %v842 = vld [vmem:[#allocation2 + $0x1440] sm:$0xff]
    %v843 = vld [vmem:[#allocation2 + $0x1448] sm:$0xff]
    %v844 = vld [vmem:[#allocation2 + $0x1450] sm:$0xff]
    %v845 = vld [vmem:[#allocation2 + $0x1458] sm:$0xff]
    %v846 = vld [vmem:[#allocation2 + $0x1460] sm:$0xff]
    %v847 = vld [vmem:[#allocation2 + $0x1468] sm:$0xff]
    %v848 = vld [vmem:[#allocation2 + $0x1470] sm:$0xff]
    %v849 = vld [vmem:[#allocation2 + $0x1478] sm:$0xff]
    %v850 = vld [vmem:[#allocation2 + $0x1480] sm:$0xff]
    %v851 = vld [vmem:[#allocation2 + $0x1488] sm:$0xff]
    %v852 = vld [vmem:[#allocation2 + $0x1490] sm:$0xff]
    %v853 = vld [vmem:[#allocation2 + $0x1498] sm:$0xff]
    %v854 = vld [vmem:[#allocation2 + $0x14a0] sm:$0xff]
    %v855 = vld [vmem:[#allocation2 + $0x14a8] sm:$0xff]
    %v856 = vld [vmem:[#allocation2 + $0x14b0] sm:$0xff]
    %v857 = vld [vmem:[#allocation2 + $0x14b8] sm:$0xff]
    %v858 = vld [vmem:[#allocation2 + $0x14c0] sm:$0xff]
    %v859 = vld [vmem:[#allocation2 + $0x14c8] sm:$0xff]
    %v860 = vld [vmem:[#allocation2 + $0x14d0] sm:$0xff]
    %v861 = vld [vmem:[#allocation2 + $0x14d8] sm:$0xff]
    %v862 = vld [vmem:[#allocation2 + $0x14e0] sm:$0xff]
    %v863 = vld [vmem:[#allocation2 + $0x14e8] sm:$0xff]
    %v864 = vld [vmem:[#allocation2 + $0x14f0] sm:$0xff]
    %v865 = vld [vmem:[#allocation2 + $0x14f8] sm:$0xff]
    %v866 = vld [vmem:[#allocation2 + $0x1500] sm:$0xff]
    %v867 = vld [vmem:[#allocation2 + $0x1508] sm:$0xff]
    %v868 = vld [vmem:[#allocation2 + $0x1510] sm:$0xff]
    %v869 = vld [vmem:[#allocation2 + $0x1518] sm:$0xff]
    %v870 = vld [vmem:[#allocation2 + $0x1520] sm:$0xff]
    %v871 = vld [vmem:[#allocation2 + $0x1528] sm:$0xff]
    %v872 = vld [vmem:[#allocation2 + $0x1530] sm:$0xff]
    %v873 = vld [vmem:[#allocation2 + $0x1538] sm:$0xff]
    %v874 = vld [vmem:[#allocation2 + $0x1540] sm:$0xff]
    %v875 = vld [vmem:[#allocation2 + $0x1548] sm:$0xff]
    %v876 = vld [vmem:[#allocation2 + $0x1550] sm:$0xff]
    %v877 = vld [vmem:[#allocation2 + $0x1558] sm:$0xff]
    %v878 = vld [vmem:[#allocation2 + $0x1560] sm:$0xff]
    %v879 = vld [vmem:[#allocation2 + $0x1568] sm:$0xff]
    %v880 = vld [vmem:[#allocation2 + $0x1570] sm:$0xff]
    %v881 = vld [vmem:[#allocation2 + $0x1578] sm:$0xff]
    %v882 = vld [vmem:[#allocation2 + $0x1580] sm:$0xff]
    %v883 = vld [vmem:[#allocation2 + $0x1588] sm:$0xff]
    %v884 = vld [vmem:[#allocation2 + $0x1590] sm:$0xff]
    %v885 = vld [vmem:[#allocation2 + $0x1598] sm:$0xff]
    %v886 = vld [vmem:[#allocation2 + $0x15a0] sm:$0xff]
    %v887 = vld [vmem:[#allocation2 + $0x15a8] sm:$0xff]
    %v888 = vld [vmem:[#allocation2 + $0x15b0] sm:$0xff]
    %v889 = vld [vmem:[#allocation2 + $0x15b8] sm:$0xff]
    %v890 = vld [vmem:[#allocation2 + $0x15c0] sm:$0xff]
    %v891 = vld [vmem:[#allocation2 + $0x15c8] sm:$0xff]
    %v892 = vld [vmem:[#allocation2 + $0x15d0] sm:$0xff]
    %v893 = vld [vmem:[#allocation2 + $0x15d8] sm:$0xff]
    %v894 = vld [vmem:[#allocation2 + $0x15e0] sm:$0xff]
    %v895 = vld [vmem:[#allocation2 + $0x15e8] sm:$0xff]
    %v896 = vld [vmem:[#allocation2 + $0x15f0] sm:$0xff]
    %v897 = vld [vmem:[#allocation2 + $0x15f8] sm:$0xff]
    %v898 = vld [vmem:[#allocation2 + $0x1600] sm:$0xff]
    %v899 = vld [vmem:[#allocation2 + $0x1608] sm:$0xff]
    %v900 = vld [vmem:[#allocation2 + $0x1610] sm:$0xff]
    %v901 = vld [vmem:[#allocation2 + $0x1618] sm:$0xff]
    %v902 = vld [vmem:[#allocation2 + $0x1620] sm:$0xff]
    %v903 = vld [vmem:[#allocation2 + $0x1628] sm:$0xff]
    %v904 = vld [vmem:[#allocation2 + $0x1630] sm:$0xff]
    %v905 = vld [vmem:[#allocation2 + $0x1638] sm:$0xff]
    %v906 = vld [vmem:[#allocation2 + $0x1640] sm:$0xff]
    %v907 = vld [vmem:[#allocation2 + $0x1648] sm:$0xff]
    %v908 = vld [vmem:[#allocation2 + $0x1650] sm:$0xff]
    %v909 = vld [vmem:[#allocation2 + $0x1658] sm:$0xff]
    %v910 = vld [vmem:[#allocation2 + $0x1660] sm:$0xff]
    %v911 = vld [vmem:[#allocation2 + $0x1668] sm:$0xff]
    %v912 = vld [vmem:[#allocation2 + $0x1670] sm:$0xff]
    %v913 = vld [vmem:[#allocation2 + $0x1678] sm:$0xff]
    %v914 = vld [vmem:[#allocation2 + $0x1680] sm:$0xff]
    %v915 = vld [vmem:[#allocation2 + $0x1688] sm:$0xff]
    %v916 = vld [vmem:[#allocation2 + $0x1690] sm:$0xff]
    %v917 = vld [vmem:[#allocation2 + $0x1698] sm:$0xff]
    %v918 = vld [vmem:[#allocation2 + $0x16a0] sm:$0xff]
    %v919 = vld [vmem:[#allocation2 + $0x16a8] sm:$0xff]
    %v920 = vld [vmem:[#allocation2 + $0x16b0] sm:$0xff]
    %v921 = vld [vmem:[#allocation2 + $0x16b8] sm:$0xff]
    %v922 = vld [vmem:[#allocation2 + $0x16c0] sm:$0xff]
    %v923 = vld [vmem:[#allocation2 + $0x16c8] sm:$0xff]
    %v924 = vld [vmem:[#allocation2 + $0x16d0] sm:$0xff]
    %v925 = vld [vmem:[#allocation2 + $0x16d8] sm:$0xff]
    %v926 = vld [vmem:[#allocation2 + $0x16e0] sm:$0xff]
    %v927 = vld [vmem:[#allocation2 + $0x16e8] sm:$0xff]
    %v928 = vld [vmem:[#allocation2 + $0x16f0] sm:$0xff]
    %v929 = vld [vmem:[#allocation2 + $0x16f8] sm:$0xff]
    %v930 = vld [vmem:[#allocation2 + $0x1700] sm:$0xff]
    %v931 = vld [vmem:[#allocation2 + $0x1708] sm:$0xff]
    %v932 = vld [vmem:[#allocation2 + $0x1710] sm:$0xff]
    %v933 = vld [vmem:[#allocation2 + $0x1718] sm:$0xff]
    %v934 = vld [vmem:[#allocation2 + $0x1720] sm:$0xff]
    %v935 = vld [vmem:[#allocation2 + $0x1728] sm:$0xff]
    %v936 = vld [vmem:[#allocation2 + $0x1730] sm:$0xff]
    %v937 = vld [vmem:[#allocation2 + $0x1738] sm:$0xff]
    %v938 = vld [vmem:[#allocation2 + $0x1740] sm:$0xff]
    %v939 = vld [vmem:[#allocation2 + $0x1748] sm:$0xff]
    %v940 = vld [vmem:[#allocation2 + $0x1750] sm:$0xff]
    %v941 = vld [vmem:[#allocation2 + $0x1758] sm:$0xff]
    %v942 = vld [vmem:[#allocation2 + $0x1760] sm:$0xff]
    %v943 = vld [vmem:[#allocation2 + $0x1768] sm:$0xff]
    %v944 = vld [vmem:[#allocation2 + $0x1770] sm:$0xff]
    %v945 = vld [vmem:[#allocation2 + $0x1778] sm:$0xff]
    %v946 = vld [vmem:[#allocation2 + $0x1780] sm:$0xff]
    %v947 = vld [vmem:[#allocation2 + $0x1788] sm:$0xff]
    %v948 = vld [vmem:[#allocation2 + $0x1790] sm:$0xff]
    %v949 = vld [vmem:[#allocation2 + $0x1798] sm:$0xff]
    %v950 = vld [vmem:[#allocation2 + $0x17a0] sm:$0xff]
    %v951 = vld [vmem:[#allocation2 + $0x17a8] sm:$0xff]
    %v952 = vld [vmem:[#allocation2 + $0x17b0] sm:$0xff]
    %v953 = vld [vmem:[#allocation2 + $0x17b8] sm:$0xff]
    %v954 = vld [vmem:[#allocation2 + $0x17c0] sm:$0xff]
    %v955 = vld [vmem:[#allocation2 + $0x17c8] sm:$0xff]
    %v956 = vld [vmem:[#allocation2 + $0x17d0] sm:$0xff]
    %v957 = vld [vmem:[#allocation2 + $0x17d8] sm:$0xff]
    %v958 = vld [vmem:[#allocation2 + $0x17e0] sm:$0xff]
    %v959 = vld [vmem:[#allocation2 + $0x17e8] sm:$0xff]
    %v960 = vld [vmem:[#allocation2 + $0x17f0] sm:$0xff]
    %v961 = vld [vmem:[#allocation2 + $0x17f8] sm:$0xff]
    %v962 = vld [vmem:[#allocation2 + $0x1800] sm:$0xff]
    %v963 = vld [vmem:[#allocation2 + $0x1808] sm:$0xff]
    %v964 = vld [vmem:[#allocation2 + $0x1810] sm:$0xff]
    %v965 = vld [vmem:[#allocation2 + $0x1818] sm:$0xff]
    %v966 = vld [vmem:[#allocation2 + $0x1820] sm:$0xff]
    %v967 = vld [vmem:[#allocation2 + $0x1828] sm:$0xff]
    %v968 = vld [vmem:[#allocation2 + $0x1830] sm:$0xff]
    %v969 = vld [vmem:[#allocation2 + $0x1838] sm:$0xff]
    %v970 = vld [vmem:[#allocation2 + $0x1840] sm:$0xff]
    %v971 = vld [vmem:[#allocation2 + $0x1848] sm:$0xff]
    %v972 = vld [vmem:[#allocation2 + $0x1850] sm:$0xff]
    %v973 = vld [vmem:[#allocation2 + $0x1858] sm:$0xff]
    %v974 = vld [vmem:[#allocation2 + $0x1860] sm:$0xff]
    %v975 = vld [vmem:[#allocation2 + $0x1868] sm:$0xff]
    %v976 = vld [vmem:[#allocation2 + $0x1870] sm:$0xff]
    %v977 = vld [vmem:[#allocation2 + $0x1878] sm:$0xff]
    %v978 = vld [vmem:[#allocation2 + $0x1880] sm:$0xff]
    %v979 = vld [vmem:[#allocation2 + $0x1888] sm:$0xff]
    %v980 = vld [vmem:[#allocation2 + $0x1890] sm:$0xff]
    %v981 = vld [vmem:[#allocation2 + $0x1898] sm:$0xff]
    %v982 = vld [vmem:[#allocation2 + $0x18a0] sm:$0xff]
    %v983 = vld [vmem:[#allocation2 + $0x18a8] sm:$0xff]
    %v984 = vld [vmem:[#allocation2 + $0x18b0] sm:$0xff]
    %v985 = vld [vmem:[#allocation2 + $0x18b8] sm:$0xff]
    %v986 = vld [vmem:[#allocation2 + $0x18c0] sm:$0xff]
    %v987 = vld [vmem:[#allocation2 + $0x18c8] sm:$0xff]
    %v988 = vld [vmem:[#allocation2 + $0x18d0] sm:$0xff]
    %v989 = vld [vmem:[#allocation2 + $0x18d8] sm:$0xff]
    %v990 = vld [vmem:[#allocation2 + $0x18e0] sm:$0xff]
    %v991 = vld [vmem:[#allocation2 + $0x18e8] sm:$0xff]
    %v992 = vld [vmem:[#allocation2 + $0x18f0] sm:$0xff]
    %v993 = vld [vmem:[#allocation2 + $0x18f8] sm:$0xff]
    %v994 = vld [vmem:[#allocation2 + $0x1900] sm:$0xff]
    %v995 = vld [vmem:[#allocation2 + $0x1908] sm:$0xff]
    %v996 = vld [vmem:[#allocation2 + $0x1910] sm:$0xff]
    %v997 = vld [vmem:[#allocation2 + $0x1918] sm:$0xff]
    %v998 = vld [vmem:[#allocation2 + $0x1920] sm:$0xff]
    %v999 = vld [vmem:[#allocation2 + $0x1928] sm:$0xff]
    %v1000 = vld [vmem:[#allocation2 + $0x1930] sm:$0xff]
    %v1001 = vld [vmem:[#allocation2 + $0x1938] sm:$0xff]
    %v1002 = vld [vmem:[#allocation2 + $0x1940] sm:$0xff]
    %v1003 = vld [vmem:[#allocation2 + $0x1948] sm:$0xff]
    %v1004 = vld [vmem:[#allocation2 + $0x1950] sm:$0xff]
    %v1005 = vld [vmem:[#allocation2 + $0x1958] sm:$0xff]
    %v1006 = vld [vmem:[#allocation2 + $0x1960] sm:$0xff]
    %v1007 = vld [vmem:[#allocation2 + $0x1968] sm:$0xff]
    %v1008 = vld [vmem:[#allocation2 + $0x1970] sm:$0xff]
    %v1009 = vld [vmem:[#allocation2 + $0x1978] sm:$0xff]
    %v1010 = vld [vmem:[#allocation2 + $0x1980] sm:$0xff]
    %v1011 = vld [vmem:[#allocation2 + $0x1988] sm:$0xff]
    %v1012 = vld [vmem:[#allocation2 + $0x1990] sm:$0xff]
    %v1013 = vld [vmem:[#allocation2 + $0x1998] sm:$0xff]
    %v1014 = vld [vmem:[#allocation2 + $0x19a0] sm:$0xff]
    %v1015 = vld [vmem:[#allocation2 + $0x19a8] sm:$0xff]
    %v1016 = vld [vmem:[#allocation2 + $0x19b0] sm:$0xff]
    %v1017 = vld [vmem:[#allocation2 + $0x19b8] sm:$0xff]
    %v1018 = vld [vmem:[#allocation2 + $0x19c0] sm:$0xff]
    %v1019 = vld [vmem:[#allocation2 + $0x19c8] sm:$0xff]
    %v1020 = vld [vmem:[#allocation2 + $0x19d0] sm:$0xff]
    %v1021 = vld [vmem:[#allocation2 + $0x19d8] sm:$0xff]
    %v1022 = vld [vmem:[#allocation2 + $0x19e0] sm:$0xff]
    %v1023 = vld [vmem:[#allocation2 + $0x19e8] sm:$0xff]
    %v1024 = vld [vmem:[#allocation2 + $0x19f0] sm:$0xff]
    %v1025 = vld [vmem:[#allocation2 + $0x19f8] sm:$0xff]
    %v1026 = vld [vmem:[#allocation2 + $0x1a00] sm:$0xff]
    %v1027 = vld [vmem:[#allocation2 + $0x1a08] sm:$0xff]
    %v1028 = vld [vmem:[#allocation2 + $0x1a10] sm:$0xff]
    %v1029 = vld [vmem:[#allocation2 + $0x1a18] sm:$0xff]
    %v1030 = vld [vmem:[#allocation2 + $0x1a20] sm:$0xff]
    %v1031 = vld [vmem:[#allocation2 + $0x1a28] sm:$0xff]
    %v1032 = vld [vmem:[#allocation2 + $0x1a30] sm:$0xff]
    %v1033 = vld [vmem:[#allocation2 + $0x1a38] sm:$0xff]
    %v1034 = vld [vmem:[#allocation2 + $0x1a40] sm:$0xff]
    %v1035 = vld [vmem:[#allocation2 + $0x1a48] sm:$0xff]
    %v1036 = vld [vmem:[#allocation2 + $0x1a50] sm:$0xff]
    %v1037 = vld [vmem:[#allocation2 + $0x1a58] sm:$0xff]
    %v1038 = vld [vmem:[#allocation2 + $0x1a60] sm:$0xff]
    %v1039 = vld [vmem:[#allocation2 + $0x1a68] sm:$0xff]
    %v1040 = vld [vmem:[#allocation2 + $0x1a70] sm:$0xff]
    %v1041 = vld [vmem:[#allocation2 + $0x1a78] sm:$0xff]
    %v1042 = vld [vmem:[#allocation2 + $0x1a80] sm:$0xff]
    %v1043 = vld [vmem:[#allocation2 + $0x1a88] sm:$0xff]
    %v1044 = vld [vmem:[#allocation2 + $0x1a90] sm:$0xff]
    %v1045 = vld [vmem:[#allocation2 + $0x1a98] sm:$0xff]
    %v1046 = vld [vmem:[#allocation2 + $0x1aa0] sm:$0xff]
    %v1047 = vld [vmem:[#allocation2 + $0x1aa8] sm:$0xff]
    %v1048 = vld [vmem:[#allocation2 + $0x1ab0] sm:$0xff]
    %v1049 = vld [vmem:[#allocation2 + $0x1ab8] sm:$0xff]
    %v1050 = vld [vmem:[#allocation2 + $0x1ac0] sm:$0xff]
    %v1051 = vld [vmem:[#allocation2 + $0x1ac8] sm:$0xff]
    %v1052 = vld [vmem:[#allocation2 + $0x1ad0] sm:$0xff]
    %v1053 = vld [vmem:[#allocation2 + $0x1ad8] sm:$0xff]
    %v1054 = vld [vmem:[#allocation2 + $0x1ae0] sm:$0xff]
    %v1055 = vld [vmem:[#allocation2 + $0x1ae8] sm:$0xff]
    %v1056 = vld [vmem:[#allocation2 + $0x1af0] sm:$0xff]
    %v1057 = vld [vmem:[#allocation2 + $0x1af8] sm:$0xff]
    %v1058 = vld [vmem:[#allocation2 + $0x1b00] sm:$0xff]
    %v1059 = vld [vmem:[#allocation2 + $0x1b08] sm:$0xff]
    %v1060 = vld [vmem:[#allocation2 + $0x1b10] sm:$0xff]
    %v1061 = vld [vmem:[#allocation2 + $0x1b18] sm:$0xff]
    %v1062 = vld [vmem:[#allocation2 + $0x1b20] sm:$0xff]
    %v1063 = vld [vmem:[#allocation2 + $0x1b28] sm:$0xff]
    %v1064 = vld [vmem:[#allocation2 + $0x1b30] sm:$0xff]
    %v1065 = vld [vmem:[#allocation2 + $0x1b38] sm:$0xff]
    %v1066 = vld [vmem:[#allocation2 + $0x1b40] sm:$0xff]
    %v1067 = vld [vmem:[#allocation2 + $0x1b48] sm:$0xff]
    %v1068 = vld [vmem:[#allocation2 + $0x1b50] sm:$0xff]
    %v1069 = vld [vmem:[#allocation2 + $0x1b58] sm:$0xff]
    %v1070 = vld [vmem:[#allocation2 + $0x1b60] sm:$0xff]
    %v1071 = vld [vmem:[#allocation2 + $0x1b68] sm:$0xff]
    %v1072 = vld [vmem:[#allocation2 + $0x1b70] sm:$0xff]
    %v1073 = vld [vmem:[#allocation2 + $0x1b78] sm:$0xff]
    %v1074 = vld [vmem:[#allocation2 + $0x1b80] sm:$0xff]
    %v1075 = vld [vmem:[#allocation2 + $0x1b88] sm:$0xff]
    %v1076 = vld [vmem:[#allocation2 + $0x1b90] sm:$0xff]
    %v1077 = vld [vmem:[#allocation2 + $0x1b98] sm:$0xff]
    %v1078 = vld [vmem:[#allocation2 + $0x1ba0] sm:$0xff]
    %v1079 = vld [vmem:[#allocation2 + $0x1ba8] sm:$0xff]
    %v1080 = vld [vmem:[#allocation2 + $0x1bb0] sm:$0xff]
    %v1081 = vld [vmem:[#allocation2 + $0x1bb8] sm:$0xff]
    %v1082 = vld [vmem:[#allocation2 + $0x1bc0] sm:$0xff]
    %v1083 = vld [vmem:[#allocation2 + $0x1bc8] sm:$0xff]
    %v1084 = vld [vmem:[#allocation2 + $0x1bd0] sm:$0xff]
    %v1085 = vld [vmem:[#allocation2 + $0x1bd8] sm:$0xff]
    %v1086 = vld [vmem:[#allocation2 + $0x1be0] sm:$0xff]
    %v1087 = vld [vmem:[#allocation2 + $0x1be8] sm:$0xff]
    %v1088 = vld [vmem:[#allocation2 + $0x1bf0] sm:$0xff]
    %v1089 = vld [vmem:[#allocation2 + $0x1bf8] sm:$0xff]
    %v1090 = vld [vmem:[#allocation2 + $0x1c00] sm:$0xff]
    %v1091 = vld [vmem:[#allocation2 + $0x1c08] sm:$0xff]
    %v1092 = vld [vmem:[#allocation2 + $0x1c10] sm:$0xff]
    %v1093 = vld [vmem:[#allocation2 + $0x1c18] sm:$0xff]
    %v1094 = vld [vmem:[#allocation2 + $0x1c20] sm:$0xff]
    %v1095 = vld [vmem:[#allocation2 + $0x1c28] sm:$0xff]
    %v1096 = vld [vmem:[#allocation2 + $0x1c30] sm:$0xff]
    %v1097 = vld [vmem:[#allocation2 + $0x1c38] sm:$0xff]
    %v1098 = vld [vmem:[#allocation2 + $0x1c40] sm:$0xff]
    %v1099 = vld [vmem:[#allocation2 + $0x1c48] sm:$0xff]
    %v1100 = vld [vmem:[#allocation2 + $0x1c50] sm:$0xff]
    %v1101 = vld [vmem:[#allocation2 + $0x1c58] sm:$0xff]
    %v1102 = vld [vmem:[#allocation2 + $0x1c60] sm:$0xff]
    %v1103 = vld [vmem:[#allocation2 + $0x1c68] sm:$0xff]
    %v1104 = vld [vmem:[#allocation2 + $0x1c70] sm:$0xff]
    %v1105 = vld [vmem:[#allocation2 + $0x1c78] sm:$0xff]
    %v1106 = vld [vmem:[#allocation2 + $0x1c80] sm:$0xff]
    %v1107 = vld [vmem:[#allocation2 + $0x1c88] sm:$0xff]
    %v1108 = vld [vmem:[#allocation2 + $0x1c90] sm:$0xff]
    %v1109 = vld [vmem:[#allocation2 + $0x1c98] sm:$0xff]
    %v1110 = vld [vmem:[#allocation2 + $0x1ca0] sm:$0xff]
    %v1111 = vld [vmem:[#allocation2 + $0x1ca8] sm:$0xff]
    %v1112 = vld [vmem:[#allocation2 + $0x1cb0] sm:$0xff]
    %v1113 = vld [vmem:[#allocation2 + $0x1cb8] sm:$0xff]
    %v1114 = vld [vmem:[#allocation2 + $0x1cc0] sm:$0xff]
    %v1115 = vld [vmem:[#allocation2 + $0x1cc8] sm:$0xff]
    %v1116 = vld [vmem:[#allocation2 + $0x1cd0] sm:$0xff]
    %v1117 = vld [vmem:[#allocation2 + $0x1cd8] sm:$0xff]
    %v1118 = vld [vmem:[#allocation2 + $0x1ce0] sm:$0xff]
    %v1119 = vld [vmem:[#allocation2 + $0x1ce8] sm:$0xff]
    %v1120 = vld [vmem:[#allocation2 + $0x1cf0] sm:$0xff]
    %v1121 = vld [vmem:[#allocation2 + $0x1cf8] sm:$0xff]
    %v1122 = vld [vmem:[#allocation2 + $0x1d00] sm:$0xff]
    %v1123 = vld [vmem:[#allocation2 + $0x1d08] sm:$0xff]
    %v1124 = vld [vmem:[#allocation2 + $0x1d10] sm:$0xff]
    %v1125 = vld [vmem:[#allocation2 + $0x1d18] sm:$0xff]
    %v1126 = vld [vmem:[#allocation2 + $0x1d20] sm:$0xff]
    %v1127 = vld [vmem:[#allocation2 + $0x1d28] sm:$0xff]
    %v1128 = vld [vmem:[#allocation2 + $0x1d30] sm:$0xff]
    %v1129 = vld [vmem:[#allocation2 + $0x1d38] sm:$0xff]
    %v1130 = vld [vmem:[#allocation2 + $0x1d40] sm:$0xff]
    %v1131 = vld [vmem:[#allocation2 + $0x1d48] sm:$0xff]
    %v1132 = vld [vmem:[#allocation2 + $0x1d50] sm:$0xff]
    %v1133 = vld [vmem:[#allocation2 + $0x1d58] sm:$0xff]
    %v1134 = vld [vmem:[#allocation2 + $0x1d60] sm:$0xff]
    %v1135 = vld [vmem:[#allocation2 + $0x1d68] sm:$0xff]
    %v1136 = vld [vmem:[#allocation2 + $0x1d70] sm:$0xff]
    %v1137 = vld [vmem:[#allocation2 + $0x1d78] sm:$0xff]
    %v1138 = vld [vmem:[#allocation2 + $0x1d80] sm:$0xff]
    %v1139 = vld [vmem:[#allocation2 + $0x1d88] sm:$0xff]
    %v1140 = vld [vmem:[#allocation2 + $0x1d90] sm:$0xff]
    %v1141 = vld [vmem:[#allocation2 + $0x1d98] sm:$0xff]
    %v1142 = vld [vmem:[#allocation2 + $0x1da0] sm:$0xff]
    %v1143 = vld [vmem:[#allocation2 + $0x1da8] sm:$0xff]
    %v1144 = vld [vmem:[#allocation2 + $0x1db0] sm:$0xff]
    %v1145 = vld [vmem:[#allocation2 + $0x1db8] sm:$0xff]
    %v1146 = vld [vmem:[#allocation2 + $0x1dc0] sm:$0xff]
    %v1147 = vld [vmem:[#allocation2 + $0x1dc8] sm:$0xff]
    %v1148 = vld [vmem:[#allocation2 + $0x1dd0] sm:$0xff]
    %v1149 = vld [vmem:[#allocation2 + $0x1dd8] sm:$0xff]
    %v1150 = vld [vmem:[#allocation2 + $0x1de0] sm:$0xff]
    %v1151 = vld [vmem:[#allocation2 + $0x1de8] sm:$0xff]
    %v1152 = vld [vmem:[#allocation2 + $0x1df0] sm:$0xff]
    %v1153 = vld [vmem:[#allocation2 + $0x1df8] sm:$0xff]
    %v1154 = vld [vmem:[#allocation2 + $0x1e00] sm:$0xff]
    %v1155 = vld [vmem:[#allocation2 + $0x1e08] sm:$0xff]
    %v1156 = vld [vmem:[#allocation2 + $0x1e10] sm:$0xff]
    %v1157 = vld [vmem:[#allocation2 + $0x1e18] sm:$0xff]
    %v1158 = vld [vmem:[#allocation2 + $0x1e20] sm:$0xff]
    %v1159 = vld [vmem:[#allocation2 + $0x1e28] sm:$0xff]
    %v1160 = vld [vmem:[#allocation2 + $0x1e30] sm:$0xff]
    %v1161 = vld [vmem:[#allocation2 + $0x1e38] sm:$0xff]
    %v1162 = vld [vmem:[#allocation2 + $0x1e40] sm:$0xff]
    %v1163 = vld [vmem:[#allocation2 + $0x1e48] sm:$0xff]
    %v1164 = vld [vmem:[#allocation2 + $0x1e50] sm:$0xff]
    %v1165 = vld [vmem:[#allocation2 + $0x1e58] sm:$0xff]
    %v1166 = vld [vmem:[#allocation2 + $0x1e60] sm:$0xff]
    %v1167 = vld [vmem:[#allocation2 + $0x1e68] sm:$0xff]
    %v1168 = vld [vmem:[#allocation2 + $0x1e70] sm:$0xff]
    %v1169 = vld [vmem:[#allocation2 + $0x1e78] sm:$0xff]
    %v1170 = vld [vmem:[#allocation2 + $0x1e80] sm:$0xff]
    %v1171 = vld [vmem:[#allocation2 + $0x1e88] sm:$0xff]
    %v1172 = vld [vmem:[#allocation2 + $0x1e90] sm:$0xff]
    %v1173 = vld [vmem:[#allocation2 + $0x1e98] sm:$0xff]
    %v1174 = vld [vmem:[#allocation2 + $0x1ea0] sm:$0xff]
    %v1175 = vld [vmem:[#allocation2 + $0x1ea8] sm:$0xff]
    %v1176 = vld [vmem:[#allocation2 + $0x1eb0] sm:$0xff]
    %v1177 = vld [vmem:[#allocation2 + $0x1eb8] sm:$0xff]
    %v1178 = vld [vmem:[#allocation2 + $0x1ec0] sm:$0xff]
    %v1179 = vld [vmem:[#allocation2 + $0x1ec8] sm:$0xff]
    %v1180 = vld [vmem:[#allocation2 + $0x1ed0] sm:$0xff]
    %v1181 = vld [vmem:[#allocation2 + $0x1ed8] sm:$0xff]
    %v1182 = vld [vmem:[#allocation2 + $0x1ee0] sm:$0xff]
    %v1183 = vld [vmem:[#allocation2 + $0x1ee8] sm:$0xff]
    %v1184 = vld [vmem:[#allocation2 + $0x1ef0] sm:$0xff]
    %v1185 = vld [vmem:[#allocation2 + $0x1ef8] sm:$0xff]
    %v1186 = vld [vmem:[#allocation2 + $0x1f00] sm:$0xff]
    %v1187 = vld [vmem:[#allocation2 + $0x1f08] sm:$0xff]
    %v1188 = vld [vmem:[#allocation2 + $0x1f10] sm:$0xff]
    %v1189 = vld [vmem:[#allocation2 + $0x1f18] sm:$0xff]
    %v1190 = vld [vmem:[#allocation2 + $0x1f20] sm:$0xff]
    %v1191 = vld [vmem:[#allocation2 + $0x1f28] sm:$0xff]
    %v1192 = vld [vmem:[#allocation2 + $0x1f30] sm:$0xff]
    %v1193 = vld [vmem:[#allocation2 + $0x1f38] sm:$0xff]
    %v1194 = vld [vmem:[#allocation2 + $0x1f40] sm:$0xff]
    %v1195 = vld [vmem:[#allocation2 + $0x1f48] sm:$0xff]
    %v1196 = vld [vmem:[#allocation2 + $0x1f50] sm:$0xff]
    %v1197 = vld [vmem:[#allocation2 + $0x1f58] sm:$0xff]
    %v1198 = vld [vmem:[#allocation2 + $0x1f60] sm:$0xff]
    %v1199 = vld [vmem:[#allocation2 + $0x1f68] sm:$0xff]
    %v1200 = vld [vmem:[#allocation2 + $0x1f70] sm:$0xff]
    %v1201 = vld [vmem:[#allocation2 + $0x1f78] sm:$0xff]
    %v1202 = vld [vmem:[#allocation2 + $0x1f80] sm:$0xff]
    %v1203 = vld [vmem:[#allocation2 + $0x1f88] sm:$0xff]
    %v1204 = vld [vmem:[#allocation2 + $0x1f90] sm:$0xff]
    %v1205 = vld [vmem:[#allocation2 + $0x1f98] sm:$0xff]
    %v1206 = vld [vmem:[#allocation2 + $0x1fa0] sm:$0xff]
    %v1207 = vld [vmem:[#allocation2 + $0x1fa8] sm:$0xff]
    %v1208 = vld [vmem:[#allocation2 + $0x1fb0] sm:$0xff]
    %v1209 = vld [vmem:[#allocation2 + $0x1fb8] sm:$0xff]
    %v1210 = vld [vmem:[#allocation2 + $0x1fc0] sm:$0xff]
    %v1211 = vld [vmem:[#allocation2 + $0x1fc8] sm:$0xff]
    %v1212 = vld [vmem:[#allocation2 + $0x1fd0] sm:$0xff]
    %v1213 = vld [vmem:[#allocation2 + $0x1fd8] sm:$0xff]
    %v1214 = vld [vmem:[#allocation2 + $0x1fe0] sm:$0xff]
    %v1215 = vld [vmem:[#allocation2 + $0x1fe8] sm:$0xff]
    %v1216 = vld [vmem:[#allocation2 + $0x1ff0] sm:$0xff]
    %v1217 = vld [vmem:[#allocation2 + $0x1ff8] sm:$0xff]
    %v1218 = vld [vmem:[#allocation2 + $0x2000] sm:$0xff]
    %v1219 = vld [vmem:[#allocation2 + $0x2008] sm:$0xff]
    %v1220 = vld [vmem:[#allocation2 + $0x2010] sm:$0xff]
    %v1221 = vld [vmem:[#allocation2 + $0x2018] sm:$0xff]
    %v1222 = vld [vmem:[#allocation2 + $0x2020] sm:$0xff]
    %v1223 = vld [vmem:[#allocation2 + $0x2028] sm:$0xff]
    %v1224 = vld [vmem:[#allocation2 + $0x2030] sm:$0xff]
    %v1225 = vld [vmem:[#allocation2 + $0x2038] sm:$0xff]
    %v1226 = vld [vmem:[#allocation2 + $0x2040] sm:$0xff]
    %v1227 = vld [vmem:[#allocation2 + $0x2048] sm:$0xff]
    %v1228 = vld [vmem:[#allocation2 + $0x2050] sm:$0xff]
    %v1229 = vld [vmem:[#allocation2 + $0x2058] sm:$0xff]
    %v1230 = vld [vmem:[#allocation2 + $0x2060] sm:$0xff]
    %v1231 = vld [vmem:[#allocation2 + $0x2068] sm:$0xff]
    %v1232 = vld [vmem:[#allocation2 + $0x2070] sm:$0xff]
    %v1233 = vld [vmem:[#allocation2 + $0x2078] sm:$0xff]
    %v1234 = vld [vmem:[#allocation2 + $0x2080] sm:$0xff]
    %v1235 = vld [vmem:[#allocation2 + $0x2088] sm:$0xff]
    %v1236 = vld [vmem:[#allocation2 + $0x2090] sm:$0xff]
    %v1237 = vld [vmem:[#allocation2 + $0x2098] sm:$0xff]
    %v1238 = vld [vmem:[#allocation2 + $0x20a0] sm:$0xff]
    %v1239 = vld [vmem:[#allocation2 + $0x20a8] sm:$0xff]
    %v1240 = vld [vmem:[#allocation2 + $0x20b0] sm:$0xff]
    %v1241 = vld [vmem:[#allocation2 + $0x20b8] sm:$0xff]
    %v1242 = vld [vmem:[#allocation2 + $0x20c0] sm:$0xff]
    %v1243 = vld [vmem:[#allocation2 + $0x20c8] sm:$0xff]
    %v1244 = vld [vmem:[#allocation2 + $0x20d0] sm:$0xff]
    %v1245 = vld [vmem:[#allocation2 + $0x20d8] sm:$0xff]
    %v1246 = vld [vmem:[#allocation2 + $0x20e0] sm:$0xff]
    %v1247 = vld [vmem:[#allocation2 + $0x20e8] sm:$0xff]
    %v1248 = vld [vmem:[#allocation2 + $0x20f0] sm:$0xff]
    %v1249 = vld [vmem:[#allocation2 + $0x20f8] sm:$0xff]
    %v1250 = vld [vmem:[#allocation2 + $0x2100] sm:$0xff]
    %v1251 = vld [vmem:[#allocation2 + $0x2108] sm:$0xff]
    %v1252 = vld [vmem:[#allocation2 + $0x2110] sm:$0xff]
    %v1253 = vld [vmem:[#allocation2 + $0x2118] sm:$0xff]
    %v1254 = vld [vmem:[#allocation2 + $0x2120] sm:$0xff]
    %v1255 = vld [vmem:[#allocation2 + $0x2128] sm:$0xff]
    %v1256 = vld [vmem:[#allocation2 + $0x2130] sm:$0xff]
    %v1257 = vld [vmem:[#allocation2 + $0x2138] sm:$0xff]
    %v1258 = vld [vmem:[#allocation2 + $0x2140] sm:$0xff]
    %v1259 = vld [vmem:[#allocation2 + $0x2148] sm:$0xff]
    %v1260 = vld [vmem:[#allocation2 + $0x2150] sm:$0xff]
    %v1261 = vld [vmem:[#allocation2 + $0x2158] sm:$0xff]
    %v1262 = vld [vmem:[#allocation2 + $0x2160] sm:$0xff]
    %v1263 = vld [vmem:[#allocation2 + $0x2168] sm:$0xff]
    %v1264 = vld [vmem:[#allocation2 + $0x2170] sm:$0xff]
    %v1265 = vld [vmem:[#allocation2 + $0x2178] sm:$0xff]
    %v1266 = vld [vmem:[#allocation2 + $0x2180] sm:$0xff]
    %v1267 = vld [vmem:[#allocation2 + $0x2188] sm:$0xff]
    %v1268 = vld [vmem:[#allocation2 + $0x2190] sm:$0xff]
    %v1269 = vld [vmem:[#allocation2 + $0x2198] sm:$0xff]
    %v1270 = vld [vmem:[#allocation2 + $0x21a0] sm:$0xff]
    %v1271 = vld [vmem:[#allocation2 + $0x21a8] sm:$0xff]
    %v1272 = vld [vmem:[#allocation2 + $0x21b0] sm:$0xff]
    %v1273 = vld [vmem:[#allocation2 + $0x21b8] sm:$0xff]
    %v1274 = vld [vmem:[#allocation2 + $0x21c0] sm:$0xff]
    %v1275 = vld [vmem:[#allocation2 + $0x21c8] sm:$0xff]
    %v1276 = vld [vmem:[#allocation2 + $0x21d0] sm:$0xff]
    %v1277 = vld [vmem:[#allocation2 + $0x21d8] sm:$0xff]
    %v1278 = vld [vmem:[#allocation2 + $0x21e0] sm:$0xff]
    %v1279 = vld [vmem:[#allocation2 + $0x21e8] sm:$0xff]
    %v1280 = vld [vmem:[#allocation2 + $0x21f0] sm:$0xff]
    %v1281 = vld [vmem:[#allocation2 + $0x21f8] sm:$0xff]
    %v1282 = vld [vmem:[#allocation2 + $0x2200] sm:$0xff]
    %v1283 = vld [vmem:[#allocation2 + $0x2208] sm:$0xff]
    %v1284 = vld [vmem:[#allocation2 + $0x2210] sm:$0xff]
    %v1285 = vld [vmem:[#allocation2 + $0x2218] sm:$0xff]
    %v1286 = vld [vmem:[#allocation2 + $0x2220] sm:$0xff]
    %v1287 = vld [vmem:[#allocation2 + $0x2228] sm:$0xff]
    %v1288 = vld [vmem:[#allocation2 + $0x2230] sm:$0xff]
    %v1289 = vld [vmem:[#allocation2 + $0x2238] sm:$0xff]
    %v1290 = vld [vmem:[#allocation2 + $0x2240] sm:$0xff]
    %v1291 = vld [vmem:[#allocation2 + $0x2248] sm:$0xff]
    %v1292 = vld [vmem:[#allocation2 + $0x2250] sm:$0xff]
    %v1293 = vld [vmem:[#allocation2 + $0x2258] sm:$0xff]
    %v1294 = vld [vmem:[#allocation2 + $0x2260] sm:$0xff]
    %v1295 = vld [vmem:[#allocation2 + $0x2268] sm:$0xff]
    %v1296 = vld [vmem:[#allocation2 + $0x2270] sm:$0xff]
    %v1297 = vld [vmem:[#allocation2 + $0x2278] sm:$0xff]
    %v1298 = vld [vmem:[#allocation2 + $0x2280] sm:$0xff]
    %v1299 = vld [vmem:[#allocation2 + $0x2288] sm:$0xff]
    %v1300 = vld [vmem:[#allocation2 + $0x2290] sm:$0xff]
    %v1301 = vld [vmem:[#allocation2 + $0x2298] sm:$0xff]
    %v1302 = vld [vmem:[#allocation2 + $0x22a0] sm:$0xff]
    %v1303 = vld [vmem:[#allocation2 + $0x22a8] sm:$0xff]
    %v1304 = vld [vmem:[#allocation2 + $0x22b0] sm:$0xff]
    %v1305 = vld [vmem:[#allocation2 + $0x22b8] sm:$0xff]
    %v1306 = vld [vmem:[#allocation2 + $0x22c0] sm:$0xff]
    %v1307 = vld [vmem:[#allocation2 + $0x22c8] sm:$0xff]
    %v1308 = vld [vmem:[#allocation2 + $0x22d0] sm:$0xff]
    %v1309 = vld [vmem:[#allocation2 + $0x22d8] sm:$0xff]
    %v1310 = vld [vmem:[#allocation2 + $0x22e0] sm:$0xff]
    %v1311 = vld [vmem:[#allocation2 + $0x22e8] sm:$0xff]
    %v1312 = vld [vmem:[#allocation2 + $0x22f0] sm:$0xff]
    %v1313 = vld [vmem:[#allocation2 + $0x22f8] sm:$0xff]
    %v1314 = vld [vmem:[#allocation2 + $0x2300] sm:$0xff]
    %v1315 = vld [vmem:[#allocation2 + $0x2308] sm:$0xff]
    %v1316 = vld [vmem:[#allocation2 + $0x2310] sm:$0xff]
    %v1317 = vld [vmem:[#allocation2 + $0x2318] sm:$0xff]
    %v1318 = vld [vmem:[#allocation2 + $0x2320] sm:$0xff]
    %v1319 = vld [vmem:[#allocation2 + $0x2328] sm:$0xff]
    %v1320 = vld [vmem:[#allocation2 + $0x2330] sm:$0xff]
    %v1321 = vld [vmem:[#allocation2 + $0x2338] sm:$0xff]
    %v1322 = vld [vmem:[#allocation2 + $0x2340] sm:$0xff]
    %v1323 = vld [vmem:[#allocation2 + $0x2348] sm:$0xff]
    %v1324 = vld [vmem:[#allocation2 + $0x2350] sm:$0xff]
    %v1325 = vld [vmem:[#allocation2 + $0x2358] sm:$0xff]
    %v1326 = vld [vmem:[#allocation2 + $0x2360] sm:$0xff]
    %v1327 = vld [vmem:[#allocation2 + $0x2368] sm:$0xff]
    %v1328 = vld [vmem:[#allocation2 + $0x2370] sm:$0xff]
    %v1329 = vld [vmem:[#allocation2 + $0x2378] sm:$0xff]
    %v1330 = vld [vmem:[#allocation2 + $0x2380] sm:$0xff]
    %v1331 = vld [vmem:[#allocation2 + $0x2388] sm:$0xff]
    %v1332 = vld [vmem:[#allocation2 + $0x2390] sm:$0xff]
    %v1333 = vld [vmem:[#allocation2 + $0x2398] sm:$0xff]
    %v1334 = vld [vmem:[#allocation2 + $0x23a0] sm:$0xff]
    %v1335 = vld [vmem:[#allocation2 + $0x23a8] sm:$0xff]
    %v1336 = vld [vmem:[#allocation2 + $0x23b0] sm:$0xff]
    %v1337 = vld [vmem:[#allocation2 + $0x23b8] sm:$0xff]
    %v1338 = vld [vmem:[#allocation2 + $0x23c0] sm:$0xff]
    %v1339 = vld [vmem:[#allocation2 + $0x23c8] sm:$0xff]
    %v1340 = vld [vmem:[#allocation2 + $0x23d0] sm:$0xff]
    %v1341 = vld [vmem:[#allocation2 + $0x23d8] sm:$0xff]
    %v1342 = vld [vmem:[#allocation2 + $0x23e0] sm:$0xff]
    %v1343 = vld [vmem:[#allocation2 + $0x23e8] sm:$0xff]
    %v1344 = vld [vmem:[#allocation2 + $0x23f0] sm:$0xff]
    %v1345 = vld [vmem:[#allocation2 + $0x23f8] sm:$0xff]
    %v1346 = vld [vmem:[#allocation2 + $0x2400] sm:$0xff]
    %v1347 = vld [vmem:[#allocation2 + $0x2408] sm:$0xff]
    %v1348 = vld [vmem:[#allocation2 + $0x2410] sm:$0xff]
    %v1349 = vld [vmem:[#allocation2 + $0x2418] sm:$0xff]
    %v1350 = vld [vmem:[#allocation2 + $0x2420] sm:$0xff]
    %v1351 = vld [vmem:[#allocation2 + $0x2428] sm:$0xff]
    %v1352 = vld [vmem:[#allocation2 + $0x2430] sm:$0xff]
    %v1353 = vld [vmem:[#allocation2 + $0x2438] sm:$0xff]
    %v1354 = vld [vmem:[#allocation2 + $0x2440] sm:$0xff]
    %v1355 = vld [vmem:[#allocation2 + $0x2448] sm:$0xff]
    %v1356 = vld [vmem:[#allocation2 + $0x2450] sm:$0xff]
    %v1357 = vld [vmem:[#allocation2 + $0x2458] sm:$0xff]
    %v1358 = vld [vmem:[#allocation2 + $0x2460] sm:$0xff]
    %v1359 = vld [vmem:[#allocation2 + $0x2468] sm:$0xff]
    %v1360 = vld [vmem:[#allocation2 + $0x2470] sm:$0xff]
    %v1361 = vld [vmem:[#allocation2 + $0x2478] sm:$0xff]
    %v1362 = vld [vmem:[#allocation2 + $0x2480] sm:$0xff]
    %v1363 = vld [vmem:[#allocation2 + $0x2488] sm:$0xff]
    %v1364 = vld [vmem:[#allocation2 + $0x2490] sm:$0xff]
    %v1365 = vld [vmem:[#allocation2 + $0x2498] sm:$0xff]
    %v1366 = vld [vmem:[#allocation2 + $0x24a0] sm:$0xff]
    %v1367 = vld [vmem:[#allocation2 + $0x24a8] sm:$0xff]
    %v1368 = vld [vmem:[#allocation2 + $0x24b0] sm:$0xff]
    %v1369 = vld [vmem:[#allocation2 + $0x24b8] sm:$0xff]
    %v1370 = vld [vmem:[#allocation2 + $0x24c0] sm:$0xff]
    %v1371 = vld [vmem:[#allocation2 + $0x24c8] sm:$0xff]
    %v1372 = vld [vmem:[#allocation2 + $0x24d0] sm:$0xff]
    %v1373 = vld [vmem:[#allocation2 + $0x24d8] sm:$0xff]
    %v1374 = vld [vmem:[#allocation2 + $0x24e0] sm:$0xff]
    %v1375 = vld [vmem:[#allocation2 + $0x24e8] sm:$0xff]
    %v1376 = vld [vmem:[#allocation2 + $0x24f0] sm:$0xff]
    %v1377 = vld [vmem:[#allocation2 + $0x24f8] sm:$0xff]
    %v1378 = vld [vmem:[#allocation2 + $0x2500] sm:$0xff]
    %v1379 = vld [vmem:[#allocation2 + $0x2508] sm:$0xff]
    %v1380 = vld [vmem:[#allocation2 + $0x2510] sm:$0xff]
    %v1381 = vld [vmem:[#allocation2 + $0x2518] sm:$0xff]
    %v1382 = vld [vmem:[#allocation2 + $0x2520] sm:$0xff]
    %v1383 = vld [vmem:[#allocation2 + $0x2528] sm:$0xff]
    %v1384 = vld [vmem:[#allocation2 + $0x2530] sm:$0xff]
    %v1385 = vld [vmem:[#allocation2 + $0x2538] sm:$0xff]
    %v1386 = vld [vmem:[#allocation2 + $0x2540] sm:$0xff]
    %v1387 = vld [vmem:[#allocation2 + $0x2548] sm:$0xff]
    %v1388 = vld [vmem:[#allocation2 + $0x2550] sm:$0xff]
    %v1389 = vld [vmem:[#allocation2 + $0x2558] sm:$0xff]
    %v1390 = vld [vmem:[#allocation2 + $0x2560] sm:$0xff]
    %v1391 = vld [vmem:[#allocation2 + $0x2568] sm:$0xff]
    %v1392 = vld [vmem:[#allocation2 + $0x2570] sm:$0xff]
    %v1393 = vld [vmem:[#allocation2 + $0x2578] sm:$0xff]
    %v1394 = vld [vmem:[#allocation2 + $0x2580] sm:$0xff]
    %v1395 = vld [vmem:[#allocation2 + $0x2588] sm:$0xff]
    %v1396 = vld [vmem:[#allocation2 + $0x2590] sm:$0xff]
    %v1397 = vld [vmem:[#allocation2 + $0x2598] sm:$0xff]
    %v1398 = vld [vmem:[#allocation2 + $0x25a0] sm:$0xff]
    %v1399 = vld [vmem:[#allocation2 + $0x25a8] sm:$0xff]
    %v1400 = vld [vmem:[#allocation2 + $0x25b0] sm:$0xff]
    %v1401 = vld [vmem:[#allocation2 + $0x25b8] sm:$0xff]
    %v1402 = vld [vmem:[#allocation2 + $0x25c0] sm:$0xff]
    %v1403 = vld [vmem:[#allocation2 + $0x25c8] sm:$0xff]
    %v1404 = vld [vmem:[#allocation2 + $0x25d0] sm:$0xff]
    %v1405 = vld [vmem:[#allocation2 + $0x25d8] sm:$0xff]
    %v1406 = vld [vmem:[#allocation2 + $0x25e0] sm:$0xff]
    %v1407 = vld [vmem:[#allocation2 + $0x25e8] sm:$0xff]
    %v1408 = vld [vmem:[#allocation2 + $0x25f0] sm:$0xff]
    %v1409 = vld [vmem:[#allocation2 + $0x25f8] sm:$0xff]
    %v1410 = vld [vmem:[#allocation2 + $0x2600] sm:$0xff]
    %v1411 = vld [vmem:[#allocation2 + $0x2608] sm:$0xff]
    %v1412 = vld [vmem:[#allocation2 + $0x2610] sm:$0xff]
    %v1413 = vld [vmem:[#allocation2 + $0x2618] sm:$0xff]
    %v1414 = vld [vmem:[#allocation2 + $0x2620] sm:$0xff]
    %v1415 = vld [vmem:[#allocation2 + $0x2628] sm:$0xff]
    %v1416 = vld [vmem:[#allocation2 + $0x2630] sm:$0xff]
    %v1417 = vld [vmem:[#allocation2 + $0x2638] sm:$0xff]
    %v1418 = vld [vmem:[#allocation2 + $0x2640] sm:$0xff]
    %v1419 = vld [vmem:[#allocation2 + $0x2648] sm:$0xff]
    %v1420 = vld [vmem:[#allocation2 + $0x2650] sm:$0xff]
    %v1421 = vld [vmem:[#allocation2 + $0x2658] sm:$0xff]
    %v1422 = vld [vmem:[#allocation2 + $0x2660] sm:$0xff]
    %v1423 = vld [vmem:[#allocation2 + $0x2668] sm:$0xff]
    %v1424 = vld [vmem:[#allocation2 + $0x2670] sm:$0xff]
    %v1425 = vld [vmem:[#allocation2 + $0x2678] sm:$0xff]
    %v1426 = vld [vmem:[#allocation2 + $0x2680] sm:$0xff]
    %v1427 = vld [vmem:[#allocation2 + $0x2688] sm:$0xff]
    %v1428 = vld [vmem:[#allocation2 + $0x2690] sm:$0xff]
    %v1429 = vld [vmem:[#allocation2 + $0x2698] sm:$0xff]
    %v1430 = vld [vmem:[#allocation2 + $0x26a0] sm:$0xff]
    %v1431 = vld [vmem:[#allocation2 + $0x26a8] sm:$0xff]
    %v1432 = vld [vmem:[#allocation2 + $0x26b0] sm:$0xff]
    %v1433 = vld [vmem:[#allocation2 + $0x26b8] sm:$0xff]
    %v1434 = vld [vmem:[#allocation2 + $0x26c0] sm:$0xff]
    %v1435 = vld [vmem:[#allocation2 + $0x26c8] sm:$0xff]
    %v1436 = vld [vmem:[#allocation2 + $0x26d0] sm:$0xff]
    %v1437 = vld [vmem:[#allocation2 + $0x26d8] sm:$0xff]
    %v1438 = vld [vmem:[#allocation2 + $0x26e0] sm:$0xff]
    %v1439 = vld [vmem:[#allocation2 + $0x26e8] sm:$0xff]
    %v1440 = vld [vmem:[#allocation2 + $0x26f0] sm:$0xff]
    %v1441 = vld [vmem:[#allocation2 + $0x26f8] sm:$0xff]
    %v1442 = vld [vmem:[#allocation2 + $0x2700] sm:$0xff]
    %v1443 = vld [vmem:[#allocation2 + $0x2708] sm:$0xff]
    %v1444 = vld [vmem:[#allocation2 + $0x2710] sm:$0xff]
    %v1445 = vld [vmem:[#allocation2 + $0x2718] sm:$0xff]
    %v1446 = vld [vmem:[#allocation2 + $0x2720] sm:$0xff]
    %v1447 = vld [vmem:[#allocation2 + $0x2728] sm:$0xff]
    %v1448 = vld [vmem:[#allocation2 + $0x2730] sm:$0xff]
    %v1449 = vld [vmem:[#allocation2 + $0x2738] sm:$0xff]
    %v1450 = vld [vmem:[#allocation2 + $0x2740] sm:$0xff]
    %v1451 = vld [vmem:[#allocation2 + $0x2748] sm:$0xff]
    %v1452 = vld [vmem:[#allocation2 + $0x2750] sm:$0xff]
    %v1453 = vld [vmem:[#allocation2 + $0x2758] sm:$0xff]
    %v1454 = vld [vmem:[#allocation2 + $0x2760] sm:$0xff]
    %v1455 = vld [vmem:[#allocation2 + $0x2768] sm:$0xff]
    %v1456 = vld [vmem:[#allocation2 + $0x2770] sm:$0xff]
    %v1457 = vld [vmem:[#allocation2 + $0x2778] sm:$0xff]
    %v1458 = vld [vmem:[#allocation2 + $0x2780] sm:$0xff]
    %v1459 = vld [vmem:[#allocation2 + $0x2788] sm:$0xff]
    %v1460 = vld [vmem:[#allocation2 + $0x2790] sm:$0xff]
    %v1461 = vld [vmem:[#allocation2 + $0x2798] sm:$0xff]
    %v1462 = vld [vmem:[#allocation2 + $0x27a0] sm:$0xff]
    %v1463 = vld [vmem:[#allocation2 + $0x27a8] sm:$0xff]
    %v1464 = vld [vmem:[#allocation2 + $0x27b0] sm:$0xff]
    %v1465 = vld [vmem:[#allocation2 + $0x27b8] sm:$0xff]
    %v1466 = vld [vmem:[#allocation2 + $0x27c0] sm:$0xff]
    %v1467 = vld [vmem:[#allocation2 + $0x27c8] sm:$0xff]
    %v1468 = vld [vmem:[#allocation2 + $0x27d0] sm:$0xff]
    %v1469 = vld [vmem:[#allocation2 + $0x27d8] sm:$0xff]
    %v1470 = vld [vmem:[#allocation2 + $0x27e0] sm:$0xff]
    %v1471 = vld [vmem:[#allocation2 + $0x27e8] sm:$0xff]
    %v1472 = vld [vmem:[#allocation2 + $0x27f0] sm:$0xff]
    %v1473 = vld [vmem:[#allocation2 + $0x27f8] sm:$0xff]
    %v1474 = vld [vmem:[#allocation2 + $0x2800] sm:$0xff]
    %v1475 = vld [vmem:[#allocation2 + $0x2808] sm:$0xff]
    %v1476 = vld [vmem:[#allocation2 + $0x2810] sm:$0xff]
    %v1477 = vld [vmem:[#allocation2 + $0x2818] sm:$0xff]
    %v1478 = vld [vmem:[#allocation2 + $0x2820] sm:$0xff]
    %v1479 = vld [vmem:[#allocation2 + $0x2828] sm:$0xff]
    %v1480 = vld [vmem:[#allocation2 + $0x2830] sm:$0xff]
    %v1481 = vld [vmem:[#allocation2 + $0x2838] sm:$0xff]
    %v1482 = vld [vmem:[#allocation2 + $0x2840] sm:$0xff]
    %v1483 = vld [vmem:[#allocation2 + $0x2848] sm:$0xff]
    %v1484 = vld [vmem:[#allocation2 + $0x2850] sm:$0xff]
    %v1485 = vld [vmem:[#allocation2 + $0x2858] sm:$0xff]
    %v1486 = vld [vmem:[#allocation2 + $0x2860] sm:$0xff]
    %v1487 = vld [vmem:[#allocation2 + $0x2868] sm:$0xff]
    %v1488 = vld [vmem:[#allocation2 + $0x2870] sm:$0xff]
    %v1489 = vld [vmem:[#allocation2 + $0x2878] sm:$0xff]
    %v1490 = vld [vmem:[#allocation2 + $0x2880] sm:$0xff]
    %v1491 = vld [vmem:[#allocation2 + $0x2888] sm:$0xff]
    %v1492 = vld [vmem:[#allocation2 + $0x2890] sm:$0xff]
    %v1493 = vld [vmem:[#allocation2 + $0x2898] sm:$0xff]
    %v1494 = vld [vmem:[#allocation2 + $0x28a0] sm:$0xff]
    %v1495 = vld [vmem:[#allocation2 + $0x28a8] sm:$0xff]
    %v1496 = vld [vmem:[#allocation2 + $0x28b0] sm:$0xff]
    %v1497 = vld [vmem:[#allocation2 + $0x28b8] sm:$0xff]
    %v1498 = vld [vmem:[#allocation2 + $0x28c0] sm:$0xff]
    %v1499 = vld [vmem:[#allocation2 + $0x28c8] sm:$0xff]
    %v1500 = vld [vmem:[#allocation2 + $0x28d0] sm:$0xff]
    %v1501 = vld [vmem:[#allocation2 + $0x28d8] sm:$0xff]
    %v1502 = vld [vmem:[#allocation2 + $0x28e0] sm:$0xff]
    %v1503 = vld [vmem:[#allocation2 + $0x28e8] sm:$0xff]
    %v1504 = vld [vmem:[#allocation2 + $0x28f0] sm:$0xff]
    %v1505 = vld [vmem:[#allocation2 + $0x28f8] sm:$0xff]
    %v1506 = vld [vmem:[#allocation2 + $0x2900] sm:$0xff]
    %v1507 = vld [vmem:[#allocation2 + $0x2908] sm:$0xff]
    %v1508 = vld [vmem:[#allocation2 + $0x2910] sm:$0xff]
    %v1509 = vld [vmem:[#allocation2 + $0x2918] sm:$0xff]
    %v1510 = vld [vmem:[#allocation2 + $0x2920] sm:$0xff]
    %v1511 = vld [vmem:[#allocation2 + $0x2928] sm:$0xff]
    %v1512 = vld [vmem:[#allocation2 + $0x2930] sm:$0xff]
    %v1513 = vld [vmem:[#allocation2 + $0x2938] sm:$0xff]
    %v1514 = vld [vmem:[#allocation2 + $0x2940] sm:$0xff]
    %v1515 = vld [vmem:[#allocation2 + $0x2948] sm:$0xff]
    %v1516 = vld [vmem:[#allocation2 + $0x2950] sm:$0xff]
    %v1517 = vld [vmem:[#allocation2 + $0x2958] sm:$0xff]
    %v1518 = vld [vmem:[#allocation2 + $0x2960] sm:$0xff]
    %v1519 = vld [vmem:[#allocation2 + $0x2968] sm:$0xff]
    %v1520 = vld [vmem:[#allocation2 + $0x2970] sm:$0xff]
    %v1521 = vld [vmem:[#allocation2 + $0x2978] sm:$0xff]
    %v1522 = vld [vmem:[#allocation2 + $0x2980] sm:$0xff]
    %v1523 = vld [vmem:[#allocation2 + $0x2988] sm:$0xff]
    %v1524 = vld [vmem:[#allocation2 + $0x2990] sm:$0xff]
    %v1525 = vld [vmem:[#allocation2 + $0x2998] sm:$0xff]
    %v1526 = vld [vmem:[#allocation2 + $0x29a0] sm:$0xff]
    %v1527 = vld [vmem:[#allocation2 + $0x29a8] sm:$0xff]
    %v1528 = vld [vmem:[#allocation2 + $0x29b0] sm:$0xff]
    %v1529 = vld [vmem:[#allocation2 + $0x29b8] sm:$0xff]
    %v1530 = vld [vmem:[#allocation2 + $0x29c0] sm:$0xff]
    %v1531 = vld [vmem:[#allocation2 + $0x29c8] sm:$0xff]
    %v1532 = vld [vmem:[#allocation2 + $0x29d0] sm:$0xff]
    %v1533 = vld [vmem:[#allocation2 + $0x29d8] sm:$0xff]
    %v1534 = vld [vmem:[#allocation2 + $0x29e0] sm:$0xff]
    %v1535 = vld [vmem:[#allocation2 + $0x29e8] sm:$0xff]
    %v1536 = vld [vmem:[#allocation2 + $0x29f0] sm:$0xff]
    %v1537 = vld [vmem:[#allocation2 + $0x29f8] sm:$0xff]
    %v1538 = vld [vmem:[#allocation2 + $0x2a00] sm:$0xff]
    %v1539 = vld [vmem:[#allocation2 + $0x2a08] sm:$0xff]
    %v1540 = vld [vmem:[#allocation2 + $0x2a10] sm:$0xff]
    %v1541 = vld [vmem:[#allocation2 + $0x2a18] sm:$0xff]
    %v1542 = vld [vmem:[#allocation2 + $0x2a20] sm:$0xff]
    %v1543 = vld [vmem:[#allocation2 + $0x2a28] sm:$0xff]
    %v1544 = vld [vmem:[#allocation2 + $0x2a30] sm:$0xff]
    %v1545 = vld [vmem:[#allocation2 + $0x2a38] sm:$0xff]
    %v1546 = vld [vmem:[#allocation2 + $0x2a40] sm:$0xff]
    %v1547 = vld [vmem:[#allocation2 + $0x2a48] sm:$0xff]
    %v1548 = vld [vmem:[#allocation2 + $0x2a50] sm:$0xff]
    %v1549 = vld [vmem:[#allocation2 + $0x2a58] sm:$0xff]
    %v1550 = vld [vmem:[#allocation2 + $0x2a60] sm:$0xff]
    %v1551 = vld [vmem:[#allocation2 + $0x2a68] sm:$0xff]
    %v1552 = vld [vmem:[#allocation2 + $0x2a70] sm:$0xff]
    %v1553 = vld [vmem:[#allocation2 + $0x2a78] sm:$0xff]
    %v1554 = vld [vmem:[#allocation2 + $0x2a80] sm:$0xff]
    %v1555 = vld [vmem:[#allocation2 + $0x2a88] sm:$0xff]
    %v1556 = vld [vmem:[#allocation2 + $0x2a90] sm:$0xff]
    %v1557 = vld [vmem:[#allocation2 + $0x2a98] sm:$0xff]
    %v1558 = vld [vmem:[#allocation2 + $0x2aa0] sm:$0xff]
    %v1559 = vld [vmem:[#allocation2 + $0x2aa8] sm:$0xff]
    %v1560 = vld [vmem:[#allocation2 + $0x2ab0] sm:$0xff]
    %v1561 = vld [vmem:[#allocation2 + $0x2ab8] sm:$0xff]
    %v1562 = vld [vmem:[#allocation2 + $0x2ac0] sm:$0xff]
    %v1563 = vld [vmem:[#allocation2 + $0x2ac8] sm:$0xff]
    %v1564 = vld [vmem:[#allocation2 + $0x2ad0] sm:$0xff]
    %v1565 = vld [vmem:[#allocation2 + $0x2ad8] sm:$0xff]
    %v1566 = vld [vmem:[#allocation2 + $0x2ae0] sm:$0xff]
    %v1567 = vld [vmem:[#allocation2 + $0x2ae8] sm:$0xff]
    %v1568 = vld [vmem:[#allocation2 + $0x2af0] sm:$0xff]
    %v1569 = vld [vmem:[#allocation2 + $0x2af8] sm:$0xff]
    %v1570 = vld [vmem:[#allocation2 + $0x2b00] sm:$0xff]
    %v1571 = vld [vmem:[#allocation2 + $0x2b08] sm:$0xff]
    %v1572 = vld [vmem:[#allocation2 + $0x2b10] sm:$0xff]
    %v1573 = vld [vmem:[#allocation2 + $0x2b18] sm:$0xff]
    %v1574 = vld [vmem:[#allocation2 + $0x2b20] sm:$0xff]
    %v1575 = vld [vmem:[#allocation2 + $0x2b28] sm:$0xff]
    %v1576 = vld [vmem:[#allocation2 + $0x2b30] sm:$0xff]
    %v1577 = vld [vmem:[#allocation2 + $0x2b38] sm:$0xff]
    %v1578 = vld [vmem:[#allocation2 + $0x2b40] sm:$0xff]
    %v1579 = vld [vmem:[#allocation2 + $0x2b48] sm:$0xff]
    %v1580 = vld [vmem:[#allocation2 + $0x2b50] sm:$0xff]
    %v1581 = vld [vmem:[#allocation2 + $0x2b58] sm:$0xff]
    %v1582 = vld [vmem:[#allocation2 + $0x2b60] sm:$0xff]
    %v1583 = vld [vmem:[#allocation2 + $0x2b68] sm:$0xff]
    %v1584 = vld [vmem:[#allocation2 + $0x2b70] sm:$0xff]
    %v1585 = vld [vmem:[#allocation2 + $0x2b78] sm:$0xff]
    %v1586 = vld [vmem:[#allocation2 + $0x2b80] sm:$0xff]
    %v1587 = vld [vmem:[#allocation2 + $0x2b88] sm:$0xff]
    %v1588 = vld [vmem:[#allocation2 + $0x2b90] sm:$0xff]
    %v1589 = vld [vmem:[#allocation2 + $0x2b98] sm:$0xff]
    %v1590 = vld [vmem:[#allocation2 + $0x2ba0] sm:$0xff]
    %v1591 = vld [vmem:[#allocation2 + $0x2ba8] sm:$0xff]
    %v1592 = vld [vmem:[#allocation2 + $0x2bb0] sm:$0xff]
    %v1593 = vld [vmem:[#allocation2 + $0x2bb8] sm:$0xff]
    %v1594 = vld [vmem:[#allocation2 + $0x2bc0] sm:$0xff]
    %v1595 = vld [vmem:[#allocation2 + $0x2bc8] sm:$0xff]
    %v1596 = vld [vmem:[#allocation2 + $0x2bd0] sm:$0xff]
    %v1597 = vld [vmem:[#allocation2 + $0x2bd8] sm:$0xff]
    %v1598 = vld [vmem:[#allocation2 + $0x2be0] sm:$0xff]
    %v1599 = vld [vmem:[#allocation2 + $0x2be8] sm:$0xff]
    %v1600 = vld [vmem:[#allocation2 + $0x2bf0] sm:$0xff]
    %v1601 = vld [vmem:[#allocation2 + $0x2bf8] sm:$0xff]
    %v1602 = vld [vmem:[#allocation2 + $0x2c00] sm:$0xff]
    %v1603 = vld [vmem:[#allocation2 + $0x2c08] sm:$0xff]
    %v1604 = vld [vmem:[#allocation2 + $0x2c10] sm:$0xff]
    %v1605 = vld [vmem:[#allocation2 + $0x2c18] sm:$0xff]
    %v1606 = vld [vmem:[#allocation2 + $0x2c20] sm:$0xff]
    %v1607 = vld [vmem:[#allocation2 + $0x2c28] sm:$0xff]
    %v1608 = vld [vmem:[#allocation2 + $0x2c30] sm:$0xff]
    %v1609 = vld [vmem:[#allocation2 + $0x2c38] sm:$0xff]
    %v1610 = vld [vmem:[#allocation2 + $0x2c40] sm:$0xff]
    %v1611 = vld [vmem:[#allocation2 + $0x2c48] sm:$0xff]
    %v1612 = vld [vmem:[#allocation2 + $0x2c50] sm:$0xff]
    %v1613 = vld [vmem:[#allocation2 + $0x2c58] sm:$0xff]
    %v1614 = vld [vmem:[#allocation2 + $0x2c60] sm:$0xff]
    %v1615 = vld [vmem:[#allocation2 + $0x2c68] sm:$0xff]
    %v1616 = vld [vmem:[#allocation2 + $0x2c70] sm:$0xff]
    %v1617 = vld [vmem:[#allocation2 + $0x2c78] sm:$0xff]
    %v1618 = vld [vmem:[#allocation2 + $0x2c80] sm:$0xff]
    %v1619 = vld [vmem:[#allocation2 + $0x2c88] sm:$0xff]
    %v1620 = vld [vmem:[#allocation2 + $0x2c90] sm:$0xff]
    %v1621 = vld [vmem:[#allocation2 + $0x2c98] sm:$0xff]
    %v1622 = vld [vmem:[#allocation2 + $0x2ca0] sm:$0xff]
    %v1623 = vld [vmem:[#allocation2 + $0x2ca8] sm:$0xff]
    %v1624 = vld [vmem:[#allocation2 + $0x2cb0] sm:$0xff]
    %v1625 = vld [vmem:[#allocation2 + $0x2cb8] sm:$0xff]
    %v1626 = vld [vmem:[#allocation2 + $0x2cc0] sm:$0xff]
    %v1627 = vld [vmem:[#allocation2 + $0x2cc8] sm:$0xff]
    %v1628 = vld [vmem:[#allocation2 + $0x2cd0] sm:$0xff]
    %v1629 = vld [vmem:[#allocation2 + $0x2cd8] sm:$0xff]
    %v1630 = vld [vmem:[#allocation2 + $0x2ce0] sm:$0xff]
    %v1631 = vld [vmem:[#allocation2 + $0x2ce8] sm:$0xff]
    %v1632 = vld [vmem:[#allocation2 + $0x2cf0] sm:$0xff]
    %v1633 = vld [vmem:[#allocation2 + $0x2cf8] sm:$0xff]
    %v1634 = vld [vmem:[#allocation2 + $0x2d00] sm:$0xff]
    %v1635 = vld [vmem:[#allocation2 + $0x2d08] sm:$0xff]
    %v1636 = vld [vmem:[#allocation2 + $0x2d10] sm:$0xff]
    %v1637 = vld [vmem:[#allocation2 + $0x2d18] sm:$0xff]
    %v1638 = vld [vmem:[#allocation2 + $0x2d20] sm:$0xff]
    %v1639 = vld [vmem:[#allocation2 + $0x2d28] sm:$0xff]
    %v1640 = vld [vmem:[#allocation2 + $0x2d30] sm:$0xff]
    %v1641 = vld [vmem:[#allocation2 + $0x2d38] sm:$0xff]
    %v1642 = vld [vmem:[#allocation2 + $0x2d40] sm:$0xff]
    %v1643 = vld [vmem:[#allocation2 + $0x2d48] sm:$0xff]
    %v1644 = vld [vmem:[#allocation2 + $0x2d50] sm:$0xff]
    %v1645 = vld [vmem:[#allocation2 + $0x2d58] sm:$0xff]
    %v1646 = vld [vmem:[#allocation2 + $0x2d60] sm:$0xff]
    %v1647 = vld [vmem:[#allocation2 + $0x2d68] sm:$0xff]
    %v1648 = vld [vmem:[#allocation2 + $0x2d70] sm:$0xff]
    %v1649 = vld [vmem:[#allocation2 + $0x2d78] sm:$0xff]
    %v1650 = vld [vmem:[#allocation2 + $0x2d80] sm:$0xff]
    %v1651 = vld [vmem:[#allocation2 + $0x2d88] sm:$0xff]
    %v1652 = vld [vmem:[#allocation2 + $0x2d90] sm:$0xff]
    %v1653 = vld [vmem:[#allocation2 + $0x2d98] sm:$0xff]
    %v1654 = vld [vmem:[#allocation2 + $0x2da0] sm:$0xff]
    %v1655 = vld [vmem:[#allocation2 + $0x2da8] sm:$0xff]
    %v1656 = vld [vmem:[#allocation2 + $0x2db0] sm:$0xff]
    %v1657 = vld [vmem:[#allocation2 + $0x2db8] sm:$0xff]
    %v1658 = vld [vmem:[#allocation2 + $0x2dc0] sm:$0xff]
    %v1659 = vld [vmem:[#allocation2 + $0x2dc8] sm:$0xff]
    %v1660 = vld [vmem:[#allocation2 + $0x2dd0] sm:$0xff]
    %v1661 = vld [vmem:[#allocation2 + $0x2dd8] sm:$0xff]
    %v1662 = vld [vmem:[#allocation2 + $0x2de0] sm:$0xff]
    %v1663 = vld [vmem:[#allocation2 + $0x2de8] sm:$0xff]
    %v1664 = vld [vmem:[#allocation2 + $0x2df0] sm:$0xff]
    %v1665 = vld [vmem:[#allocation2 + $0x2df8] sm:$0xff]
    %v1666 = vld [vmem:[#allocation2 + $0x2e00] sm:$0xff]
    %v1667 = vld [vmem:[#allocation2 + $0x2e08] sm:$0xff]
    %v1668 = vld [vmem:[#allocation2 + $0x2e10] sm:$0xff]
    %v1669 = vld [vmem:[#allocation2 + $0x2e18] sm:$0xff]
    %v1670 = vld [vmem:[#allocation2 + $0x2e20] sm:$0xff]
    %v1671 = vld [vmem:[#allocation2 + $0x2e28] sm:$0xff]
    %v1672 = vld [vmem:[#allocation2 + $0x2e30] sm:$0xff]
    %v1673 = vld [vmem:[#allocation2 + $0x2e38] sm:$0xff]
    %v1674 = vld [vmem:[#allocation2 + $0x2e40] sm:$0xff]
    %v1675 = vld [vmem:[#allocation2 + $0x2e48] sm:$0xff]
    %v1676 = vld [vmem:[#allocation2 + $0x2e50] sm:$0xff]
    %v1677 = vld [vmem:[#allocation2 + $0x2e58] sm:$0xff]
    %v1678 = vld [vmem:[#allocation2 + $0x2e60] sm:$0xff]
    %v1679 = vld [vmem:[#allocation2 + $0x2e68] sm:$0xff]
    %v1680 = vld [vmem:[#allocation2 + $0x2e70] sm:$0xff]
    %v1681 = vld [vmem:[#allocation2 + $0x2e78] sm:$0xff]
    %v1682 = vld [vmem:[#allocation2 + $0x2e80] sm:$0xff]
    %v1683 = vld [vmem:[#allocation2 + $0x2e88] sm:$0xff]
    %v1684 = vld [vmem:[#allocation2 + $0x2e90] sm:$0xff]
    %v1685 = vld [vmem:[#allocation2 + $0x2e98] sm:$0xff]
    %v1686 = vld [vmem:[#allocation2 + $0x2ea0] sm:$0xff]
    %v1687 = vld [vmem:[#allocation2 + $0x2ea8] sm:$0xff]
    %v1688 = vld [vmem:[#allocation2 + $0x2eb0] sm:$0xff]
    %v1689 = vld [vmem:[#allocation2 + $0x2eb8] sm:$0xff]
    %v1690 = vld [vmem:[#allocation2 + $0x2ec0] sm:$0xff]
    %v1691 = vld [vmem:[#allocation2 + $0x2ec8] sm:$0xff]
    %v1692 = vld [vmem:[#allocation2 + $0x2ed0] sm:$0xff]
    %v1693 = vld [vmem:[#allocation2 + $0x2ed8] sm:$0xff]
    %v1694 = vld [vmem:[#allocation2 + $0x2ee0] sm:$0xff]
    %v1695 = vld [vmem:[#allocation2 + $0x2ee8] sm:$0xff]
    %v1696 = vld [vmem:[#allocation2 + $0x2ef0] sm:$0xff]
    %v1697 = vld [vmem:[#allocation2 + $0x2ef8] sm:$0xff]
    %v1698 = vld [vmem:[#allocation2 + $0x2f00] sm:$0xff]
    %v1699 = vld [vmem:[#allocation2 + $0x2f08] sm:$0xff]
    %v1700 = vld [vmem:[#allocation2 + $0x2f10] sm:$0xff]
    %v1701 = vld [vmem:[#allocation2 + $0x2f18] sm:$0xff]
    %v1702 = vld [vmem:[#allocation2 + $0x2f20] sm:$0xff]
    %v1703 = vld [vmem:[#allocation2 + $0x2f28] sm:$0xff]
    %v1704 = vld [vmem:[#allocation2 + $0x2f30] sm:$0xff]
    %v1705 = vld [vmem:[#allocation2 + $0x2f38] sm:$0xff]
    %v1706 = vld [vmem:[#allocation2 + $0x2f40] sm:$0xff]
    %v1707 = vld [vmem:[#allocation2 + $0x2f48] sm:$0xff]
    %v1708 = vld [vmem:[#allocation2 + $0x2f50] sm:$0xff]
    %v1709 = vld [vmem:[#allocation2 + $0x2f58] sm:$0xff]
    %v1710 = vld [vmem:[#allocation2 + $0x2f60] sm:$0xff]
    %v1711 = vld [vmem:[#allocation2 + $0x2f68] sm:$0xff]
    %v1712 = vld [vmem:[#allocation2 + $0x2f70] sm:$0xff]
    %v1713 = vld [vmem:[#allocation2 + $0x2f78] sm:$0xff]
    %v1714 = vld [vmem:[#allocation2 + $0x2f80] sm:$0xff]
    %v1715 = vld [vmem:[#allocation2 + $0x2f88] sm:$0xff]
    %v1716 = vld [vmem:[#allocation2 + $0x2f90] sm:$0xff]
    %v1717 = vld [vmem:[#allocation2 + $0x2f98] sm:$0xff]
    %v1718 = vld [vmem:[#allocation2 + $0x2fa0] sm:$0xff]
    %v1719 = vld [vmem:[#allocation2 + $0x2fa8] sm:$0xff]
    %v1720 = vld [vmem:[#allocation2 + $0x2fb0] sm:$0xff]
    %v1721 = vld [vmem:[#allocation2 + $0x2fb8] sm:$0xff]
    %v1722 = vld [vmem:[#allocation2 + $0x2fc0] sm:$0xff]
    %v1723 = vld [vmem:[#allocation2 + $0x2fc8] sm:$0xff]
    %v1724 = vld [vmem:[#allocation2 + $0x2fd0] sm:$0xff]
    %v1725 = vld [vmem:[#allocation2 + $0x2fd8] sm:$0xff]
    %v1726 = vld [vmem:[#allocation2 + $0x2fe0] sm:$0xff]
    %v1727 = vld [vmem:[#allocation2 + $0x2fe8] sm:$0xff]
    %v1728 = vld [vmem:[#allocation2 + $0x2ff0] sm:$0xff]
    %v1729 = vld [vmem:[#allocation2 + $0x2ff8] sm:$0xff]
    %v1730 = vld [vmem:[#allocation4] sm:$0xff]
    %v1732 = vperm.slane %v1730, 0
    %v1733 = vperm.slane %v1730, 1
    %v1734 = vperm.slane %v1730, 2
    %v1735 = vperm.slane %v1730, 3
    %v1736 = vperm.slane %v1730, 4
    %v1737 = vperm.slane %v1730, 5
    %v1738 = vperm.slane %v1730, 6
    %v1739 = vperm.slane %v1730, 7
    %v1772 = vunpack.c.l.b16 %v170
    %v1773 = vunpack.c.h.b16 %v170
    %v1774 = vunpack.c.l.b16 %v171
    %v1775 = vunpack.c.h.b16 %v171
    %v1776 = vunpack.c.l.b16 %v172
    %v1777 = vunpack.c.h.b16 %v172
    %v1778 = vunpack.c.l.b16 %v173
    %v1779 = vunpack.c.h.b16 %v173
    %v1780 = vunpack.c.l.b16 %v174
    %v1781 = vunpack.c.h.b16 %v174
    %v1782 = vunpack.c.l.b16 %v175
    %v1783 = vunpack.c.h.b16 %v175
    %v1784 = vunpack.c.l.b16 %v176
    %v1785 = vunpack.c.h.b16 %v176
    %v1786 = vunpack.c.l.b16 %v177
    %v1787 = vunpack.c.h.b16 %v177
    %v1788 = vunpack.c.l.b16 %v178
    %v1789 = vunpack.c.h.b16 %v178
    %v1790 = vunpack.c.l.b16 %v179
    %v1791 = vunpack.c.h.b16 %v179
    %v1792 = vunpack.c.l.b16 %v180
    %v1793 = vunpack.c.h.b16 %v180
    %v1794 = vunpack.c.l.b16 %v181
    %v1795 = vunpack.c.h.b16 %v181
    %v1796 = vunpack.c.l.b16 %v182
    %v1797 = vunpack.c.h.b16 %v182
    %v1798 = vunpack.c.l.b16 %v183
    %v1799 = vunpack.c.h.b16 %v183
    %v1800 = vunpack.c.l.b16 %v184
    %v1801 = vunpack.c.h.b16 %v184
    %v1802 = vunpack.c.l.b16 %v185
    %v1803 = vunpack.c.h.b16 %v185
    %v1804 = vunpack.c.l.b16 %v186
    %v1805 = vunpack.c.h.b16 %v186
    %v1806 = vunpack.c.l.b16 %v187
    %v1807 = vunpack.c.h.b16 %v187
    %v1808 = vunpack.c.l.b16 %v188
    %v1809 = vunpack.c.h.b16 %v188
    %v1810 = vunpack.c.l.b16 %v189
    %v1811 = vunpack.c.h.b16 %v189
    %v1812 = vunpack.c.l.b16 %v190
    %v1813 = vunpack.c.h.b16 %v190
    %v1814 = vunpack.c.l.b16 %v191
    %v1815 = vunpack.c.h.b16 %v191
    %v1816 = vunpack.c.l.b16 %v192
    %v1817 = vunpack.c.h.b16 %v192
    %v1818 = vunpack.c.l.b16 %v193
    %v1819 = vunpack.c.h.b16 %v193
    %v1820 = vpack.c.b16 %v1796, %v1772
    %v1821 = vpack.c.b16 %v1797, %v1773
    %v1822 = vpack.c.b16 %v1798, %v1774
    %v1823 = vpack.c.b16 %v1799, %v1775
    %v1824 = vpack.c.b16 %v1800, %v1776
    %v1825 = vpack.c.b16 %v1801, %v1777
    %v1826 = vpack.c.b16 %v1802, %v1778
    %v1827 = vpack.c.b16 %v1803, %v1779
    %v1828 = vpack.c.b16 %v1804, %v1780
    %v1829 = vpack.c.b16 %v1805, %v1781
    %v1830 = vpack.c.b16 %v1806, %v1782
    %v1831 = vpack.c.b16 %v1807, %v1783
    %v1832 = vpack.c.b16 %v1808, %v1784
    %v1833 = vpack.c.b16 %v1809, %v1785
    %v1834 = vpack.c.b16 %v1810, %v1786
    %v1835 = vpack.c.b16 %v1811, %v1787
    %v1836 = vpack.c.b16 %v1812, %v1788
    %v1837 = vpack.c.b16 %v1813, %v1789
    %v1838 = vpack.c.b16 %v1814, %v1790
    %v1839 = vpack.c.b16 %v1815, %v1791
    %v1840 = vpack.c.b16 %v1816, %v1792
    %v1841 = vpack.c.b16 %v1817, %v1793
    %v1842 = vpack.c.b16 %v1818, %v1794
    %v1843 = vpack.c.b16 %v1819, %v1795
    %v3404 = vunpack.c.l.b16 %v194
    %v3405 = vunpack.c.h.b16 %v194
    %v3406 = vunpack.c.l.b16 %v195
    %v3407 = vunpack.c.h.b16 %v195
    %v3408 = vunpack.c.l.b16 %v196
    %v3409 = vunpack.c.h.b16 %v196
    %v3410 = vunpack.c.l.b16 %v197
    %v3411 = vunpack.c.h.b16 %v197
    %v3412 = vunpack.c.l.b16 %v198
    %v3413 = vunpack.c.h.b16 %v198
    %v3414 = vunpack.c.l.b16 %v199
    %v3415 = vunpack.c.h.b16 %v199
    %v3416 = vunpack.c.l.b16 %v200
    %v3417 = vunpack.c.h.b16 %v200
    %v3418 = vunpack.c.l.b16 %v201
    %v3419 = vunpack.c.h.b16 %v201
    %v3420 = vunpack.c.l.b16 %v202
    %v3421 = vunpack.c.h.b16 %v202
    %v3422 = vunpack.c.l.b16 %v203
    %v3423 = vunpack.c.h.b16 %v203
    %v3424 = vunpack.c.l.b16 %v204
    %v3425 = vunpack.c.h.b16 %v204
    %v3426 = vunpack.c.l.b16 %v205
    %v3427 = vunpack.c.h.b16 %v205
    %v3428 = vunpack.c.l.b16 %v206
    %v3429 = vunpack.c.h.b16 %v206
    %v3430 = vunpack.c.l.b16 %v207
    %v3431 = vunpack.c.h.b16 %v207
    %v3432 = vunpack.c.l.b16 %v208
    %v3433 = vunpack.c.h.b16 %v208
    %v3434 = vunpack.c.l.b16 %v209
    %v3435 = vunpack.c.h.b16 %v209
    %v3436 = vunpack.c.l.b16 %v210
    %v3437 = vunpack.c.h.b16 %v210
    %v3438 = vunpack.c.l.b16 %v211
    %v3439 = vunpack.c.h.b16 %v211
    %v3440 = vunpack.c.l.b16 %v212
    %v3441 = vunpack.c.h.b16 %v212
    %v3442 = vunpack.c.l.b16 %v213
    %v3443 = vunpack.c.h.b16 %v213
    %v3444 = vunpack.c.l.b16 %v214
    %v3445 = vunpack.c.h.b16 %v214
    %v3446 = vunpack.c.l.b16 %v215
    %v3447 = vunpack.c.h.b16 %v215
    %v3448 = vunpack.c.l.b16 %v216
    %v3449 = vunpack.c.h.b16 %v216
    %v3450 = vunpack.c.l.b16 %v217
    %v3451 = vunpack.c.h.b16 %v217
    %v3452 = vunpack.c.l.b16 %v218
    %v3453 = vunpack.c.h.b16 %v218
    %v3454 = vunpack.c.l.b16 %v219
    %v3455 = vunpack.c.h.b16 %v219
    %v3456 = vunpack.c.l.b16 %v220
    %v3457 = vunpack.c.h.b16 %v220
    %v3458 = vunpack.c.l.b16 %v221
    %v3459 = vunpack.c.h.b16 %v221
    %v3460 = vunpack.c.l.b16 %v222
    %v3461 = vunpack.c.h.b16 %v222
    %v3462 = vunpack.c.l.b16 %v223
    %v3463 = vunpack.c.h.b16 %v223
    %v3464 = vunpack.c.l.b16 %v224
    %v3465 = vunpack.c.h.b16 %v224
    %v3466 = vunpack.c.l.b16 %v225
    %v3467 = vunpack.c.h.b16 %v225
    %v3468 = vunpack.c.l.b16 %v226
    %v3469 = vunpack.c.h.b16 %v226
    %v3470 = vunpack.c.l.b16 %v227
    %v3471 = vunpack.c.h.b16 %v227
    %v3472 = vunpack.c.l.b16 %v228
    %v3473 = vunpack.c.h.b16 %v228
    %v3474 = vunpack.c.l.b16 %v229
    %v3475 = vunpack.c.h.b16 %v229
    %v3476 = vunpack.c.l.b16 %v230
    %v3477 = vunpack.c.h.b16 %v230
    %v3478 = vunpack.c.l.b16 %v231
    %v3479 = vunpack.c.h.b16 %v231
    %v3480 = vunpack.c.l.b16 %v232
    %v3481 = vunpack.c.h.b16 %v232
    %v3482 = vunpack.c.l.b16 %v233
    %v3483 = vunpack.c.h.b16 %v233
    %v3484 = vunpack.c.l.b16 %v234
    %v3485 = vunpack.c.h.b16 %v234
    %v3486 = vunpack.c.l.b16 %v235
    %v3487 = vunpack.c.h.b16 %v235
    %v3488 = vunpack.c.l.b16 %v236
    %v3489 = vunpack.c.h.b16 %v236
    %v3490 = vunpack.c.l.b16 %v237
    %v3491 = vunpack.c.h.b16 %v237
    %v3492 = vunpack.c.l.b16 %v238
    %v3493 = vunpack.c.h.b16 %v238
    %v3494 = vunpack.c.l.b16 %v239
    %v3495 = vunpack.c.h.b16 %v239
    %v3496 = vunpack.c.l.b16 %v240
    %v3497 = vunpack.c.h.b16 %v240
    %v3498 = vunpack.c.l.b16 %v241
    %v3499 = vunpack.c.h.b16 %v241
    %v3500 = vunpack.c.l.b16 %v242
    %v3501 = vunpack.c.h.b16 %v242
    %v3502 = vunpack.c.l.b16 %v243
    %v3503 = vunpack.c.h.b16 %v243
    %v3504 = vunpack.c.l.b16 %v244
    %v3505 = vunpack.c.h.b16 %v244
    %v3506 = vunpack.c.l.b16 %v245
    %v3507 = vunpack.c.h.b16 %v245
    %v3508 = vunpack.c.l.b16 %v246
    %v3509 = vunpack.c.h.b16 %v246
    %v3510 = vunpack.c.l.b16 %v247
    %v3511 = vunpack.c.h.b16 %v247
    %v3512 = vunpack.c.l.b16 %v248
    %v3513 = vunpack.c.h.b16 %v248
    %v3514 = vunpack.c.l.b16 %v249
    %v3515 = vunpack.c.h.b16 %v249
    %v3516 = vunpack.c.l.b16 %v250
    %v3517 = vunpack.c.h.b16 %v250
    %v3518 = vunpack.c.l.b16 %v251
    %v3519 = vunpack.c.h.b16 %v251
    %v3520 = vunpack.c.l.b16 %v252
    %v3521 = vunpack.c.h.b16 %v252
    %v3522 = vunpack.c.l.b16 %v253
    %v3523 = vunpack.c.h.b16 %v253
    %v3524 = vunpack.c.l.b16 %v254
    %v3525 = vunpack.c.h.b16 %v254
    %v3526 = vunpack.c.l.b16 %v255
    %v3527 = vunpack.c.h.b16 %v255
    %v3528 = vunpack.c.l.b16 %v256
    %v3529 = vunpack.c.h.b16 %v256
    %v3530 = vunpack.c.l.b16 %v257
    %v3531 = vunpack.c.h.b16 %v257
    %v3532 = vunpack.c.l.b16 %v258
    %v3533 = vunpack.c.h.b16 %v258
    %v3534 = vunpack.c.l.b16 %v259
    %v3535 = vunpack.c.h.b16 %v259
    %v3536 = vunpack.c.l.b16 %v260
    %v3537 = vunpack.c.h.b16 %v260
    %v3538 = vunpack.c.l.b16 %v261
    %v3539 = vunpack.c.h.b16 %v261
    %v3540 = vunpack.c.l.b16 %v262
    %v3541 = vunpack.c.h.b16 %v262
    %v3542 = vunpack.c.l.b16 %v263
    %v3543 = vunpack.c.h.b16 %v263
    %v3544 = vunpack.c.l.b16 %v264
    %v3545 = vunpack.c.h.b16 %v264
    %v3546 = vunpack.c.l.b16 %v265
    %v3547 = vunpack.c.h.b16 %v265
    %v3548 = vunpack.c.l.b16 %v266
    %v3549 = vunpack.c.h.b16 %v266
    %v3550 = vunpack.c.l.b16 %v267
    %v3551 = vunpack.c.h.b16 %v267
    %v3552 = vunpack.c.l.b16 %v268
    %v3553 = vunpack.c.h.b16 %v268
    %v3554 = vunpack.c.l.b16 %v269
    %v3555 = vunpack.c.h.b16 %v269
    %v3556 = vunpack.c.l.b16 %v270
    %v3557 = vunpack.c.h.b16 %v270
    %v3558 = vunpack.c.l.b16 %v271
    %v3559 = vunpack.c.h.b16 %v271
    %v3560 = vunpack.c.l.b16 %v272
    %v3561 = vunpack.c.h.b16 %v272
    %v3562 = vunpack.c.l.b16 %v273
    %v3563 = vunpack.c.h.b16 %v273
    %v3564 = vunpack.c.l.b16 %v274
    %v3565 = vunpack.c.h.b16 %v274
    %v3566 = vunpack.c.l.b16 %v275
    %v3567 = vunpack.c.h.b16 %v275
    %v3568 = vunpack.c.l.b16 %v276
    %v3569 = vunpack.c.h.b16 %v276
    %v3570 = vunpack.c.l.b16 %v277
    %v3571 = vunpack.c.h.b16 %v277
    %v3572 = vunpack.c.l.b16 %v278
    %v3573 = vunpack.c.h.b16 %v278
    %v3574 = vunpack.c.l.b16 %v279
    %v3575 = vunpack.c.h.b16 %v279
    %v3576 = vunpack.c.l.b16 %v280
    %v3577 = vunpack.c.h.b16 %v280
    %v3578 = vunpack.c.l.b16 %v281
    %v3579 = vunpack.c.h.b16 %v281
    %v3580 = vunpack.c.l.b16 %v282
    %v3581 = vunpack.c.h.b16 %v282
    %v3582 = vunpack.c.l.b16 %v283
    %v3583 = vunpack.c.h.b16 %v283
    %v3584 = vunpack.c.l.b16 %v284
    %v3585 = vunpack.c.h.b16 %v284
    %v3586 = vunpack.c.l.b16 %v285
    %v3587 = vunpack.c.h.b16 %v285
    %v3588 = vunpack.c.l.b16 %v286
    %v3589 = vunpack.c.h.b16 %v286
    %v3590 = vunpack.c.l.b16 %v287
    %v3591 = vunpack.c.h.b16 %v287
    %v3592 = vunpack.c.l.b16 %v288
    %v3593 = vunpack.c.h.b16 %v288
    %v3594 = vunpack.c.l.b16 %v289
    %v3595 = vunpack.c.h.b16 %v289
    %v3596 = vunpack.c.l.b16 %v290
    %v3597 = vunpack.c.h.b16 %v290
    %v3598 = vunpack.c.l.b16 %v291
    %v3599 = vunpack.c.h.b16 %v291
    %v3600 = vunpack.c.l.b16 %v292
    %v3601 = vunpack.c.h.b16 %v292
    %v3602 = vunpack.c.l.b16 %v293
    %v3603 = vunpack.c.h.b16 %v293
    %v3604 = vunpack.c.l.b16 %v294
    %v3605 = vunpack.c.h.b16 %v294
    %v3606 = vunpack.c.l.b16 %v295
    %v3607 = vunpack.c.h.b16 %v295
    %v3608 = vunpack.c.l.b16 %v296
    %v3609 = vunpack.c.h.b16 %v296
    %v3610 = vunpack.c.l.b16 %v297
    %v3611 = vunpack.c.h.b16 %v297
    %v3612 = vunpack.c.l.b16 %v298
    %v3613 = vunpack.c.h.b16 %v298
    %v3614 = vunpack.c.l.b16 %v299
    %v3615 = vunpack.c.h.b16 %v299
    %v3616 = vunpack.c.l.b16 %v300
    %v3617 = vunpack.c.h.b16 %v300
    %v3618 = vunpack.c.l.b16 %v301
    %v3619 = vunpack.c.h.b16 %v301
    %v3620 = vunpack.c.l.b16 %v302
    %v3621 = vunpack.c.h.b16 %v302
    %v3622 = vunpack.c.l.b16 %v303
    %v3623 = vunpack.c.h.b16 %v303
    %v3624 = vunpack.c.l.b16 %v304
    %v3625 = vunpack.c.h.b16 %v304
    %v3626 = vunpack.c.l.b16 %v305
    %v3627 = vunpack.c.h.b16 %v305
    %v3628 = vunpack.c.l.b16 %v306
    %v3629 = vunpack.c.h.b16 %v306
    %v3630 = vunpack.c.l.b16 %v307
    %v3631 = vunpack.c.h.b16 %v307
    %v3632 = vunpack.c.l.b16 %v308
    %v3633 = vunpack.c.h.b16 %v308
    %v3634 = vunpack.c.l.b16 %v309
    %v3635 = vunpack.c.h.b16 %v309
    %v3636 = vunpack.c.l.b16 %v310
    %v3637 = vunpack.c.h.b16 %v310
    %v3638 = vunpack.c.l.b16 %v311
    %v3639 = vunpack.c.h.b16 %v311
    %v3640 = vunpack.c.l.b16 %v312
    %v3641 = vunpack.c.h.b16 %v312
    %v3642 = vunpack.c.l.b16 %v313
    %v3643 = vunpack.c.h.b16 %v313
    %v3644 = vunpack.c.l.b16 %v314
    %v3645 = vunpack.c.h.b16 %v314
    %v3646 = vunpack.c.l.b16 %v315
    %v3647 = vunpack.c.h.b16 %v315
    %v3648 = vunpack.c.l.b16 %v316
    %v3649 = vunpack.c.h.b16 %v316
    %v3650 = vunpack.c.l.b16 %v317
    %v3651 = vunpack.c.h.b16 %v317
    %v3652 = vunpack.c.l.b16 %v318
    %v3653 = vunpack.c.h.b16 %v318
    %v3654 = vunpack.c.l.b16 %v319
    %v3655 = vunpack.c.h.b16 %v319
    %v3656 = vunpack.c.l.b16 %v320
    %v3657 = vunpack.c.h.b16 %v320
    %v3658 = vunpack.c.l.b16 %v321
    %v3659 = vunpack.c.h.b16 %v321
    %v3660 = vunpack.c.l.b16 %v322
    %v3661 = vunpack.c.h.b16 %v322
    %v3662 = vunpack.c.l.b16 %v323
    %v3663 = vunpack.c.h.b16 %v323
    %v3664 = vunpack.c.l.b16 %v324
    %v3665 = vunpack.c.h.b16 %v324
    %v3666 = vunpack.c.l.b16 %v325
    %v3667 = vunpack.c.h.b16 %v325
    %v3668 = vunpack.c.l.b16 %v326
    %v3669 = vunpack.c.h.b16 %v326
    %v3670 = vunpack.c.l.b16 %v327
    %v3671 = vunpack.c.h.b16 %v327
    %v3672 = vunpack.c.l.b16 %v328
    %v3673 = vunpack.c.h.b16 %v328
    %v3674 = vunpack.c.l.b16 %v329
    %v3675 = vunpack.c.h.b16 %v329
    %v3676 = vunpack.c.l.b16 %v330
    %v3677 = vunpack.c.h.b16 %v330
    %v3678 = vunpack.c.l.b16 %v331
    %v3679 = vunpack.c.h.b16 %v331
    %v3680 = vunpack.c.l.b16 %v332
    %v3681 = vunpack.c.h.b16 %v332
    %v3682 = vunpack.c.l.b16 %v333
    %v3683 = vunpack.c.h.b16 %v333
    %v3684 = vunpack.c.l.b16 %v334
    %v3685 = vunpack.c.h.b16 %v334
    %v3686 = vunpack.c.l.b16 %v335
    %v3687 = vunpack.c.h.b16 %v335
    %v3688 = vunpack.c.l.b16 %v336
    %v3689 = vunpack.c.h.b16 %v336
    %v3690 = vunpack.c.l.b16 %v337
    %v3691 = vunpack.c.h.b16 %v337
    %v3692 = vunpack.c.l.b16 %v338
    %v3693 = vunpack.c.h.b16 %v338
    %v3694 = vunpack.c.l.b16 %v339
    %v3695 = vunpack.c.h.b16 %v339
    %v3696 = vunpack.c.l.b16 %v340
    %v3697 = vunpack.c.h.b16 %v340
    %v3698 = vunpack.c.l.b16 %v341
    %v3699 = vunpack.c.h.b16 %v341
    %v3700 = vunpack.c.l.b16 %v342
    %v3701 = vunpack.c.h.b16 %v342
    %v3702 = vunpack.c.l.b16 %v343
    %v3703 = vunpack.c.h.b16 %v343
    %v3704 = vunpack.c.l.b16 %v344
    %v3705 = vunpack.c.h.b16 %v344
    %v3706 = vunpack.c.l.b16 %v345
    %v3707 = vunpack.c.h.b16 %v345
    %v3708 = vunpack.c.l.b16 %v346
    %v3709 = vunpack.c.h.b16 %v346
    %v3710 = vunpack.c.l.b16 %v347
    %v3711 = vunpack.c.h.b16 %v347
    %v3712 = vunpack.c.l.b16 %v348
    %v3713 = vunpack.c.h.b16 %v348
    %v3714 = vunpack.c.l.b16 %v349
    %v3715 = vunpack.c.h.b16 %v349
    %v3716 = vunpack.c.l.b16 %v350
    %v3717 = vunpack.c.h.b16 %v350
    %v3718 = vunpack.c.l.b16 %v351
    %v3719 = vunpack.c.h.b16 %v351
    %v3720 = vunpack.c.l.b16 %v352
    %v3721 = vunpack.c.h.b16 %v352
    %v3722 = vunpack.c.l.b16 %v353
    %v3723 = vunpack.c.h.b16 %v353
    %v3724 = vunpack.c.l.b16 %v354
    %v3725 = vunpack.c.h.b16 %v354
    %v3726 = vunpack.c.l.b16 %v355
    %v3727 = vunpack.c.h.b16 %v355
    %v3728 = vunpack.c.l.b16 %v356
    %v3729 = vunpack.c.h.b16 %v356
    %v3730 = vunpack.c.l.b16 %v357
    %v3731 = vunpack.c.h.b16 %v357
    %v3732 = vunpack.c.l.b16 %v358
    %v3733 = vunpack.c.h.b16 %v358
    %v3734 = vunpack.c.l.b16 %v359
    %v3735 = vunpack.c.h.b16 %v359
    %v3736 = vunpack.c.l.b16 %v360
    %v3737 = vunpack.c.h.b16 %v360
    %v3738 = vunpack.c.l.b16 %v361
    %v3739 = vunpack.c.h.b16 %v361
    %v3740 = vunpack.c.l.b16 %v362
    %v3741 = vunpack.c.h.b16 %v362
    %v3742 = vunpack.c.l.b16 %v363
    %v3743 = vunpack.c.h.b16 %v363
    %v3744 = vunpack.c.l.b16 %v364
    %v3745 = vunpack.c.h.b16 %v364
    %v3746 = vunpack.c.l.b16 %v365
    %v3747 = vunpack.c.h.b16 %v365
    %v3748 = vunpack.c.l.b16 %v366
    %v3749 = vunpack.c.h.b16 %v366
    %v3750 = vunpack.c.l.b16 %v367
    %v3751 = vunpack.c.h.b16 %v367
    %v3752 = vunpack.c.l.b16 %v368
    %v3753 = vunpack.c.h.b16 %v368
    %v3754 = vunpack.c.l.b16 %v369
    %v3755 = vunpack.c.h.b16 %v369
    %v3756 = vunpack.c.l.b16 %v370
    %v3757 = vunpack.c.h.b16 %v370
    %v3758 = vunpack.c.l.b16 %v371
    %v3759 = vunpack.c.h.b16 %v371
    %v3760 = vunpack.c.l.b16 %v372
    %v3761 = vunpack.c.h.b16 %v372
    %v3762 = vunpack.c.l.b16 %v373
    %v3763 = vunpack.c.h.b16 %v373
    %v3764 = vunpack.c.l.b16 %v374
    %v3765 = vunpack.c.h.b16 %v374
    %v3766 = vunpack.c.l.b16 %v375
    %v3767 = vunpack.c.h.b16 %v375
    %v3768 = vunpack.c.l.b16 %v376
    %v3769 = vunpack.c.h.b16 %v376
    %v3770 = vunpack.c.l.b16 %v377
    %v3771 = vunpack.c.h.b16 %v377
    %v3772 = vunpack.c.l.b16 %v378
    %v3773 = vunpack.c.h.b16 %v378
    %v3774 = vunpack.c.l.b16 %v379
    %v3775 = vunpack.c.h.b16 %v379
    %v3776 = vunpack.c.l.b16 %v380
    %v3777 = vunpack.c.h.b16 %v380
    %v3778 = vunpack.c.l.b16 %v381
    %v3779 = vunpack.c.h.b16 %v381
    %v3780 = vunpack.c.l.b16 %v382
    %v3781 = vunpack.c.h.b16 %v382
    %v3782 = vunpack.c.l.b16 %v383
    %v3783 = vunpack.c.h.b16 %v383
    %v3784 = vunpack.c.l.b16 %v384
    %v3785 = vunpack.c.h.b16 %v384
    %v3786 = vunpack.c.l.b16 %v385
    %v3787 = vunpack.c.h.b16 %v385
    %v3788 = vunpack.c.l.b16 %v386
    %v3789 = vunpack.c.h.b16 %v386
    %v3790 = vunpack.c.l.b16 %v387
    %v3791 = vunpack.c.h.b16 %v387
    %v3792 = vunpack.c.l.b16 %v388
    %v3793 = vunpack.c.h.b16 %v388
    %v3794 = vunpack.c.l.b16 %v389
    %v3795 = vunpack.c.h.b16 %v389
    %v3796 = vunpack.c.l.b16 %v390
    %v3797 = vunpack.c.h.b16 %v390
    %v3798 = vunpack.c.l.b16 %v391
    %v3799 = vunpack.c.h.b16 %v391
    %v3800 = vunpack.c.l.b16 %v392
    %v3801 = vunpack.c.h.b16 %v392
    %v3802 = vunpack.c.l.b16 %v393
    %v3803 = vunpack.c.h.b16 %v393
    %v3804 = vunpack.c.l.b16 %v394
    %v3805 = vunpack.c.h.b16 %v394
    %v3806 = vunpack.c.l.b16 %v395
    %v3807 = vunpack.c.h.b16 %v395
    %v3808 = vunpack.c.l.b16 %v396
    %v3809 = vunpack.c.h.b16 %v396
    %v3810 = vunpack.c.l.b16 %v397
    %v3811 = vunpack.c.h.b16 %v397
    %v3812 = vunpack.c.l.b16 %v398
    %v3813 = vunpack.c.h.b16 %v398
    %v3814 = vunpack.c.l.b16 %v399
    %v3815 = vunpack.c.h.b16 %v399
    %v3816 = vunpack.c.l.b16 %v400
    %v3817 = vunpack.c.h.b16 %v400
    %v3818 = vunpack.c.l.b16 %v401
    %v3819 = vunpack.c.h.b16 %v401
    %v3820 = vunpack.c.l.b16 %v402
    %v3821 = vunpack.c.h.b16 %v402
    %v3822 = vunpack.c.l.b16 %v403
    %v3823 = vunpack.c.h.b16 %v403
    %v3824 = vunpack.c.l.b16 %v404
    %v3825 = vunpack.c.h.b16 %v404
    %v3826 = vunpack.c.l.b16 %v405
    %v3827 = vunpack.c.h.b16 %v405
    %v3828 = vunpack.c.l.b16 %v406
    %v3829 = vunpack.c.h.b16 %v406
    %v3830 = vunpack.c.l.b16 %v407
    %v3831 = vunpack.c.h.b16 %v407
    %v3832 = vunpack.c.l.b16 %v408
    %v3833 = vunpack.c.h.b16 %v408
    %v3834 = vunpack.c.l.b16 %v409
    %v3835 = vunpack.c.h.b16 %v409
    %v3836 = vunpack.c.l.b16 %v410
    %v3837 = vunpack.c.h.b16 %v410
    %v3838 = vunpack.c.l.b16 %v411
    %v3839 = vunpack.c.h.b16 %v411
    %v3840 = vunpack.c.l.b16 %v412
    %v3841 = vunpack.c.h.b16 %v412
    %v3842 = vunpack.c.l.b16 %v413
    %v3843 = vunpack.c.h.b16 %v413
    %v3844 = vunpack.c.l.b16 %v414
    %v3845 = vunpack.c.h.b16 %v414
    %v3846 = vunpack.c.l.b16 %v415
    %v3847 = vunpack.c.h.b16 %v415
    %v3848 = vunpack.c.l.b16 %v416
    %v3849 = vunpack.c.h.b16 %v416
    %v3850 = vunpack.c.l.b16 %v417
    %v3851 = vunpack.c.h.b16 %v417
    %v3852 = vunpack.c.l.b16 %v418
    %v3853 = vunpack.c.h.b16 %v418
    %v3854 = vunpack.c.l.b16 %v419
    %v3855 = vunpack.c.h.b16 %v419
    %v3856 = vunpack.c.l.b16 %v420
    %v3857 = vunpack.c.h.b16 %v420
    %v3858 = vunpack.c.l.b16 %v421
    %v3859 = vunpack.c.h.b16 %v421
    %v3860 = vunpack.c.l.b16 %v422
    %v3861 = vunpack.c.h.b16 %v422
    %v3862 = vunpack.c.l.b16 %v423
    %v3863 = vunpack.c.h.b16 %v423
    %v3864 = vunpack.c.l.b16 %v424
    %v3865 = vunpack.c.h.b16 %v424
    %v3866 = vunpack.c.l.b16 %v425
    %v3867 = vunpack.c.h.b16 %v425
    %v3868 = vunpack.c.l.b16 %v426
    %v3869 = vunpack.c.h.b16 %v426
    %v3870 = vunpack.c.l.b16 %v427
    %v3871 = vunpack.c.h.b16 %v427
    %v3872 = vunpack.c.l.b16 %v428
    %v3873 = vunpack.c.h.b16 %v428
    %v3874 = vunpack.c.l.b16 %v429
    %v3875 = vunpack.c.h.b16 %v429
    %v3876 = vunpack.c.l.b16 %v430
    %v3877 = vunpack.c.h.b16 %v430
    %v3878 = vunpack.c.l.b16 %v431
    %v3879 = vunpack.c.h.b16 %v431
    %v3880 = vunpack.c.l.b16 %v432
    %v3881 = vunpack.c.h.b16 %v432
    %v3882 = vunpack.c.l.b16 %v433
    %v3883 = vunpack.c.h.b16 %v433
    %v3884 = vunpack.c.l.b16 %v434
    %v3885 = vunpack.c.h.b16 %v434
    %v3886 = vunpack.c.l.b16 %v435
    %v3887 = vunpack.c.h.b16 %v435
    %v3888 = vunpack.c.l.b16 %v436
    %v3889 = vunpack.c.h.b16 %v436
    %v3890 = vunpack.c.l.b16 %v437
    %v3891 = vunpack.c.h.b16 %v437
    %v3892 = vunpack.c.l.b16 %v438
    %v3893 = vunpack.c.h.b16 %v438
    %v3894 = vunpack.c.l.b16 %v439
    %v3895 = vunpack.c.h.b16 %v439
    %v3896 = vunpack.c.l.b16 %v440
    %v3897 = vunpack.c.h.b16 %v440
    %v3898 = vunpack.c.l.b16 %v441
    %v3899 = vunpack.c.h.b16 %v441
    %v3900 = vunpack.c.l.b16 %v442
    %v3901 = vunpack.c.h.b16 %v442
    %v3902 = vunpack.c.l.b16 %v443
    %v3903 = vunpack.c.h.b16 %v443
    %v3904 = vunpack.c.l.b16 %v444
    %v3905 = vunpack.c.h.b16 %v444
    %v3906 = vunpack.c.l.b16 %v445
    %v3907 = vunpack.c.h.b16 %v445
    %v3908 = vunpack.c.l.b16 %v446
    %v3909 = vunpack.c.h.b16 %v446
    %v3910 = vunpack.c.l.b16 %v447
    %v3911 = vunpack.c.h.b16 %v447
    %v3912 = vunpack.c.l.b16 %v448
    %v3913 = vunpack.c.h.b16 %v448
    %v3914 = vunpack.c.l.b16 %v449
    %v3915 = vunpack.c.h.b16 %v449
    %v3916 = vunpack.c.l.b16 %v450
    %v3917 = vunpack.c.h.b16 %v450
    %v3918 = vunpack.c.l.b16 %v451
    %v3919 = vunpack.c.h.b16 %v451
    %v3920 = vunpack.c.l.b16 %v452
    %v3921 = vunpack.c.h.b16 %v452
    %v3922 = vunpack.c.l.b16 %v453
    %v3923 = vunpack.c.h.b16 %v453
    %v3924 = vunpack.c.l.b16 %v454
    %v3925 = vunpack.c.h.b16 %v454
    %v3926 = vunpack.c.l.b16 %v455
    %v3927 = vunpack.c.h.b16 %v455
    %v3928 = vunpack.c.l.b16 %v456
    %v3929 = vunpack.c.h.b16 %v456
    %v3930 = vunpack.c.l.b16 %v457
    %v3931 = vunpack.c.h.b16 %v457
    %v3932 = vunpack.c.l.b16 %v458
    %v3933 = vunpack.c.h.b16 %v458
    %v3934 = vunpack.c.l.b16 %v459
    %v3935 = vunpack.c.h.b16 %v459
    %v3936 = vunpack.c.l.b16 %v460
    %v3937 = vunpack.c.h.b16 %v460
    %v3938 = vunpack.c.l.b16 %v461
    %v3939 = vunpack.c.h.b16 %v461
    %v3940 = vunpack.c.l.b16 %v462
    %v3941 = vunpack.c.h.b16 %v462
    %v3942 = vunpack.c.l.b16 %v463
    %v3943 = vunpack.c.h.b16 %v463
    %v3944 = vunpack.c.l.b16 %v464
    %v3945 = vunpack.c.h.b16 %v464
    %v3946 = vunpack.c.l.b16 %v465
    %v3947 = vunpack.c.h.b16 %v465
    %v3948 = vunpack.c.l.b16 %v466
    %v3949 = vunpack.c.h.b16 %v466
    %v3950 = vunpack.c.l.b16 %v467
    %v3951 = vunpack.c.h.b16 %v467
    %v3952 = vunpack.c.l.b16 %v468
    %v3953 = vunpack.c.h.b16 %v468
    %v3954 = vunpack.c.l.b16 %v469
    %v3955 = vunpack.c.h.b16 %v469
    %v3956 = vunpack.c.l.b16 %v470
    %v3957 = vunpack.c.h.b16 %v470
    %v3958 = vunpack.c.l.b16 %v471
    %v3959 = vunpack.c.h.b16 %v471
    %v3960 = vunpack.c.l.b16 %v472
    %v3961 = vunpack.c.h.b16 %v472
    %v3962 = vunpack.c.l.b16 %v473
    %v3963 = vunpack.c.h.b16 %v473
    %v3964 = vunpack.c.l.b16 %v474
    %v3965 = vunpack.c.h.b16 %v474
    %v3966 = vunpack.c.l.b16 %v475
    %v3967 = vunpack.c.h.b16 %v475
    %v3968 = vunpack.c.l.b16 %v476
    %v3969 = vunpack.c.h.b16 %v476
    %v3970 = vunpack.c.l.b16 %v477
    %v3971 = vunpack.c.h.b16 %v477
    %v3972 = vunpack.c.l.b16 %v478
    %v3973 = vunpack.c.h.b16 %v478
    %v3974 = vunpack.c.l.b16 %v479
    %v3975 = vunpack.c.h.b16 %v479
    %v3976 = vunpack.c.l.b16 %v480
    %v3977 = vunpack.c.h.b16 %v480
    %v3978 = vunpack.c.l.b16 %v481
    %v3979 = vunpack.c.h.b16 %v481
    %v3980 = vunpack.c.l.b16 %v482
    %v3981 = vunpack.c.h.b16 %v482
    %v3982 = vunpack.c.l.b16 %v483
    %v3983 = vunpack.c.h.b16 %v483
    %v3984 = vunpack.c.l.b16 %v484
    %v3985 = vunpack.c.h.b16 %v484
    %v3986 = vunpack.c.l.b16 %v485
    %v3987 = vunpack.c.h.b16 %v485
    %v3988 = vunpack.c.l.b16 %v486
    %v3989 = vunpack.c.h.b16 %v486
    %v3990 = vunpack.c.l.b16 %v487
    %v3991 = vunpack.c.h.b16 %v487
    %v3992 = vunpack.c.l.b16 %v488
    %v3993 = vunpack.c.h.b16 %v488
    %v3994 = vunpack.c.l.b16 %v489
    %v3995 = vunpack.c.h.b16 %v489
    %v3996 = vunpack.c.l.b16 %v490
    %v3997 = vunpack.c.h.b16 %v490
    %v3998 = vunpack.c.l.b16 %v491
    %v3999 = vunpack.c.h.b16 %v491
    %v4000 = vunpack.c.l.b16 %v492
    %v4001 = vunpack.c.h.b16 %v492
    %v4002 = vunpack.c.l.b16 %v493
    %v4003 = vunpack.c.h.b16 %v493
    %v4004 = vunpack.c.l.b16 %v494
    %v4005 = vunpack.c.h.b16 %v494
    %v4006 = vunpack.c.l.b16 %v495
    %v4007 = vunpack.c.h.b16 %v495
    %v4008 = vunpack.c.l.b16 %v496
    %v4009 = vunpack.c.h.b16 %v496
    %v4010 = vunpack.c.l.b16 %v497
    %v4011 = vunpack.c.h.b16 %v497
    %v4012 = vunpack.c.l.b16 %v498
    %v4013 = vunpack.c.h.b16 %v498
    %v4014 = vunpack.c.l.b16 %v499
    %v4015 = vunpack.c.h.b16 %v499
    %v4016 = vunpack.c.l.b16 %v500
    %v4017 = vunpack.c.h.b16 %v500
    %v4018 = vunpack.c.l.b16 %v501
    %v4019 = vunpack.c.h.b16 %v501
    %v4020 = vunpack.c.l.b16 %v502
    %v4021 = vunpack.c.h.b16 %v502
    %v4022 = vunpack.c.l.b16 %v503
    %v4023 = vunpack.c.h.b16 %v503
    %v4024 = vunpack.c.l.b16 %v504
    %v4025 = vunpack.c.h.b16 %v504
    %v4026 = vunpack.c.l.b16 %v505
    %v4027 = vunpack.c.h.b16 %v505
    %v4028 = vunpack.c.l.b16 %v506
    %v4029 = vunpack.c.h.b16 %v506
    %v4030 = vunpack.c.l.b16 %v507
    %v4031 = vunpack.c.h.b16 %v507
    %v4032 = vunpack.c.l.b16 %v508
    %v4033 = vunpack.c.h.b16 %v508
    %v4034 = vunpack.c.l.b16 %v509
    %v4035 = vunpack.c.h.b16 %v509
    %v4036 = vunpack.c.l.b16 %v510
    %v4037 = vunpack.c.h.b16 %v510
    %v4038 = vunpack.c.l.b16 %v511
    %v4039 = vunpack.c.h.b16 %v511
    %v4040 = vunpack.c.l.b16 %v512
    %v4041 = vunpack.c.h.b16 %v512
    %v4042 = vunpack.c.l.b16 %v513
    %v4043 = vunpack.c.h.b16 %v513
    %v4044 = vunpack.c.l.b16 %v514
    %v4045 = vunpack.c.h.b16 %v514
    %v4046 = vunpack.c.l.b16 %v515
    %v4047 = vunpack.c.h.b16 %v515
    %v4048 = vunpack.c.l.b16 %v516
    %v4049 = vunpack.c.h.b16 %v516
    %v4050 = vunpack.c.l.b16 %v517
    %v4051 = vunpack.c.h.b16 %v517
    %v4052 = vunpack.c.l.b16 %v518
    %v4053 = vunpack.c.h.b16 %v518
    %v4054 = vunpack.c.l.b16 %v519
    %v4055 = vunpack.c.h.b16 %v519
    %v4056 = vunpack.c.l.b16 %v520
    %v4057 = vunpack.c.h.b16 %v520
    %v4058 = vunpack.c.l.b16 %v521
    %v4059 = vunpack.c.h.b16 %v521
    %v4060 = vunpack.c.l.b16 %v522
    %v4061 = vunpack.c.h.b16 %v522
    %v4062 = vunpack.c.l.b16 %v523
    %v4063 = vunpack.c.h.b16 %v523
    %v4064 = vunpack.c.l.b16 %v524
    %v4065 = vunpack.c.h.b16 %v524
    %v4066 = vunpack.c.l.b16 %v525
    %v4067 = vunpack.c.h.b16 %v525
    %v4068 = vunpack.c.l.b16 %v526
    %v4069 = vunpack.c.h.b16 %v526
    %v4070 = vunpack.c.l.b16 %v527
    %v4071 = vunpack.c.h.b16 %v527
    %v4072 = vunpack.c.l.b16 %v528
    %v4073 = vunpack.c.h.b16 %v528
    %v4074 = vunpack.c.l.b16 %v529
    %v4075 = vunpack.c.h.b16 %v529
    %v4076 = vunpack.c.l.b16 %v530
    %v4077 = vunpack.c.h.b16 %v530
    %v4078 = vunpack.c.l.b16 %v531
    %v4079 = vunpack.c.h.b16 %v531
    %v4080 = vunpack.c.l.b16 %v532
    %v4081 = vunpack.c.h.b16 %v532
    %v4082 = vunpack.c.l.b16 %v533
    %v4083 = vunpack.c.h.b16 %v533
    %v4084 = vunpack.c.l.b16 %v534
    %v4085 = vunpack.c.h.b16 %v534
    %v4086 = vunpack.c.l.b16 %v535
    %v4087 = vunpack.c.h.b16 %v535
    %v4088 = vunpack.c.l.b16 %v536
    %v4089 = vunpack.c.h.b16 %v536
    %v4090 = vunpack.c.l.b16 %v537
    %v4091 = vunpack.c.h.b16 %v537
    %v4092 = vunpack.c.l.b16 %v538
    %v4093 = vunpack.c.h.b16 %v538
    %v4094 = vunpack.c.l.b16 %v539
    %v4095 = vunpack.c.h.b16 %v539
    %v4096 = vunpack.c.l.b16 %v540
    %v4097 = vunpack.c.h.b16 %v540
    %v4098 = vunpack.c.l.b16 %v541
    %v4099 = vunpack.c.h.b16 %v541
    %v4100 = vunpack.c.l.b16 %v542
    %v4101 = vunpack.c.h.b16 %v542
    %v4102 = vunpack.c.l.b16 %v543
    %v4103 = vunpack.c.h.b16 %v543
    %v4104 = vunpack.c.l.b16 %v544
    %v4105 = vunpack.c.h.b16 %v544
    %v4106 = vunpack.c.l.b16 %v545
    %v4107 = vunpack.c.h.b16 %v545
    %v4108 = vunpack.c.l.b16 %v546
    %v4109 = vunpack.c.h.b16 %v546
    %v4110 = vunpack.c.l.b16 %v547
    %v4111 = vunpack.c.h.b16 %v547
    %v4112 = vunpack.c.l.b16 %v548
    %v4113 = vunpack.c.h.b16 %v548
    %v4114 = vunpack.c.l.b16 %v549
    %v4115 = vunpack.c.h.b16 %v549
    %v4116 = vunpack.c.l.b16 %v550
    %v4117 = vunpack.c.h.b16 %v550
    %v4118 = vunpack.c.l.b16 %v551
    %v4119 = vunpack.c.h.b16 %v551
    %v4120 = vunpack.c.l.b16 %v552
    %v4121 = vunpack.c.h.b16 %v552
    %v4122 = vunpack.c.l.b16 %v553
    %v4123 = vunpack.c.h.b16 %v553
    %v4124 = vunpack.c.l.b16 %v554
    %v4125 = vunpack.c.h.b16 %v554
    %v4126 = vunpack.c.l.b16 %v555
    %v4127 = vunpack.c.h.b16 %v555
    %v4128 = vunpack.c.l.b16 %v556
    %v4129 = vunpack.c.h.b16 %v556
    %v4130 = vunpack.c.l.b16 %v557
    %v4131 = vunpack.c.h.b16 %v557
    %v4132 = vunpack.c.l.b16 %v558
    %v4133 = vunpack.c.h.b16 %v558
    %v4134 = vunpack.c.l.b16 %v559
    %v4135 = vunpack.c.h.b16 %v559
    %v4136 = vunpack.c.l.b16 %v560
    %v4137 = vunpack.c.h.b16 %v560
    %v4138 = vunpack.c.l.b16 %v561
    %v4139 = vunpack.c.h.b16 %v561
    %v4140 = vunpack.c.l.b16 %v562
    %v4141 = vunpack.c.h.b16 %v562
    %v4142 = vunpack.c.l.b16 %v563
    %v4143 = vunpack.c.h.b16 %v563
    %v4144 = vunpack.c.l.b16 %v564
    %v4145 = vunpack.c.h.b16 %v564
    %v4146 = vunpack.c.l.b16 %v565
    %v4147 = vunpack.c.h.b16 %v565
    %v4148 = vunpack.c.l.b16 %v566
    %v4149 = vunpack.c.h.b16 %v566
    %v4150 = vunpack.c.l.b16 %v567
    %v4151 = vunpack.c.h.b16 %v567
    %v4152 = vunpack.c.l.b16 %v568
    %v4153 = vunpack.c.h.b16 %v568
    %v4154 = vunpack.c.l.b16 %v569
    %v4155 = vunpack.c.h.b16 %v569
    %v4156 = vunpack.c.l.b16 %v570
    %v4157 = vunpack.c.h.b16 %v570
    %v4158 = vunpack.c.l.b16 %v571
    %v4159 = vunpack.c.h.b16 %v571
    %v4160 = vunpack.c.l.b16 %v572
    %v4161 = vunpack.c.h.b16 %v572
    %v4162 = vunpack.c.l.b16 %v573
    %v4163 = vunpack.c.h.b16 %v573
    %v4164 = vunpack.c.l.b16 %v574
    %v4165 = vunpack.c.h.b16 %v574
    %v4166 = vunpack.c.l.b16 %v575
    %v4167 = vunpack.c.h.b16 %v575
    %v4168 = vunpack.c.l.b16 %v576
    %v4169 = vunpack.c.h.b16 %v576
    %v4170 = vunpack.c.l.b16 %v577
    %v4171 = vunpack.c.h.b16 %v577
    %v4172 = vunpack.c.l.b16 %v578
    %v4173 = vunpack.c.h.b16 %v578
    %v4174 = vunpack.c.l.b16 %v579
    %v4175 = vunpack.c.h.b16 %v579
    %v4176 = vunpack.c.l.b16 %v580
    %v4177 = vunpack.c.h.b16 %v580
    %v4178 = vunpack.c.l.b16 %v581
    %v4179 = vunpack.c.h.b16 %v581
    %v4180 = vunpack.c.l.b16 %v582
    %v4181 = vunpack.c.h.b16 %v582
    %v4182 = vunpack.c.l.b16 %v583
    %v4183 = vunpack.c.h.b16 %v583
    %v4184 = vunpack.c.l.b16 %v584
    %v4185 = vunpack.c.h.b16 %v584
    %v4186 = vunpack.c.l.b16 %v585
    %v4187 = vunpack.c.h.b16 %v585
    %v4188 = vunpack.c.l.b16 %v586
    %v4189 = vunpack.c.h.b16 %v586
    %v4190 = vunpack.c.l.b16 %v587
    %v4191 = vunpack.c.h.b16 %v587
    %v4192 = vunpack.c.l.b16 %v588
    %v4193 = vunpack.c.h.b16 %v588
    %v4194 = vunpack.c.l.b16 %v589
    %v4195 = vunpack.c.h.b16 %v589
    %v4196 = vunpack.c.l.b16 %v590
    %v4197 = vunpack.c.h.b16 %v590
    %v4198 = vunpack.c.l.b16 %v591
    %v4199 = vunpack.c.h.b16 %v591
    %v4200 = vunpack.c.l.b16 %v592
    %v4201 = vunpack.c.h.b16 %v592
    %v4202 = vunpack.c.l.b16 %v593
    %v4203 = vunpack.c.h.b16 %v593
    %v4204 = vunpack.c.l.b16 %v594
    %v4205 = vunpack.c.h.b16 %v594
    %v4206 = vunpack.c.l.b16 %v595
    %v4207 = vunpack.c.h.b16 %v595
    %v4208 = vunpack.c.l.b16 %v596
    %v4209 = vunpack.c.h.b16 %v596
    %v4210 = vunpack.c.l.b16 %v597
    %v4211 = vunpack.c.h.b16 %v597
    %v4212 = vunpack.c.l.b16 %v598
    %v4213 = vunpack.c.h.b16 %v598
    %v4214 = vunpack.c.l.b16 %v599
    %v4215 = vunpack.c.h.b16 %v599
    %v4216 = vunpack.c.l.b16 %v600
    %v4217 = vunpack.c.h.b16 %v600
    %v4218 = vunpack.c.l.b16 %v601
    %v4219 = vunpack.c.h.b16 %v601
    %v4220 = vunpack.c.l.b16 %v602
    %v4221 = vunpack.c.h.b16 %v602
    %v4222 = vunpack.c.l.b16 %v603
    %v4223 = vunpack.c.h.b16 %v603
    %v4224 = vunpack.c.l.b16 %v604
    %v4225 = vunpack.c.h.b16 %v604
    %v4226 = vunpack.c.l.b16 %v605
    %v4227 = vunpack.c.h.b16 %v605
    %v4228 = vunpack.c.l.b16 %v606
    %v4229 = vunpack.c.h.b16 %v606
    %v4230 = vunpack.c.l.b16 %v607
    %v4231 = vunpack.c.h.b16 %v607
    %v4232 = vunpack.c.l.b16 %v608
    %v4233 = vunpack.c.h.b16 %v608
    %v4234 = vunpack.c.l.b16 %v609
    %v4235 = vunpack.c.h.b16 %v609
    %v4236 = vunpack.c.l.b16 %v610
    %v4237 = vunpack.c.h.b16 %v610
    %v4238 = vunpack.c.l.b16 %v611
    %v4239 = vunpack.c.h.b16 %v611
    %v4240 = vunpack.c.l.b16 %v612
    %v4241 = vunpack.c.h.b16 %v612
    %v4242 = vunpack.c.l.b16 %v613
    %v4243 = vunpack.c.h.b16 %v613
    %v4244 = vunpack.c.l.b16 %v614
    %v4245 = vunpack.c.h.b16 %v614
    %v4246 = vunpack.c.l.b16 %v615
    %v4247 = vunpack.c.h.b16 %v615
    %v4248 = vunpack.c.l.b16 %v616
    %v4249 = vunpack.c.h.b16 %v616
    %v4250 = vunpack.c.l.b16 %v617
    %v4251 = vunpack.c.h.b16 %v617
    %v4252 = vunpack.c.l.b16 %v618
    %v4253 = vunpack.c.h.b16 %v618
    %v4254 = vunpack.c.l.b16 %v619
    %v4255 = vunpack.c.h.b16 %v619
    %v4256 = vunpack.c.l.b16 %v620
    %v4257 = vunpack.c.h.b16 %v620
    %v4258 = vunpack.c.l.b16 %v621
    %v4259 = vunpack.c.h.b16 %v621
    %v4260 = vunpack.c.l.b16 %v622
    %v4261 = vunpack.c.h.b16 %v622
    %v4262 = vunpack.c.l.b16 %v623
    %v4263 = vunpack.c.h.b16 %v623
    %v4264 = vunpack.c.l.b16 %v624
    %v4265 = vunpack.c.h.b16 %v624
    %v4266 = vunpack.c.l.b16 %v625
    %v4267 = vunpack.c.h.b16 %v625
    %v4268 = vunpack.c.l.b16 %v626
    %v4269 = vunpack.c.h.b16 %v626
    %v4270 = vunpack.c.l.b16 %v627
    %v4271 = vunpack.c.h.b16 %v627
    %v4272 = vunpack.c.l.b16 %v628
    %v4273 = vunpack.c.h.b16 %v628
    %v4274 = vunpack.c.l.b16 %v629
    %v4275 = vunpack.c.h.b16 %v629
    %v4276 = vunpack.c.l.b16 %v630
    %v4277 = vunpack.c.h.b16 %v630
    %v4278 = vunpack.c.l.b16 %v631
    %v4279 = vunpack.c.h.b16 %v631
    %v4280 = vunpack.c.l.b16 %v632
    %v4281 = vunpack.c.h.b16 %v632
    %v4282 = vunpack.c.l.b16 %v633
    %v4283 = vunpack.c.h.b16 %v633
    %v4284 = vunpack.c.l.b16 %v634
    %v4285 = vunpack.c.h.b16 %v634
    %v4286 = vunpack.c.l.b16 %v635
    %v4287 = vunpack.c.h.b16 %v635
    %v4288 = vunpack.c.l.b16 %v636
    %v4289 = vunpack.c.h.b16 %v636
    %v4290 = vunpack.c.l.b16 %v637
    %v4291 = vunpack.c.h.b16 %v637
    %v4292 = vunpack.c.l.b16 %v638
    %v4293 = vunpack.c.h.b16 %v638
    %v4294 = vunpack.c.l.b16 %v639
    %v4295 = vunpack.c.h.b16 %v639
    %v4296 = vunpack.c.l.b16 %v640
    %v4297 = vunpack.c.h.b16 %v640
    %v4298 = vunpack.c.l.b16 %v641
    %v4299 = vunpack.c.h.b16 %v641
    %v4300 = vunpack.c.l.b16 %v642
    %v4301 = vunpack.c.h.b16 %v642
    %v4302 = vunpack.c.l.b16 %v643
    %v4303 = vunpack.c.h.b16 %v643
    %v4304 = vunpack.c.l.b16 %v644
    %v4305 = vunpack.c.h.b16 %v644
    %v4306 = vunpack.c.l.b16 %v645
    %v4307 = vunpack.c.h.b16 %v645
    %v4308 = vunpack.c.l.b16 %v646
    %v4309 = vunpack.c.h.b16 %v646
    %v4310 = vunpack.c.l.b16 %v647
    %v4311 = vunpack.c.h.b16 %v647
    %v4312 = vunpack.c.l.b16 %v648
    %v4313 = vunpack.c.h.b16 %v648
    %v4314 = vunpack.c.l.b16 %v649
    %v4315 = vunpack.c.h.b16 %v649
    %v4316 = vunpack.c.l.b16 %v650
    %v4317 = vunpack.c.h.b16 %v650
    %v4318 = vunpack.c.l.b16 %v651
    %v4319 = vunpack.c.h.b16 %v651
    %v4320 = vunpack.c.l.b16 %v652
    %v4321 = vunpack.c.h.b16 %v652
    %v4322 = vunpack.c.l.b16 %v653
    %v4323 = vunpack.c.h.b16 %v653
    %v4324 = vunpack.c.l.b16 %v654
    %v4325 = vunpack.c.h.b16 %v654
    %v4326 = vunpack.c.l.b16 %v655
    %v4327 = vunpack.c.h.b16 %v655
    %v4328 = vunpack.c.l.b16 %v656
    %v4329 = vunpack.c.h.b16 %v656
    %v4330 = vunpack.c.l.b16 %v657
    %v4331 = vunpack.c.h.b16 %v657
    %v4332 = vunpack.c.l.b16 %v658
    %v4333 = vunpack.c.h.b16 %v658
    %v4334 = vunpack.c.l.b16 %v659
    %v4335 = vunpack.c.h.b16 %v659
    %v4336 = vunpack.c.l.b16 %v660
    %v4337 = vunpack.c.h.b16 %v660
    %v4338 = vunpack.c.l.b16 %v661
    %v4339 = vunpack.c.h.b16 %v661
    %v4340 = vunpack.c.l.b16 %v662
    %v4341 = vunpack.c.h.b16 %v662
    %v4342 = vunpack.c.l.b16 %v663
    %v4343 = vunpack.c.h.b16 %v663
    %v4344 = vunpack.c.l.b16 %v664
    %v4345 = vunpack.c.h.b16 %v664
    %v4346 = vunpack.c.l.b16 %v665
    %v4347 = vunpack.c.h.b16 %v665
    %v4348 = vunpack.c.l.b16 %v666
    %v4349 = vunpack.c.h.b16 %v666
    %v4350 = vunpack.c.l.b16 %v667
    %v4351 = vunpack.c.h.b16 %v667
    %v4352 = vunpack.c.l.b16 %v668
    %v4353 = vunpack.c.h.b16 %v668
    %v4354 = vunpack.c.l.b16 %v669
    %v4355 = vunpack.c.h.b16 %v669
    %v4356 = vunpack.c.l.b16 %v670
    %v4357 = vunpack.c.h.b16 %v670
    %v4358 = vunpack.c.l.b16 %v671
    %v4359 = vunpack.c.h.b16 %v671
    %v4360 = vunpack.c.l.b16 %v672
    %v4361 = vunpack.c.h.b16 %v672
    %v4362 = vunpack.c.l.b16 %v673
    %v4363 = vunpack.c.h.b16 %v673
    %v4364 = vunpack.c.l.b16 %v674
    %v4365 = vunpack.c.h.b16 %v674
    %v4366 = vunpack.c.l.b16 %v675
    %v4367 = vunpack.c.h.b16 %v675
    %v4368 = vunpack.c.l.b16 %v676
    %v4369 = vunpack.c.h.b16 %v676
    %v4370 = vunpack.c.l.b16 %v677
    %v4371 = vunpack.c.h.b16 %v677
    %v4372 = vunpack.c.l.b16 %v678
    %v4373 = vunpack.c.h.b16 %v678
    %v4374 = vunpack.c.l.b16 %v679
    %v4375 = vunpack.c.h.b16 %v679
    %v4376 = vunpack.c.l.b16 %v680
    %v4377 = vunpack.c.h.b16 %v680
    %v4378 = vunpack.c.l.b16 %v681
    %v4379 = vunpack.c.h.b16 %v681
    %v4380 = vunpack.c.l.b16 %v682
    %v4381 = vunpack.c.h.b16 %v682
    %v4382 = vunpack.c.l.b16 %v683
    %v4383 = vunpack.c.h.b16 %v683
    %v4384 = vunpack.c.l.b16 %v684
    %v4385 = vunpack.c.h.b16 %v684
    %v4386 = vunpack.c.l.b16 %v685
    %v4387 = vunpack.c.h.b16 %v685
    %v4388 = vunpack.c.l.b16 %v686
    %v4389 = vunpack.c.h.b16 %v686
    %v4390 = vunpack.c.l.b16 %v687
    %v4391 = vunpack.c.h.b16 %v687
    %v4392 = vunpack.c.l.b16 %v688
    %v4393 = vunpack.c.h.b16 %v688
    %v4394 = vunpack.c.l.b16 %v689
    %v4395 = vunpack.c.h.b16 %v689
    %v4396 = vunpack.c.l.b16 %v690
    %v4397 = vunpack.c.h.b16 %v690
    %v4398 = vunpack.c.l.b16 %v691
    %v4399 = vunpack.c.h.b16 %v691
    %v4400 = vunpack.c.l.b16 %v692
    %v4401 = vunpack.c.h.b16 %v692
    %v4402 = vunpack.c.l.b16 %v693
    %v4403 = vunpack.c.h.b16 %v693
    %v4404 = vunpack.c.l.b16 %v694
    %v4405 = vunpack.c.h.b16 %v694
    %v4406 = vunpack.c.l.b16 %v695
    %v4407 = vunpack.c.h.b16 %v695
    %v4408 = vunpack.c.l.b16 %v696
    %v4409 = vunpack.c.h.b16 %v696
    %v4410 = vunpack.c.l.b16 %v697
    %v4411 = vunpack.c.h.b16 %v697
    %v4412 = vunpack.c.l.b16 %v698
    %v4413 = vunpack.c.h.b16 %v698
    %v4414 = vunpack.c.l.b16 %v699
    %v4415 = vunpack.c.h.b16 %v699
    %v4416 = vunpack.c.l.b16 %v700
    %v4417 = vunpack.c.h.b16 %v700
    %v4418 = vunpack.c.l.b16 %v701
    %v4419 = vunpack.c.h.b16 %v701
    %v4420 = vunpack.c.l.b16 %v702
    %v4421 = vunpack.c.h.b16 %v702
    %v4422 = vunpack.c.l.b16 %v703
    %v4423 = vunpack.c.h.b16 %v703
    %v4424 = vunpack.c.l.b16 %v704
    %v4425 = vunpack.c.h.b16 %v704
    %v4426 = vunpack.c.l.b16 %v705
    %v4427 = vunpack.c.h.b16 %v705
    %v4428 = vunpack.c.l.b16 %v706
    %v4429 = vunpack.c.h.b16 %v706
    %v4430 = vunpack.c.l.b16 %v707
    %v4431 = vunpack.c.h.b16 %v707
    %v4432 = vunpack.c.l.b16 %v708
    %v4433 = vunpack.c.h.b16 %v708
    %v4434 = vunpack.c.l.b16 %v709
    %v4435 = vunpack.c.h.b16 %v709
    %v4436 = vunpack.c.l.b16 %v710
    %v4437 = vunpack.c.h.b16 %v710
    %v4438 = vunpack.c.l.b16 %v711
    %v4439 = vunpack.c.h.b16 %v711
    %v4440 = vunpack.c.l.b16 %v712
    %v4441 = vunpack.c.h.b16 %v712
    %v4442 = vunpack.c.l.b16 %v713
    %v4443 = vunpack.c.h.b16 %v713
    %v4444 = vunpack.c.l.b16 %v714
    %v4445 = vunpack.c.h.b16 %v714
    %v4446 = vunpack.c.l.b16 %v715
    %v4447 = vunpack.c.h.b16 %v715
    %v4448 = vunpack.c.l.b16 %v716
    %v4449 = vunpack.c.h.b16 %v716
    %v4450 = vunpack.c.l.b16 %v717
    %v4451 = vunpack.c.h.b16 %v717
    %v4452 = vunpack.c.l.b16 %v718
    %v4453 = vunpack.c.h.b16 %v718
    %v4454 = vunpack.c.l.b16 %v719
    %v4455 = vunpack.c.h.b16 %v719
    %v4456 = vunpack.c.l.b16 %v720
    %v4457 = vunpack.c.h.b16 %v720
    %v4458 = vunpack.c.l.b16 %v721
    %v4459 = vunpack.c.h.b16 %v721
    %v4460 = vunpack.c.l.b16 %v722
    %v4461 = vunpack.c.h.b16 %v722
    %v4462 = vunpack.c.l.b16 %v723
    %v4463 = vunpack.c.h.b16 %v723
    %v4464 = vunpack.c.l.b16 %v724
    %v4465 = vunpack.c.h.b16 %v724
    %v4466 = vunpack.c.l.b16 %v725
    %v4467 = vunpack.c.h.b16 %v725
    %v4468 = vunpack.c.l.b16 %v726
    %v4469 = vunpack.c.h.b16 %v726
    %v4470 = vunpack.c.l.b16 %v727
    %v4471 = vunpack.c.h.b16 %v727
    %v4472 = vunpack.c.l.b16 %v728
    %v4473 = vunpack.c.h.b16 %v728
    %v4474 = vunpack.c.l.b16 %v729
    %v4475 = vunpack.c.h.b16 %v729
    %v4476 = vunpack.c.l.b16 %v730
    %v4477 = vunpack.c.h.b16 %v730
    %v4478 = vunpack.c.l.b16 %v731
    %v4479 = vunpack.c.h.b16 %v731
    %v4480 = vunpack.c.l.b16 %v732
    %v4481 = vunpack.c.h.b16 %v732
    %v4482 = vunpack.c.l.b16 %v733
    %v4483 = vunpack.c.h.b16 %v733
    %v4484 = vunpack.c.l.b16 %v734
    %v4485 = vunpack.c.h.b16 %v734
    %v4486 = vunpack.c.l.b16 %v735
    %v4487 = vunpack.c.h.b16 %v735
    %v4488 = vunpack.c.l.b16 %v736
    %v4489 = vunpack.c.h.b16 %v736
    %v4490 = vunpack.c.l.b16 %v737
    %v4491 = vunpack.c.h.b16 %v737
    %v4492 = vunpack.c.l.b16 %v738
    %v4493 = vunpack.c.h.b16 %v738
    %v4494 = vunpack.c.l.b16 %v739
    %v4495 = vunpack.c.h.b16 %v739
    %v4496 = vunpack.c.l.b16 %v740
    %v4497 = vunpack.c.h.b16 %v740
    %v4498 = vunpack.c.l.b16 %v741
    %v4499 = vunpack.c.h.b16 %v741
    %v4500 = vunpack.c.l.b16 %v742
    %v4501 = vunpack.c.h.b16 %v742
    %v4502 = vunpack.c.l.b16 %v743
    %v4503 = vunpack.c.h.b16 %v743
    %v4504 = vunpack.c.l.b16 %v744
    %v4505 = vunpack.c.h.b16 %v744
    %v4506 = vunpack.c.l.b16 %v745
    %v4507 = vunpack.c.h.b16 %v745
    %v4508 = vunpack.c.l.b16 %v746
    %v4509 = vunpack.c.h.b16 %v746
    %v4510 = vunpack.c.l.b16 %v747
    %v4511 = vunpack.c.h.b16 %v747
    %v4512 = vunpack.c.l.b16 %v748
    %v4513 = vunpack.c.h.b16 %v748
    %v4514 = vunpack.c.l.b16 %v749
    %v4515 = vunpack.c.h.b16 %v749
    %v4516 = vunpack.c.l.b16 %v750
    %v4517 = vunpack.c.h.b16 %v750
    %v4518 = vunpack.c.l.b16 %v751
    %v4519 = vunpack.c.h.b16 %v751
    %v4520 = vunpack.c.l.b16 %v752
    %v4521 = vunpack.c.h.b16 %v752
    %v4522 = vunpack.c.l.b16 %v753
    %v4523 = vunpack.c.h.b16 %v753
    %v4524 = vunpack.c.l.b16 %v754
    %v4525 = vunpack.c.h.b16 %v754
    %v4526 = vunpack.c.l.b16 %v755
    %v4527 = vunpack.c.h.b16 %v755
    %v4528 = vunpack.c.l.b16 %v756
    %v4529 = vunpack.c.h.b16 %v756
    %v4530 = vunpack.c.l.b16 %v757
    %v4531 = vunpack.c.h.b16 %v757
    %v4532 = vunpack.c.l.b16 %v758
    %v4533 = vunpack.c.h.b16 %v758
    %v4534 = vunpack.c.l.b16 %v759
    %v4535 = vunpack.c.h.b16 %v759
    %v4536 = vunpack.c.l.b16 %v760
    %v4537 = vunpack.c.h.b16 %v760
    %v4538 = vunpack.c.l.b16 %v761
    %v4539 = vunpack.c.h.b16 %v761
    %v4540 = vunpack.c.l.b16 %v762
    %v4541 = vunpack.c.h.b16 %v762
    %v4542 = vunpack.c.l.b16 %v763
    %v4543 = vunpack.c.h.b16 %v763
    %v4544 = vunpack.c.l.b16 %v764
    %v4545 = vunpack.c.h.b16 %v764
    %v4546 = vunpack.c.l.b16 %v765
    %v4547 = vunpack.c.h.b16 %v765
    %v4548 = vunpack.c.l.b16 %v766
    %v4549 = vunpack.c.h.b16 %v766
    %v4550 = vunpack.c.l.b16 %v767
    %v4551 = vunpack.c.h.b16 %v767
    %v4552 = vunpack.c.l.b16 %v768
    %v4553 = vunpack.c.h.b16 %v768
    %v4554 = vunpack.c.l.b16 %v769
    %v4555 = vunpack.c.h.b16 %v769
    %v4556 = vunpack.c.l.b16 %v770
    %v4557 = vunpack.c.h.b16 %v770
    %v4558 = vunpack.c.l.b16 %v771
    %v4559 = vunpack.c.h.b16 %v771
    %v4560 = vunpack.c.l.b16 %v772
    %v4561 = vunpack.c.h.b16 %v772
    %v4562 = vunpack.c.l.b16 %v773
    %v4563 = vunpack.c.h.b16 %v773
    %v4564 = vunpack.c.l.b16 %v774
    %v4565 = vunpack.c.h.b16 %v774
    %v4566 = vunpack.c.l.b16 %v775
    %v4567 = vunpack.c.h.b16 %v775
    %v4568 = vunpack.c.l.b16 %v776
    %v4569 = vunpack.c.h.b16 %v776
    %v4570 = vunpack.c.l.b16 %v777
    %v4571 = vunpack.c.h.b16 %v777
    %v4572 = vunpack.c.l.b16 %v778
    %v4573 = vunpack.c.h.b16 %v778
    %v4574 = vunpack.c.l.b16 %v779
    %v4575 = vunpack.c.h.b16 %v779
    %v4576 = vunpack.c.l.b16 %v780
    %v4577 = vunpack.c.h.b16 %v780
    %v4578 = vunpack.c.l.b16 %v781
    %v4579 = vunpack.c.h.b16 %v781
    %v4580 = vunpack.c.l.b16 %v782
    %v4581 = vunpack.c.h.b16 %v782
    %v4582 = vunpack.c.l.b16 %v783
    %v4583 = vunpack.c.h.b16 %v783
    %v4584 = vunpack.c.l.b16 %v784
    %v4585 = vunpack.c.h.b16 %v784
    %v4586 = vunpack.c.l.b16 %v785
    %v4587 = vunpack.c.h.b16 %v785
    %v4588 = vunpack.c.l.b16 %v786
    %v4589 = vunpack.c.h.b16 %v786
    %v4590 = vunpack.c.l.b16 %v787
    %v4591 = vunpack.c.h.b16 %v787
    %v4592 = vunpack.c.l.b16 %v788
    %v4593 = vunpack.c.h.b16 %v788
    %v4594 = vunpack.c.l.b16 %v789
    %v4595 = vunpack.c.h.b16 %v789
    %v4596 = vunpack.c.l.b16 %v790
    %v4597 = vunpack.c.h.b16 %v790
    %v4598 = vunpack.c.l.b16 %v791
    %v4599 = vunpack.c.h.b16 %v791
    %v4600 = vunpack.c.l.b16 %v792
    %v4601 = vunpack.c.h.b16 %v792
    %v4602 = vunpack.c.l.b16 %v793
    %v4603 = vunpack.c.h.b16 %v793
    %v4604 = vunpack.c.l.b16 %v794
    %v4605 = vunpack.c.h.b16 %v794
    %v4606 = vunpack.c.l.b16 %v795
    %v4607 = vunpack.c.h.b16 %v795
    %v4608 = vunpack.c.l.b16 %v796
    %v4609 = vunpack.c.h.b16 %v796
    %v4610 = vunpack.c.l.b16 %v797
    %v4611 = vunpack.c.h.b16 %v797
    %v4612 = vunpack.c.l.b16 %v798
    %v4613 = vunpack.c.h.b16 %v798
    %v4614 = vunpack.c.l.b16 %v799
    %v4615 = vunpack.c.h.b16 %v799
    %v4616 = vunpack.c.l.b16 %v800
    %v4617 = vunpack.c.h.b16 %v800
    %v4618 = vunpack.c.l.b16 %v801
    %v4619 = vunpack.c.h.b16 %v801
    %v4620 = vunpack.c.l.b16 %v802
    %v4621 = vunpack.c.h.b16 %v802
    %v4622 = vunpack.c.l.b16 %v803
    %v4623 = vunpack.c.h.b16 %v803
    %v4624 = vunpack.c.l.b16 %v804
    %v4625 = vunpack.c.h.b16 %v804
    %v4626 = vunpack.c.l.b16 %v805
    %v4627 = vunpack.c.h.b16 %v805
    %v4628 = vunpack.c.l.b16 %v806
    %v4629 = vunpack.c.h.b16 %v806
    %v4630 = vunpack.c.l.b16 %v807
    %v4631 = vunpack.c.h.b16 %v807
    %v4632 = vunpack.c.l.b16 %v808
    %v4633 = vunpack.c.h.b16 %v808
    %v4634 = vunpack.c.l.b16 %v809
    %v4635 = vunpack.c.h.b16 %v809
    %v4636 = vunpack.c.l.b16 %v810
    %v4637 = vunpack.c.h.b16 %v810
    %v4638 = vunpack.c.l.b16 %v811
    %v4639 = vunpack.c.h.b16 %v811
    %v4640 = vunpack.c.l.b16 %v812
    %v4641 = vunpack.c.h.b16 %v812
    %v4642 = vunpack.c.l.b16 %v813
    %v4643 = vunpack.c.h.b16 %v813
    %v4644 = vunpack.c.l.b16 %v814
    %v4645 = vunpack.c.h.b16 %v814
    %v4646 = vunpack.c.l.b16 %v815
    %v4647 = vunpack.c.h.b16 %v815
    %v4648 = vunpack.c.l.b16 %v816
    %v4649 = vunpack.c.h.b16 %v816
    %v4650 = vunpack.c.l.b16 %v817
    %v4651 = vunpack.c.h.b16 %v817
    %v4652 = vunpack.c.l.b16 %v818
    %v4653 = vunpack.c.h.b16 %v818
    %v4654 = vunpack.c.l.b16 %v819
    %v4655 = vunpack.c.h.b16 %v819
    %v4656 = vunpack.c.l.b16 %v820
    %v4657 = vunpack.c.h.b16 %v820
    %v4658 = vunpack.c.l.b16 %v821
    %v4659 = vunpack.c.h.b16 %v821
    %v4660 = vunpack.c.l.b16 %v822
    %v4661 = vunpack.c.h.b16 %v822
    %v4662 = vunpack.c.l.b16 %v823
    %v4663 = vunpack.c.h.b16 %v823
    %v4664 = vunpack.c.l.b16 %v824
    %v4665 = vunpack.c.h.b16 %v824
    %v4666 = vunpack.c.l.b16 %v825
    %v4667 = vunpack.c.h.b16 %v825
    %v4668 = vunpack.c.l.b16 %v826
    %v4669 = vunpack.c.h.b16 %v826
    %v4670 = vunpack.c.l.b16 %v827
    %v4671 = vunpack.c.h.b16 %v827
    %v4672 = vunpack.c.l.b16 %v828
    %v4673 = vunpack.c.h.b16 %v828
    %v4674 = vunpack.c.l.b16 %v829
    %v4675 = vunpack.c.h.b16 %v829
    %v4676 = vunpack.c.l.b16 %v830
    %v4677 = vunpack.c.h.b16 %v830
    %v4678 = vunpack.c.l.b16 %v831
    %v4679 = vunpack.c.h.b16 %v831
    %v4680 = vunpack.c.l.b16 %v832
    %v4681 = vunpack.c.h.b16 %v832
    %v4682 = vunpack.c.l.b16 %v833
    %v4683 = vunpack.c.h.b16 %v833
    %v4684 = vunpack.c.l.b16 %v834
    %v4685 = vunpack.c.h.b16 %v834
    %v4686 = vunpack.c.l.b16 %v835
    %v4687 = vunpack.c.h.b16 %v835
    %v4688 = vunpack.c.l.b16 %v836
    %v4689 = vunpack.c.h.b16 %v836
    %v4690 = vunpack.c.l.b16 %v837
    %v4691 = vunpack.c.h.b16 %v837
    %v4692 = vunpack.c.l.b16 %v838
    %v4693 = vunpack.c.h.b16 %v838
    %v4694 = vunpack.c.l.b16 %v839
    %v4695 = vunpack.c.h.b16 %v839
    %v4696 = vunpack.c.l.b16 %v840
    %v4697 = vunpack.c.h.b16 %v840
    %v4698 = vunpack.c.l.b16 %v841
    %v4699 = vunpack.c.h.b16 %v841
    %v4700 = vunpack.c.l.b16 %v842
    %v4701 = vunpack.c.h.b16 %v842
    %v4702 = vunpack.c.l.b16 %v843
    %v4703 = vunpack.c.h.b16 %v843
    %v4704 = vunpack.c.l.b16 %v844
    %v4705 = vunpack.c.h.b16 %v844
    %v4706 = vunpack.c.l.b16 %v845
    %v4707 = vunpack.c.h.b16 %v845
    %v4708 = vunpack.c.l.b16 %v846
    %v4709 = vunpack.c.h.b16 %v846
    %v4710 = vunpack.c.l.b16 %v847
    %v4711 = vunpack.c.h.b16 %v847
    %v4712 = vunpack.c.l.b16 %v848
    %v4713 = vunpack.c.h.b16 %v848
    %v4714 = vunpack.c.l.b16 %v849
    %v4715 = vunpack.c.h.b16 %v849
    %v4716 = vunpack.c.l.b16 %v850
    %v4717 = vunpack.c.h.b16 %v850
    %v4718 = vunpack.c.l.b16 %v851
    %v4719 = vunpack.c.h.b16 %v851
    %v4720 = vunpack.c.l.b16 %v852
    %v4721 = vunpack.c.h.b16 %v852
    %v4722 = vunpack.c.l.b16 %v853
    %v4723 = vunpack.c.h.b16 %v853
    %v4724 = vunpack.c.l.b16 %v854
    %v4725 = vunpack.c.h.b16 %v854
    %v4726 = vunpack.c.l.b16 %v855
    %v4727 = vunpack.c.h.b16 %v855
    %v4728 = vunpack.c.l.b16 %v856
    %v4729 = vunpack.c.h.b16 %v856
    %v4730 = vunpack.c.l.b16 %v857
    %v4731 = vunpack.c.h.b16 %v857
    %v4732 = vunpack.c.l.b16 %v858
    %v4733 = vunpack.c.h.b16 %v858
    %v4734 = vunpack.c.l.b16 %v859
    %v4735 = vunpack.c.h.b16 %v859
    %v4736 = vunpack.c.l.b16 %v860
    %v4737 = vunpack.c.h.b16 %v860
    %v4738 = vunpack.c.l.b16 %v861
    %v4739 = vunpack.c.h.b16 %v861
    %v4740 = vunpack.c.l.b16 %v862
    %v4741 = vunpack.c.h.b16 %v862
    %v4742 = vunpack.c.l.b16 %v863
    %v4743 = vunpack.c.h.b16 %v863
    %v4744 = vunpack.c.l.b16 %v864
    %v4745 = vunpack.c.h.b16 %v864
    %v4746 = vunpack.c.l.b16 %v865
    %v4747 = vunpack.c.h.b16 %v865
    %v4748 = vunpack.c.l.b16 %v866
    %v4749 = vunpack.c.h.b16 %v866
    %v4750 = vunpack.c.l.b16 %v867
    %v4751 = vunpack.c.h.b16 %v867
    %v4752 = vunpack.c.l.b16 %v868
    %v4753 = vunpack.c.h.b16 %v868
    %v4754 = vunpack.c.l.b16 %v869
    %v4755 = vunpack.c.h.b16 %v869
    %v4756 = vunpack.c.l.b16 %v870
    %v4757 = vunpack.c.h.b16 %v870
    %v4758 = vunpack.c.l.b16 %v871
    %v4759 = vunpack.c.h.b16 %v871
    %v4760 = vunpack.c.l.b16 %v872
    %v4761 = vunpack.c.h.b16 %v872
    %v4762 = vunpack.c.l.b16 %v873
    %v4763 = vunpack.c.h.b16 %v873
    %v4764 = vunpack.c.l.b16 %v874
    %v4765 = vunpack.c.h.b16 %v874
    %v4766 = vunpack.c.l.b16 %v875
    %v4767 = vunpack.c.h.b16 %v875
    %v4768 = vunpack.c.l.b16 %v876
    %v4769 = vunpack.c.h.b16 %v876
    %v4770 = vunpack.c.l.b16 %v877
    %v4771 = vunpack.c.h.b16 %v877
    %v4772 = vunpack.c.l.b16 %v878
    %v4773 = vunpack.c.h.b16 %v878
    %v4774 = vunpack.c.l.b16 %v879
    %v4775 = vunpack.c.h.b16 %v879
    %v4776 = vunpack.c.l.b16 %v880
    %v4777 = vunpack.c.h.b16 %v880
    %v4778 = vunpack.c.l.b16 %v881
    %v4779 = vunpack.c.h.b16 %v881
    %v4780 = vunpack.c.l.b16 %v882
    %v4781 = vunpack.c.h.b16 %v882
    %v4782 = vunpack.c.l.b16 %v883
    %v4783 = vunpack.c.h.b16 %v883
    %v4784 = vunpack.c.l.b16 %v884
    %v4785 = vunpack.c.h.b16 %v884
    %v4786 = vunpack.c.l.b16 %v885
    %v4787 = vunpack.c.h.b16 %v885
    %v4788 = vunpack.c.l.b16 %v886
    %v4789 = vunpack.c.h.b16 %v886
    %v4790 = vunpack.c.l.b16 %v887
    %v4791 = vunpack.c.h.b16 %v887
    %v4792 = vunpack.c.l.b16 %v888
    %v4793 = vunpack.c.h.b16 %v888
    %v4794 = vunpack.c.l.b16 %v889
    %v4795 = vunpack.c.h.b16 %v889
    %v4796 = vunpack.c.l.b16 %v890
    %v4797 = vunpack.c.h.b16 %v890
    %v4798 = vunpack.c.l.b16 %v891
    %v4799 = vunpack.c.h.b16 %v891
    %v4800 = vunpack.c.l.b16 %v892
    %v4801 = vunpack.c.h.b16 %v892
    %v4802 = vunpack.c.l.b16 %v893
    %v4803 = vunpack.c.h.b16 %v893
    %v4804 = vunpack.c.l.b16 %v894
    %v4805 = vunpack.c.h.b16 %v894
    %v4806 = vunpack.c.l.b16 %v895
    %v4807 = vunpack.c.h.b16 %v895
    %v4808 = vunpack.c.l.b16 %v896
    %v4809 = vunpack.c.h.b16 %v896
    %v4810 = vunpack.c.l.b16 %v897
    %v4811 = vunpack.c.h.b16 %v897
    %v4812 = vunpack.c.l.b16 %v898
    %v4813 = vunpack.c.h.b16 %v898
    %v4814 = vunpack.c.l.b16 %v899
    %v4815 = vunpack.c.h.b16 %v899
    %v4816 = vunpack.c.l.b16 %v900
    %v4817 = vunpack.c.h.b16 %v900
    %v4818 = vunpack.c.l.b16 %v901
    %v4819 = vunpack.c.h.b16 %v901
    %v4820 = vunpack.c.l.b16 %v902
    %v4821 = vunpack.c.h.b16 %v902
    %v4822 = vunpack.c.l.b16 %v903
    %v4823 = vunpack.c.h.b16 %v903
    %v4824 = vunpack.c.l.b16 %v904
    %v4825 = vunpack.c.h.b16 %v904
    %v4826 = vunpack.c.l.b16 %v905
    %v4827 = vunpack.c.h.b16 %v905
    %v4828 = vunpack.c.l.b16 %v906
    %v4829 = vunpack.c.h.b16 %v906
    %v4830 = vunpack.c.l.b16 %v907
    %v4831 = vunpack.c.h.b16 %v907
    %v4832 = vunpack.c.l.b16 %v908
    %v4833 = vunpack.c.h.b16 %v908
    %v4834 = vunpack.c.l.b16 %v909
    %v4835 = vunpack.c.h.b16 %v909
    %v4836 = vunpack.c.l.b16 %v910
    %v4837 = vunpack.c.h.b16 %v910
    %v4838 = vunpack.c.l.b16 %v911
    %v4839 = vunpack.c.h.b16 %v911
    %v4840 = vunpack.c.l.b16 %v912
    %v4841 = vunpack.c.h.b16 %v912
    %v4842 = vunpack.c.l.b16 %v913
    %v4843 = vunpack.c.h.b16 %v913
    %v4844 = vunpack.c.l.b16 %v914
    %v4845 = vunpack.c.h.b16 %v914
    %v4846 = vunpack.c.l.b16 %v915
    %v4847 = vunpack.c.h.b16 %v915
    %v4848 = vunpack.c.l.b16 %v916
    %v4849 = vunpack.c.h.b16 %v916
    %v4850 = vunpack.c.l.b16 %v917
    %v4851 = vunpack.c.h.b16 %v917
    %v4852 = vunpack.c.l.b16 %v918
    %v4853 = vunpack.c.h.b16 %v918
    %v4854 = vunpack.c.l.b16 %v919
    %v4855 = vunpack.c.h.b16 %v919
    %v4856 = vunpack.c.l.b16 %v920
    %v4857 = vunpack.c.h.b16 %v920
    %v4858 = vunpack.c.l.b16 %v921
    %v4859 = vunpack.c.h.b16 %v921
    %v4860 = vunpack.c.l.b16 %v922
    %v4861 = vunpack.c.h.b16 %v922
    %v4862 = vunpack.c.l.b16 %v923
    %v4863 = vunpack.c.h.b16 %v923
    %v4864 = vunpack.c.l.b16 %v924
    %v4865 = vunpack.c.h.b16 %v924
    %v4866 = vunpack.c.l.b16 %v925
    %v4867 = vunpack.c.h.b16 %v925
    %v4868 = vunpack.c.l.b16 %v926
    %v4869 = vunpack.c.h.b16 %v926
    %v4870 = vunpack.c.l.b16 %v927
    %v4871 = vunpack.c.h.b16 %v927
    %v4872 = vunpack.c.l.b16 %v928
    %v4873 = vunpack.c.h.b16 %v928
    %v4874 = vunpack.c.l.b16 %v929
    %v4875 = vunpack.c.h.b16 %v929
    %v4876 = vunpack.c.l.b16 %v930
    %v4877 = vunpack.c.h.b16 %v930
    %v4878 = vunpack.c.l.b16 %v931
    %v4879 = vunpack.c.h.b16 %v931
    %v4880 = vunpack.c.l.b16 %v932
    %v4881 = vunpack.c.h.b16 %v932
    %v4882 = vunpack.c.l.b16 %v933
    %v4883 = vunpack.c.h.b16 %v933
    %v4884 = vunpack.c.l.b16 %v934
    %v4885 = vunpack.c.h.b16 %v934
    %v4886 = vunpack.c.l.b16 %v935
    %v4887 = vunpack.c.h.b16 %v935
    %v4888 = vunpack.c.l.b16 %v936
    %v4889 = vunpack.c.h.b16 %v936
    %v4890 = vunpack.c.l.b16 %v937
    %v4891 = vunpack.c.h.b16 %v937
    %v4892 = vunpack.c.l.b16 %v938
    %v4893 = vunpack.c.h.b16 %v938
    %v4894 = vunpack.c.l.b16 %v939
    %v4895 = vunpack.c.h.b16 %v939
    %v4896 = vunpack.c.l.b16 %v940
    %v4897 = vunpack.c.h.b16 %v940
    %v4898 = vunpack.c.l.b16 %v941
    %v4899 = vunpack.c.h.b16 %v941
    %v4900 = vunpack.c.l.b16 %v942
    %v4901 = vunpack.c.h.b16 %v942
    %v4902 = vunpack.c.l.b16 %v943
    %v4903 = vunpack.c.h.b16 %v943
    %v4904 = vunpack.c.l.b16 %v944
    %v4905 = vunpack.c.h.b16 %v944
    %v4906 = vunpack.c.l.b16 %v945
    %v4907 = vunpack.c.h.b16 %v945
    %v4908 = vunpack.c.l.b16 %v946
    %v4909 = vunpack.c.h.b16 %v946
    %v4910 = vunpack.c.l.b16 %v947
    %v4911 = vunpack.c.h.b16 %v947
    %v4912 = vunpack.c.l.b16 %v948
    %v4913 = vunpack.c.h.b16 %v948
    %v4914 = vunpack.c.l.b16 %v949
    %v4915 = vunpack.c.h.b16 %v949
    %v4916 = vunpack.c.l.b16 %v950
    %v4917 = vunpack.c.h.b16 %v950
    %v4918 = vunpack.c.l.b16 %v951
    %v4919 = vunpack.c.h.b16 %v951
    %v4920 = vunpack.c.l.b16 %v952
    %v4921 = vunpack.c.h.b16 %v952
    %v4922 = vunpack.c.l.b16 %v953
    %v4923 = vunpack.c.h.b16 %v953
    %v4924 = vunpack.c.l.b16 %v954
    %v4925 = vunpack.c.h.b16 %v954
    %v4926 = vunpack.c.l.b16 %v955
    %v4927 = vunpack.c.h.b16 %v955
    %v4928 = vunpack.c.l.b16 %v956
    %v4929 = vunpack.c.h.b16 %v956
    %v4930 = vunpack.c.l.b16 %v957
    %v4931 = vunpack.c.h.b16 %v957
    %v4932 = vunpack.c.l.b16 %v958
    %v4933 = vunpack.c.h.b16 %v958
    %v4934 = vunpack.c.l.b16 %v959
    %v4935 = vunpack.c.h.b16 %v959
    %v4936 = vunpack.c.l.b16 %v960
    %v4937 = vunpack.c.h.b16 %v960
    %v4938 = vunpack.c.l.b16 %v961
    %v4939 = vunpack.c.h.b16 %v961
    %v4940 = vunpack.c.l.b16 %v962
    %v4941 = vunpack.c.h.b16 %v962
    %v4942 = vunpack.c.l.b16 %v963
    %v4943 = vunpack.c.h.b16 %v963
    %v4944 = vunpack.c.l.b16 %v964
    %v4945 = vunpack.c.h.b16 %v964
    %v4946 = vunpack.c.l.b16 %v965
    %v4947 = vunpack.c.h.b16 %v965
    %v4948 = vunpack.c.l.b16 %v966
    %v4949 = vunpack.c.h.b16 %v966
    %v4950 = vunpack.c.l.b16 %v967
    %v4951 = vunpack.c.h.b16 %v967
    %v4952 = vunpack.c.l.b16 %v968
    %v4953 = vunpack.c.h.b16 %v968
    %v4954 = vunpack.c.l.b16 %v969
    %v4955 = vunpack.c.h.b16 %v969
    %v4956 = vunpack.c.l.b16 %v970
    %v4957 = vunpack.c.h.b16 %v970
    %v4958 = vunpack.c.l.b16 %v971
    %v4959 = vunpack.c.h.b16 %v971
    %v4960 = vunpack.c.l.b16 %v972
    %v4961 = vunpack.c.h.b16 %v972
    %v4962 = vunpack.c.l.b16 %v973
    %v4963 = vunpack.c.h.b16 %v973
    %v4964 = vunpack.c.l.b16 %v974
    %v4965 = vunpack.c.h.b16 %v974
    %v4966 = vunpack.c.l.b16 %v975
    %v4967 = vunpack.c.h.b16 %v975
    %v4968 = vunpack.c.l.b16 %v976
    %v4969 = vunpack.c.h.b16 %v976
    %v4970 = vunpack.c.l.b16 %v977
    %v4971 = vunpack.c.h.b16 %v977
    %v4972 = vunpack.c.l.b16 %v978
    %v4973 = vunpack.c.h.b16 %v978
    %v4974 = vunpack.c.l.b16 %v979
    %v4975 = vunpack.c.h.b16 %v979
    %v4976 = vunpack.c.l.b16 %v980
    %v4977 = vunpack.c.h.b16 %v980
    %v4978 = vunpack.c.l.b16 %v981
    %v4979 = vunpack.c.h.b16 %v981
    %v4980 = vunpack.c.l.b16 %v982
    %v4981 = vunpack.c.h.b16 %v982
    %v4982 = vunpack.c.l.b16 %v983
    %v4983 = vunpack.c.h.b16 %v983
    %v4984 = vunpack.c.l.b16 %v984
    %v4985 = vunpack.c.h.b16 %v984
    %v4986 = vunpack.c.l.b16 %v985
    %v4987 = vunpack.c.h.b16 %v985
    %v4988 = vunpack.c.l.b16 %v986
    %v4989 = vunpack.c.h.b16 %v986
    %v4990 = vunpack.c.l.b16 %v987
    %v4991 = vunpack.c.h.b16 %v987
    %v4992 = vunpack.c.l.b16 %v988
    %v4993 = vunpack.c.h.b16 %v988
    %v4994 = vunpack.c.l.b16 %v989
    %v4995 = vunpack.c.h.b16 %v989
    %v4996 = vunpack.c.l.b16 %v990
    %v4997 = vunpack.c.h.b16 %v990
    %v4998 = vunpack.c.l.b16 %v991
    %v4999 = vunpack.c.h.b16 %v991
    %v5000 = vunpack.c.l.b16 %v992
    %v5001 = vunpack.c.h.b16 %v992
    %v5002 = vunpack.c.l.b16 %v993
    %v5003 = vunpack.c.h.b16 %v993
    %v5004 = vunpack.c.l.b16 %v994
    %v5005 = vunpack.c.h.b16 %v994
    %v5006 = vunpack.c.l.b16 %v995
    %v5007 = vunpack.c.h.b16 %v995
    %v5008 = vunpack.c.l.b16 %v996
    %v5009 = vunpack.c.h.b16 %v996
    %v5010 = vunpack.c.l.b16 %v997
    %v5011 = vunpack.c.h.b16 %v997
    %v5012 = vunpack.c.l.b16 %v998
    %v5013 = vunpack.c.h.b16 %v998
    %v5014 = vunpack.c.l.b16 %v999
    %v5015 = vunpack.c.h.b16 %v999
    %v5016 = vunpack.c.l.b16 %v1000
    %v5017 = vunpack.c.h.b16 %v1000
    %v5018 = vunpack.c.l.b16 %v1001
    %v5019 = vunpack.c.h.b16 %v1001
    %v5020 = vunpack.c.l.b16 %v1002
    %v5021 = vunpack.c.h.b16 %v1002
    %v5022 = vunpack.c.l.b16 %v1003
    %v5023 = vunpack.c.h.b16 %v1003
    %v5024 = vunpack.c.l.b16 %v1004
    %v5025 = vunpack.c.h.b16 %v1004
    %v5026 = vunpack.c.l.b16 %v1005
    %v5027 = vunpack.c.h.b16 %v1005
    %v5028 = vunpack.c.l.b16 %v1006
    %v5029 = vunpack.c.h.b16 %v1006
    %v5030 = vunpack.c.l.b16 %v1007
    %v5031 = vunpack.c.h.b16 %v1007
    %v5032 = vunpack.c.l.b16 %v1008
    %v5033 = vunpack.c.h.b16 %v1008
    %v5034 = vunpack.c.l.b16 %v1009
    %v5035 = vunpack.c.h.b16 %v1009
    %v5036 = vunpack.c.l.b16 %v1010
    %v5037 = vunpack.c.h.b16 %v1010
    %v5038 = vunpack.c.l.b16 %v1011
    %v5039 = vunpack.c.h.b16 %v1011
    %v5040 = vunpack.c.l.b16 %v1012
    %v5041 = vunpack.c.h.b16 %v1012
    %v5042 = vunpack.c.l.b16 %v1013
    %v5043 = vunpack.c.h.b16 %v1013
    %v5044 = vunpack.c.l.b16 %v1014
    %v5045 = vunpack.c.h.b16 %v1014
    %v5046 = vunpack.c.l.b16 %v1015
    %v5047 = vunpack.c.h.b16 %v1015
    %v5048 = vunpack.c.l.b16 %v1016
    %v5049 = vunpack.c.h.b16 %v1016
    %v5050 = vunpack.c.l.b16 %v1017
    %v5051 = vunpack.c.h.b16 %v1017
    %v5052 = vunpack.c.l.b16 %v1018
    %v5053 = vunpack.c.h.b16 %v1018
    %v5054 = vunpack.c.l.b16 %v1019
    %v5055 = vunpack.c.h.b16 %v1019
    %v5056 = vunpack.c.l.b16 %v1020
    %v5057 = vunpack.c.h.b16 %v1020
    %v5058 = vunpack.c.l.b16 %v1021
    %v5059 = vunpack.c.h.b16 %v1021
    %v5060 = vunpack.c.l.b16 %v1022
    %v5061 = vunpack.c.h.b16 %v1022
    %v5062 = vunpack.c.l.b16 %v1023
    %v5063 = vunpack.c.h.b16 %v1023
    %v5064 = vunpack.c.l.b16 %v1024
    %v5065 = vunpack.c.h.b16 %v1024
    %v5066 = vunpack.c.l.b16 %v1025
    %v5067 = vunpack.c.h.b16 %v1025
    %v5068 = vunpack.c.l.b16 %v1026
    %v5069 = vunpack.c.h.b16 %v1026
    %v5070 = vunpack.c.l.b16 %v1027
    %v5071 = vunpack.c.h.b16 %v1027
    %v5072 = vunpack.c.l.b16 %v1028
    %v5073 = vunpack.c.h.b16 %v1028
    %v5074 = vunpack.c.l.b16 %v1029
    %v5075 = vunpack.c.h.b16 %v1029
    %v5076 = vunpack.c.l.b16 %v1030
    %v5077 = vunpack.c.h.b16 %v1030
    %v5078 = vunpack.c.l.b16 %v1031
    %v5079 = vunpack.c.h.b16 %v1031
    %v5080 = vunpack.c.l.b16 %v1032
    %v5081 = vunpack.c.h.b16 %v1032
    %v5082 = vunpack.c.l.b16 %v1033
    %v5083 = vunpack.c.h.b16 %v1033
    %v5084 = vunpack.c.l.b16 %v1034
    %v5085 = vunpack.c.h.b16 %v1034
    %v5086 = vunpack.c.l.b16 %v1035
    %v5087 = vunpack.c.h.b16 %v1035
    %v5088 = vunpack.c.l.b16 %v1036
    %v5089 = vunpack.c.h.b16 %v1036
    %v5090 = vunpack.c.l.b16 %v1037
    %v5091 = vunpack.c.h.b16 %v1037
    %v5092 = vunpack.c.l.b16 %v1038
    %v5093 = vunpack.c.h.b16 %v1038
    %v5094 = vunpack.c.l.b16 %v1039
    %v5095 = vunpack.c.h.b16 %v1039
    %v5096 = vunpack.c.l.b16 %v1040
    %v5097 = vunpack.c.h.b16 %v1040
    %v5098 = vunpack.c.l.b16 %v1041
    %v5099 = vunpack.c.h.b16 %v1041
    %v5100 = vunpack.c.l.b16 %v1042
    %v5101 = vunpack.c.h.b16 %v1042
    %v5102 = vunpack.c.l.b16 %v1043
    %v5103 = vunpack.c.h.b16 %v1043
    %v5104 = vunpack.c.l.b16 %v1044
    %v5105 = vunpack.c.h.b16 %v1044
    %v5106 = vunpack.c.l.b16 %v1045
    %v5107 = vunpack.c.h.b16 %v1045
    %v5108 = vunpack.c.l.b16 %v1046
    %v5109 = vunpack.c.h.b16 %v1046
    %v5110 = vunpack.c.l.b16 %v1047
    %v5111 = vunpack.c.h.b16 %v1047
    %v5112 = vunpack.c.l.b16 %v1048
    %v5113 = vunpack.c.h.b16 %v1048
    %v5114 = vunpack.c.l.b16 %v1049
    %v5115 = vunpack.c.h.b16 %v1049
    %v5116 = vunpack.c.l.b16 %v1050
    %v5117 = vunpack.c.h.b16 %v1050
    %v5118 = vunpack.c.l.b16 %v1051
    %v5119 = vunpack.c.h.b16 %v1051
    %v5120 = vunpack.c.l.b16 %v1052
    %v5121 = vunpack.c.h.b16 %v1052
    %v5122 = vunpack.c.l.b16 %v1053
    %v5123 = vunpack.c.h.b16 %v1053
    %v5124 = vunpack.c.l.b16 %v1054
    %v5125 = vunpack.c.h.b16 %v1054
    %v5126 = vunpack.c.l.b16 %v1055
    %v5127 = vunpack.c.h.b16 %v1055
    %v5128 = vunpack.c.l.b16 %v1056
    %v5129 = vunpack.c.h.b16 %v1056
    %v5130 = vunpack.c.l.b16 %v1057
    %v5131 = vunpack.c.h.b16 %v1057
    %v5132 = vunpack.c.l.b16 %v1058
    %v5133 = vunpack.c.h.b16 %v1058
    %v5134 = vunpack.c.l.b16 %v1059
    %v5135 = vunpack.c.h.b16 %v1059
    %v5136 = vunpack.c.l.b16 %v1060
    %v5137 = vunpack.c.h.b16 %v1060
    %v5138 = vunpack.c.l.b16 %v1061
    %v5139 = vunpack.c.h.b16 %v1061
    %v5140 = vunpack.c.l.b16 %v1062
    %v5141 = vunpack.c.h.b16 %v1062
    %v5142 = vunpack.c.l.b16 %v1063
    %v5143 = vunpack.c.h.b16 %v1063
    %v5144 = vunpack.c.l.b16 %v1064
    %v5145 = vunpack.c.h.b16 %v1064
    %v5146 = vunpack.c.l.b16 %v1065
    %v5147 = vunpack.c.h.b16 %v1065
    %v5148 = vunpack.c.l.b16 %v1066
    %v5149 = vunpack.c.h.b16 %v1066
    %v5150 = vunpack.c.l.b16 %v1067
    %v5151 = vunpack.c.h.b16 %v1067
    %v5152 = vunpack.c.l.b16 %v1068
    %v5153 = vunpack.c.h.b16 %v1068
    %v5154 = vunpack.c.l.b16 %v1069
    %v5155 = vunpack.c.h.b16 %v1069
    %v5156 = vunpack.c.l.b16 %v1070
    %v5157 = vunpack.c.h.b16 %v1070
    %v5158 = vunpack.c.l.b16 %v1071
    %v5159 = vunpack.c.h.b16 %v1071
    %v5160 = vunpack.c.l.b16 %v1072
    %v5161 = vunpack.c.h.b16 %v1072
    %v5162 = vunpack.c.l.b16 %v1073
    %v5163 = vunpack.c.h.b16 %v1073
    %v5164 = vunpack.c.l.b16 %v1074
    %v5165 = vunpack.c.h.b16 %v1074
    %v5166 = vunpack.c.l.b16 %v1075
    %v5167 = vunpack.c.h.b16 %v1075
    %v5168 = vunpack.c.l.b16 %v1076
    %v5169 = vunpack.c.h.b16 %v1076
    %v5170 = vunpack.c.l.b16 %v1077
    %v5171 = vunpack.c.h.b16 %v1077
    %v5172 = vunpack.c.l.b16 %v1078
    %v5173 = vunpack.c.h.b16 %v1078
    %v5174 = vunpack.c.l.b16 %v1079
    %v5175 = vunpack.c.h.b16 %v1079
    %v5176 = vunpack.c.l.b16 %v1080
    %v5177 = vunpack.c.h.b16 %v1080
    %v5178 = vunpack.c.l.b16 %v1081
    %v5179 = vunpack.c.h.b16 %v1081
    %v5180 = vunpack.c.l.b16 %v1082
    %v5181 = vunpack.c.h.b16 %v1082
    %v5182 = vunpack.c.l.b16 %v1083
    %v5183 = vunpack.c.h.b16 %v1083
    %v5184 = vunpack.c.l.b16 %v1084
    %v5185 = vunpack.c.h.b16 %v1084
    %v5186 = vunpack.c.l.b16 %v1085
    %v5187 = vunpack.c.h.b16 %v1085
    %v5188 = vunpack.c.l.b16 %v1086
    %v5189 = vunpack.c.h.b16 %v1086
    %v5190 = vunpack.c.l.b16 %v1087
    %v5191 = vunpack.c.h.b16 %v1087
    %v5192 = vunpack.c.l.b16 %v1088
    %v5193 = vunpack.c.h.b16 %v1088
    %v5194 = vunpack.c.l.b16 %v1089
    %v5195 = vunpack.c.h.b16 %v1089
    %v5196 = vunpack.c.l.b16 %v1090
    %v5197 = vunpack.c.h.b16 %v1090
    %v5198 = vunpack.c.l.b16 %v1091
    %v5199 = vunpack.c.h.b16 %v1091
    %v5200 = vunpack.c.l.b16 %v1092
    %v5201 = vunpack.c.h.b16 %v1092
    %v5202 = vunpack.c.l.b16 %v1093
    %v5203 = vunpack.c.h.b16 %v1093
    %v5204 = vunpack.c.l.b16 %v1094
    %v5205 = vunpack.c.h.b16 %v1094
    %v5206 = vunpack.c.l.b16 %v1095
    %v5207 = vunpack.c.h.b16 %v1095
    %v5208 = vunpack.c.l.b16 %v1096
    %v5209 = vunpack.c.h.b16 %v1096
    %v5210 = vunpack.c.l.b16 %v1097
    %v5211 = vunpack.c.h.b16 %v1097
    %v5212 = vunpack.c.l.b16 %v1098
    %v5213 = vunpack.c.h.b16 %v1098
    %v5214 = vunpack.c.l.b16 %v1099
    %v5215 = vunpack.c.h.b16 %v1099
    %v5216 = vunpack.c.l.b16 %v1100
    %v5217 = vunpack.c.h.b16 %v1100
    %v5218 = vunpack.c.l.b16 %v1101
    %v5219 = vunpack.c.h.b16 %v1101
    %v5220 = vunpack.c.l.b16 %v1102
    %v5221 = vunpack.c.h.b16 %v1102
    %v5222 = vunpack.c.l.b16 %v1103
    %v5223 = vunpack.c.h.b16 %v1103
    %v5224 = vunpack.c.l.b16 %v1104
    %v5225 = vunpack.c.h.b16 %v1104
    %v5226 = vunpack.c.l.b16 %v1105
    %v5227 = vunpack.c.h.b16 %v1105
    %v5228 = vunpack.c.l.b16 %v1106
    %v5229 = vunpack.c.h.b16 %v1106
    %v5230 = vunpack.c.l.b16 %v1107
    %v5231 = vunpack.c.h.b16 %v1107
    %v5232 = vunpack.c.l.b16 %v1108
    %v5233 = vunpack.c.h.b16 %v1108
    %v5234 = vunpack.c.l.b16 %v1109
    %v5235 = vunpack.c.h.b16 %v1109
    %v5236 = vunpack.c.l.b16 %v1110
    %v5237 = vunpack.c.h.b16 %v1110
    %v5238 = vunpack.c.l.b16 %v1111
    %v5239 = vunpack.c.h.b16 %v1111
    %v5240 = vunpack.c.l.b16 %v1112
    %v5241 = vunpack.c.h.b16 %v1112
    %v5242 = vunpack.c.l.b16 %v1113
    %v5243 = vunpack.c.h.b16 %v1113
    %v5244 = vunpack.c.l.b16 %v1114
    %v5245 = vunpack.c.h.b16 %v1114
    %v5246 = vunpack.c.l.b16 %v1115
    %v5247 = vunpack.c.h.b16 %v1115
    %v5248 = vunpack.c.l.b16 %v1116
    %v5249 = vunpack.c.h.b16 %v1116
    %v5250 = vunpack.c.l.b16 %v1117
    %v5251 = vunpack.c.h.b16 %v1117
    %v5252 = vunpack.c.l.b16 %v1118
    %v5253 = vunpack.c.h.b16 %v1118
    %v5254 = vunpack.c.l.b16 %v1119
    %v5255 = vunpack.c.h.b16 %v1119
    %v5256 = vunpack.c.l.b16 %v1120
    %v5257 = vunpack.c.h.b16 %v1120
    %v5258 = vunpack.c.l.b16 %v1121
    %v5259 = vunpack.c.h.b16 %v1121
    %v5260 = vunpack.c.l.b16 %v1122
    %v5261 = vunpack.c.h.b16 %v1122
    %v5262 = vunpack.c.l.b16 %v1123
    %v5263 = vunpack.c.h.b16 %v1123
    %v5264 = vunpack.c.l.b16 %v1124
    %v5265 = vunpack.c.h.b16 %v1124
    %v5266 = vunpack.c.l.b16 %v1125
    %v5267 = vunpack.c.h.b16 %v1125
    %v5268 = vunpack.c.l.b16 %v1126
    %v5269 = vunpack.c.h.b16 %v1126
    %v5270 = vunpack.c.l.b16 %v1127
    %v5271 = vunpack.c.h.b16 %v1127
    %v5272 = vunpack.c.l.b16 %v1128
    %v5273 = vunpack.c.h.b16 %v1128
    %v5274 = vunpack.c.l.b16 %v1129
    %v5275 = vunpack.c.h.b16 %v1129
    %v5276 = vunpack.c.l.b16 %v1130
    %v5277 = vunpack.c.h.b16 %v1130
    %v5278 = vunpack.c.l.b16 %v1131
    %v5279 = vunpack.c.h.b16 %v1131
    %v5280 = vunpack.c.l.b16 %v1132
    %v5281 = vunpack.c.h.b16 %v1132
    %v5282 = vunpack.c.l.b16 %v1133
    %v5283 = vunpack.c.h.b16 %v1133
    %v5284 = vunpack.c.l.b16 %v1134
    %v5285 = vunpack.c.h.b16 %v1134
    %v5286 = vunpack.c.l.b16 %v1135
    %v5287 = vunpack.c.h.b16 %v1135
    %v5288 = vunpack.c.l.b16 %v1136
    %v5289 = vunpack.c.h.b16 %v1136
    %v5290 = vunpack.c.l.b16 %v1137
    %v5291 = vunpack.c.h.b16 %v1137
    %v5292 = vunpack.c.l.b16 %v1138
    %v5293 = vunpack.c.h.b16 %v1138
    %v5294 = vunpack.c.l.b16 %v1139
    %v5295 = vunpack.c.h.b16 %v1139
    %v5296 = vunpack.c.l.b16 %v1140
    %v5297 = vunpack.c.h.b16 %v1140
    %v5298 = vunpack.c.l.b16 %v1141
    %v5299 = vunpack.c.h.b16 %v1141
    %v5300 = vunpack.c.l.b16 %v1142
    %v5301 = vunpack.c.h.b16 %v1142
    %v5302 = vunpack.c.l.b16 %v1143
    %v5303 = vunpack.c.h.b16 %v1143
    %v5304 = vunpack.c.l.b16 %v1144
    %v5305 = vunpack.c.h.b16 %v1144
    %v5306 = vunpack.c.l.b16 %v1145
    %v5307 = vunpack.c.h.b16 %v1145
    %v5308 = vunpack.c.l.b16 %v1146
    %v5309 = vunpack.c.h.b16 %v1146
    %v5310 = vunpack.c.l.b16 %v1147
    %v5311 = vunpack.c.h.b16 %v1147
    %v5312 = vunpack.c.l.b16 %v1148
    %v5313 = vunpack.c.h.b16 %v1148
    %v5314 = vunpack.c.l.b16 %v1149
    %v5315 = vunpack.c.h.b16 %v1149
    %v5316 = vunpack.c.l.b16 %v1150
    %v5317 = vunpack.c.h.b16 %v1150
    %v5318 = vunpack.c.l.b16 %v1151
    %v5319 = vunpack.c.h.b16 %v1151
    %v5320 = vunpack.c.l.b16 %v1152
    %v5321 = vunpack.c.h.b16 %v1152
    %v5322 = vunpack.c.l.b16 %v1153
    %v5323 = vunpack.c.h.b16 %v1153
    %v5324 = vunpack.c.l.b16 %v1154
    %v5325 = vunpack.c.h.b16 %v1154
    %v5326 = vunpack.c.l.b16 %v1155
    %v5327 = vunpack.c.h.b16 %v1155
    %v5328 = vunpack.c.l.b16 %v1156
    %v5329 = vunpack.c.h.b16 %v1156
    %v5330 = vunpack.c.l.b16 %v1157
    %v5331 = vunpack.c.h.b16 %v1157
    %v5332 = vunpack.c.l.b16 %v1158
    %v5333 = vunpack.c.h.b16 %v1158
    %v5334 = vunpack.c.l.b16 %v1159
    %v5335 = vunpack.c.h.b16 %v1159
    %v5336 = vunpack.c.l.b16 %v1160
    %v5337 = vunpack.c.h.b16 %v1160
    %v5338 = vunpack.c.l.b16 %v1161
    %v5339 = vunpack.c.h.b16 %v1161
    %v5340 = vunpack.c.l.b16 %v1162
    %v5341 = vunpack.c.h.b16 %v1162
    %v5342 = vunpack.c.l.b16 %v1163
    %v5343 = vunpack.c.h.b16 %v1163
    %v5344 = vunpack.c.l.b16 %v1164
    %v5345 = vunpack.c.h.b16 %v1164
    %v5346 = vunpack.c.l.b16 %v1165
    %v5347 = vunpack.c.h.b16 %v1165
    %v5348 = vunpack.c.l.b16 %v1166
    %v5349 = vunpack.c.h.b16 %v1166
    %v5350 = vunpack.c.l.b16 %v1167
    %v5351 = vunpack.c.h.b16 %v1167
    %v5352 = vunpack.c.l.b16 %v1168
    %v5353 = vunpack.c.h.b16 %v1168
    %v5354 = vunpack.c.l.b16 %v1169
    %v5355 = vunpack.c.h.b16 %v1169
    %v5356 = vunpack.c.l.b16 %v1170
    %v5357 = vunpack.c.h.b16 %v1170
    %v5358 = vunpack.c.l.b16 %v1171
    %v5359 = vunpack.c.h.b16 %v1171
    %v5360 = vunpack.c.l.b16 %v1172
    %v5361 = vunpack.c.h.b16 %v1172
    %v5362 = vunpack.c.l.b16 %v1173
    %v5363 = vunpack.c.h.b16 %v1173
    %v5364 = vunpack.c.l.b16 %v1174
    %v5365 = vunpack.c.h.b16 %v1174
    %v5366 = vunpack.c.l.b16 %v1175
    %v5367 = vunpack.c.h.b16 %v1175
    %v5368 = vunpack.c.l.b16 %v1176
    %v5369 = vunpack.c.h.b16 %v1176
    %v5370 = vunpack.c.l.b16 %v1177
    %v5371 = vunpack.c.h.b16 %v1177
    %v5372 = vunpack.c.l.b16 %v1178
    %v5373 = vunpack.c.h.b16 %v1178
    %v5374 = vunpack.c.l.b16 %v1179
    %v5375 = vunpack.c.h.b16 %v1179
    %v5376 = vunpack.c.l.b16 %v1180
    %v5377 = vunpack.c.h.b16 %v1180
    %v5378 = vunpack.c.l.b16 %v1181
    %v5379 = vunpack.c.h.b16 %v1181
    %v5380 = vunpack.c.l.b16 %v1182
    %v5381 = vunpack.c.h.b16 %v1182
    %v5382 = vunpack.c.l.b16 %v1183
    %v5383 = vunpack.c.h.b16 %v1183
    %v5384 = vunpack.c.l.b16 %v1184
    %v5385 = vunpack.c.h.b16 %v1184
    %v5386 = vunpack.c.l.b16 %v1185
    %v5387 = vunpack.c.h.b16 %v1185
    %v5388 = vunpack.c.l.b16 %v1186
    %v5389 = vunpack.c.h.b16 %v1186
    %v5390 = vunpack.c.l.b16 %v1187
    %v5391 = vunpack.c.h.b16 %v1187
    %v5392 = vunpack.c.l.b16 %v1188
    %v5393 = vunpack.c.h.b16 %v1188
    %v5394 = vunpack.c.l.b16 %v1189
    %v5395 = vunpack.c.h.b16 %v1189
    %v5396 = vunpack.c.l.b16 %v1190
    %v5397 = vunpack.c.h.b16 %v1190
    %v5398 = vunpack.c.l.b16 %v1191
    %v5399 = vunpack.c.h.b16 %v1191
    %v5400 = vunpack.c.l.b16 %v1192
    %v5401 = vunpack.c.h.b16 %v1192
    %v5402 = vunpack.c.l.b16 %v1193
    %v5403 = vunpack.c.h.b16 %v1193
    %v5404 = vunpack.c.l.b16 %v1194
    %v5405 = vunpack.c.h.b16 %v1194
    %v5406 = vunpack.c.l.b16 %v1195
    %v5407 = vunpack.c.h.b16 %v1195
    %v5408 = vunpack.c.l.b16 %v1196
    %v5409 = vunpack.c.h.b16 %v1196
    %v5410 = vunpack.c.l.b16 %v1197
    %v5411 = vunpack.c.h.b16 %v1197
    %v5412 = vunpack.c.l.b16 %v1198
    %v5413 = vunpack.c.h.b16 %v1198
    %v5414 = vunpack.c.l.b16 %v1199
    %v5415 = vunpack.c.h.b16 %v1199
    %v5416 = vunpack.c.l.b16 %v1200
    %v5417 = vunpack.c.h.b16 %v1200
    %v5418 = vunpack.c.l.b16 %v1201
    %v5419 = vunpack.c.h.b16 %v1201
    %v5420 = vunpack.c.l.b16 %v1202
    %v5421 = vunpack.c.h.b16 %v1202
    %v5422 = vunpack.c.l.b16 %v1203
    %v5423 = vunpack.c.h.b16 %v1203
    %v5424 = vunpack.c.l.b16 %v1204
    %v5425 = vunpack.c.h.b16 %v1204
    %v5426 = vunpack.c.l.b16 %v1205
    %v5427 = vunpack.c.h.b16 %v1205
    %v5428 = vunpack.c.l.b16 %v1206
    %v5429 = vunpack.c.h.b16 %v1206
    %v5430 = vunpack.c.l.b16 %v1207
    %v5431 = vunpack.c.h.b16 %v1207
    %v5432 = vunpack.c.l.b16 %v1208
    %v5433 = vunpack.c.h.b16 %v1208
    %v5434 = vunpack.c.l.b16 %v1209
    %v5435 = vunpack.c.h.b16 %v1209
    %v5436 = vunpack.c.l.b16 %v1210
    %v5437 = vunpack.c.h.b16 %v1210
    %v5438 = vunpack.c.l.b16 %v1211
    %v5439 = vunpack.c.h.b16 %v1211
    %v5440 = vunpack.c.l.b16 %v1212
    %v5441 = vunpack.c.h.b16 %v1212
    %v5442 = vunpack.c.l.b16 %v1213
    %v5443 = vunpack.c.h.b16 %v1213
    %v5444 = vunpack.c.l.b16 %v1214
    %v5445 = vunpack.c.h.b16 %v1214
    %v5446 = vunpack.c.l.b16 %v1215
    %v5447 = vunpack.c.h.b16 %v1215
    %v5448 = vunpack.c.l.b16 %v1216
    %v5449 = vunpack.c.h.b16 %v1216
    %v5450 = vunpack.c.l.b16 %v1217
    %v5451 = vunpack.c.h.b16 %v1217
    %v5452 = vunpack.c.l.b16 %v1218
    %v5453 = vunpack.c.h.b16 %v1218
    %v5454 = vunpack.c.l.b16 %v1219
    %v5455 = vunpack.c.h.b16 %v1219
    %v5456 = vunpack.c.l.b16 %v1220
    %v5457 = vunpack.c.h.b16 %v1220
    %v5458 = vunpack.c.l.b16 %v1221
    %v5459 = vunpack.c.h.b16 %v1221
    %v5460 = vunpack.c.l.b16 %v1222
    %v5461 = vunpack.c.h.b16 %v1222
    %v5462 = vunpack.c.l.b16 %v1223
    %v5463 = vunpack.c.h.b16 %v1223
    %v5464 = vunpack.c.l.b16 %v1224
    %v5465 = vunpack.c.h.b16 %v1224
    %v5466 = vunpack.c.l.b16 %v1225
    %v5467 = vunpack.c.h.b16 %v1225
    %v5468 = vunpack.c.l.b16 %v1226
    %v5469 = vunpack.c.h.b16 %v1226
    %v5470 = vunpack.c.l.b16 %v1227
    %v5471 = vunpack.c.h.b16 %v1227
    %v5472 = vunpack.c.l.b16 %v1228
    %v5473 = vunpack.c.h.b16 %v1228
    %v5474 = vunpack.c.l.b16 %v1229
    %v5475 = vunpack.c.h.b16 %v1229
    %v5476 = vunpack.c.l.b16 %v1230
    %v5477 = vunpack.c.h.b16 %v1230
    %v5478 = vunpack.c.l.b16 %v1231
    %v5479 = vunpack.c.h.b16 %v1231
    %v5480 = vunpack.c.l.b16 %v1232
    %v5481 = vunpack.c.h.b16 %v1232
    %v5482 = vunpack.c.l.b16 %v1233
    %v5483 = vunpack.c.h.b16 %v1233
    %v5484 = vunpack.c.l.b16 %v1234
    %v5485 = vunpack.c.h.b16 %v1234
    %v5486 = vunpack.c.l.b16 %v1235
    %v5487 = vunpack.c.h.b16 %v1235
    %v5488 = vunpack.c.l.b16 %v1236
    %v5489 = vunpack.c.h.b16 %v1236
    %v5490 = vunpack.c.l.b16 %v1237
    %v5491 = vunpack.c.h.b16 %v1237
    %v5492 = vunpack.c.l.b16 %v1238
    %v5493 = vunpack.c.h.b16 %v1238
    %v5494 = vunpack.c.l.b16 %v1239
    %v5495 = vunpack.c.h.b16 %v1239
    %v5496 = vunpack.c.l.b16 %v1240
    %v5497 = vunpack.c.h.b16 %v1240
    %v5498 = vunpack.c.l.b16 %v1241
    %v5499 = vunpack.c.h.b16 %v1241
    %v5500 = vunpack.c.l.b16 %v1242
    %v5501 = vunpack.c.h.b16 %v1242
    %v5502 = vunpack.c.l.b16 %v1243
    %v5503 = vunpack.c.h.b16 %v1243
    %v5504 = vunpack.c.l.b16 %v1244
    %v5505 = vunpack.c.h.b16 %v1244
    %v5506 = vunpack.c.l.b16 %v1245
    %v5507 = vunpack.c.h.b16 %v1245
    %v5508 = vunpack.c.l.b16 %v1246
    %v5509 = vunpack.c.h.b16 %v1246
    %v5510 = vunpack.c.l.b16 %v1247
    %v5511 = vunpack.c.h.b16 %v1247
    %v5512 = vunpack.c.l.b16 %v1248
    %v5513 = vunpack.c.h.b16 %v1248
    %v5514 = vunpack.c.l.b16 %v1249
    %v5515 = vunpack.c.h.b16 %v1249
    %v5516 = vunpack.c.l.b16 %v1250
    %v5517 = vunpack.c.h.b16 %v1250
    %v5518 = vunpack.c.l.b16 %v1251
    %v5519 = vunpack.c.h.b16 %v1251
    %v5520 = vunpack.c.l.b16 %v1252
    %v5521 = vunpack.c.h.b16 %v1252
    %v5522 = vunpack.c.l.b16 %v1253
    %v5523 = vunpack.c.h.b16 %v1253
    %v5524 = vunpack.c.l.b16 %v1254
    %v5525 = vunpack.c.h.b16 %v1254
    %v5526 = vunpack.c.l.b16 %v1255
    %v5527 = vunpack.c.h.b16 %v1255
    %v5528 = vunpack.c.l.b16 %v1256
    %v5529 = vunpack.c.h.b16 %v1256
    %v5530 = vunpack.c.l.b16 %v1257
    %v5531 = vunpack.c.h.b16 %v1257
    %v5532 = vunpack.c.l.b16 %v1258
    %v5533 = vunpack.c.h.b16 %v1258
    %v5534 = vunpack.c.l.b16 %v1259
    %v5535 = vunpack.c.h.b16 %v1259
    %v5536 = vunpack.c.l.b16 %v1260
    %v5537 = vunpack.c.h.b16 %v1260
    %v5538 = vunpack.c.l.b16 %v1261
    %v5539 = vunpack.c.h.b16 %v1261
    %v5540 = vunpack.c.l.b16 %v1262
    %v5541 = vunpack.c.h.b16 %v1262
    %v5542 = vunpack.c.l.b16 %v1263
    %v5543 = vunpack.c.h.b16 %v1263
    %v5544 = vunpack.c.l.b16 %v1264
    %v5545 = vunpack.c.h.b16 %v1264
    %v5546 = vunpack.c.l.b16 %v1265
    %v5547 = vunpack.c.h.b16 %v1265
    %v5548 = vunpack.c.l.b16 %v1266
    %v5549 = vunpack.c.h.b16 %v1266
    %v5550 = vunpack.c.l.b16 %v1267
    %v5551 = vunpack.c.h.b16 %v1267
    %v5552 = vunpack.c.l.b16 %v1268
    %v5553 = vunpack.c.h.b16 %v1268
    %v5554 = vunpack.c.l.b16 %v1269
    %v5555 = vunpack.c.h.b16 %v1269
    %v5556 = vunpack.c.l.b16 %v1270
    %v5557 = vunpack.c.h.b16 %v1270
    %v5558 = vunpack.c.l.b16 %v1271
    %v5559 = vunpack.c.h.b16 %v1271
    %v5560 = vunpack.c.l.b16 %v1272
    %v5561 = vunpack.c.h.b16 %v1272
    %v5562 = vunpack.c.l.b16 %v1273
    %v5563 = vunpack.c.h.b16 %v1273
    %v5564 = vunpack.c.l.b16 %v1274
    %v5565 = vunpack.c.h.b16 %v1274
    %v5566 = vunpack.c.l.b16 %v1275
    %v5567 = vunpack.c.h.b16 %v1275
    %v5568 = vunpack.c.l.b16 %v1276
    %v5569 = vunpack.c.h.b16 %v1276
    %v5570 = vunpack.c.l.b16 %v1277
    %v5571 = vunpack.c.h.b16 %v1277
    %v5572 = vunpack.c.l.b16 %v1278
    %v5573 = vunpack.c.h.b16 %v1278
    %v5574 = vunpack.c.l.b16 %v1279
    %v5575 = vunpack.c.h.b16 %v1279
    %v5576 = vunpack.c.l.b16 %v1280
    %v5577 = vunpack.c.h.b16 %v1280
    %v5578 = vunpack.c.l.b16 %v1281
    %v5579 = vunpack.c.h.b16 %v1281
    %v5580 = vunpack.c.l.b16 %v1282
    %v5581 = vunpack.c.h.b16 %v1282
    %v5582 = vunpack.c.l.b16 %v1283
    %v5583 = vunpack.c.h.b16 %v1283
    %v5584 = vunpack.c.l.b16 %v1284
    %v5585 = vunpack.c.h.b16 %v1284
    %v5586 = vunpack.c.l.b16 %v1285
    %v5587 = vunpack.c.h.b16 %v1285
    %v5588 = vunpack.c.l.b16 %v1286
    %v5589 = vunpack.c.h.b16 %v1286
    %v5590 = vunpack.c.l.b16 %v1287
    %v5591 = vunpack.c.h.b16 %v1287
    %v5592 = vunpack.c.l.b16 %v1288
    %v5593 = vunpack.c.h.b16 %v1288
    %v5594 = vunpack.c.l.b16 %v1289
    %v5595 = vunpack.c.h.b16 %v1289
    %v5596 = vunpack.c.l.b16 %v1290
    %v5597 = vunpack.c.h.b16 %v1290
    %v5598 = vunpack.c.l.b16 %v1291
    %v5599 = vunpack.c.h.b16 %v1291
    %v5600 = vunpack.c.l.b16 %v1292
    %v5601 = vunpack.c.h.b16 %v1292
    %v5602 = vunpack.c.l.b16 %v1293
    %v5603 = vunpack.c.h.b16 %v1293
    %v5604 = vunpack.c.l.b16 %v1294
    %v5605 = vunpack.c.h.b16 %v1294
    %v5606 = vunpack.c.l.b16 %v1295
    %v5607 = vunpack.c.h.b16 %v1295
    %v5608 = vunpack.c.l.b16 %v1296
    %v5609 = vunpack.c.h.b16 %v1296
    %v5610 = vunpack.c.l.b16 %v1297
    %v5611 = vunpack.c.h.b16 %v1297
    %v5612 = vunpack.c.l.b16 %v1298
    %v5613 = vunpack.c.h.b16 %v1298
    %v5614 = vunpack.c.l.b16 %v1299
    %v5615 = vunpack.c.h.b16 %v1299
    %v5616 = vunpack.c.l.b16 %v1300
    %v5617 = vunpack.c.h.b16 %v1300
    %v5618 = vunpack.c.l.b16 %v1301
    %v5619 = vunpack.c.h.b16 %v1301
    %v5620 = vunpack.c.l.b16 %v1302
    %v5621 = vunpack.c.h.b16 %v1302
    %v5622 = vunpack.c.l.b16 %v1303
    %v5623 = vunpack.c.h.b16 %v1303
    %v5624 = vunpack.c.l.b16 %v1304
    %v5625 = vunpack.c.h.b16 %v1304
    %v5626 = vunpack.c.l.b16 %v1305
    %v5627 = vunpack.c.h.b16 %v1305
    %v5628 = vunpack.c.l.b16 %v1306
    %v5629 = vunpack.c.h.b16 %v1306
    %v5630 = vunpack.c.l.b16 %v1307
    %v5631 = vunpack.c.h.b16 %v1307
    %v5632 = vunpack.c.l.b16 %v1308
    %v5633 = vunpack.c.h.b16 %v1308
    %v5634 = vunpack.c.l.b16 %v1309
    %v5635 = vunpack.c.h.b16 %v1309
    %v5636 = vunpack.c.l.b16 %v1310
    %v5637 = vunpack.c.h.b16 %v1310
    %v5638 = vunpack.c.l.b16 %v1311
    %v5639 = vunpack.c.h.b16 %v1311
    %v5640 = vunpack.c.l.b16 %v1312
    %v5641 = vunpack.c.h.b16 %v1312
    %v5642 = vunpack.c.l.b16 %v1313
    %v5643 = vunpack.c.h.b16 %v1313
    %v5644 = vunpack.c.l.b16 %v1314
    %v5645 = vunpack.c.h.b16 %v1314
    %v5646 = vunpack.c.l.b16 %v1315
    %v5647 = vunpack.c.h.b16 %v1315
    %v5648 = vunpack.c.l.b16 %v1316
    %v5649 = vunpack.c.h.b16 %v1316
    %v5650 = vunpack.c.l.b16 %v1317
    %v5651 = vunpack.c.h.b16 %v1317
    %v5652 = vunpack.c.l.b16 %v1318
    %v5653 = vunpack.c.h.b16 %v1318
    %v5654 = vunpack.c.l.b16 %v1319
    %v5655 = vunpack.c.h.b16 %v1319
    %v5656 = vunpack.c.l.b16 %v1320
    %v5657 = vunpack.c.h.b16 %v1320
    %v5658 = vunpack.c.l.b16 %v1321
    %v5659 = vunpack.c.h.b16 %v1321
    %v5660 = vunpack.c.l.b16 %v1322
    %v5661 = vunpack.c.h.b16 %v1322
    %v5662 = vunpack.c.l.b16 %v1323
    %v5663 = vunpack.c.h.b16 %v1323
    %v5664 = vunpack.c.l.b16 %v1324
    %v5665 = vunpack.c.h.b16 %v1324
    %v5666 = vunpack.c.l.b16 %v1325
    %v5667 = vunpack.c.h.b16 %v1325
    %v5668 = vunpack.c.l.b16 %v1326
    %v5669 = vunpack.c.h.b16 %v1326
    %v5670 = vunpack.c.l.b16 %v1327
    %v5671 = vunpack.c.h.b16 %v1327
    %v5672 = vunpack.c.l.b16 %v1328
    %v5673 = vunpack.c.h.b16 %v1328
    %v5674 = vunpack.c.l.b16 %v1329
    %v5675 = vunpack.c.h.b16 %v1329
    %v5676 = vunpack.c.l.b16 %v1330
    %v5677 = vunpack.c.h.b16 %v1330
    %v5678 = vunpack.c.l.b16 %v1331
    %v5679 = vunpack.c.h.b16 %v1331
    %v5680 = vunpack.c.l.b16 %v1332
    %v5681 = vunpack.c.h.b16 %v1332
    %v5682 = vunpack.c.l.b16 %v1333
    %v5683 = vunpack.c.h.b16 %v1333
    %v5684 = vunpack.c.l.b16 %v1334
    %v5685 = vunpack.c.h.b16 %v1334
    %v5686 = vunpack.c.l.b16 %v1335
    %v5687 = vunpack.c.h.b16 %v1335
    %v5688 = vunpack.c.l.b16 %v1336
    %v5689 = vunpack.c.h.b16 %v1336
    %v5690 = vunpack.c.l.b16 %v1337
    %v5691 = vunpack.c.h.b16 %v1337
    %v5692 = vunpack.c.l.b16 %v1338
    %v5693 = vunpack.c.h.b16 %v1338
    %v5694 = vunpack.c.l.b16 %v1339
    %v5695 = vunpack.c.h.b16 %v1339
    %v5696 = vunpack.c.l.b16 %v1340
    %v5697 = vunpack.c.h.b16 %v1340
    %v5698 = vunpack.c.l.b16 %v1341
    %v5699 = vunpack.c.h.b16 %v1341
    %v5700 = vunpack.c.l.b16 %v1342
    %v5701 = vunpack.c.h.b16 %v1342
    %v5702 = vunpack.c.l.b16 %v1343
    %v5703 = vunpack.c.h.b16 %v1343
    %v5704 = vunpack.c.l.b16 %v1344
    %v5705 = vunpack.c.h.b16 %v1344
    %v5706 = vunpack.c.l.b16 %v1345
    %v5707 = vunpack.c.h.b16 %v1345
    %v5708 = vunpack.c.l.b16 %v1346
    %v5709 = vunpack.c.h.b16 %v1346
    %v5710 = vunpack.c.l.b16 %v1347
    %v5711 = vunpack.c.h.b16 %v1347
    %v5712 = vunpack.c.l.b16 %v1348
    %v5713 = vunpack.c.h.b16 %v1348
    %v5714 = vunpack.c.l.b16 %v1349
    %v5715 = vunpack.c.h.b16 %v1349
    %v5716 = vunpack.c.l.b16 %v1350
    %v5717 = vunpack.c.h.b16 %v1350
    %v5718 = vunpack.c.l.b16 %v1351
    %v5719 = vunpack.c.h.b16 %v1351
    %v5720 = vunpack.c.l.b16 %v1352
    %v5721 = vunpack.c.h.b16 %v1352
    %v5722 = vunpack.c.l.b16 %v1353
    %v5723 = vunpack.c.h.b16 %v1353
    %v5724 = vunpack.c.l.b16 %v1354
    %v5725 = vunpack.c.h.b16 %v1354
    %v5726 = vunpack.c.l.b16 %v1355
    %v5727 = vunpack.c.h.b16 %v1355
    %v5728 = vunpack.c.l.b16 %v1356
    %v5729 = vunpack.c.h.b16 %v1356
    %v5730 = vunpack.c.l.b16 %v1357
    %v5731 = vunpack.c.h.b16 %v1357
    %v5732 = vunpack.c.l.b16 %v1358
    %v5733 = vunpack.c.h.b16 %v1358
    %v5734 = vunpack.c.l.b16 %v1359
    %v5735 = vunpack.c.h.b16 %v1359
    %v5736 = vunpack.c.l.b16 %v1360
    %v5737 = vunpack.c.h.b16 %v1360
    %v5738 = vunpack.c.l.b16 %v1361
    %v5739 = vunpack.c.h.b16 %v1361
    %v5740 = vunpack.c.l.b16 %v1362
    %v5741 = vunpack.c.h.b16 %v1362
    %v5742 = vunpack.c.l.b16 %v1363
    %v5743 = vunpack.c.h.b16 %v1363
    %v5744 = vunpack.c.l.b16 %v1364
    %v5745 = vunpack.c.h.b16 %v1364
    %v5746 = vunpack.c.l.b16 %v1365
    %v5747 = vunpack.c.h.b16 %v1365
    %v5748 = vunpack.c.l.b16 %v1366
    %v5749 = vunpack.c.h.b16 %v1366
    %v5750 = vunpack.c.l.b16 %v1367
    %v5751 = vunpack.c.h.b16 %v1367
    %v5752 = vunpack.c.l.b16 %v1368
    %v5753 = vunpack.c.h.b16 %v1368
    %v5754 = vunpack.c.l.b16 %v1369
    %v5755 = vunpack.c.h.b16 %v1369
    %v5756 = vunpack.c.l.b16 %v1370
    %v5757 = vunpack.c.h.b16 %v1370
    %v5758 = vunpack.c.l.b16 %v1371
    %v5759 = vunpack.c.h.b16 %v1371
    %v5760 = vunpack.c.l.b16 %v1372
    %v5761 = vunpack.c.h.b16 %v1372
    %v5762 = vunpack.c.l.b16 %v1373
    %v5763 = vunpack.c.h.b16 %v1373
    %v5764 = vunpack.c.l.b16 %v1374
    %v5765 = vunpack.c.h.b16 %v1374
    %v5766 = vunpack.c.l.b16 %v1375
    %v5767 = vunpack.c.h.b16 %v1375
    %v5768 = vunpack.c.l.b16 %v1376
    %v5769 = vunpack.c.h.b16 %v1376
    %v5770 = vunpack.c.l.b16 %v1377
    %v5771 = vunpack.c.h.b16 %v1377
    %v5772 = vunpack.c.l.b16 %v1378
    %v5773 = vunpack.c.h.b16 %v1378
    %v5774 = vunpack.c.l.b16 %v1379
    %v5775 = vunpack.c.h.b16 %v1379
    %v5776 = vunpack.c.l.b16 %v1380
    %v5777 = vunpack.c.h.b16 %v1380
    %v5778 = vunpack.c.l.b16 %v1381
    %v5779 = vunpack.c.h.b16 %v1381
    %v5780 = vunpack.c.l.b16 %v1382
    %v5781 = vunpack.c.h.b16 %v1382
    %v5782 = vunpack.c.l.b16 %v1383
    %v5783 = vunpack.c.h.b16 %v1383
    %v5784 = vunpack.c.l.b16 %v1384
    %v5785 = vunpack.c.h.b16 %v1384
    %v5786 = vunpack.c.l.b16 %v1385
    %v5787 = vunpack.c.h.b16 %v1385
    %v5788 = vunpack.c.l.b16 %v1386
    %v5789 = vunpack.c.h.b16 %v1386
    %v5790 = vunpack.c.l.b16 %v1387
    %v5791 = vunpack.c.h.b16 %v1387
    %v5792 = vunpack.c.l.b16 %v1388
    %v5793 = vunpack.c.h.b16 %v1388
    %v5794 = vunpack.c.l.b16 %v1389
    %v5795 = vunpack.c.h.b16 %v1389
    %v5796 = vunpack.c.l.b16 %v1390
    %v5797 = vunpack.c.h.b16 %v1390
    %v5798 = vunpack.c.l.b16 %v1391
    %v5799 = vunpack.c.h.b16 %v1391
    %v5800 = vunpack.c.l.b16 %v1392
    %v5801 = vunpack.c.h.b16 %v1392
    %v5802 = vunpack.c.l.b16 %v1393
    %v5803 = vunpack.c.h.b16 %v1393
    %v5804 = vunpack.c.l.b16 %v1394
    %v5805 = vunpack.c.h.b16 %v1394
    %v5806 = vunpack.c.l.b16 %v1395
    %v5807 = vunpack.c.h.b16 %v1395
    %v5808 = vunpack.c.l.b16 %v1396
    %v5809 = vunpack.c.h.b16 %v1396
    %v5810 = vunpack.c.l.b16 %v1397
    %v5811 = vunpack.c.h.b16 %v1397
    %v5812 = vunpack.c.l.b16 %v1398
    %v5813 = vunpack.c.h.b16 %v1398
    %v5814 = vunpack.c.l.b16 %v1399
    %v5815 = vunpack.c.h.b16 %v1399
    %v5816 = vunpack.c.l.b16 %v1400
    %v5817 = vunpack.c.h.b16 %v1400
    %v5818 = vunpack.c.l.b16 %v1401
    %v5819 = vunpack.c.h.b16 %v1401
    %v5820 = vunpack.c.l.b16 %v1402
    %v5821 = vunpack.c.h.b16 %v1402
    %v5822 = vunpack.c.l.b16 %v1403
    %v5823 = vunpack.c.h.b16 %v1403
    %v5824 = vunpack.c.l.b16 %v1404
    %v5825 = vunpack.c.h.b16 %v1404
    %v5826 = vunpack.c.l.b16 %v1405
    %v5827 = vunpack.c.h.b16 %v1405
    %v5828 = vunpack.c.l.b16 %v1406
    %v5829 = vunpack.c.h.b16 %v1406
    %v5830 = vunpack.c.l.b16 %v1407
    %v5831 = vunpack.c.h.b16 %v1407
    %v5832 = vunpack.c.l.b16 %v1408
    %v5833 = vunpack.c.h.b16 %v1408
    %v5834 = vunpack.c.l.b16 %v1409
    %v5835 = vunpack.c.h.b16 %v1409
    %v5836 = vunpack.c.l.b16 %v1410
    %v5837 = vunpack.c.h.b16 %v1410
    %v5838 = vunpack.c.l.b16 %v1411
    %v5839 = vunpack.c.h.b16 %v1411
    %v5840 = vunpack.c.l.b16 %v1412
    %v5841 = vunpack.c.h.b16 %v1412
    %v5842 = vunpack.c.l.b16 %v1413
    %v5843 = vunpack.c.h.b16 %v1413
    %v5844 = vunpack.c.l.b16 %v1414
    %v5845 = vunpack.c.h.b16 %v1414
    %v5846 = vunpack.c.l.b16 %v1415
    %v5847 = vunpack.c.h.b16 %v1415
    %v5848 = vunpack.c.l.b16 %v1416
    %v5849 = vunpack.c.h.b16 %v1416
    %v5850 = vunpack.c.l.b16 %v1417
    %v5851 = vunpack.c.h.b16 %v1417
    %v5852 = vunpack.c.l.b16 %v1418
    %v5853 = vunpack.c.h.b16 %v1418
    %v5854 = vunpack.c.l.b16 %v1419
    %v5855 = vunpack.c.h.b16 %v1419
    %v5856 = vunpack.c.l.b16 %v1420
    %v5857 = vunpack.c.h.b16 %v1420
    %v5858 = vunpack.c.l.b16 %v1421
    %v5859 = vunpack.c.h.b16 %v1421
    %v5860 = vunpack.c.l.b16 %v1422
    %v5861 = vunpack.c.h.b16 %v1422
    %v5862 = vunpack.c.l.b16 %v1423
    %v5863 = vunpack.c.h.b16 %v1423
    %v5864 = vunpack.c.l.b16 %v1424
    %v5865 = vunpack.c.h.b16 %v1424
    %v5866 = vunpack.c.l.b16 %v1425
    %v5867 = vunpack.c.h.b16 %v1425
    %v5868 = vunpack.c.l.b16 %v1426
    %v5869 = vunpack.c.h.b16 %v1426
    %v5870 = vunpack.c.l.b16 %v1427
    %v5871 = vunpack.c.h.b16 %v1427
    %v5872 = vunpack.c.l.b16 %v1428
    %v5873 = vunpack.c.h.b16 %v1428
    %v5874 = vunpack.c.l.b16 %v1429
    %v5875 = vunpack.c.h.b16 %v1429
    %v5876 = vunpack.c.l.b16 %v1430
    %v5877 = vunpack.c.h.b16 %v1430
    %v5878 = vunpack.c.l.b16 %v1431
    %v5879 = vunpack.c.h.b16 %v1431
    %v5880 = vunpack.c.l.b16 %v1432
    %v5881 = vunpack.c.h.b16 %v1432
    %v5882 = vunpack.c.l.b16 %v1433
    %v5883 = vunpack.c.h.b16 %v1433
    %v5884 = vunpack.c.l.b16 %v1434
    %v5885 = vunpack.c.h.b16 %v1434
    %v5886 = vunpack.c.l.b16 %v1435
    %v5887 = vunpack.c.h.b16 %v1435
    %v5888 = vunpack.c.l.b16 %v1436
    %v5889 = vunpack.c.h.b16 %v1436
    %v5890 = vunpack.c.l.b16 %v1437
    %v5891 = vunpack.c.h.b16 %v1437
    %v5892 = vunpack.c.l.b16 %v1438
    %v5893 = vunpack.c.h.b16 %v1438
    %v5894 = vunpack.c.l.b16 %v1439
    %v5895 = vunpack.c.h.b16 %v1439
    %v5896 = vunpack.c.l.b16 %v1440
    %v5897 = vunpack.c.h.b16 %v1440
    %v5898 = vunpack.c.l.b16 %v1441
    %v5899 = vunpack.c.h.b16 %v1441
    %v5900 = vunpack.c.l.b16 %v1442
    %v5901 = vunpack.c.h.b16 %v1442
    %v5902 = vunpack.c.l.b16 %v1443
    %v5903 = vunpack.c.h.b16 %v1443
    %v5904 = vunpack.c.l.b16 %v1444
    %v5905 = vunpack.c.h.b16 %v1444
    %v5906 = vunpack.c.l.b16 %v1445
    %v5907 = vunpack.c.h.b16 %v1445
    %v5908 = vunpack.c.l.b16 %v1446
    %v5909 = vunpack.c.h.b16 %v1446
    %v5910 = vunpack.c.l.b16 %v1447
    %v5911 = vunpack.c.h.b16 %v1447
    %v5912 = vunpack.c.l.b16 %v1448
    %v5913 = vunpack.c.h.b16 %v1448
    %v5914 = vunpack.c.l.b16 %v1449
    %v5915 = vunpack.c.h.b16 %v1449
    %v5916 = vunpack.c.l.b16 %v1450
    %v5917 = vunpack.c.h.b16 %v1450
    %v5918 = vunpack.c.l.b16 %v1451
    %v5919 = vunpack.c.h.b16 %v1451
    %v5920 = vunpack.c.l.b16 %v1452
    %v5921 = vunpack.c.h.b16 %v1452
    %v5922 = vunpack.c.l.b16 %v1453
    %v5923 = vunpack.c.h.b16 %v1453
    %v5924 = vunpack.c.l.b16 %v1454
    %v5925 = vunpack.c.h.b16 %v1454
    %v5926 = vunpack.c.l.b16 %v1455
    %v5927 = vunpack.c.h.b16 %v1455
    %v5928 = vunpack.c.l.b16 %v1456
    %v5929 = vunpack.c.h.b16 %v1456
    %v5930 = vunpack.c.l.b16 %v1457
    %v5931 = vunpack.c.h.b16 %v1457
    %v5932 = vunpack.c.l.b16 %v1458
    %v5933 = vunpack.c.h.b16 %v1458
    %v5934 = vunpack.c.l.b16 %v1459
    %v5935 = vunpack.c.h.b16 %v1459
    %v5936 = vunpack.c.l.b16 %v1460
    %v5937 = vunpack.c.h.b16 %v1460
    %v5938 = vunpack.c.l.b16 %v1461
    %v5939 = vunpack.c.h.b16 %v1461
    %v5940 = vunpack.c.l.b16 %v1462
    %v5941 = vunpack.c.h.b16 %v1462
    %v5942 = vunpack.c.l.b16 %v1463
    %v5943 = vunpack.c.h.b16 %v1463
    %v5944 = vunpack.c.l.b16 %v1464
    %v5945 = vunpack.c.h.b16 %v1464
    %v5946 = vunpack.c.l.b16 %v1465
    %v5947 = vunpack.c.h.b16 %v1465
    %v5948 = vunpack.c.l.b16 %v1466
    %v5949 = vunpack.c.h.b16 %v1466
    %v5950 = vunpack.c.l.b16 %v1467
    %v5951 = vunpack.c.h.b16 %v1467
    %v5952 = vunpack.c.l.b16 %v1468
    %v5953 = vunpack.c.h.b16 %v1468
    %v5954 = vunpack.c.l.b16 %v1469
    %v5955 = vunpack.c.h.b16 %v1469
    %v5956 = vunpack.c.l.b16 %v1470
    %v5957 = vunpack.c.h.b16 %v1470
    %v5958 = vunpack.c.l.b16 %v1471
    %v5959 = vunpack.c.h.b16 %v1471
    %v5960 = vunpack.c.l.b16 %v1472
    %v5961 = vunpack.c.h.b16 %v1472
    %v5962 = vunpack.c.l.b16 %v1473
    %v5963 = vunpack.c.h.b16 %v1473
    %v5964 = vunpack.c.l.b16 %v1474
    %v5965 = vunpack.c.h.b16 %v1474
    %v5966 = vunpack.c.l.b16 %v1475
    %v5967 = vunpack.c.h.b16 %v1475
    %v5968 = vunpack.c.l.b16 %v1476
    %v5969 = vunpack.c.h.b16 %v1476
    %v5970 = vunpack.c.l.b16 %v1477
    %v5971 = vunpack.c.h.b16 %v1477
    %v5972 = vunpack.c.l.b16 %v1478
    %v5973 = vunpack.c.h.b16 %v1478
    %v5974 = vunpack.c.l.b16 %v1479
    %v5975 = vunpack.c.h.b16 %v1479
    %v5976 = vunpack.c.l.b16 %v1480
    %v5977 = vunpack.c.h.b16 %v1480
    %v5978 = vunpack.c.l.b16 %v1481
    %v5979 = vunpack.c.h.b16 %v1481
    %v5980 = vunpack.c.l.b16 %v1482
    %v5981 = vunpack.c.h.b16 %v1482
    %v5982 = vunpack.c.l.b16 %v1483
    %v5983 = vunpack.c.h.b16 %v1483
    %v5984 = vunpack.c.l.b16 %v1484
    %v5985 = vunpack.c.h.b16 %v1484
    %v5986 = vunpack.c.l.b16 %v1485
    %v5987 = vunpack.c.h.b16 %v1485
    %v5988 = vunpack.c.l.b16 %v1486
    %v5989 = vunpack.c.h.b16 %v1486
    %v5990 = vunpack.c.l.b16 %v1487
    %v5991 = vunpack.c.h.b16 %v1487
    %v5992 = vunpack.c.l.b16 %v1488
    %v5993 = vunpack.c.h.b16 %v1488
    %v5994 = vunpack.c.l.b16 %v1489
    %v5995 = vunpack.c.h.b16 %v1489
    %v5996 = vunpack.c.l.b16 %v1490
    %v5997 = vunpack.c.h.b16 %v1490
    %v5998 = vunpack.c.l.b16 %v1491
    %v5999 = vunpack.c.h.b16 %v1491
    %v6000 = vunpack.c.l.b16 %v1492
    %v6001 = vunpack.c.h.b16 %v1492
    %v6002 = vunpack.c.l.b16 %v1493
    %v6003 = vunpack.c.h.b16 %v1493
    %v6004 = vunpack.c.l.b16 %v1494
    %v6005 = vunpack.c.h.b16 %v1494
    %v6006 = vunpack.c.l.b16 %v1495
    %v6007 = vunpack.c.h.b16 %v1495
    %v6008 = vunpack.c.l.b16 %v1496
    %v6009 = vunpack.c.h.b16 %v1496
    %v6010 = vunpack.c.l.b16 %v1497
    %v6011 = vunpack.c.h.b16 %v1497
    %v6012 = vunpack.c.l.b16 %v1498
    %v6013 = vunpack.c.h.b16 %v1498
    %v6014 = vunpack.c.l.b16 %v1499
    %v6015 = vunpack.c.h.b16 %v1499
    %v6016 = vunpack.c.l.b16 %v1500
    %v6017 = vunpack.c.h.b16 %v1500
    %v6018 = vunpack.c.l.b16 %v1501
    %v6019 = vunpack.c.h.b16 %v1501
    %v6020 = vunpack.c.l.b16 %v1502
    %v6021 = vunpack.c.h.b16 %v1502
    %v6022 = vunpack.c.l.b16 %v1503
    %v6023 = vunpack.c.h.b16 %v1503
    %v6024 = vunpack.c.l.b16 %v1504
    %v6025 = vunpack.c.h.b16 %v1504
    %v6026 = vunpack.c.l.b16 %v1505
    %v6027 = vunpack.c.h.b16 %v1505
    %v6028 = vunpack.c.l.b16 %v1506
    %v6029 = vunpack.c.h.b16 %v1506
    %v6030 = vunpack.c.l.b16 %v1507
    %v6031 = vunpack.c.h.b16 %v1507
    %v6032 = vunpack.c.l.b16 %v1508
    %v6033 = vunpack.c.h.b16 %v1508
    %v6034 = vunpack.c.l.b16 %v1509
    %v6035 = vunpack.c.h.b16 %v1509
    %v6036 = vunpack.c.l.b16 %v1510
    %v6037 = vunpack.c.h.b16 %v1510
    %v6038 = vunpack.c.l.b16 %v1511
    %v6039 = vunpack.c.h.b16 %v1511
    %v6040 = vunpack.c.l.b16 %v1512
    %v6041 = vunpack.c.h.b16 %v1512
    %v6042 = vunpack.c.l.b16 %v1513
    %v6043 = vunpack.c.h.b16 %v1513
    %v6044 = vunpack.c.l.b16 %v1514
    %v6045 = vunpack.c.h.b16 %v1514
    %v6046 = vunpack.c.l.b16 %v1515
    %v6047 = vunpack.c.h.b16 %v1515
    %v6048 = vunpack.c.l.b16 %v1516
    %v6049 = vunpack.c.h.b16 %v1516
    %v6050 = vunpack.c.l.b16 %v1517
    %v6051 = vunpack.c.h.b16 %v1517
    %v6052 = vunpack.c.l.b16 %v1518
    %v6053 = vunpack.c.h.b16 %v1518
    %v6054 = vunpack.c.l.b16 %v1519
    %v6055 = vunpack.c.h.b16 %v1519
    %v6056 = vunpack.c.l.b16 %v1520
    %v6057 = vunpack.c.h.b16 %v1520
    %v6058 = vunpack.c.l.b16 %v1521
    %v6059 = vunpack.c.h.b16 %v1521
    %v6060 = vunpack.c.l.b16 %v1522
    %v6061 = vunpack.c.h.b16 %v1522
    %v6062 = vunpack.c.l.b16 %v1523
    %v6063 = vunpack.c.h.b16 %v1523
    %v6064 = vunpack.c.l.b16 %v1524
    %v6065 = vunpack.c.h.b16 %v1524
    %v6066 = vunpack.c.l.b16 %v1525
    %v6067 = vunpack.c.h.b16 %v1525
    %v6068 = vunpack.c.l.b16 %v1526
    %v6069 = vunpack.c.h.b16 %v1526
    %v6070 = vunpack.c.l.b16 %v1527
    %v6071 = vunpack.c.h.b16 %v1527
    %v6072 = vunpack.c.l.b16 %v1528
    %v6073 = vunpack.c.h.b16 %v1528
    %v6074 = vunpack.c.l.b16 %v1529
    %v6075 = vunpack.c.h.b16 %v1529
    %v6076 = vunpack.c.l.b16 %v1530
    %v6077 = vunpack.c.h.b16 %v1530
    %v6078 = vunpack.c.l.b16 %v1531
    %v6079 = vunpack.c.h.b16 %v1531
    %v6080 = vunpack.c.l.b16 %v1532
    %v6081 = vunpack.c.h.b16 %v1532
    %v6082 = vunpack.c.l.b16 %v1533
    %v6083 = vunpack.c.h.b16 %v1533
    %v6084 = vunpack.c.l.b16 %v1534
    %v6085 = vunpack.c.h.b16 %v1534
    %v6086 = vunpack.c.l.b16 %v1535
    %v6087 = vunpack.c.h.b16 %v1535
    %v6088 = vunpack.c.l.b16 %v1536
    %v6089 = vunpack.c.h.b16 %v1536
    %v6090 = vunpack.c.l.b16 %v1537
    %v6091 = vunpack.c.h.b16 %v1537
    %v6092 = vunpack.c.l.b16 %v1538
    %v6093 = vunpack.c.h.b16 %v1538
    %v6094 = vunpack.c.l.b16 %v1539
    %v6095 = vunpack.c.h.b16 %v1539
    %v6096 = vunpack.c.l.b16 %v1540
    %v6097 = vunpack.c.h.b16 %v1540
    %v6098 = vunpack.c.l.b16 %v1541
    %v6099 = vunpack.c.h.b16 %v1541
    %v6100 = vunpack.c.l.b16 %v1542
    %v6101 = vunpack.c.h.b16 %v1542
    %v6102 = vunpack.c.l.b16 %v1543
    %v6103 = vunpack.c.h.b16 %v1543
    %v6104 = vunpack.c.l.b16 %v1544
    %v6105 = vunpack.c.h.b16 %v1544
    %v6106 = vunpack.c.l.b16 %v1545
    %v6107 = vunpack.c.h.b16 %v1545
    %v6108 = vunpack.c.l.b16 %v1546
    %v6109 = vunpack.c.h.b16 %v1546
    %v6110 = vunpack.c.l.b16 %v1547
    %v6111 = vunpack.c.h.b16 %v1547
    %v6112 = vunpack.c.l.b16 %v1548
    %v6113 = vunpack.c.h.b16 %v1548
    %v6114 = vunpack.c.l.b16 %v1549
    %v6115 = vunpack.c.h.b16 %v1549
    %v6116 = vunpack.c.l.b16 %v1550
    %v6117 = vunpack.c.h.b16 %v1550
    %v6118 = vunpack.c.l.b16 %v1551
    %v6119 = vunpack.c.h.b16 %v1551
    %v6120 = vunpack.c.l.b16 %v1552
    %v6121 = vunpack.c.h.b16 %v1552
    %v6122 = vunpack.c.l.b16 %v1553
    %v6123 = vunpack.c.h.b16 %v1553
    %v6124 = vunpack.c.l.b16 %v1554
    %v6125 = vunpack.c.h.b16 %v1554
    %v6126 = vunpack.c.l.b16 %v1555
    %v6127 = vunpack.c.h.b16 %v1555
    %v6128 = vunpack.c.l.b16 %v1556
    %v6129 = vunpack.c.h.b16 %v1556
    %v6130 = vunpack.c.l.b16 %v1557
    %v6131 = vunpack.c.h.b16 %v1557
    %v6132 = vunpack.c.l.b16 %v1558
    %v6133 = vunpack.c.h.b16 %v1558
    %v6134 = vunpack.c.l.b16 %v1559
    %v6135 = vunpack.c.h.b16 %v1559
    %v6136 = vunpack.c.l.b16 %v1560
    %v6137 = vunpack.c.h.b16 %v1560
    %v6138 = vunpack.c.l.b16 %v1561
    %v6139 = vunpack.c.h.b16 %v1561
    %v6140 = vunpack.c.l.b16 %v1562
    %v6141 = vunpack.c.h.b16 %v1562
    %v6142 = vunpack.c.l.b16 %v1563
    %v6143 = vunpack.c.h.b16 %v1563
    %v6144 = vunpack.c.l.b16 %v1564
    %v6145 = vunpack.c.h.b16 %v1564
    %v6146 = vunpack.c.l.b16 %v1565
    %v6147 = vunpack.c.h.b16 %v1565
    %v6148 = vunpack.c.l.b16 %v1566
    %v6149 = vunpack.c.h.b16 %v1566
    %v6150 = vunpack.c.l.b16 %v1567
    %v6151 = vunpack.c.h.b16 %v1567
    %v6152 = vunpack.c.l.b16 %v1568
    %v6153 = vunpack.c.h.b16 %v1568
    %v6154 = vunpack.c.l.b16 %v1569
    %v6155 = vunpack.c.h.b16 %v1569
    %v6156 = vunpack.c.l.b16 %v1570
    %v6157 = vunpack.c.h.b16 %v1570
    %v6158 = vunpack.c.l.b16 %v1571
    %v6159 = vunpack.c.h.b16 %v1571
    %v6160 = vunpack.c.l.b16 %v1572
    %v6161 = vunpack.c.h.b16 %v1572
    %v6162 = vunpack.c.l.b16 %v1573
    %v6163 = vunpack.c.h.b16 %v1573
    %v6164 = vunpack.c.l.b16 %v1574
    %v6165 = vunpack.c.h.b16 %v1574
    %v6166 = vunpack.c.l.b16 %v1575
    %v6167 = vunpack.c.h.b16 %v1575
    %v6168 = vunpack.c.l.b16 %v1576
    %v6169 = vunpack.c.h.b16 %v1576
    %v6170 = vunpack.c.l.b16 %v1577
    %v6171 = vunpack.c.h.b16 %v1577
    %v6172 = vunpack.c.l.b16 %v1578
    %v6173 = vunpack.c.h.b16 %v1578
    %v6174 = vunpack.c.l.b16 %v1579
    %v6175 = vunpack.c.h.b16 %v1579
    %v6176 = vunpack.c.l.b16 %v1580
    %v6177 = vunpack.c.h.b16 %v1580
    %v6178 = vunpack.c.l.b16 %v1581
    %v6179 = vunpack.c.h.b16 %v1581
    %v6180 = vunpack.c.l.b16 %v1582
    %v6181 = vunpack.c.h.b16 %v1582
    %v6182 = vunpack.c.l.b16 %v1583
    %v6183 = vunpack.c.h.b16 %v1583
    %v6184 = vunpack.c.l.b16 %v1584
    %v6185 = vunpack.c.h.b16 %v1584
    %v6186 = vunpack.c.l.b16 %v1585
    %v6187 = vunpack.c.h.b16 %v1585
    %v6188 = vunpack.c.l.b16 %v1586
    %v6189 = vunpack.c.h.b16 %v1586
    %v6190 = vunpack.c.l.b16 %v1587
    %v6191 = vunpack.c.h.b16 %v1587
    %v6192 = vunpack.c.l.b16 %v1588
    %v6193 = vunpack.c.h.b16 %v1588
    %v6194 = vunpack.c.l.b16 %v1589
    %v6195 = vunpack.c.h.b16 %v1589
    %v6196 = vunpack.c.l.b16 %v1590
    %v6197 = vunpack.c.h.b16 %v1590
    %v6198 = vunpack.c.l.b16 %v1591
    %v6199 = vunpack.c.h.b16 %v1591
    %v6200 = vunpack.c.l.b16 %v1592
    %v6201 = vunpack.c.h.b16 %v1592
    %v6202 = vunpack.c.l.b16 %v1593
    %v6203 = vunpack.c.h.b16 %v1593
    %v6204 = vunpack.c.l.b16 %v1594
    %v6205 = vunpack.c.h.b16 %v1594
    %v6206 = vunpack.c.l.b16 %v1595
    %v6207 = vunpack.c.h.b16 %v1595
    %v6208 = vunpack.c.l.b16 %v1596
    %v6209 = vunpack.c.h.b16 %v1596
    %v6210 = vunpack.c.l.b16 %v1597
    %v6211 = vunpack.c.h.b16 %v1597
    %v6212 = vunpack.c.l.b16 %v1598
    %v6213 = vunpack.c.h.b16 %v1598
    %v6214 = vunpack.c.l.b16 %v1599
    %v6215 = vunpack.c.h.b16 %v1599
    %v6216 = vunpack.c.l.b16 %v1600
    %v6217 = vunpack.c.h.b16 %v1600
    %v6218 = vunpack.c.l.b16 %v1601
    %v6219 = vunpack.c.h.b16 %v1601
    %v6220 = vunpack.c.l.b16 %v1602
    %v6221 = vunpack.c.h.b16 %v1602
    %v6222 = vunpack.c.l.b16 %v1603
    %v6223 = vunpack.c.h.b16 %v1603
    %v6224 = vunpack.c.l.b16 %v1604
    %v6225 = vunpack.c.h.b16 %v1604
    %v6226 = vunpack.c.l.b16 %v1605
    %v6227 = vunpack.c.h.b16 %v1605
    %v6228 = vunpack.c.l.b16 %v1606
    %v6229 = vunpack.c.h.b16 %v1606
    %v6230 = vunpack.c.l.b16 %v1607
    %v6231 = vunpack.c.h.b16 %v1607
    %v6232 = vunpack.c.l.b16 %v1608
    %v6233 = vunpack.c.h.b16 %v1608
    %v6234 = vunpack.c.l.b16 %v1609
    %v6235 = vunpack.c.h.b16 %v1609
    %v6236 = vunpack.c.l.b16 %v1610
    %v6237 = vunpack.c.h.b16 %v1610
    %v6238 = vunpack.c.l.b16 %v1611
    %v6239 = vunpack.c.h.b16 %v1611
    %v6240 = vunpack.c.l.b16 %v1612
    %v6241 = vunpack.c.h.b16 %v1612
    %v6242 = vunpack.c.l.b16 %v1613
    %v6243 = vunpack.c.h.b16 %v1613
    %v6244 = vunpack.c.l.b16 %v1614
    %v6245 = vunpack.c.h.b16 %v1614
    %v6246 = vunpack.c.l.b16 %v1615
    %v6247 = vunpack.c.h.b16 %v1615
    %v6248 = vunpack.c.l.b16 %v1616
    %v6249 = vunpack.c.h.b16 %v1616
    %v6250 = vunpack.c.l.b16 %v1617
    %v6251 = vunpack.c.h.b16 %v1617
    %v6252 = vunpack.c.l.b16 %v1618
    %v6253 = vunpack.c.h.b16 %v1618
    %v6254 = vunpack.c.l.b16 %v1619
    %v6255 = vunpack.c.h.b16 %v1619
    %v6256 = vunpack.c.l.b16 %v1620
    %v6257 = vunpack.c.h.b16 %v1620
    %v6258 = vunpack.c.l.b16 %v1621
    %v6259 = vunpack.c.h.b16 %v1621
    %v6260 = vunpack.c.l.b16 %v1622
    %v6261 = vunpack.c.h.b16 %v1622
    %v6262 = vunpack.c.l.b16 %v1623
    %v6263 = vunpack.c.h.b16 %v1623
    %v6264 = vunpack.c.l.b16 %v1624
    %v6265 = vunpack.c.h.b16 %v1624
    %v6266 = vunpack.c.l.b16 %v1625
    %v6267 = vunpack.c.h.b16 %v1625
    %v6268 = vunpack.c.l.b16 %v1626
    %v6269 = vunpack.c.h.b16 %v1626
    %v6270 = vunpack.c.l.b16 %v1627
    %v6271 = vunpack.c.h.b16 %v1627
    %v6272 = vunpack.c.l.b16 %v1628
    %v6273 = vunpack.c.h.b16 %v1628
    %v6274 = vunpack.c.l.b16 %v1629
    %v6275 = vunpack.c.h.b16 %v1629
    %v6276 = vunpack.c.l.b16 %v1630
    %v6277 = vunpack.c.h.b16 %v1630
    %v6278 = vunpack.c.l.b16 %v1631
    %v6279 = vunpack.c.h.b16 %v1631
    %v6280 = vunpack.c.l.b16 %v1632
    %v6281 = vunpack.c.h.b16 %v1632
    %v6282 = vunpack.c.l.b16 %v1633
    %v6283 = vunpack.c.h.b16 %v1633
    %v6284 = vunpack.c.l.b16 %v1634
    %v6285 = vunpack.c.h.b16 %v1634
    %v6286 = vunpack.c.l.b16 %v1635
    %v6287 = vunpack.c.h.b16 %v1635
    %v6288 = vunpack.c.l.b16 %v1636
    %v6289 = vunpack.c.h.b16 %v1636
    %v6290 = vunpack.c.l.b16 %v1637
    %v6291 = vunpack.c.h.b16 %v1637
    %v6292 = vunpack.c.l.b16 %v1638
    %v6293 = vunpack.c.h.b16 %v1638
    %v6294 = vunpack.c.l.b16 %v1639
    %v6295 = vunpack.c.h.b16 %v1639
    %v6296 = vunpack.c.l.b16 %v1640
    %v6297 = vunpack.c.h.b16 %v1640
    %v6298 = vunpack.c.l.b16 %v1641
    %v6299 = vunpack.c.h.b16 %v1641
    %v6300 = vunpack.c.l.b16 %v1642
    %v6301 = vunpack.c.h.b16 %v1642
    %v6302 = vunpack.c.l.b16 %v1643
    %v6303 = vunpack.c.h.b16 %v1643
    %v6304 = vunpack.c.l.b16 %v1644
    %v6305 = vunpack.c.h.b16 %v1644
    %v6306 = vunpack.c.l.b16 %v1645
    %v6307 = vunpack.c.h.b16 %v1645
    %v6308 = vunpack.c.l.b16 %v1646
    %v6309 = vunpack.c.h.b16 %v1646
    %v6310 = vunpack.c.l.b16 %v1647
    %v6311 = vunpack.c.h.b16 %v1647
    %v6312 = vunpack.c.l.b16 %v1648
    %v6313 = vunpack.c.h.b16 %v1648
    %v6314 = vunpack.c.l.b16 %v1649
    %v6315 = vunpack.c.h.b16 %v1649
    %v6316 = vunpack.c.l.b16 %v1650
    %v6317 = vunpack.c.h.b16 %v1650
    %v6318 = vunpack.c.l.b16 %v1651
    %v6319 = vunpack.c.h.b16 %v1651
    %v6320 = vunpack.c.l.b16 %v1652
    %v6321 = vunpack.c.h.b16 %v1652
    %v6322 = vunpack.c.l.b16 %v1653
    %v6323 = vunpack.c.h.b16 %v1653
    %v6324 = vunpack.c.l.b16 %v1654
    %v6325 = vunpack.c.h.b16 %v1654
    %v6326 = vunpack.c.l.b16 %v1655
    %v6327 = vunpack.c.h.b16 %v1655
    %v6328 = vunpack.c.l.b16 %v1656
    %v6329 = vunpack.c.h.b16 %v1656
    %v6330 = vunpack.c.l.b16 %v1657
    %v6331 = vunpack.c.h.b16 %v1657
    %v6332 = vunpack.c.l.b16 %v1658
    %v6333 = vunpack.c.h.b16 %v1658
    %v6334 = vunpack.c.l.b16 %v1659
    %v6335 = vunpack.c.h.b16 %v1659
    %v6336 = vunpack.c.l.b16 %v1660
    %v6337 = vunpack.c.h.b16 %v1660
    %v6338 = vunpack.c.l.b16 %v1661
    %v6339 = vunpack.c.h.b16 %v1661
    %v6340 = vunpack.c.l.b16 %v1662
    %v6341 = vunpack.c.h.b16 %v1662
    %v6342 = vunpack.c.l.b16 %v1663
    %v6343 = vunpack.c.h.b16 %v1663
    %v6344 = vunpack.c.l.b16 %v1664
    %v6345 = vunpack.c.h.b16 %v1664
    %v6346 = vunpack.c.l.b16 %v1665
    %v6347 = vunpack.c.h.b16 %v1665
    %v6348 = vunpack.c.l.b16 %v1666
    %v6349 = vunpack.c.h.b16 %v1666
    %v6350 = vunpack.c.l.b16 %v1667
    %v6351 = vunpack.c.h.b16 %v1667
    %v6352 = vunpack.c.l.b16 %v1668
    %v6353 = vunpack.c.h.b16 %v1668
    %v6354 = vunpack.c.l.b16 %v1669
    %v6355 = vunpack.c.h.b16 %v1669
    %v6356 = vunpack.c.l.b16 %v1670
    %v6357 = vunpack.c.h.b16 %v1670
    %v6358 = vunpack.c.l.b16 %v1671
    %v6359 = vunpack.c.h.b16 %v1671
    %v6360 = vunpack.c.l.b16 %v1672
    %v6361 = vunpack.c.h.b16 %v1672
    %v6362 = vunpack.c.l.b16 %v1673
    %v6363 = vunpack.c.h.b16 %v1673
    %v6364 = vunpack.c.l.b16 %v1674
    %v6365 = vunpack.c.h.b16 %v1674
    %v6366 = vunpack.c.l.b16 %v1675
    %v6367 = vunpack.c.h.b16 %v1675
    %v6368 = vunpack.c.l.b16 %v1676
    %v6369 = vunpack.c.h.b16 %v1676
    %v6370 = vunpack.c.l.b16 %v1677
    %v6371 = vunpack.c.h.b16 %v1677
    %v6372 = vunpack.c.l.b16 %v1678
    %v6373 = vunpack.c.h.b16 %v1678
    %v6374 = vunpack.c.l.b16 %v1679
    %v6375 = vunpack.c.h.b16 %v1679
    %v6376 = vunpack.c.l.b16 %v1680
    %v6377 = vunpack.c.h.b16 %v1680
    %v6378 = vunpack.c.l.b16 %v1681
    %v6379 = vunpack.c.h.b16 %v1681
    %v6380 = vunpack.c.l.b16 %v1682
    %v6381 = vunpack.c.h.b16 %v1682
    %v6382 = vunpack.c.l.b16 %v1683
    %v6383 = vunpack.c.h.b16 %v1683
    %v6384 = vunpack.c.l.b16 %v1684
    %v6385 = vunpack.c.h.b16 %v1684
    %v6386 = vunpack.c.l.b16 %v1685
    %v6387 = vunpack.c.h.b16 %v1685
    %v6388 = vunpack.c.l.b16 %v1686
    %v6389 = vunpack.c.h.b16 %v1686
    %v6390 = vunpack.c.l.b16 %v1687
    %v6391 = vunpack.c.h.b16 %v1687
    %v6392 = vunpack.c.l.b16 %v1688
    %v6393 = vunpack.c.h.b16 %v1688
    %v6394 = vunpack.c.l.b16 %v1689
    %v6395 = vunpack.c.h.b16 %v1689
    %v6396 = vunpack.c.l.b16 %v1690
    %v6397 = vunpack.c.h.b16 %v1690
    %v6398 = vunpack.c.l.b16 %v1691
    %v6399 = vunpack.c.h.b16 %v1691
    %v6400 = vunpack.c.l.b16 %v1692
    %v6401 = vunpack.c.h.b16 %v1692
    %v6402 = vunpack.c.l.b16 %v1693
    %v6403 = vunpack.c.h.b16 %v1693
    %v6404 = vunpack.c.l.b16 %v1694
    %v6405 = vunpack.c.h.b16 %v1694
    %v6406 = vunpack.c.l.b16 %v1695
    %v6407 = vunpack.c.h.b16 %v1695
    %v6408 = vunpack.c.l.b16 %v1696
    %v6409 = vunpack.c.h.b16 %v1696
    %v6410 = vunpack.c.l.b16 %v1697
    %v6411 = vunpack.c.h.b16 %v1697
    %v6412 = vunpack.c.l.b16 %v1698
    %v6413 = vunpack.c.h.b16 %v1698
    %v6414 = vunpack.c.l.b16 %v1699
    %v6415 = vunpack.c.h.b16 %v1699
    %v6416 = vunpack.c.l.b16 %v1700
    %v6417 = vunpack.c.h.b16 %v1700
    %v6418 = vunpack.c.l.b16 %v1701
    %v6419 = vunpack.c.h.b16 %v1701
    %v6420 = vunpack.c.l.b16 %v1702
    %v6421 = vunpack.c.h.b16 %v1702
    %v6422 = vunpack.c.l.b16 %v1703
    %v6423 = vunpack.c.h.b16 %v1703
    %v6424 = vunpack.c.l.b16 %v1704
    %v6425 = vunpack.c.h.b16 %v1704
    %v6426 = vunpack.c.l.b16 %v1705
    %v6427 = vunpack.c.h.b16 %v1705
    %v6428 = vunpack.c.l.b16 %v1706
    %v6429 = vunpack.c.h.b16 %v1706
    %v6430 = vunpack.c.l.b16 %v1707
    %v6431 = vunpack.c.h.b16 %v1707
    %v6432 = vunpack.c.l.b16 %v1708
    %v6433 = vunpack.c.h.b16 %v1708
    %v6434 = vunpack.c.l.b16 %v1709
    %v6435 = vunpack.c.h.b16 %v1709
    %v6436 = vunpack.c.l.b16 %v1710
    %v6437 = vunpack.c.h.b16 %v1710
    %v6438 = vunpack.c.l.b16 %v1711
    %v6439 = vunpack.c.h.b16 %v1711
    %v6440 = vunpack.c.l.b16 %v1712
    %v6441 = vunpack.c.h.b16 %v1712
    %v6442 = vunpack.c.l.b16 %v1713
    %v6443 = vunpack.c.h.b16 %v1713
    %v6444 = vunpack.c.l.b16 %v1714
    %v6445 = vunpack.c.h.b16 %v1714
    %v6446 = vunpack.c.l.b16 %v1715
    %v6447 = vunpack.c.h.b16 %v1715
    %v6448 = vunpack.c.l.b16 %v1716
    %v6449 = vunpack.c.h.b16 %v1716
    %v6450 = vunpack.c.l.b16 %v1717
    %v6451 = vunpack.c.h.b16 %v1717
    %v6452 = vunpack.c.l.b16 %v1718
    %v6453 = vunpack.c.h.b16 %v1718
    %v6454 = vunpack.c.l.b16 %v1719
    %v6455 = vunpack.c.h.b16 %v1719
    %v6456 = vunpack.c.l.b16 %v1720
    %v6457 = vunpack.c.h.b16 %v1720
    %v6458 = vunpack.c.l.b16 %v1721
    %v6459 = vunpack.c.h.b16 %v1721
    %v6460 = vunpack.c.l.b16 %v1722
    %v6461 = vunpack.c.h.b16 %v1722
    %v6462 = vunpack.c.l.b16 %v1723
    %v6463 = vunpack.c.h.b16 %v1723
    %v6464 = vunpack.c.l.b16 %v1724
    %v6465 = vunpack.c.h.b16 %v1724
    %v6466 = vunpack.c.l.b16 %v1725
    %v6467 = vunpack.c.h.b16 %v1725
    %v6468 = vunpack.c.l.b16 %v1726
    %v6469 = vunpack.c.h.b16 %v1726
    %v6470 = vunpack.c.l.b16 %v1727
    %v6471 = vunpack.c.h.b16 %v1727
    %v6472 = vunpack.c.l.b16 %v1728
    %v6473 = vunpack.c.h.b16 %v1728
    %v6474 = vunpack.c.l.b16 %v1729
    %v6475 = vunpack.c.h.b16 %v1729
    %v6476 = vpack.c.b16 %v3412, %v3404
    %v6477 = vpack.c.b16 %v3413, %v3405
    %v6478 = vpack.c.b16 %v3414, %v3406
    %v6479 = vpack.c.b16 %v3415, %v3407
    %v6480 = vpack.c.b16 %v3416, %v3408
    %v6481 = vpack.c.b16 %v3417, %v3409
    %v6482 = vpack.c.b16 %v3418, %v3410
    %v6483 = vpack.c.b16 %v3419, %v3411
    %v6484 = vpack.c.b16 %v3428, %v3420
    %v6485 = vpack.c.b16 %v3429, %v3421
    %v6486 = vpack.c.b16 %v3430, %v3422
    %v6487 = vpack.c.b16 %v3431, %v3423
    %v6488 = vpack.c.b16 %v3432, %v3424
    %v6489 = vpack.c.b16 %v3433, %v3425
    %v6490 = vpack.c.b16 %v3434, %v3426
    %v6491 = vpack.c.b16 %v3435, %v3427
    %v6492 = vpack.c.b16 %v3444, %v3436
    %v6493 = vpack.c.b16 %v3445, %v3437
    %v6494 = vpack.c.b16 %v3446, %v3438
    %v6495 = vpack.c.b16 %v3447, %v3439
    %v6496 = vpack.c.b16 %v3448, %v3440
    %v6497 = vpack.c.b16 %v3449, %v3441
    %v6498 = vpack.c.b16 %v3450, %v3442
    %v6499 = vpack.c.b16 %v3451, %v3443
    %v6500 = vpack.c.b16 %v3460, %v3452
    %v6501 = vpack.c.b16 %v3461, %v3453
    %v6502 = vpack.c.b16 %v3462, %v3454
    %v6503 = vpack.c.b16 %v3463, %v3455
    %v6504 = vpack.c.b16 %v3464, %v3456
    %v6505 = vpack.c.b16 %v3465, %v3457
    %v6506 = vpack.c.b16 %v3466, %v3458
    %v6507 = vpack.c.b16 %v3467, %v3459
    %v6508 = vpack.c.b16 %v3476, %v3468
    %v6509 = vpack.c.b16 %v3477, %v3469
    %v6510 = vpack.c.b16 %v3478, %v3470
    %v6511 = vpack.c.b16 %v3479, %v3471
    %v6512 = vpack.c.b16 %v3480, %v3472
    %v6513 = vpack.c.b16 %v3481, %v3473
    %v6514 = vpack.c.b16 %v3482, %v3474
    %v6515 = vpack.c.b16 %v3483, %v3475
    %v6516 = vpack.c.b16 %v3492, %v3484
    %v6517 = vpack.c.b16 %v3493, %v3485
    %v6518 = vpack.c.b16 %v3494, %v3486
    %v6519 = vpack.c.b16 %v3495, %v3487
    %v6520 = vpack.c.b16 %v3496, %v3488
    %v6521 = vpack.c.b16 %v3497, %v3489
    %v6522 = vpack.c.b16 %v3498, %v3490
    %v6523 = vpack.c.b16 %v3499, %v3491
    %v6524 = vpack.c.b16 %v3508, %v3500
    %v6525 = vpack.c.b16 %v3509, %v3501
    %v6526 = vpack.c.b16 %v3510, %v3502
    %v6527 = vpack.c.b16 %v3511, %v3503
    %v6528 = vpack.c.b16 %v3512, %v3504
    %v6529 = vpack.c.b16 %v3513, %v3505
    %v6530 = vpack.c.b16 %v3514, %v3506
    %v6531 = vpack.c.b16 %v3515, %v3507
    %v6532 = vpack.c.b16 %v3524, %v3516
    %v6533 = vpack.c.b16 %v3525, %v3517
    %v6534 = vpack.c.b16 %v3526, %v3518
    %v6535 = vpack.c.b16 %v3527, %v3519
    %v6536 = vpack.c.b16 %v3528, %v3520
    %v6537 = vpack.c.b16 %v3529, %v3521
    %v6538 = vpack.c.b16 %v3530, %v3522
    %v6539 = vpack.c.b16 %v3531, %v3523
    %v6540 = vpack.c.b16 %v3540, %v3532
    %v6541 = vpack.c.b16 %v3541, %v3533
    %v6542 = vpack.c.b16 %v3542, %v3534
    %v6543 = vpack.c.b16 %v3543, %v3535
    %v6544 = vpack.c.b16 %v3544, %v3536
    %v6545 = vpack.c.b16 %v3545, %v3537
    %v6546 = vpack.c.b16 %v3546, %v3538
    %v6547 = vpack.c.b16 %v3547, %v3539
    %v6548 = vpack.c.b16 %v3556, %v3548
    %v6549 = vpack.c.b16 %v3557, %v3549
    %v6550 = vpack.c.b16 %v3558, %v3550
    %v6551 = vpack.c.b16 %v3559, %v3551
    %v6552 = vpack.c.b16 %v3560, %v3552
    %v6553 = vpack.c.b16 %v3561, %v3553
    %v6554 = vpack.c.b16 %v3562, %v3554
    %v6555 = vpack.c.b16 %v3563, %v3555
    %v6556 = vpack.c.b16 %v3572, %v3564
    %v6557 = vpack.c.b16 %v3573, %v3565
    %v6558 = vpack.c.b16 %v3574, %v3566
    %v6559 = vpack.c.b16 %v3575, %v3567
    %v6560 = vpack.c.b16 %v3576, %v3568
    %v6561 = vpack.c.b16 %v3577, %v3569
    %v6562 = vpack.c.b16 %v3578, %v3570
    %v6563 = vpack.c.b16 %v3579, %v3571
    %v6564 = vpack.c.b16 %v3588, %v3580
    %v6565 = vpack.c.b16 %v3589, %v3581
    %v6566 = vpack.c.b16 %v3590, %v3582
    %v6567 = vpack.c.b16 %v3591, %v3583
    %v6568 = vpack.c.b16 %v3592, %v3584
    %v6569 = vpack.c.b16 %v3593, %v3585
    %v6570 = vpack.c.b16 %v3594, %v3586
    %v6571 = vpack.c.b16 %v3595, %v3587
    %v6572 = vpack.c.b16 %v3604, %v3596
    %v6573 = vpack.c.b16 %v3605, %v3597
    %v6574 = vpack.c.b16 %v3606, %v3598
    %v6575 = vpack.c.b16 %v3607, %v3599
    %v6576 = vpack.c.b16 %v3608, %v3600
    %v6577 = vpack.c.b16 %v3609, %v3601
    %v6578 = vpack.c.b16 %v3610, %v3602
    %v6579 = vpack.c.b16 %v3611, %v3603
    %v6580 = vpack.c.b16 %v3620, %v3612
    %v6581 = vpack.c.b16 %v3621, %v3613
    %v6582 = vpack.c.b16 %v3622, %v3614
    %v6583 = vpack.c.b16 %v3623, %v3615
    %v6584 = vpack.c.b16 %v3624, %v3616
    %v6585 = vpack.c.b16 %v3625, %v3617
    %v6586 = vpack.c.b16 %v3626, %v3618
    %v6587 = vpack.c.b16 %v3627, %v3619
    %v6588 = vpack.c.b16 %v3636, %v3628
    %v6589 = vpack.c.b16 %v3637, %v3629
    %v6590 = vpack.c.b16 %v3638, %v3630
    %v6591 = vpack.c.b16 %v3639, %v3631
    %v6592 = vpack.c.b16 %v3640, %v3632
    %v6593 = vpack.c.b16 %v3641, %v3633
    %v6594 = vpack.c.b16 %v3642, %v3634
    %v6595 = vpack.c.b16 %v3643, %v3635
    %v6596 = vpack.c.b16 %v3652, %v3644
    %v6597 = vpack.c.b16 %v3653, %v3645
    %v6598 = vpack.c.b16 %v3654, %v3646
    %v6599 = vpack.c.b16 %v3655, %v3647
    %v6600 = vpack.c.b16 %v3656, %v3648
    %v6601 = vpack.c.b16 %v3657, %v3649
    %v6602 = vpack.c.b16 %v3658, %v3650
    %v6603 = vpack.c.b16 %v3659, %v3651
    %v6604 = vpack.c.b16 %v3668, %v3660
    %v6605 = vpack.c.b16 %v3669, %v3661
    %v6606 = vpack.c.b16 %v3670, %v3662
    %v6607 = vpack.c.b16 %v3671, %v3663
    %v6608 = vpack.c.b16 %v3672, %v3664
    %v6609 = vpack.c.b16 %v3673, %v3665
    %v6610 = vpack.c.b16 %v3674, %v3666
    %v6611 = vpack.c.b16 %v3675, %v3667
    %v6612 = vpack.c.b16 %v3684, %v3676
    %v6613 = vpack.c.b16 %v3685, %v3677
    %v6614 = vpack.c.b16 %v3686, %v3678
    %v6615 = vpack.c.b16 %v3687, %v3679
    %v6616 = vpack.c.b16 %v3688, %v3680
    %v6617 = vpack.c.b16 %v3689, %v3681
    %v6618 = vpack.c.b16 %v3690, %v3682
    %v6619 = vpack.c.b16 %v3691, %v3683
    %v6620 = vpack.c.b16 %v3700, %v3692
    %v6621 = vpack.c.b16 %v3701, %v3693
    %v6622 = vpack.c.b16 %v3702, %v3694
    %v6623 = vpack.c.b16 %v3703, %v3695
    %v6624 = vpack.c.b16 %v3704, %v3696
    %v6625 = vpack.c.b16 %v3705, %v3697
    %v6626 = vpack.c.b16 %v3706, %v3698
    %v6627 = vpack.c.b16 %v3707, %v3699
    %v6628 = vpack.c.b16 %v3716, %v3708
    %v6629 = vpack.c.b16 %v3717, %v3709
    %v6630 = vpack.c.b16 %v3718, %v3710
    %v6631 = vpack.c.b16 %v3719, %v3711
    %v6632 = vpack.c.b16 %v3720, %v3712
    %v6633 = vpack.c.b16 %v3721, %v3713
    %v6634 = vpack.c.b16 %v3722, %v3714
    %v6635 = vpack.c.b16 %v3723, %v3715
    %v6636 = vpack.c.b16 %v3732, %v3724
    %v6637 = vpack.c.b16 %v3733, %v3725
    %v6638 = vpack.c.b16 %v3734, %v3726
    %v6639 = vpack.c.b16 %v3735, %v3727
    %v6640 = vpack.c.b16 %v3736, %v3728
    %v6641 = vpack.c.b16 %v3737, %v3729
    %v6642 = vpack.c.b16 %v3738, %v3730
    %v6643 = vpack.c.b16 %v3739, %v3731
    %v6644 = vpack.c.b16 %v3748, %v3740
    %v6645 = vpack.c.b16 %v3749, %v3741
    %v6646 = vpack.c.b16 %v3750, %v3742
    %v6647 = vpack.c.b16 %v3751, %v3743
    %v6648 = vpack.c.b16 %v3752, %v3744
    %v6649 = vpack.c.b16 %v3753, %v3745
    %v6650 = vpack.c.b16 %v3754, %v3746
    %v6651 = vpack.c.b16 %v3755, %v3747
    %v6652 = vpack.c.b16 %v3764, %v3756
    %v6653 = vpack.c.b16 %v3765, %v3757
    %v6654 = vpack.c.b16 %v3766, %v3758
    %v6655 = vpack.c.b16 %v3767, %v3759
    %v6656 = vpack.c.b16 %v3768, %v3760
    %v6657 = vpack.c.b16 %v3769, %v3761
    %v6658 = vpack.c.b16 %v3770, %v3762
    %v6659 = vpack.c.b16 %v3771, %v3763
    %v6660 = vpack.c.b16 %v3780, %v3772
    %v6661 = vpack.c.b16 %v3781, %v3773
    %v6662 = vpack.c.b16 %v3782, %v3774
    %v6663 = vpack.c.b16 %v3783, %v3775
    %v6664 = vpack.c.b16 %v3784, %v3776
    %v6665 = vpack.c.b16 %v3785, %v3777
    %v6666 = vpack.c.b16 %v3786, %v3778
    %v6667 = vpack.c.b16 %v3787, %v3779
    %v6668 = vpack.c.b16 %v3796, %v3788
    %v6669 = vpack.c.b16 %v3797, %v3789
    %v6670 = vpack.c.b16 %v3798, %v3790
    %v6671 = vpack.c.b16 %v3799, %v3791
    %v6672 = vpack.c.b16 %v3800, %v3792
    %v6673 = vpack.c.b16 %v3801, %v3793
    %v6674 = vpack.c.b16 %v3802, %v3794
    %v6675 = vpack.c.b16 %v3803, %v3795
    %v6676 = vpack.c.b16 %v3812, %v3804
    %v6677 = vpack.c.b16 %v3813, %v3805
    %v6678 = vpack.c.b16 %v3814, %v3806
    %v6679 = vpack.c.b16 %v3815, %v3807
    %v6680 = vpack.c.b16 %v3816, %v3808
    %v6681 = vpack.c.b16 %v3817, %v3809
    %v6682 = vpack.c.b16 %v3818, %v3810
    %v6683 = vpack.c.b16 %v3819, %v3811
    %v6684 = vpack.c.b16 %v3828, %v3820
    %v6685 = vpack.c.b16 %v3829, %v3821
    %v6686 = vpack.c.b16 %v3830, %v3822
    %v6687 = vpack.c.b16 %v3831, %v3823
    %v6688 = vpack.c.b16 %v3832, %v3824
    %v6689 = vpack.c.b16 %v3833, %v3825
    %v6690 = vpack.c.b16 %v3834, %v3826
    %v6691 = vpack.c.b16 %v3835, %v3827
    %v6692 = vpack.c.b16 %v3844, %v3836
    %v6693 = vpack.c.b16 %v3845, %v3837
    %v6694 = vpack.c.b16 %v3846, %v3838
    %v6695 = vpack.c.b16 %v3847, %v3839
    %v6696 = vpack.c.b16 %v3848, %v3840
    %v6697 = vpack.c.b16 %v3849, %v3841
    %v6698 = vpack.c.b16 %v3850, %v3842
    %v6699 = vpack.c.b16 %v3851, %v3843
    %v6700 = vpack.c.b16 %v3860, %v3852
    %v6701 = vpack.c.b16 %v3861, %v3853
    %v6702 = vpack.c.b16 %v3862, %v3854
    %v6703 = vpack.c.b16 %v3863, %v3855
    %v6704 = vpack.c.b16 %v3864, %v3856
    %v6705 = vpack.c.b16 %v3865, %v3857
    %v6706 = vpack.c.b16 %v3866, %v3858
    %v6707 = vpack.c.b16 %v3867, %v3859
    %v6708 = vpack.c.b16 %v3876, %v3868
    %v6709 = vpack.c.b16 %v3877, %v3869
    %v6710 = vpack.c.b16 %v3878, %v3870
    %v6711 = vpack.c.b16 %v3879, %v3871
    %v6712 = vpack.c.b16 %v3880, %v3872
    %v6713 = vpack.c.b16 %v3881, %v3873
    %v6714 = vpack.c.b16 %v3882, %v3874
    %v6715 = vpack.c.b16 %v3883, %v3875
    %v6716 = vpack.c.b16 %v3892, %v3884
    %v6717 = vpack.c.b16 %v3893, %v3885
    %v6718 = vpack.c.b16 %v3894, %v3886
    %v6719 = vpack.c.b16 %v3895, %v3887
    %v6720 = vpack.c.b16 %v3896, %v3888
    %v6721 = vpack.c.b16 %v3897, %v3889
    %v6722 = vpack.c.b16 %v3898, %v3890
    %v6723 = vpack.c.b16 %v3899, %v3891
    %v6724 = vpack.c.b16 %v3908, %v3900
    %v6725 = vpack.c.b16 %v3909, %v3901
    %v6726 = vpack.c.b16 %v3910, %v3902
    %v6727 = vpack.c.b16 %v3911, %v3903
    %v6728 = vpack.c.b16 %v3912, %v3904
    %v6729 = vpack.c.b16 %v3913, %v3905
    %v6730 = vpack.c.b16 %v3914, %v3906
    %v6731 = vpack.c.b16 %v3915, %v3907
    %v6732 = vpack.c.b16 %v3924, %v3916
    %v6733 = vpack.c.b16 %v3925, %v3917
    %v6734 = vpack.c.b16 %v3926, %v3918
    %v6735 = vpack.c.b16 %v3927, %v3919
    %v6736 = vpack.c.b16 %v3928, %v3920
    %v6737 = vpack.c.b16 %v3929, %v3921
    %v6738 = vpack.c.b16 %v3930, %v3922
    %v6739 = vpack.c.b16 %v3931, %v3923
    %v6740 = vpack.c.b16 %v3940, %v3932
    %v6741 = vpack.c.b16 %v3941, %v3933
    %v6742 = vpack.c.b16 %v3942, %v3934
    %v6743 = vpack.c.b16 %v3943, %v3935
    %v6744 = vpack.c.b16 %v3944, %v3936
    %v6745 = vpack.c.b16 %v3945, %v3937
    %v6746 = vpack.c.b16 %v3946, %v3938
    %v6747 = vpack.c.b16 %v3947, %v3939
    %v6748 = vpack.c.b16 %v3956, %v3948
    %v6749 = vpack.c.b16 %v3957, %v3949
    %v6750 = vpack.c.b16 %v3958, %v3950
    %v6751 = vpack.c.b16 %v3959, %v3951
    %v6752 = vpack.c.b16 %v3960, %v3952
    %v6753 = vpack.c.b16 %v3961, %v3953
    %v6754 = vpack.c.b16 %v3962, %v3954
    %v6755 = vpack.c.b16 %v3963, %v3955
    %v6756 = vpack.c.b16 %v3972, %v3964
    %v6757 = vpack.c.b16 %v3973, %v3965
    %v6758 = vpack.c.b16 %v3974, %v3966
    %v6759 = vpack.c.b16 %v3975, %v3967
    %v6760 = vpack.c.b16 %v3976, %v3968
    %v6761 = vpack.c.b16 %v3977, %v3969
    %v6762 = vpack.c.b16 %v3978, %v3970
    %v6763 = vpack.c.b16 %v3979, %v3971
    %v6764 = vpack.c.b16 %v3988, %v3980
    %v6765 = vpack.c.b16 %v3989, %v3981
    %v6766 = vpack.c.b16 %v3990, %v3982
    %v6767 = vpack.c.b16 %v3991, %v3983
    %v6768 = vpack.c.b16 %v3992, %v3984
    %v6769 = vpack.c.b16 %v3993, %v3985
    %v6770 = vpack.c.b16 %v3994, %v3986
    %v6771 = vpack.c.b16 %v3995, %v3987
    %v6772 = vpack.c.b16 %v4004, %v3996
    %v6773 = vpack.c.b16 %v4005, %v3997
    %v6774 = vpack.c.b16 %v4006, %v3998
    %v6775 = vpack.c.b16 %v4007, %v3999
    %v6776 = vpack.c.b16 %v4008, %v4000
    %v6777 = vpack.c.b16 %v4009, %v4001
    %v6778 = vpack.c.b16 %v4010, %v4002
    %v6779 = vpack.c.b16 %v4011, %v4003
    %v6780 = vpack.c.b16 %v4020, %v4012
    %v6781 = vpack.c.b16 %v4021, %v4013
    %v6782 = vpack.c.b16 %v4022, %v4014
    %v6783 = vpack.c.b16 %v4023, %v4015
    %v6784 = vpack.c.b16 %v4024, %v4016
    %v6785 = vpack.c.b16 %v4025, %v4017
    %v6786 = vpack.c.b16 %v4026, %v4018
    %v6787 = vpack.c.b16 %v4027, %v4019
    %v6788 = vpack.c.b16 %v4036, %v4028
    %v6789 = vpack.c.b16 %v4037, %v4029
    %v6790 = vpack.c.b16 %v4038, %v4030
    %v6791 = vpack.c.b16 %v4039, %v4031
    %v6792 = vpack.c.b16 %v4040, %v4032
    %v6793 = vpack.c.b16 %v4041, %v4033
    %v6794 = vpack.c.b16 %v4042, %v4034
    %v6795 = vpack.c.b16 %v4043, %v4035
    %v6796 = vpack.c.b16 %v4052, %v4044
    %v6797 = vpack.c.b16 %v4053, %v4045
    %v6798 = vpack.c.b16 %v4054, %v4046
    %v6799 = vpack.c.b16 %v4055, %v4047
    %v6800 = vpack.c.b16 %v4056, %v4048
    %v6801 = vpack.c.b16 %v4057, %v4049
    %v6802 = vpack.c.b16 %v4058, %v4050
    %v6803 = vpack.c.b16 %v4059, %v4051
    %v6804 = vpack.c.b16 %v4068, %v4060
    %v6805 = vpack.c.b16 %v4069, %v4061
    %v6806 = vpack.c.b16 %v4070, %v4062
    %v6807 = vpack.c.b16 %v4071, %v4063
    %v6808 = vpack.c.b16 %v4072, %v4064
    %v6809 = vpack.c.b16 %v4073, %v4065
    %v6810 = vpack.c.b16 %v4074, %v4066
    %v6811 = vpack.c.b16 %v4075, %v4067
    %v6812 = vpack.c.b16 %v4084, %v4076
    %v6813 = vpack.c.b16 %v4085, %v4077
    %v6814 = vpack.c.b16 %v4086, %v4078
    %v6815 = vpack.c.b16 %v4087, %v4079
    %v6816 = vpack.c.b16 %v4088, %v4080
    %v6817 = vpack.c.b16 %v4089, %v4081
    %v6818 = vpack.c.b16 %v4090, %v4082
    %v6819 = vpack.c.b16 %v4091, %v4083
    %v6820 = vpack.c.b16 %v4100, %v4092
    %v6821 = vpack.c.b16 %v4101, %v4093
    %v6822 = vpack.c.b16 %v4102, %v4094
    %v6823 = vpack.c.b16 %v4103, %v4095
    %v6824 = vpack.c.b16 %v4104, %v4096
    %v6825 = vpack.c.b16 %v4105, %v4097
    %v6826 = vpack.c.b16 %v4106, %v4098
    %v6827 = vpack.c.b16 %v4107, %v4099
    %v6828 = vpack.c.b16 %v4116, %v4108
    %v6829 = vpack.c.b16 %v4117, %v4109
    %v6830 = vpack.c.b16 %v4118, %v4110
    %v6831 = vpack.c.b16 %v4119, %v4111
    %v6832 = vpack.c.b16 %v4120, %v4112
    %v6833 = vpack.c.b16 %v4121, %v4113
    %v6834 = vpack.c.b16 %v4122, %v4114
    %v6835 = vpack.c.b16 %v4123, %v4115
    %v6836 = vpack.c.b16 %v4132, %v4124
    %v6837 = vpack.c.b16 %v4133, %v4125
    %v6838 = vpack.c.b16 %v4134, %v4126
    %v6839 = vpack.c.b16 %v4135, %v4127
    %v6840 = vpack.c.b16 %v4136, %v4128
    %v6841 = vpack.c.b16 %v4137, %v4129
    %v6842 = vpack.c.b16 %v4138, %v4130
    %v6843 = vpack.c.b16 %v4139, %v4131
    %v6844 = vpack.c.b16 %v4148, %v4140
    %v6845 = vpack.c.b16 %v4149, %v4141
    %v6846 = vpack.c.b16 %v4150, %v4142
    %v6847 = vpack.c.b16 %v4151, %v4143
    %v6848 = vpack.c.b16 %v4152, %v4144
    %v6849 = vpack.c.b16 %v4153, %v4145
    %v6850 = vpack.c.b16 %v4154, %v4146
    %v6851 = vpack.c.b16 %v4155, %v4147
    %v6852 = vpack.c.b16 %v4164, %v4156
    %v6853 = vpack.c.b16 %v4165, %v4157
    %v6854 = vpack.c.b16 %v4166, %v4158
    %v6855 = vpack.c.b16 %v4167, %v4159
    %v6856 = vpack.c.b16 %v4168, %v4160
    %v6857 = vpack.c.b16 %v4169, %v4161
    %v6858 = vpack.c.b16 %v4170, %v4162
    %v6859 = vpack.c.b16 %v4171, %v4163
    %v6860 = vpack.c.b16 %v4180, %v4172
    %v6861 = vpack.c.b16 %v4181, %v4173
    %v6862 = vpack.c.b16 %v4182, %v4174
    %v6863 = vpack.c.b16 %v4183, %v4175
    %v6864 = vpack.c.b16 %v4184, %v4176
    %v6865 = vpack.c.b16 %v4185, %v4177
    %v6866 = vpack.c.b16 %v4186, %v4178
    %v6867 = vpack.c.b16 %v4187, %v4179
    %v6868 = vpack.c.b16 %v4196, %v4188
    %v6869 = vpack.c.b16 %v4197, %v4189
    %v6870 = vpack.c.b16 %v4198, %v4190
    %v6871 = vpack.c.b16 %v4199, %v4191
    %v6872 = vpack.c.b16 %v4200, %v4192
    %v6873 = vpack.c.b16 %v4201, %v4193
    %v6874 = vpack.c.b16 %v4202, %v4194
    %v6875 = vpack.c.b16 %v4203, %v4195
    %v6876 = vpack.c.b16 %v4212, %v4204
    %v6877 = vpack.c.b16 %v4213, %v4205
    %v6878 = vpack.c.b16 %v4214, %v4206
    %v6879 = vpack.c.b16 %v4215, %v4207
    %v6880 = vpack.c.b16 %v4216, %v4208
    %v6881 = vpack.c.b16 %v4217, %v4209
    %v6882 = vpack.c.b16 %v4218, %v4210
    %v6883 = vpack.c.b16 %v4219, %v4211
    %v6884 = vpack.c.b16 %v4228, %v4220
    %v6885 = vpack.c.b16 %v4229, %v4221
    %v6886 = vpack.c.b16 %v4230, %v4222
    %v6887 = vpack.c.b16 %v4231, %v4223
    %v6888 = vpack.c.b16 %v4232, %v4224
    %v6889 = vpack.c.b16 %v4233, %v4225
    %v6890 = vpack.c.b16 %v4234, %v4226
    %v6891 = vpack.c.b16 %v4235, %v4227
    %v6892 = vpack.c.b16 %v4244, %v4236
    %v6893 = vpack.c.b16 %v4245, %v4237
    %v6894 = vpack.c.b16 %v4246, %v4238
    %v6895 = vpack.c.b16 %v4247, %v4239
    %v6896 = vpack.c.b16 %v4248, %v4240
    %v6897 = vpack.c.b16 %v4249, %v4241
    %v6898 = vpack.c.b16 %v4250, %v4242
    %v6899 = vpack.c.b16 %v4251, %v4243
    %v6900 = vpack.c.b16 %v4260, %v4252
    %v6901 = vpack.c.b16 %v4261, %v4253
    %v6902 = vpack.c.b16 %v4262, %v4254
    %v6903 = vpack.c.b16 %v4263, %v4255
    %v6904 = vpack.c.b16 %v4264, %v4256
    %v6905 = vpack.c.b16 %v4265, %v4257
    %v6906 = vpack.c.b16 %v4266, %v4258
    %v6907 = vpack.c.b16 %v4267, %v4259
    %v6908 = vpack.c.b16 %v4276, %v4268
    %v6909 = vpack.c.b16 %v4277, %v4269
    %v6910 = vpack.c.b16 %v4278, %v4270
    %v6911 = vpack.c.b16 %v4279, %v4271
    %v6912 = vpack.c.b16 %v4280, %v4272
    %v6913 = vpack.c.b16 %v4281, %v4273
    %v6914 = vpack.c.b16 %v4282, %v4274
    %v6915 = vpack.c.b16 %v4283, %v4275
    %v6916 = vpack.c.b16 %v4292, %v4284
    %v6917 = vpack.c.b16 %v4293, %v4285
    %v6918 = vpack.c.b16 %v4294, %v4286
    %v6919 = vpack.c.b16 %v4295, %v4287
    %v6920 = vpack.c.b16 %v4296, %v4288
    %v6921 = vpack.c.b16 %v4297, %v4289
    %v6922 = vpack.c.b16 %v4298, %v4290
    %v6923 = vpack.c.b16 %v4299, %v4291
    %v6924 = vpack.c.b16 %v4308, %v4300
    %v6925 = vpack.c.b16 %v4309, %v4301
    %v6926 = vpack.c.b16 %v4310, %v4302
    %v6927 = vpack.c.b16 %v4311, %v4303
    %v6928 = vpack.c.b16 %v4312, %v4304
    %v6929 = vpack.c.b16 %v4313, %v4305
    %v6930 = vpack.c.b16 %v4314, %v4306
    %v6931 = vpack.c.b16 %v4315, %v4307
    %v6932 = vpack.c.b16 %v4324, %v4316
    %v6933 = vpack.c.b16 %v4325, %v4317
    %v6934 = vpack.c.b16 %v4326, %v4318
    %v6935 = vpack.c.b16 %v4327, %v4319
    %v6936 = vpack.c.b16 %v4328, %v4320
    %v6937 = vpack.c.b16 %v4329, %v4321
    %v6938 = vpack.c.b16 %v4330, %v4322
    %v6939 = vpack.c.b16 %v4331, %v4323
    %v6940 = vpack.c.b16 %v4340, %v4332
    %v6941 = vpack.c.b16 %v4341, %v4333
    %v6942 = vpack.c.b16 %v4342, %v4334
    %v6943 = vpack.c.b16 %v4343, %v4335
    %v6944 = vpack.c.b16 %v4344, %v4336
    %v6945 = vpack.c.b16 %v4345, %v4337
    %v6946 = vpack.c.b16 %v4346, %v4338
    %v6947 = vpack.c.b16 %v4347, %v4339
    %v6948 = vpack.c.b16 %v4356, %v4348
    %v6949 = vpack.c.b16 %v4357, %v4349
    %v6950 = vpack.c.b16 %v4358, %v4350
    %v6951 = vpack.c.b16 %v4359, %v4351
    %v6952 = vpack.c.b16 %v4360, %v4352
    %v6953 = vpack.c.b16 %v4361, %v4353
    %v6954 = vpack.c.b16 %v4362, %v4354
    %v6955 = vpack.c.b16 %v4363, %v4355
    %v6956 = vpack.c.b16 %v4372, %v4364
    %v6957 = vpack.c.b16 %v4373, %v4365
    %v6958 = vpack.c.b16 %v4374, %v4366
    %v6959 = vpack.c.b16 %v4375, %v4367
    %v6960 = vpack.c.b16 %v4376, %v4368
    %v6961 = vpack.c.b16 %v4377, %v4369
    %v6962 = vpack.c.b16 %v4378, %v4370
    %v6963 = vpack.c.b16 %v4379, %v4371
    %v6964 = vpack.c.b16 %v4388, %v4380
    %v6965 = vpack.c.b16 %v4389, %v4381
    %v6966 = vpack.c.b16 %v4390, %v4382
    %v6967 = vpack.c.b16 %v4391, %v4383
    %v6968 = vpack.c.b16 %v4392, %v4384
    %v6969 = vpack.c.b16 %v4393, %v4385
    %v6970 = vpack.c.b16 %v4394, %v4386
    %v6971 = vpack.c.b16 %v4395, %v4387
    %v6972 = vpack.c.b16 %v4404, %v4396
    %v6973 = vpack.c.b16 %v4405, %v4397
    %v6974 = vpack.c.b16 %v4406, %v4398
    %v6975 = vpack.c.b16 %v4407, %v4399
    %v6976 = vpack.c.b16 %v4408, %v4400
    %v6977 = vpack.c.b16 %v4409, %v4401
    %v6978 = vpack.c.b16 %v4410, %v4402
    %v6979 = vpack.c.b16 %v4411, %v4403
    %v6980 = vpack.c.b16 %v4420, %v4412
    %v6981 = vpack.c.b16 %v4421, %v4413
    %v6982 = vpack.c.b16 %v4422, %v4414
    %v6983 = vpack.c.b16 %v4423, %v4415
    %v6984 = vpack.c.b16 %v4424, %v4416
    %v6985 = vpack.c.b16 %v4425, %v4417
    %v6986 = vpack.c.b16 %v4426, %v4418
    %v6987 = vpack.c.b16 %v4427, %v4419
    %v6988 = vpack.c.b16 %v4436, %v4428
    %v6989 = vpack.c.b16 %v4437, %v4429
    %v6990 = vpack.c.b16 %v4438, %v4430
    %v6991 = vpack.c.b16 %v4439, %v4431
    %v6992 = vpack.c.b16 %v4440, %v4432
    %v6993 = vpack.c.b16 %v4441, %v4433
    %v6994 = vpack.c.b16 %v4442, %v4434
    %v6995 = vpack.c.b16 %v4443, %v4435
    %v6996 = vpack.c.b16 %v4452, %v4444
    %v6997 = vpack.c.b16 %v4453, %v4445
    %v6998 = vpack.c.b16 %v4454, %v4446
    %v6999 = vpack.c.b16 %v4455, %v4447
    %v7000 = vpack.c.b16 %v4456, %v4448
    %v7001 = vpack.c.b16 %v4457, %v4449
    %v7002 = vpack.c.b16 %v4458, %v4450
    %v7003 = vpack.c.b16 %v4459, %v4451
    %v7004 = vpack.c.b16 %v4468, %v4460
    %v7005 = vpack.c.b16 %v4469, %v4461
    %v7006 = vpack.c.b16 %v4470, %v4462
    %v7007 = vpack.c.b16 %v4471, %v4463
    %v7008 = vpack.c.b16 %v4472, %v4464
    %v7009 = vpack.c.b16 %v4473, %v4465
    %v7010 = vpack.c.b16 %v4474, %v4466
    %v7011 = vpack.c.b16 %v4475, %v4467
    %v7012 = vpack.c.b16 %v4484, %v4476
    %v7013 = vpack.c.b16 %v4485, %v4477
    %v7014 = vpack.c.b16 %v4486, %v4478
    %v7015 = vpack.c.b16 %v4487, %v4479
    %v7016 = vpack.c.b16 %v4488, %v4480
    %v7017 = vpack.c.b16 %v4489, %v4481
    %v7018 = vpack.c.b16 %v4490, %v4482
    %v7019 = vpack.c.b16 %v4491, %v4483
    %v7020 = vpack.c.b16 %v4500, %v4492
    %v7021 = vpack.c.b16 %v4501, %v4493
    %v7022 = vpack.c.b16 %v4502, %v4494
    %v7023 = vpack.c.b16 %v4503, %v4495
    %v7024 = vpack.c.b16 %v4504, %v4496
    %v7025 = vpack.c.b16 %v4505, %v4497
    %v7026 = vpack.c.b16 %v4506, %v4498
    %v7027 = vpack.c.b16 %v4507, %v4499
    %v7028 = vpack.c.b16 %v4516, %v4508
    %v7029 = vpack.c.b16 %v4517, %v4509
    %v7030 = vpack.c.b16 %v4518, %v4510
    %v7031 = vpack.c.b16 %v4519, %v4511
    %v7032 = vpack.c.b16 %v4520, %v4512
    %v7033 = vpack.c.b16 %v4521, %v4513
    %v7034 = vpack.c.b16 %v4522, %v4514
    %v7035 = vpack.c.b16 %v4523, %v4515
    %v7036 = vpack.c.b16 %v4532, %v4524
    %v7037 = vpack.c.b16 %v4533, %v4525
    %v7038 = vpack.c.b16 %v4534, %v4526
    %v7039 = vpack.c.b16 %v4535, %v4527
    %v7040 = vpack.c.b16 %v4536, %v4528
    %v7041 = vpack.c.b16 %v4537, %v4529
    %v7042 = vpack.c.b16 %v4538, %v4530
    %v7043 = vpack.c.b16 %v4539, %v4531
    %v7044 = vpack.c.b16 %v4548, %v4540
    %v7045 = vpack.c.b16 %v4549, %v4541
    %v7046 = vpack.c.b16 %v4550, %v4542
    %v7047 = vpack.c.b16 %v4551, %v4543
    %v7048 = vpack.c.b16 %v4552, %v4544
    %v7049 = vpack.c.b16 %v4553, %v4545
    %v7050 = vpack.c.b16 %v4554, %v4546
    %v7051 = vpack.c.b16 %v4555, %v4547
    %v7052 = vpack.c.b16 %v4564, %v4556
    %v7053 = vpack.c.b16 %v4565, %v4557
    %v7054 = vpack.c.b16 %v4566, %v4558
    %v7055 = vpack.c.b16 %v4567, %v4559
    %v7056 = vpack.c.b16 %v4568, %v4560
    %v7057 = vpack.c.b16 %v4569, %v4561
    %v7058 = vpack.c.b16 %v4570, %v4562
    %v7059 = vpack.c.b16 %v4571, %v4563
    %v7060 = vpack.c.b16 %v4580, %v4572
    %v7061 = vpack.c.b16 %v4581, %v4573
    %v7062 = vpack.c.b16 %v4582, %v4574
    %v7063 = vpack.c.b16 %v4583, %v4575
    %v7064 = vpack.c.b16 %v4584, %v4576
    %v7065 = vpack.c.b16 %v4585, %v4577
    %v7066 = vpack.c.b16 %v4586, %v4578
    %v7067 = vpack.c.b16 %v4587, %v4579
    %v7068 = vpack.c.b16 %v4596, %v4588
    %v7069 = vpack.c.b16 %v4597, %v4589
    %v7070 = vpack.c.b16 %v4598, %v4590
    %v7071 = vpack.c.b16 %v4599, %v4591
    %v7072 = vpack.c.b16 %v4600, %v4592
    %v7073 = vpack.c.b16 %v4601, %v4593
    %v7074 = vpack.c.b16 %v4602, %v4594
    %v7075 = vpack.c.b16 %v4603, %v4595
    %v7076 = vpack.c.b16 %v4612, %v4604
    %v7077 = vpack.c.b16 %v4613, %v4605
    %v7078 = vpack.c.b16 %v4614, %v4606
    %v7079 = vpack.c.b16 %v4615, %v4607
    %v7080 = vpack.c.b16 %v4616, %v4608
    %v7081 = vpack.c.b16 %v4617, %v4609
    %v7082 = vpack.c.b16 %v4618, %v4610
    %v7083 = vpack.c.b16 %v4619, %v4611
    %v7084 = vpack.c.b16 %v4628, %v4620
    %v7085 = vpack.c.b16 %v4629, %v4621
    %v7086 = vpack.c.b16 %v4630, %v4622
    %v7087 = vpack.c.b16 %v4631, %v4623
    %v7088 = vpack.c.b16 %v4632, %v4624
    %v7089 = vpack.c.b16 %v4633, %v4625
    %v7090 = vpack.c.b16 %v4634, %v4626
    %v7091 = vpack.c.b16 %v4635, %v4627
    %v7092 = vpack.c.b16 %v4644, %v4636
    %v7093 = vpack.c.b16 %v4645, %v4637
    %v7094 = vpack.c.b16 %v4646, %v4638
    %v7095 = vpack.c.b16 %v4647, %v4639
    %v7096 = vpack.c.b16 %v4648, %v4640
    %v7097 = vpack.c.b16 %v4649, %v4641
    %v7098 = vpack.c.b16 %v4650, %v4642
    %v7099 = vpack.c.b16 %v4651, %v4643
    %v7100 = vpack.c.b16 %v4660, %v4652
    %v7101 = vpack.c.b16 %v4661, %v4653
    %v7102 = vpack.c.b16 %v4662, %v4654
    %v7103 = vpack.c.b16 %v4663, %v4655
    %v7104 = vpack.c.b16 %v4664, %v4656
    %v7105 = vpack.c.b16 %v4665, %v4657
    %v7106 = vpack.c.b16 %v4666, %v4658
    %v7107 = vpack.c.b16 %v4667, %v4659
    %v7108 = vpack.c.b16 %v4676, %v4668
    %v7109 = vpack.c.b16 %v4677, %v4669
    %v7110 = vpack.c.b16 %v4678, %v4670
    %v7111 = vpack.c.b16 %v4679, %v4671
    %v7112 = vpack.c.b16 %v4680, %v4672
    %v7113 = vpack.c.b16 %v4681, %v4673
    %v7114 = vpack.c.b16 %v4682, %v4674
    %v7115 = vpack.c.b16 %v4683, %v4675
    %v7116 = vpack.c.b16 %v4692, %v4684
    %v7117 = vpack.c.b16 %v4693, %v4685
    %v7118 = vpack.c.b16 %v4694, %v4686
    %v7119 = vpack.c.b16 %v4695, %v4687
    %v7120 = vpack.c.b16 %v4696, %v4688
    %v7121 = vpack.c.b16 %v4697, %v4689
    %v7122 = vpack.c.b16 %v4698, %v4690
    %v7123 = vpack.c.b16 %v4699, %v4691
    %v7124 = vpack.c.b16 %v4708, %v4700
    %v7125 = vpack.c.b16 %v4709, %v4701
    %v7126 = vpack.c.b16 %v4710, %v4702
    %v7127 = vpack.c.b16 %v4711, %v4703
    %v7128 = vpack.c.b16 %v4712, %v4704
    %v7129 = vpack.c.b16 %v4713, %v4705
    %v7130 = vpack.c.b16 %v4714, %v4706
    %v7131 = vpack.c.b16 %v4715, %v4707
    %v7132 = vpack.c.b16 %v4724, %v4716
    %v7133 = vpack.c.b16 %v4725, %v4717
    %v7134 = vpack.c.b16 %v4726, %v4718
    %v7135 = vpack.c.b16 %v4727, %v4719
    %v7136 = vpack.c.b16 %v4728, %v4720
    %v7137 = vpack.c.b16 %v4729, %v4721
    %v7138 = vpack.c.b16 %v4730, %v4722
    %v7139 = vpack.c.b16 %v4731, %v4723
    %v7140 = vpack.c.b16 %v4740, %v4732
    %v7141 = vpack.c.b16 %v4741, %v4733
    %v7142 = vpack.c.b16 %v4742, %v4734
    %v7143 = vpack.c.b16 %v4743, %v4735
    %v7144 = vpack.c.b16 %v4744, %v4736
    %v7145 = vpack.c.b16 %v4745, %v4737
    %v7146 = vpack.c.b16 %v4746, %v4738
    %v7147 = vpack.c.b16 %v4747, %v4739
    %v7148 = vpack.c.b16 %v4756, %v4748
    %v7149 = vpack.c.b16 %v4757, %v4749
    %v7150 = vpack.c.b16 %v4758, %v4750
    %v7151 = vpack.c.b16 %v4759, %v4751
    %v7152 = vpack.c.b16 %v4760, %v4752
    %v7153 = vpack.c.b16 %v4761, %v4753
    %v7154 = vpack.c.b16 %v4762, %v4754
    %v7155 = vpack.c.b16 %v4763, %v4755
    %v7156 = vpack.c.b16 %v4772, %v4764
    %v7157 = vpack.c.b16 %v4773, %v4765
    %v7158 = vpack.c.b16 %v4774, %v4766
    %v7159 = vpack.c.b16 %v4775, %v4767
    %v7160 = vpack.c.b16 %v4776, %v4768
    %v7161 = vpack.c.b16 %v4777, %v4769
    %v7162 = vpack.c.b16 %v4778, %v4770
    %v7163 = vpack.c.b16 %v4779, %v4771
    %v7164 = vpack.c.b16 %v4788, %v4780
    %v7165 = vpack.c.b16 %v4789, %v4781
    %v7166 = vpack.c.b16 %v4790, %v4782
    %v7167 = vpack.c.b16 %v4791, %v4783
    %v7168 = vpack.c.b16 %v4792, %v4784
    %v7169 = vpack.c.b16 %v4793, %v4785
    %v7170 = vpack.c.b16 %v4794, %v4786
    %v7171 = vpack.c.b16 %v4795, %v4787
    %v7172 = vpack.c.b16 %v4804, %v4796
    %v7173 = vpack.c.b16 %v4805, %v4797
    %v7174 = vpack.c.b16 %v4806, %v4798
    %v7175 = vpack.c.b16 %v4807, %v4799
    %v7176 = vpack.c.b16 %v4808, %v4800
    %v7177 = vpack.c.b16 %v4809, %v4801
    %v7178 = vpack.c.b16 %v4810, %v4802
    %v7179 = vpack.c.b16 %v4811, %v4803
    %v7180 = vpack.c.b16 %v4820, %v4812
    %v7181 = vpack.c.b16 %v4821, %v4813
    %v7182 = vpack.c.b16 %v4822, %v4814
    %v7183 = vpack.c.b16 %v4823, %v4815
    %v7184 = vpack.c.b16 %v4824, %v4816
    %v7185 = vpack.c.b16 %v4825, %v4817
    %v7186 = vpack.c.b16 %v4826, %v4818
    %v7187 = vpack.c.b16 %v4827, %v4819
    %v7188 = vpack.c.b16 %v4836, %v4828
    %v7189 = vpack.c.b16 %v4837, %v4829
    %v7190 = vpack.c.b16 %v4838, %v4830
    %v7191 = vpack.c.b16 %v4839, %v4831
    %v7192 = vpack.c.b16 %v4840, %v4832
    %v7193 = vpack.c.b16 %v4841, %v4833
    %v7194 = vpack.c.b16 %v4842, %v4834
    %v7195 = vpack.c.b16 %v4843, %v4835
    %v7196 = vpack.c.b16 %v4852, %v4844
    %v7197 = vpack.c.b16 %v4853, %v4845
    %v7198 = vpack.c.b16 %v4854, %v4846
    %v7199 = vpack.c.b16 %v4855, %v4847
    %v7200 = vpack.c.b16 %v4856, %v4848
    %v7201 = vpack.c.b16 %v4857, %v4849
    %v7202 = vpack.c.b16 %v4858, %v4850
    %v7203 = vpack.c.b16 %v4859, %v4851
    %v7204 = vpack.c.b16 %v4868, %v4860
    %v7205 = vpack.c.b16 %v4869, %v4861
    %v7206 = vpack.c.b16 %v4870, %v4862
    %v7207 = vpack.c.b16 %v4871, %v4863
    %v7208 = vpack.c.b16 %v4872, %v4864
    %v7209 = vpack.c.b16 %v4873, %v4865
    %v7210 = vpack.c.b16 %v4874, %v4866
    %v7211 = vpack.c.b16 %v4875, %v4867
    %v7212 = vpack.c.b16 %v4884, %v4876
    %v7213 = vpack.c.b16 %v4885, %v4877
    %v7214 = vpack.c.b16 %v4886, %v4878
    %v7215 = vpack.c.b16 %v4887, %v4879
    %v7216 = vpack.c.b16 %v4888, %v4880
    %v7217 = vpack.c.b16 %v4889, %v4881
    %v7218 = vpack.c.b16 %v4890, %v4882
    %v7219 = vpack.c.b16 %v4891, %v4883
    %v7220 = vpack.c.b16 %v4900, %v4892
    %v7221 = vpack.c.b16 %v4901, %v4893
    %v7222 = vpack.c.b16 %v4902, %v4894
    %v7223 = vpack.c.b16 %v4903, %v4895
    %v7224 = vpack.c.b16 %v4904, %v4896
    %v7225 = vpack.c.b16 %v4905, %v4897
    %v7226 = vpack.c.b16 %v4906, %v4898
    %v7227 = vpack.c.b16 %v4907, %v4899
    %v7228 = vpack.c.b16 %v4916, %v4908
    %v7229 = vpack.c.b16 %v4917, %v4909
    %v7230 = vpack.c.b16 %v4918, %v4910
    %v7231 = vpack.c.b16 %v4919, %v4911
    %v7232 = vpack.c.b16 %v4920, %v4912
    %v7233 = vpack.c.b16 %v4921, %v4913
    %v7234 = vpack.c.b16 %v4922, %v4914
    %v7235 = vpack.c.b16 %v4923, %v4915
    %v7236 = vpack.c.b16 %v4932, %v4924
    %v7237 = vpack.c.b16 %v4933, %v4925
    %v7238 = vpack.c.b16 %v4934, %v4926
    %v7239 = vpack.c.b16 %v4935, %v4927
    %v7240 = vpack.c.b16 %v4936, %v4928
    %v7241 = vpack.c.b16 %v4937, %v4929
    %v7242 = vpack.c.b16 %v4938, %v4930
    %v7243 = vpack.c.b16 %v4939, %v4931
    %v7244 = vpack.c.b16 %v4948, %v4940
    %v7245 = vpack.c.b16 %v4949, %v4941
    %v7246 = vpack.c.b16 %v4950, %v4942
    %v7247 = vpack.c.b16 %v4951, %v4943
    %v7248 = vpack.c.b16 %v4952, %v4944
    %v7249 = vpack.c.b16 %v4953, %v4945
    %v7250 = vpack.c.b16 %v4954, %v4946
    %v7251 = vpack.c.b16 %v4955, %v4947
    %v7252 = vpack.c.b16 %v4964, %v4956
    %v7253 = vpack.c.b16 %v4965, %v4957
    %v7254 = vpack.c.b16 %v4966, %v4958
    %v7255 = vpack.c.b16 %v4967, %v4959
    %v7256 = vpack.c.b16 %v4968, %v4960
    %v7257 = vpack.c.b16 %v4969, %v4961
    %v7258 = vpack.c.b16 %v4970, %v4962
    %v7259 = vpack.c.b16 %v4971, %v4963
    %v7260 = vpack.c.b16 %v4980, %v4972
    %v7261 = vpack.c.b16 %v4981, %v4973
    %v7262 = vpack.c.b16 %v4982, %v4974
    %v7263 = vpack.c.b16 %v4983, %v4975
    %v7264 = vpack.c.b16 %v4984, %v4976
    %v7265 = vpack.c.b16 %v4985, %v4977
    %v7266 = vpack.c.b16 %v4986, %v4978
    %v7267 = vpack.c.b16 %v4987, %v4979
    %v7268 = vpack.c.b16 %v4996, %v4988
    %v7269 = vpack.c.b16 %v4997, %v4989
    %v7270 = vpack.c.b16 %v4998, %v4990
    %v7271 = vpack.c.b16 %v4999, %v4991
    %v7272 = vpack.c.b16 %v5000, %v4992
    %v7273 = vpack.c.b16 %v5001, %v4993
    %v7274 = vpack.c.b16 %v5002, %v4994
    %v7275 = vpack.c.b16 %v5003, %v4995
    %v7276 = vpack.c.b16 %v5012, %v5004
    %v7277 = vpack.c.b16 %v5013, %v5005
    %v7278 = vpack.c.b16 %v5014, %v5006
    %v7279 = vpack.c.b16 %v5015, %v5007
    %v7280 = vpack.c.b16 %v5016, %v5008
    %v7281 = vpack.c.b16 %v5017, %v5009
    %v7282 = vpack.c.b16 %v5018, %v5010
    %v7283 = vpack.c.b16 %v5019, %v5011
    %v7284 = vpack.c.b16 %v5028, %v5020
    %v7285 = vpack.c.b16 %v5029, %v5021
    %v7286 = vpack.c.b16 %v5030, %v5022
    %v7287 = vpack.c.b16 %v5031, %v5023
    %v7288 = vpack.c.b16 %v5032, %v5024
    %v7289 = vpack.c.b16 %v5033, %v5025
    %v7290 = vpack.c.b16 %v5034, %v5026
    %v7291 = vpack.c.b16 %v5035, %v5027
    %v7292 = vpack.c.b16 %v5044, %v5036
    %v7293 = vpack.c.b16 %v5045, %v5037
    %v7294 = vpack.c.b16 %v5046, %v5038
    %v7295 = vpack.c.b16 %v5047, %v5039
    %v7296 = vpack.c.b16 %v5048, %v5040
    %v7297 = vpack.c.b16 %v5049, %v5041
    %v7298 = vpack.c.b16 %v5050, %v5042
    %v7299 = vpack.c.b16 %v5051, %v5043
    %v7300 = vpack.c.b16 %v5060, %v5052
    %v7301 = vpack.c.b16 %v5061, %v5053
    %v7302 = vpack.c.b16 %v5062, %v5054
    %v7303 = vpack.c.b16 %v5063, %v5055
    %v7304 = vpack.c.b16 %v5064, %v5056
    %v7305 = vpack.c.b16 %v5065, %v5057
    %v7306 = vpack.c.b16 %v5066, %v5058
    %v7307 = vpack.c.b16 %v5067, %v5059
    %v7308 = vpack.c.b16 %v5076, %v5068
    %v7309 = vpack.c.b16 %v5077, %v5069
    %v7310 = vpack.c.b16 %v5078, %v5070
    %v7311 = vpack.c.b16 %v5079, %v5071
    %v7312 = vpack.c.b16 %v5080, %v5072
    %v7313 = vpack.c.b16 %v5081, %v5073
    %v7314 = vpack.c.b16 %v5082, %v5074
    %v7315 = vpack.c.b16 %v5083, %v5075
    %v7316 = vpack.c.b16 %v5092, %v5084
    %v7317 = vpack.c.b16 %v5093, %v5085
    %v7318 = vpack.c.b16 %v5094, %v5086
    %v7319 = vpack.c.b16 %v5095, %v5087
    %v7320 = vpack.c.b16 %v5096, %v5088
    %v7321 = vpack.c.b16 %v5097, %v5089
    %v7322 = vpack.c.b16 %v5098, %v5090
    %v7323 = vpack.c.b16 %v5099, %v5091
    %v7324 = vpack.c.b16 %v5108, %v5100
    %v7325 = vpack.c.b16 %v5109, %v5101
    %v7326 = vpack.c.b16 %v5110, %v5102
    %v7327 = vpack.c.b16 %v5111, %v5103
    %v7328 = vpack.c.b16 %v5112, %v5104
    %v7329 = vpack.c.b16 %v5113, %v5105
    %v7330 = vpack.c.b16 %v5114, %v5106
    %v7331 = vpack.c.b16 %v5115, %v5107
    %v7332 = vpack.c.b16 %v5124, %v5116
    %v7333 = vpack.c.b16 %v5125, %v5117
    %v7334 = vpack.c.b16 %v5126, %v5118
    %v7335 = vpack.c.b16 %v5127, %v5119
    %v7336 = vpack.c.b16 %v5128, %v5120
    %v7337 = vpack.c.b16 %v5129, %v5121
    %v7338 = vpack.c.b16 %v5130, %v5122
    %v7339 = vpack.c.b16 %v5131, %v5123
    %v7340 = vpack.c.b16 %v5140, %v5132
    %v7341 = vpack.c.b16 %v5141, %v5133
    %v7342 = vpack.c.b16 %v5142, %v5134
    %v7343 = vpack.c.b16 %v5143, %v5135
    %v7344 = vpack.c.b16 %v5144, %v5136
    %v7345 = vpack.c.b16 %v5145, %v5137
    %v7346 = vpack.c.b16 %v5146, %v5138
    %v7347 = vpack.c.b16 %v5147, %v5139
    %v7348 = vpack.c.b16 %v5156, %v5148
    %v7349 = vpack.c.b16 %v5157, %v5149
    %v7350 = vpack.c.b16 %v5158, %v5150
    %v7351 = vpack.c.b16 %v5159, %v5151
    %v7352 = vpack.c.b16 %v5160, %v5152
    %v7353 = vpack.c.b16 %v5161, %v5153
    %v7354 = vpack.c.b16 %v5162, %v5154
    %v7355 = vpack.c.b16 %v5163, %v5155
    %v7356 = vpack.c.b16 %v5172, %v5164
    %v7357 = vpack.c.b16 %v5173, %v5165
    %v7358 = vpack.c.b16 %v5174, %v5166
    %v7359 = vpack.c.b16 %v5175, %v5167
    %v7360 = vpack.c.b16 %v5176, %v5168
    %v7361 = vpack.c.b16 %v5177, %v5169
    %v7362 = vpack.c.b16 %v5178, %v5170
    %v7363 = vpack.c.b16 %v5179, %v5171
    %v7364 = vpack.c.b16 %v5188, %v5180
    %v7365 = vpack.c.b16 %v5189, %v5181
    %v7366 = vpack.c.b16 %v5190, %v5182
    %v7367 = vpack.c.b16 %v5191, %v5183
    %v7368 = vpack.c.b16 %v5192, %v5184
    %v7369 = vpack.c.b16 %v5193, %v5185
    %v7370 = vpack.c.b16 %v5194, %v5186
    %v7371 = vpack.c.b16 %v5195, %v5187
    %v7372 = vpack.c.b16 %v5204, %v5196
    %v7373 = vpack.c.b16 %v5205, %v5197
    %v7374 = vpack.c.b16 %v5206, %v5198
    %v7375 = vpack.c.b16 %v5207, %v5199
    %v7376 = vpack.c.b16 %v5208, %v5200
    %v7377 = vpack.c.b16 %v5209, %v5201
    %v7378 = vpack.c.b16 %v5210, %v5202
    %v7379 = vpack.c.b16 %v5211, %v5203
    %v7380 = vpack.c.b16 %v5220, %v5212
    %v7381 = vpack.c.b16 %v5221, %v5213
    %v7382 = vpack.c.b16 %v5222, %v5214
    %v7383 = vpack.c.b16 %v5223, %v5215
    %v7384 = vpack.c.b16 %v5224, %v5216
    %v7385 = vpack.c.b16 %v5225, %v5217
    %v7386 = vpack.c.b16 %v5226, %v5218
    %v7387 = vpack.c.b16 %v5227, %v5219
    %v7388 = vpack.c.b16 %v5236, %v5228
    %v7389 = vpack.c.b16 %v5237, %v5229
    %v7390 = vpack.c.b16 %v5238, %v5230
    %v7391 = vpack.c.b16 %v5239, %v5231
    %v7392 = vpack.c.b16 %v5240, %v5232
    %v7393 = vpack.c.b16 %v5241, %v5233
    %v7394 = vpack.c.b16 %v5242, %v5234
    %v7395 = vpack.c.b16 %v5243, %v5235
    %v7396 = vpack.c.b16 %v5252, %v5244
    %v7397 = vpack.c.b16 %v5253, %v5245
    %v7398 = vpack.c.b16 %v5254, %v5246
    %v7399 = vpack.c.b16 %v5255, %v5247
    %v7400 = vpack.c.b16 %v5256, %v5248
    %v7401 = vpack.c.b16 %v5257, %v5249
    %v7402 = vpack.c.b16 %v5258, %v5250
    %v7403 = vpack.c.b16 %v5259, %v5251
    %v7404 = vpack.c.b16 %v5268, %v5260
    %v7405 = vpack.c.b16 %v5269, %v5261
    %v7406 = vpack.c.b16 %v5270, %v5262
    %v7407 = vpack.c.b16 %v5271, %v5263
    %v7408 = vpack.c.b16 %v5272, %v5264
    %v7409 = vpack.c.b16 %v5273, %v5265
    %v7410 = vpack.c.b16 %v5274, %v5266
    %v7411 = vpack.c.b16 %v5275, %v5267
    %v7412 = vpack.c.b16 %v5284, %v5276
    %v7413 = vpack.c.b16 %v5285, %v5277
    %v7414 = vpack.c.b16 %v5286, %v5278
    %v7415 = vpack.c.b16 %v5287, %v5279
    %v7416 = vpack.c.b16 %v5288, %v5280
    %v7417 = vpack.c.b16 %v5289, %v5281
    %v7418 = vpack.c.b16 %v5290, %v5282
    %v7419 = vpack.c.b16 %v5291, %v5283
    %v7420 = vpack.c.b16 %v5300, %v5292
    %v7421 = vpack.c.b16 %v5301, %v5293
    %v7422 = vpack.c.b16 %v5302, %v5294
    %v7423 = vpack.c.b16 %v5303, %v5295
    %v7424 = vpack.c.b16 %v5304, %v5296
    %v7425 = vpack.c.b16 %v5305, %v5297
    %v7426 = vpack.c.b16 %v5306, %v5298
    %v7427 = vpack.c.b16 %v5307, %v5299
    %v7428 = vpack.c.b16 %v5316, %v5308
    %v7429 = vpack.c.b16 %v5317, %v5309
    %v7430 = vpack.c.b16 %v5318, %v5310
    %v7431 = vpack.c.b16 %v5319, %v5311
    %v7432 = vpack.c.b16 %v5320, %v5312
    %v7433 = vpack.c.b16 %v5321, %v5313
    %v7434 = vpack.c.b16 %v5322, %v5314
    %v7435 = vpack.c.b16 %v5323, %v5315
    %v7436 = vpack.c.b16 %v5332, %v5324
    %v7437 = vpack.c.b16 %v5333, %v5325
    %v7438 = vpack.c.b16 %v5334, %v5326
    %v7439 = vpack.c.b16 %v5335, %v5327
    %v7440 = vpack.c.b16 %v5336, %v5328
    %v7441 = vpack.c.b16 %v5337, %v5329
    %v7442 = vpack.c.b16 %v5338, %v5330
    %v7443 = vpack.c.b16 %v5339, %v5331
    %v7444 = vpack.c.b16 %v5348, %v5340
    %v7445 = vpack.c.b16 %v5349, %v5341
    %v7446 = vpack.c.b16 %v5350, %v5342
    %v7447 = vpack.c.b16 %v5351, %v5343
    %v7448 = vpack.c.b16 %v5352, %v5344
    %v7449 = vpack.c.b16 %v5353, %v5345
    %v7450 = vpack.c.b16 %v5354, %v5346
    %v7451 = vpack.c.b16 %v5355, %v5347
    %v7452 = vpack.c.b16 %v5364, %v5356
    %v7453 = vpack.c.b16 %v5365, %v5357
    %v7454 = vpack.c.b16 %v5366, %v5358
    %v7455 = vpack.c.b16 %v5367, %v5359
    %v7456 = vpack.c.b16 %v5368, %v5360
    %v7457 = vpack.c.b16 %v5369, %v5361
    %v7458 = vpack.c.b16 %v5370, %v5362
    %v7459 = vpack.c.b16 %v5371, %v5363
    %v7460 = vpack.c.b16 %v5380, %v5372
    %v7461 = vpack.c.b16 %v5381, %v5373
    %v7462 = vpack.c.b16 %v5382, %v5374
    %v7463 = vpack.c.b16 %v5383, %v5375
    %v7464 = vpack.c.b16 %v5384, %v5376
    %v7465 = vpack.c.b16 %v5385, %v5377
    %v7466 = vpack.c.b16 %v5386, %v5378
    %v7467 = vpack.c.b16 %v5387, %v5379
    %v7468 = vpack.c.b16 %v5396, %v5388
    %v7469 = vpack.c.b16 %v5397, %v5389
    %v7470 = vpack.c.b16 %v5398, %v5390
    %v7471 = vpack.c.b16 %v5399, %v5391
    %v7472 = vpack.c.b16 %v5400, %v5392
    %v7473 = vpack.c.b16 %v5401, %v5393
    %v7474 = vpack.c.b16 %v5402, %v5394
    %v7475 = vpack.c.b16 %v5403, %v5395
    %v7476 = vpack.c.b16 %v5412, %v5404
    %v7477 = vpack.c.b16 %v5413, %v5405
    %v7478 = vpack.c.b16 %v5414, %v5406
    %v7479 = vpack.c.b16 %v5415, %v5407
    %v7480 = vpack.c.b16 %v5416, %v5408
    %v7481 = vpack.c.b16 %v5417, %v5409
    %v7482 = vpack.c.b16 %v5418, %v5410
    %v7483 = vpack.c.b16 %v5419, %v5411
    %v7484 = vpack.c.b16 %v5428, %v5420
    %v7485 = vpack.c.b16 %v5429, %v5421
    %v7486 = vpack.c.b16 %v5430, %v5422
    %v7487 = vpack.c.b16 %v5431, %v5423
    %v7488 = vpack.c.b16 %v5432, %v5424
    %v7489 = vpack.c.b16 %v5433, %v5425
    %v7490 = vpack.c.b16 %v5434, %v5426
    %v7491 = vpack.c.b16 %v5435, %v5427
    %v7492 = vpack.c.b16 %v5444, %v5436
    %v7493 = vpack.c.b16 %v5445, %v5437
    %v7494 = vpack.c.b16 %v5446, %v5438
    %v7495 = vpack.c.b16 %v5447, %v5439
    %v7496 = vpack.c.b16 %v5448, %v5440
    %v7497 = vpack.c.b16 %v5449, %v5441
    %v7498 = vpack.c.b16 %v5450, %v5442
    %v7499 = vpack.c.b16 %v5451, %v5443
    %v7500 = vpack.c.b16 %v5460, %v5452
    %v7501 = vpack.c.b16 %v5461, %v5453
    %v7502 = vpack.c.b16 %v5462, %v5454
    %v7503 = vpack.c.b16 %v5463, %v5455
    %v7504 = vpack.c.b16 %v5464, %v5456
    %v7505 = vpack.c.b16 %v5465, %v5457
    %v7506 = vpack.c.b16 %v5466, %v5458
    %v7507 = vpack.c.b16 %v5467, %v5459
    %v7508 = vpack.c.b16 %v5476, %v5468
    %v7509 = vpack.c.b16 %v5477, %v5469
    %v7510 = vpack.c.b16 %v5478, %v5470
    %v7511 = vpack.c.b16 %v5479, %v5471
    %v7512 = vpack.c.b16 %v5480, %v5472
    %v7513 = vpack.c.b16 %v5481, %v5473
    %v7514 = vpack.c.b16 %v5482, %v5474
    %v7515 = vpack.c.b16 %v5483, %v5475
    %v7516 = vpack.c.b16 %v5492, %v5484
    %v7517 = vpack.c.b16 %v5493, %v5485
    %v7518 = vpack.c.b16 %v5494, %v5486
    %v7519 = vpack.c.b16 %v5495, %v5487
    %v7520 = vpack.c.b16 %v5496, %v5488
    %v7521 = vpack.c.b16 %v5497, %v5489
    %v7522 = vpack.c.b16 %v5498, %v5490
    %v7523 = vpack.c.b16 %v5499, %v5491
    %v7524 = vpack.c.b16 %v5508, %v5500
    %v7525 = vpack.c.b16 %v5509, %v5501
    %v7526 = vpack.c.b16 %v5510, %v5502
    %v7527 = vpack.c.b16 %v5511, %v5503
    %v7528 = vpack.c.b16 %v5512, %v5504
    %v7529 = vpack.c.b16 %v5513, %v5505
    %v7530 = vpack.c.b16 %v5514, %v5506
    %v7531 = vpack.c.b16 %v5515, %v5507
    %v7532 = vpack.c.b16 %v5524, %v5516
    %v7533 = vpack.c.b16 %v5525, %v5517
    %v7534 = vpack.c.b16 %v5526, %v5518
    %v7535 = vpack.c.b16 %v5527, %v5519
    %v7536 = vpack.c.b16 %v5528, %v5520
    %v7537 = vpack.c.b16 %v5529, %v5521
    %v7538 = vpack.c.b16 %v5530, %v5522
    %v7539 = vpack.c.b16 %v5531, %v5523
    %v7540 = vpack.c.b16 %v5540, %v5532
    %v7541 = vpack.c.b16 %v5541, %v5533
    %v7542 = vpack.c.b16 %v5542, %v5534
    %v7543 = vpack.c.b16 %v5543, %v5535
    %v7544 = vpack.c.b16 %v5544, %v5536
    %v7545 = vpack.c.b16 %v5545, %v5537
    %v7546 = vpack.c.b16 %v5546, %v5538
    %v7547 = vpack.c.b16 %v5547, %v5539
    %v7548 = vpack.c.b16 %v5556, %v5548
    %v7549 = vpack.c.b16 %v5557, %v5549
    %v7550 = vpack.c.b16 %v5558, %v5550
    %v7551 = vpack.c.b16 %v5559, %v5551
    %v7552 = vpack.c.b16 %v5560, %v5552
    %v7553 = vpack.c.b16 %v5561, %v5553
    %v7554 = vpack.c.b16 %v5562, %v5554
    %v7555 = vpack.c.b16 %v5563, %v5555
    %v7556 = vpack.c.b16 %v5572, %v5564
    %v7557 = vpack.c.b16 %v5573, %v5565
    %v7558 = vpack.c.b16 %v5574, %v5566
    %v7559 = vpack.c.b16 %v5575, %v5567
    %v7560 = vpack.c.b16 %v5576, %v5568
    %v7561 = vpack.c.b16 %v5577, %v5569
    %v7562 = vpack.c.b16 %v5578, %v5570
    %v7563 = vpack.c.b16 %v5579, %v5571
    %v7564 = vpack.c.b16 %v5588, %v5580
    %v7565 = vpack.c.b16 %v5589, %v5581
    %v7566 = vpack.c.b16 %v5590, %v5582
    %v7567 = vpack.c.b16 %v5591, %v5583
    %v7568 = vpack.c.b16 %v5592, %v5584
    %v7569 = vpack.c.b16 %v5593, %v5585
    %v7570 = vpack.c.b16 %v5594, %v5586
    %v7571 = vpack.c.b16 %v5595, %v5587
    %v7572 = vpack.c.b16 %v5604, %v5596
    %v7573 = vpack.c.b16 %v5605, %v5597
    %v7574 = vpack.c.b16 %v5606, %v5598
    %v7575 = vpack.c.b16 %v5607, %v5599
    %v7576 = vpack.c.b16 %v5608, %v5600
    %v7577 = vpack.c.b16 %v5609, %v5601
    %v7578 = vpack.c.b16 %v5610, %v5602
    %v7579 = vpack.c.b16 %v5611, %v5603
    %v7580 = vpack.c.b16 %v5620, %v5612
    %v7581 = vpack.c.b16 %v5621, %v5613
    %v7582 = vpack.c.b16 %v5622, %v5614
    %v7583 = vpack.c.b16 %v5623, %v5615
    %v7584 = vpack.c.b16 %v5624, %v5616
    %v7585 = vpack.c.b16 %v5625, %v5617
    %v7586 = vpack.c.b16 %v5626, %v5618
    %v7587 = vpack.c.b16 %v5627, %v5619
    %v7588 = vpack.c.b16 %v5636, %v5628
    %v7589 = vpack.c.b16 %v5637, %v5629
    %v7590 = vpack.c.b16 %v5638, %v5630
    %v7591 = vpack.c.b16 %v5639, %v5631
    %v7592 = vpack.c.b16 %v5640, %v5632
    %v7593 = vpack.c.b16 %v5641, %v5633
    %v7594 = vpack.c.b16 %v5642, %v5634
    %v7595 = vpack.c.b16 %v5643, %v5635
    %v7596 = vpack.c.b16 %v5652, %v5644
    %v7597 = vpack.c.b16 %v5653, %v5645
    %v7598 = vpack.c.b16 %v5654, %v5646
    %v7599 = vpack.c.b16 %v5655, %v5647
    %v7600 = vpack.c.b16 %v5656, %v5648
    %v7601 = vpack.c.b16 %v5657, %v5649
    %v7602 = vpack.c.b16 %v5658, %v5650
    %v7603 = vpack.c.b16 %v5659, %v5651
    %v7604 = vpack.c.b16 %v5668, %v5660
    %v7605 = vpack.c.b16 %v5669, %v5661
    %v7606 = vpack.c.b16 %v5670, %v5662
    %v7607 = vpack.c.b16 %v5671, %v5663
    %v7608 = vpack.c.b16 %v5672, %v5664
    %v7609 = vpack.c.b16 %v5673, %v5665
    %v7610 = vpack.c.b16 %v5674, %v5666
    %v7611 = vpack.c.b16 %v5675, %v5667
    %v7612 = vpack.c.b16 %v5684, %v5676
    %v7613 = vpack.c.b16 %v5685, %v5677
    %v7614 = vpack.c.b16 %v5686, %v5678
    %v7615 = vpack.c.b16 %v5687, %v5679
    %v7616 = vpack.c.b16 %v5688, %v5680
    %v7617 = vpack.c.b16 %v5689, %v5681
    %v7618 = vpack.c.b16 %v5690, %v5682
    %v7619 = vpack.c.b16 %v5691, %v5683
    %v7620 = vpack.c.b16 %v5700, %v5692
    %v7621 = vpack.c.b16 %v5701, %v5693
    %v7622 = vpack.c.b16 %v5702, %v5694
    %v7623 = vpack.c.b16 %v5703, %v5695
    %v7624 = vpack.c.b16 %v5704, %v5696
    %v7625 = vpack.c.b16 %v5705, %v5697
    %v7626 = vpack.c.b16 %v5706, %v5698
    %v7627 = vpack.c.b16 %v5707, %v5699
    %v7628 = vpack.c.b16 %v5716, %v5708
    %v7629 = vpack.c.b16 %v5717, %v5709
    %v7630 = vpack.c.b16 %v5718, %v5710
    %v7631 = vpack.c.b16 %v5719, %v5711
    %v7632 = vpack.c.b16 %v5720, %v5712
    %v7633 = vpack.c.b16 %v5721, %v5713
    %v7634 = vpack.c.b16 %v5722, %v5714
    %v7635 = vpack.c.b16 %v5723, %v5715
    %v7636 = vpack.c.b16 %v5732, %v5724
    %v7637 = vpack.c.b16 %v5733, %v5725
    %v7638 = vpack.c.b16 %v5734, %v5726
    %v7639 = vpack.c.b16 %v5735, %v5727
    %v7640 = vpack.c.b16 %v5736, %v5728
    %v7641 = vpack.c.b16 %v5737, %v5729
    %v7642 = vpack.c.b16 %v5738, %v5730
    %v7643 = vpack.c.b16 %v5739, %v5731
    %v7644 = vpack.c.b16 %v5748, %v5740
    %v7645 = vpack.c.b16 %v5749, %v5741
    %v7646 = vpack.c.b16 %v5750, %v5742
    %v7647 = vpack.c.b16 %v5751, %v5743
    %v7648 = vpack.c.b16 %v5752, %v5744
    %v7649 = vpack.c.b16 %v5753, %v5745
    %v7650 = vpack.c.b16 %v5754, %v5746
    %v7651 = vpack.c.b16 %v5755, %v5747
    %v7652 = vpack.c.b16 %v5764, %v5756
    %v7653 = vpack.c.b16 %v5765, %v5757
    %v7654 = vpack.c.b16 %v5766, %v5758
    %v7655 = vpack.c.b16 %v5767, %v5759
    %v7656 = vpack.c.b16 %v5768, %v5760
    %v7657 = vpack.c.b16 %v5769, %v5761
    %v7658 = vpack.c.b16 %v5770, %v5762
    %v7659 = vpack.c.b16 %v5771, %v5763
    %v7660 = vpack.c.b16 %v5780, %v5772
    %v7661 = vpack.c.b16 %v5781, %v5773
    %v7662 = vpack.c.b16 %v5782, %v5774
    %v7663 = vpack.c.b16 %v5783, %v5775
    %v7664 = vpack.c.b16 %v5784, %v5776
    %v7665 = vpack.c.b16 %v5785, %v5777
    %v7666 = vpack.c.b16 %v5786, %v5778
    %v7667 = vpack.c.b16 %v5787, %v5779
    %v7668 = vpack.c.b16 %v5796, %v5788
    %v7669 = vpack.c.b16 %v5797, %v5789
    %v7670 = vpack.c.b16 %v5798, %v5790
    %v7671 = vpack.c.b16 %v5799, %v5791
    %v7672 = vpack.c.b16 %v5800, %v5792
    %v7673 = vpack.c.b16 %v5801, %v5793
    %v7674 = vpack.c.b16 %v5802, %v5794
    %v7675 = vpack.c.b16 %v5803, %v5795
    %v7676 = vpack.c.b16 %v5812, %v5804
    %v7677 = vpack.c.b16 %v5813, %v5805
    %v7678 = vpack.c.b16 %v5814, %v5806
    %v7679 = vpack.c.b16 %v5815, %v5807
    %v7680 = vpack.c.b16 %v5816, %v5808
    %v7681 = vpack.c.b16 %v5817, %v5809
    %v7682 = vpack.c.b16 %v5818, %v5810
    %v7683 = vpack.c.b16 %v5819, %v5811
    %v7684 = vpack.c.b16 %v5828, %v5820
    %v7685 = vpack.c.b16 %v5829, %v5821
    %v7686 = vpack.c.b16 %v5830, %v5822
    %v7687 = vpack.c.b16 %v5831, %v5823
    %v7688 = vpack.c.b16 %v5832, %v5824
    %v7689 = vpack.c.b16 %v5833, %v5825
    %v7690 = vpack.c.b16 %v5834, %v5826
    %v7691 = vpack.c.b16 %v5835, %v5827
    %v7692 = vpack.c.b16 %v5844, %v5836
    %v7693 = vpack.c.b16 %v5845, %v5837
    %v7694 = vpack.c.b16 %v5846, %v5838
    %v7695 = vpack.c.b16 %v5847, %v5839
    %v7696 = vpack.c.b16 %v5848, %v5840
    %v7697 = vpack.c.b16 %v5849, %v5841
    %v7698 = vpack.c.b16 %v5850, %v5842
    %v7699 = vpack.c.b16 %v5851, %v5843
    %v7700 = vpack.c.b16 %v5860, %v5852
    %v7701 = vpack.c.b16 %v5861, %v5853
    %v7702 = vpack.c.b16 %v5862, %v5854
    %v7703 = vpack.c.b16 %v5863, %v5855
    %v7704 = vpack.c.b16 %v5864, %v5856
    %v7705 = vpack.c.b16 %v5865, %v5857
    %v7706 = vpack.c.b16 %v5866, %v5858
    %v7707 = vpack.c.b16 %v5867, %v5859
    %v7708 = vpack.c.b16 %v5876, %v5868
    %v7709 = vpack.c.b16 %v5877, %v5869
    %v7710 = vpack.c.b16 %v5878, %v5870
    %v7711 = vpack.c.b16 %v5879, %v5871
    %v7712 = vpack.c.b16 %v5880, %v5872
    %v7713 = vpack.c.b16 %v5881, %v5873
    %v7714 = vpack.c.b16 %v5882, %v5874
    %v7715 = vpack.c.b16 %v5883, %v5875
    %v7716 = vpack.c.b16 %v5892, %v5884
    %v7717 = vpack.c.b16 %v5893, %v5885
    %v7718 = vpack.c.b16 %v5894, %v5886
    %v7719 = vpack.c.b16 %v5895, %v5887
    %v7720 = vpack.c.b16 %v5896, %v5888
    %v7721 = vpack.c.b16 %v5897, %v5889
    %v7722 = vpack.c.b16 %v5898, %v5890
    %v7723 = vpack.c.b16 %v5899, %v5891
    %v7724 = vpack.c.b16 %v5908, %v5900
    %v7725 = vpack.c.b16 %v5909, %v5901
    %v7726 = vpack.c.b16 %v5910, %v5902
    %v7727 = vpack.c.b16 %v5911, %v5903
    %v7728 = vpack.c.b16 %v5912, %v5904
    %v7729 = vpack.c.b16 %v5913, %v5905
    %v7730 = vpack.c.b16 %v5914, %v5906
    %v7731 = vpack.c.b16 %v5915, %v5907
    %v7732 = vpack.c.b16 %v5924, %v5916
    %v7733 = vpack.c.b16 %v5925, %v5917
    %v7734 = vpack.c.b16 %v5926, %v5918
    %v7735 = vpack.c.b16 %v5927, %v5919
    %v7736 = vpack.c.b16 %v5928, %v5920
    %v7737 = vpack.c.b16 %v5929, %v5921
    %v7738 = vpack.c.b16 %v5930, %v5922
    %v7739 = vpack.c.b16 %v5931, %v5923
    %v7740 = vpack.c.b16 %v5940, %v5932
    %v7741 = vpack.c.b16 %v5941, %v5933
    %v7742 = vpack.c.b16 %v5942, %v5934
    %v7743 = vpack.c.b16 %v5943, %v5935
    %v7744 = vpack.c.b16 %v5944, %v5936
    %v7745 = vpack.c.b16 %v5945, %v5937
    %v7746 = vpack.c.b16 %v5946, %v5938
    %v7747 = vpack.c.b16 %v5947, %v5939
    %v7748 = vpack.c.b16 %v5956, %v5948
    %v7749 = vpack.c.b16 %v5957, %v5949
    %v7750 = vpack.c.b16 %v5958, %v5950
    %v7751 = vpack.c.b16 %v5959, %v5951
    %v7752 = vpack.c.b16 %v5960, %v5952
    %v7753 = vpack.c.b16 %v5961, %v5953
    %v7754 = vpack.c.b16 %v5962, %v5954
    %v7755 = vpack.c.b16 %v5963, %v5955
    %v7756 = vpack.c.b16 %v5972, %v5964
    %v7757 = vpack.c.b16 %v5973, %v5965
    %v7758 = vpack.c.b16 %v5974, %v5966
    %v7759 = vpack.c.b16 %v5975, %v5967
    %v7760 = vpack.c.b16 %v5976, %v5968
    %v7761 = vpack.c.b16 %v5977, %v5969
    %v7762 = vpack.c.b16 %v5978, %v5970
    %v7763 = vpack.c.b16 %v5979, %v5971
    %v7764 = vpack.c.b16 %v5988, %v5980
    %v7765 = vpack.c.b16 %v5989, %v5981
    %v7766 = vpack.c.b16 %v5990, %v5982
    %v7767 = vpack.c.b16 %v5991, %v5983
    %v7768 = vpack.c.b16 %v5992, %v5984
    %v7769 = vpack.c.b16 %v5993, %v5985
    %v7770 = vpack.c.b16 %v5994, %v5986
    %v7771 = vpack.c.b16 %v5995, %v5987
    %v7772 = vpack.c.b16 %v6004, %v5996
    %v7773 = vpack.c.b16 %v6005, %v5997
    %v7774 = vpack.c.b16 %v6006, %v5998
    %v7775 = vpack.c.b16 %v6007, %v5999
    %v7776 = vpack.c.b16 %v6008, %v6000
    %v7777 = vpack.c.b16 %v6009, %v6001
    %v7778 = vpack.c.b16 %v6010, %v6002
    %v7779 = vpack.c.b16 %v6011, %v6003
    %v7780 = vpack.c.b16 %v6020, %v6012
    %v7781 = vpack.c.b16 %v6021, %v6013
    %v7782 = vpack.c.b16 %v6022, %v6014
    %v7783 = vpack.c.b16 %v6023, %v6015
    %v7784 = vpack.c.b16 %v6024, %v6016
    %v7785 = vpack.c.b16 %v6025, %v6017
    %v7786 = vpack.c.b16 %v6026, %v6018
    %v7787 = vpack.c.b16 %v6027, %v6019
    %v7788 = vpack.c.b16 %v6036, %v6028
    %v7789 = vpack.c.b16 %v6037, %v6029
    %v7790 = vpack.c.b16 %v6038, %v6030
    %v7791 = vpack.c.b16 %v6039, %v6031
    %v7792 = vpack.c.b16 %v6040, %v6032
    %v7793 = vpack.c.b16 %v6041, %v6033
    %v7794 = vpack.c.b16 %v6042, %v6034
    %v7795 = vpack.c.b16 %v6043, %v6035
    %v7796 = vpack.c.b16 %v6052, %v6044
    %v7797 = vpack.c.b16 %v6053, %v6045
    %v7798 = vpack.c.b16 %v6054, %v6046
    %v7799 = vpack.c.b16 %v6055, %v6047
    %v7800 = vpack.c.b16 %v6056, %v6048
    %v7801 = vpack.c.b16 %v6057, %v6049
    %v7802 = vpack.c.b16 %v6058, %v6050
    %v7803 = vpack.c.b16 %v6059, %v6051
    %v7804 = vpack.c.b16 %v6068, %v6060
    %v7805 = vpack.c.b16 %v6069, %v6061
    %v7806 = vpack.c.b16 %v6070, %v6062
    %v7807 = vpack.c.b16 %v6071, %v6063
    %v7808 = vpack.c.b16 %v6072, %v6064
    %v7809 = vpack.c.b16 %v6073, %v6065
    %v7810 = vpack.c.b16 %v6074, %v6066
    %v7811 = vpack.c.b16 %v6075, %v6067
    %v7812 = vpack.c.b16 %v6084, %v6076
    %v7813 = vpack.c.b16 %v6085, %v6077
    %v7814 = vpack.c.b16 %v6086, %v6078
    %v7815 = vpack.c.b16 %v6087, %v6079
    %v7816 = vpack.c.b16 %v6088, %v6080
    %v7817 = vpack.c.b16 %v6089, %v6081
    %v7818 = vpack.c.b16 %v6090, %v6082
    %v7819 = vpack.c.b16 %v6091, %v6083
    %v7820 = vpack.c.b16 %v6100, %v6092
    %v7821 = vpack.c.b16 %v6101, %v6093
    %v7822 = vpack.c.b16 %v6102, %v6094
    %v7823 = vpack.c.b16 %v6103, %v6095
    %v7824 = vpack.c.b16 %v6104, %v6096
    %v7825 = vpack.c.b16 %v6105, %v6097
    %v7826 = vpack.c.b16 %v6106, %v6098
    %v7827 = vpack.c.b16 %v6107, %v6099
    %v7828 = vpack.c.b16 %v6116, %v6108
    %v7829 = vpack.c.b16 %v6117, %v6109
    %v7830 = vpack.c.b16 %v6118, %v6110
    %v7831 = vpack.c.b16 %v6119, %v6111
    %v7832 = vpack.c.b16 %v6120, %v6112
    %v7833 = vpack.c.b16 %v6121, %v6113
    %v7834 = vpack.c.b16 %v6122, %v6114
    %v7835 = vpack.c.b16 %v6123, %v6115
    %v7836 = vpack.c.b16 %v6132, %v6124
    %v7837 = vpack.c.b16 %v6133, %v6125
    %v7838 = vpack.c.b16 %v6134, %v6126
    %v7839 = vpack.c.b16 %v6135, %v6127
    %v7840 = vpack.c.b16 %v6136, %v6128
    %v7841 = vpack.c.b16 %v6137, %v6129
    %v7842 = vpack.c.b16 %v6138, %v6130
    %v7843 = vpack.c.b16 %v6139, %v6131
    %v7844 = vpack.c.b16 %v6148, %v6140
    %v7845 = vpack.c.b16 %v6149, %v6141
    %v7846 = vpack.c.b16 %v6150, %v6142
    %v7847 = vpack.c.b16 %v6151, %v6143
    %v7848 = vpack.c.b16 %v6152, %v6144
    %v7849 = vpack.c.b16 %v6153, %v6145
    %v7850 = vpack.c.b16 %v6154, %v6146
    %v7851 = vpack.c.b16 %v6155, %v6147
    %v7852 = vpack.c.b16 %v6164, %v6156
    %v7853 = vpack.c.b16 %v6165, %v6157
    %v7854 = vpack.c.b16 %v6166, %v6158
    %v7855 = vpack.c.b16 %v6167, %v6159
    %v7856 = vpack.c.b16 %v6168, %v6160
    %v7857 = vpack.c.b16 %v6169, %v6161
    %v7858 = vpack.c.b16 %v6170, %v6162
    %v7859 = vpack.c.b16 %v6171, %v6163
    %v7860 = vpack.c.b16 %v6180, %v6172
    %v7861 = vpack.c.b16 %v6181, %v6173
    %v7862 = vpack.c.b16 %v6182, %v6174
    %v7863 = vpack.c.b16 %v6183, %v6175
    %v7864 = vpack.c.b16 %v6184, %v6176
    %v7865 = vpack.c.b16 %v6185, %v6177
    %v7866 = vpack.c.b16 %v6186, %v6178
    %v7867 = vpack.c.b16 %v6187, %v6179
    %v7868 = vpack.c.b16 %v6196, %v6188
    %v7869 = vpack.c.b16 %v6197, %v6189
    %v7870 = vpack.c.b16 %v6198, %v6190
    %v7871 = vpack.c.b16 %v6199, %v6191
    %v7872 = vpack.c.b16 %v6200, %v6192
    %v7873 = vpack.c.b16 %v6201, %v6193
    %v7874 = vpack.c.b16 %v6202, %v6194
    %v7875 = vpack.c.b16 %v6203, %v6195
    %v7876 = vpack.c.b16 %v6212, %v6204
    %v7877 = vpack.c.b16 %v6213, %v6205
    %v7878 = vpack.c.b16 %v6214, %v6206
    %v7879 = vpack.c.b16 %v6215, %v6207
    %v7880 = vpack.c.b16 %v6216, %v6208
    %v7881 = vpack.c.b16 %v6217, %v6209
    %v7882 = vpack.c.b16 %v6218, %v6210
    %v7883 = vpack.c.b16 %v6219, %v6211
    %v7884 = vpack.c.b16 %v6228, %v6220
    %v7885 = vpack.c.b16 %v6229, %v6221
    %v7886 = vpack.c.b16 %v6230, %v6222
    %v7887 = vpack.c.b16 %v6231, %v6223
    %v7888 = vpack.c.b16 %v6232, %v6224
    %v7889 = vpack.c.b16 %v6233, %v6225
    %v7890 = vpack.c.b16 %v6234, %v6226
    %v7891 = vpack.c.b16 %v6235, %v6227
    %v7892 = vpack.c.b16 %v6244, %v6236
    %v7893 = vpack.c.b16 %v6245, %v6237
    %v7894 = vpack.c.b16 %v6246, %v6238
    %v7895 = vpack.c.b16 %v6247, %v6239
    %v7896 = vpack.c.b16 %v6248, %v6240
    %v7897 = vpack.c.b16 %v6249, %v6241
    %v7898 = vpack.c.b16 %v6250, %v6242
    %v7899 = vpack.c.b16 %v6251, %v6243
    %v7900 = vpack.c.b16 %v6260, %v6252
    %v7901 = vpack.c.b16 %v6261, %v6253
    %v7902 = vpack.c.b16 %v6262, %v6254
    %v7903 = vpack.c.b16 %v6263, %v6255
    %v7904 = vpack.c.b16 %v6264, %v6256
    %v7905 = vpack.c.b16 %v6265, %v6257
    %v7906 = vpack.c.b16 %v6266, %v6258
    %v7907 = vpack.c.b16 %v6267, %v6259
    %v7908 = vpack.c.b16 %v6276, %v6268
    %v7909 = vpack.c.b16 %v6277, %v6269
    %v7910 = vpack.c.b16 %v6278, %v6270
    %v7911 = vpack.c.b16 %v6279, %v6271
    %v7912 = vpack.c.b16 %v6280, %v6272
    %v7913 = vpack.c.b16 %v6281, %v6273
    %v7914 = vpack.c.b16 %v6282, %v6274
    %v7915 = vpack.c.b16 %v6283, %v6275
    %v7916 = vpack.c.b16 %v6292, %v6284
    %v7917 = vpack.c.b16 %v6293, %v6285
    %v7918 = vpack.c.b16 %v6294, %v6286
    %v7919 = vpack.c.b16 %v6295, %v6287
    %v7920 = vpack.c.b16 %v6296, %v6288
    %v7921 = vpack.c.b16 %v6297, %v6289
    %v7922 = vpack.c.b16 %v6298, %v6290
    %v7923 = vpack.c.b16 %v6299, %v6291
    %v7924 = vpack.c.b16 %v6308, %v6300
    %v7925 = vpack.c.b16 %v6309, %v6301
    %v7926 = vpack.c.b16 %v6310, %v6302
    %v7927 = vpack.c.b16 %v6311, %v6303
    %v7928 = vpack.c.b16 %v6312, %v6304
    %v7929 = vpack.c.b16 %v6313, %v6305
    %v7930 = vpack.c.b16 %v6314, %v6306
    %v7931 = vpack.c.b16 %v6315, %v6307
    %v7932 = vpack.c.b16 %v6324, %v6316
    %v7933 = vpack.c.b16 %v6325, %v6317
    %v7934 = vpack.c.b16 %v6326, %v6318
    %v7935 = vpack.c.b16 %v6327, %v6319
    %v7936 = vpack.c.b16 %v6328, %v6320
    %v7937 = vpack.c.b16 %v6329, %v6321
    %v7938 = vpack.c.b16 %v6330, %v6322
    %v7939 = vpack.c.b16 %v6331, %v6323
    %v7940 = vpack.c.b16 %v6340, %v6332
    %v7941 = vpack.c.b16 %v6341, %v6333
    %v7942 = vpack.c.b16 %v6342, %v6334
    %v7943 = vpack.c.b16 %v6343, %v6335
    %v7944 = vpack.c.b16 %v6344, %v6336
    %v7945 = vpack.c.b16 %v6345, %v6337
    %v7946 = vpack.c.b16 %v6346, %v6338
    %v7947 = vpack.c.b16 %v6347, %v6339
    %v7948 = vpack.c.b16 %v6356, %v6348
    %v7949 = vpack.c.b16 %v6357, %v6349
    %v7950 = vpack.c.b16 %v6358, %v6350
    %v7951 = vpack.c.b16 %v6359, %v6351
    %v7952 = vpack.c.b16 %v6360, %v6352
    %v7953 = vpack.c.b16 %v6361, %v6353
    %v7954 = vpack.c.b16 %v6362, %v6354
    %v7955 = vpack.c.b16 %v6363, %v6355
    %v7956 = vpack.c.b16 %v6372, %v6364
    %v7957 = vpack.c.b16 %v6373, %v6365
    %v7958 = vpack.c.b16 %v6374, %v6366
    %v7959 = vpack.c.b16 %v6375, %v6367
    %v7960 = vpack.c.b16 %v6376, %v6368
    %v7961 = vpack.c.b16 %v6377, %v6369
    %v7962 = vpack.c.b16 %v6378, %v6370
    %v7963 = vpack.c.b16 %v6379, %v6371
    %v7964 = vpack.c.b16 %v6388, %v6380
    %v7965 = vpack.c.b16 %v6389, %v6381
    %v7966 = vpack.c.b16 %v6390, %v6382
    %v7967 = vpack.c.b16 %v6391, %v6383
    %v7968 = vpack.c.b16 %v6392, %v6384
    %v7969 = vpack.c.b16 %v6393, %v6385
    %v7970 = vpack.c.b16 %v6394, %v6386
    %v7971 = vpack.c.b16 %v6395, %v6387
    %v7972 = vpack.c.b16 %v6404, %v6396
    %v7973 = vpack.c.b16 %v6405, %v6397
    %v7974 = vpack.c.b16 %v6406, %v6398
    %v7975 = vpack.c.b16 %v6407, %v6399
    %v7976 = vpack.c.b16 %v6408, %v6400
    %v7977 = vpack.c.b16 %v6409, %v6401
    %v7978 = vpack.c.b16 %v6410, %v6402
    %v7979 = vpack.c.b16 %v6411, %v6403
    %v7980 = vpack.c.b16 %v6420, %v6412
    %v7981 = vpack.c.b16 %v6421, %v6413
    %v7982 = vpack.c.b16 %v6422, %v6414
    %v7983 = vpack.c.b16 %v6423, %v6415
    %v7984 = vpack.c.b16 %v6424, %v6416
    %v7985 = vpack.c.b16 %v6425, %v6417
    %v7986 = vpack.c.b16 %v6426, %v6418
    %v7987 = vpack.c.b16 %v6427, %v6419
    %v7988 = vpack.c.b16 %v6436, %v6428
    %v7989 = vpack.c.b16 %v6437, %v6429
    %v7990 = vpack.c.b16 %v6438, %v6430
    %v7991 = vpack.c.b16 %v6439, %v6431
    %v7992 = vpack.c.b16 %v6440, %v6432
    %v7993 = vpack.c.b16 %v6441, %v6433
    %v7994 = vpack.c.b16 %v6442, %v6434
    %v7995 = vpack.c.b16 %v6443, %v6435
    %v7996 = vpack.c.b16 %v6452, %v6444
    %v7997 = vpack.c.b16 %v6453, %v6445
    %v7998 = vpack.c.b16 %v6454, %v6446
    %v7999 = vpack.c.b16 %v6455, %v6447
    %v8000 = vpack.c.b16 %v6456, %v6448
    %v8001 = vpack.c.b16 %v6457, %v6449
    %v8002 = vpack.c.b16 %v6458, %v6450
    %v8003 = vpack.c.b16 %v6459, %v6451
    %v8004 = vpack.c.b16 %v6468, %v6460
    %v8005 = vpack.c.b16 %v6469, %v6461
    %v8006 = vpack.c.b16 %v6470, %v6462
    %v8007 = vpack.c.b16 %v6471, %v6463
    %v8008 = vpack.c.b16 %v6472, %v6464
    %v8009 = vpack.c.b16 %v6473, %v6465
    %v8010 = vpack.c.b16 %v6474, %v6466
    %v8011 = vpack.c.b16 %v6475, %v6467
    %9548 = vmatpush.bf16.msra.mxu0 %v6532
    %9549 = vmatpush.bf16.msra.mxu0 %v6524
    %9550 = vmatpush.bf16.msra.mxu0 %v6516
    %9551 = vmatpush.bf16.msra.mxu0 %v6508
    %9552 = vmatpush.bf16.msra.mxu0 %v6500
    %9553 = vmatpush.bf16.msra.mxu0 %v6492
    %9554 = vmatpush.bf16.msra.mxu0 %v6484
    %9555 = vmatpush.bf16.msra.mxu0 %v6476
    %9556 = vmatmul.bf16.gmra.mxu0 %v1820
    %v9557 = vpop.f32.mrf.mxu0
    %v9558 = vadd.f32 %v1732, %v9557
    %v9559 = vpop.f32.mrf.mxu0
    %v9560 = vadd.f32 %v1732, %v9559
    %9561 = vdwg.mxu0
    %9562 = vmatpush.bf16.msra.mxu0 %v6596
    %9563 = vmatpush.bf16.msra.mxu0 %v6588
    %9564 = vmatpush.bf16.msra.mxu0 %v6580
    %9565 = vmatpush.bf16.msra.mxu0 %v6572
    %9566 = vmatpush.bf16.msra.mxu0 %v6564
    %9567 = vmatpush.bf16.msra.mxu0 %v6556
    %9568 = vmatpush.bf16.msra.mxu0 %v6548
    %9569 = vmatpush.bf16.msra.mxu0 %v6540
    %9570 = vmatmul.bf16.gmra.mxu0 %v1821
    %v9571 = vpop.f32.mrf.mxu0
    %v9572 = vadd.f32 %v9558, %v9571
    %v9573 = vpop.f32.mrf.mxu0
    %v9574 = vadd.f32 %v9560, %v9573
    %9575 = vdwg.mxu0
    %9576 = vmatpush.bf16.msra.mxu0 %v6660
    %9577 = vmatpush.bf16.msra.mxu0 %v6652
    %9578 = vmatpush.bf16.msra.mxu0 %v6644
    %9579 = vmatpush.bf16.msra.mxu0 %v6636
    %9580 = vmatpush.bf16.msra.mxu0 %v6628
    %9581 = vmatpush.bf16.msra.mxu0 %v6620
    %9582 = vmatpush.bf16.msra.mxu0 %v6612
    %9583 = vmatpush.bf16.msra.mxu0 %v6604
    %9584 = vmatmul.bf16.gmra.mxu0 %v1822
    %v9585 = vpop.f32.mrf.mxu0
    %v9586 = vadd.f32 %v9572, %v9585
    %v9587 = vpop.f32.mrf.mxu0
    %v9588 = vadd.f32 %v9574, %v9587
    %9589 = vdwg.mxu0
    %9590 = vmatpush.bf16.msra.mxu0 %v6724
    %9591 = vmatpush.bf16.msra.mxu0 %v6716
    %9592 = vmatpush.bf16.msra.mxu0 %v6708
    %9593 = vmatpush.bf16.msra.mxu0 %v6700
    %9594 = vmatpush.bf16.msra.mxu0 %v6692
    %9595 = vmatpush.bf16.msra.mxu0 %v6684
    %9596 = vmatpush.bf16.msra.mxu0 %v6676
    %9597 = vmatpush.bf16.msra.mxu0 %v6668
    %9598 = vmatmul.bf16.gmra.mxu0 %v1823
    %v9599 = vpop.f32.mrf.mxu0
    %v9600 = vadd.f32 %v9586, %v9599
    %v9601 = vpop.f32.mrf.mxu0
    %v9602 = vadd.f32 %v9588, %v9601
    %9603 = vdwg.mxu0
    %9604 = vmatpush.bf16.msra.mxu0 %v6788
    %9605 = vmatpush.bf16.msra.mxu0 %v6780
    %9606 = vmatpush.bf16.msra.mxu0 %v6772
    %9607 = vmatpush.bf16.msra.mxu0 %v6764
    %9608 = vmatpush.bf16.msra.mxu0 %v6756
    %9609 = vmatpush.bf16.msra.mxu0 %v6748
    %9610 = vmatpush.bf16.msra.mxu0 %v6740
    %9611 = vmatpush.bf16.msra.mxu0 %v6732
    %9612 = vmatmul.bf16.gmra.mxu0 %v1824
    %v9613 = vpop.f32.mrf.mxu0
    %v9614 = vadd.f32 %v9600, %v9613
    %v9615 = vpop.f32.mrf.mxu0
    %v9616 = vadd.f32 %v9602, %v9615
    %9617 = vdwg.mxu0
    %9618 = vmatpush.bf16.msra.mxu0 %v6852
    %9619 = vmatpush.bf16.msra.mxu0 %v6844
    %9620 = vmatpush.bf16.msra.mxu0 %v6836
    %9621 = vmatpush.bf16.msra.mxu0 %v6828
    %9622 = vmatpush.bf16.msra.mxu0 %v6820
    %9623 = vmatpush.bf16.msra.mxu0 %v6812
    %9624 = vmatpush.bf16.msra.mxu0 %v6804
    %9625 = vmatpush.bf16.msra.mxu0 %v6796
    %9626 = vmatmul.bf16.gmra.mxu0 %v1825
    %v9627 = vpop.f32.mrf.mxu0
    %v9628 = vadd.f32 %v9614, %v9627
    %v9629 = vpop.f32.mrf.mxu0
    %v9630 = vadd.f32 %v9616, %v9629
    %9631 = vdwg.mxu0
    %9632 = vmatpush.bf16.msra.mxu0 %v6916
    %9633 = vmatpush.bf16.msra.mxu0 %v6908
    %9634 = vmatpush.bf16.msra.mxu0 %v6900
    %9635 = vmatpush.bf16.msra.mxu0 %v6892
    %9636 = vmatpush.bf16.msra.mxu0 %v6884
    %9637 = vmatpush.bf16.msra.mxu0 %v6876
    %9638 = vmatpush.bf16.msra.mxu0 %v6868
    %9639 = vmatpush.bf16.msra.mxu0 %v6860
    %9640 = vmatmul.bf16.gmra.mxu0 %v1826
    %v9641 = vpop.f32.mrf.mxu0
    %v9642 = vadd.f32 %v9628, %v9641
    %v9643 = vpop.f32.mrf.mxu0
    %v9644 = vadd.f32 %v9630, %v9643
    %9645 = vdwg.mxu0
    %9646 = vmatpush.bf16.msra.mxu0 %v6980
    %9647 = vmatpush.bf16.msra.mxu0 %v6972
    %9648 = vmatpush.bf16.msra.mxu0 %v6964
    %9649 = vmatpush.bf16.msra.mxu0 %v6956
    %9650 = vmatpush.bf16.msra.mxu0 %v6948
    %9651 = vmatpush.bf16.msra.mxu0 %v6940
    %9652 = vmatpush.bf16.msra.mxu0 %v6932
    %9653 = vmatpush.bf16.msra.mxu0 %v6924
    %9654 = vmatmul.bf16.gmra.mxu0 %v1827
    %v9655 = vpop.f32.mrf.mxu0
    %v9656 = vadd.f32 %v9642, %v9655
    %v9657 = vpop.f32.mrf.mxu0
    %v9658 = vadd.f32 %v9644, %v9657
    %9659 = vdwg.mxu0
    %9660 = vmatpush.bf16.msra.mxu0 %v7044
    %9661 = vmatpush.bf16.msra.mxu0 %v7036
    %9662 = vmatpush.bf16.msra.mxu0 %v7028
    %9663 = vmatpush.bf16.msra.mxu0 %v7020
    %9664 = vmatpush.bf16.msra.mxu0 %v7012
    %9665 = vmatpush.bf16.msra.mxu0 %v7004
    %9666 = vmatpush.bf16.msra.mxu0 %v6996
    %9667 = vmatpush.bf16.msra.mxu0 %v6988
    %9668 = vmatmul.bf16.gmra.mxu0 %v1828
    %v9669 = vpop.f32.mrf.mxu0
    %v9670 = vadd.f32 %v9656, %v9669
    %v9671 = vpop.f32.mrf.mxu0
    %v9672 = vadd.f32 %v9658, %v9671
    %9673 = vdwg.mxu0
    %9674 = vmatpush.bf16.msra.mxu0 %v7108
    %9675 = vmatpush.bf16.msra.mxu0 %v7100
    %9676 = vmatpush.bf16.msra.mxu0 %v7092
    %9677 = vmatpush.bf16.msra.mxu0 %v7084
    %9678 = vmatpush.bf16.msra.mxu0 %v7076
    %9679 = vmatpush.bf16.msra.mxu0 %v7068
    %9680 = vmatpush.bf16.msra.mxu0 %v7060
    %9681 = vmatpush.bf16.msra.mxu0 %v7052
    %9682 = vmatmul.bf16.gmra.mxu0 %v1829
    %v9683 = vpop.f32.mrf.mxu0
    %v9684 = vadd.f32 %v9670, %v9683
    %v9685 = vpop.f32.mrf.mxu0
    %v9686 = vadd.f32 %v9672, %v9685
    %9687 = vdwg.mxu0
    %9688 = vmatpush.bf16.msra.mxu0 %v7172
    %9689 = vmatpush.bf16.msra.mxu0 %v7164
    %9690 = vmatpush.bf16.msra.mxu0 %v7156
    %9691 = vmatpush.bf16.msra.mxu0 %v7148
    %9692 = vmatpush.bf16.msra.mxu0 %v7140
    %9693 = vmatpush.bf16.msra.mxu0 %v7132
    %9694 = vmatpush.bf16.msra.mxu0 %v7124
    %9695 = vmatpush.bf16.msra.mxu0 %v7116
    %9696 = vmatmul.bf16.gmra.mxu0 %v1830
    %v9697 = vpop.f32.mrf.mxu0
    %v9698 = vadd.f32 %v9684, %v9697
    %v9699 = vpop.f32.mrf.mxu0
    %v9700 = vadd.f32 %v9686, %v9699
    %9701 = vdwg.mxu0
    %9702 = vmatpush.bf16.msra.mxu0 %v7236
    %9703 = vmatpush.bf16.msra.mxu0 %v7228
    %9704 = vmatpush.bf16.msra.mxu0 %v7220
    %9705 = vmatpush.bf16.msra.mxu0 %v7212
    %9706 = vmatpush.bf16.msra.mxu0 %v7204
    %9707 = vmatpush.bf16.msra.mxu0 %v7196
    %9708 = vmatpush.bf16.msra.mxu0 %v7188
    %9709 = vmatpush.bf16.msra.mxu0 %v7180
    %9710 = vmatmul.bf16.gmra.mxu0 %v1831
    %v9711 = vpop.f32.mrf.mxu0
    %v9712 = vadd.f32 %v9698, %v9711
    %v9713 = vpop.f32.mrf.mxu0
    %v9714 = vadd.f32 %v9700, %v9713
    %9715 = vdwg.mxu0
    %9716 = vmatpush.bf16.msra.mxu0 %v7300
    %9717 = vmatpush.bf16.msra.mxu0 %v7292
    %9718 = vmatpush.bf16.msra.mxu0 %v7284
    %9719 = vmatpush.bf16.msra.mxu0 %v7276
    %9720 = vmatpush.bf16.msra.mxu0 %v7268
    %9721 = vmatpush.bf16.msra.mxu0 %v7260
    %9722 = vmatpush.bf16.msra.mxu0 %v7252
    %9723 = vmatpush.bf16.msra.mxu0 %v7244
    %9724 = vmatmul.bf16.gmra.mxu0 %v1832
    %v9725 = vpop.f32.mrf.mxu0
    %v9726 = vadd.f32 %v9712, %v9725
    %v9727 = vpop.f32.mrf.mxu0
    %v9728 = vadd.f32 %v9714, %v9727
    %9729 = vdwg.mxu0
    %9730 = vmatpush.bf16.msra.mxu0 %v7364
    %9731 = vmatpush.bf16.msra.mxu0 %v7356
    %9732 = vmatpush.bf16.msra.mxu0 %v7348
    %9733 = vmatpush.bf16.msra.mxu0 %v7340
    %9734 = vmatpush.bf16.msra.mxu0 %v7332
    %9735 = vmatpush.bf16.msra.mxu0 %v7324
    %9736 = vmatpush.bf16.msra.mxu0 %v7316
    %9737 = vmatpush.bf16.msra.mxu0 %v7308
    %9738 = vmatmul.bf16.gmra.mxu0 %v1833
    %v9739 = vpop.f32.mrf.mxu0
    %v9740 = vadd.f32 %v9726, %v9739
    %v9741 = vpop.f32.mrf.mxu0
    %v9742 = vadd.f32 %v9728, %v9741
    %9743 = vdwg.mxu0
    %9744 = vmatpush.bf16.msra.mxu0 %v7428
    %9745 = vmatpush.bf16.msra.mxu0 %v7420
    %9746 = vmatpush.bf16.msra.mxu0 %v7412
    %9747 = vmatpush.bf16.msra.mxu0 %v7404
    %9748 = vmatpush.bf16.msra.mxu0 %v7396
    %9749 = vmatpush.bf16.msra.mxu0 %v7388
    %9750 = vmatpush.bf16.msra.mxu0 %v7380
    %9751 = vmatpush.bf16.msra.mxu0 %v7372
    %9752 = vmatmul.bf16.gmra.mxu0 %v1834
    %v9753 = vpop.f32.mrf.mxu0
    %v9754 = vadd.f32 %v9740, %v9753
    %v9755 = vpop.f32.mrf.mxu0
    %v9756 = vadd.f32 %v9742, %v9755
    %9757 = vdwg.mxu0
    %9758 = vmatpush.bf16.msra.mxu0 %v7492
    %9759 = vmatpush.bf16.msra.mxu0 %v7484
    %9760 = vmatpush.bf16.msra.mxu0 %v7476
    %9761 = vmatpush.bf16.msra.mxu0 %v7468
    %9762 = vmatpush.bf16.msra.mxu0 %v7460
    %9763 = vmatpush.bf16.msra.mxu0 %v7452
    %9764 = vmatpush.bf16.msra.mxu0 %v7444
    %9765 = vmatpush.bf16.msra.mxu0 %v7436
    %9766 = vmatmul.bf16.gmra.mxu0 %v1835
    %v9767 = vpop.f32.mrf.mxu0
    %v9768 = vadd.f32 %v9754, %v9767
    %v9769 = vpop.f32.mrf.mxu0
    %v9770 = vadd.f32 %v9756, %v9769
    %9771 = vdwg.mxu0
    %9772 = vmatpush.bf16.msra.mxu0 %v7556
    %9773 = vmatpush.bf16.msra.mxu0 %v7548
    %9774 = vmatpush.bf16.msra.mxu0 %v7540
    %9775 = vmatpush.bf16.msra.mxu0 %v7532
    %9776 = vmatpush.bf16.msra.mxu0 %v7524
    %9777 = vmatpush.bf16.msra.mxu0 %v7516
    %9778 = vmatpush.bf16.msra.mxu0 %v7508
    %9779 = vmatpush.bf16.msra.mxu0 %v7500
    %9780 = vmatmul.bf16.gmra.mxu0 %v1836
    %v9781 = vpop.f32.mrf.mxu0
    %v9782 = vadd.f32 %v9768, %v9781
    %v9783 = vpop.f32.mrf.mxu0
    %v9784 = vadd.f32 %v9770, %v9783
    %9785 = vdwg.mxu0
    %9786 = vmatpush.bf16.msra.mxu0 %v7620
    %9787 = vmatpush.bf16.msra.mxu0 %v7612
    %9788 = vmatpush.bf16.msra.mxu0 %v7604
    %9789 = vmatpush.bf16.msra.mxu0 %v7596
    %9790 = vmatpush.bf16.msra.mxu0 %v7588
    %9791 = vmatpush.bf16.msra.mxu0 %v7580
    %9792 = vmatpush.bf16.msra.mxu0 %v7572
    %9793 = vmatpush.bf16.msra.mxu0 %v7564
    %9794 = vmatmul.bf16.gmra.mxu0 %v1837
    %v9795 = vpop.f32.mrf.mxu0
    %v9796 = vadd.f32 %v9782, %v9795
    %v9797 = vpop.f32.mrf.mxu0
    %v9798 = vadd.f32 %v9784, %v9797
    %9799 = vdwg.mxu0
    %9800 = vmatpush.bf16.msra.mxu0 %v7684
    %9801 = vmatpush.bf16.msra.mxu0 %v7676
    %9802 = vmatpush.bf16.msra.mxu0 %v7668
    %9803 = vmatpush.bf16.msra.mxu0 %v7660
    %9804 = vmatpush.bf16.msra.mxu0 %v7652
    %9805 = vmatpush.bf16.msra.mxu0 %v7644
    %9806 = vmatpush.bf16.msra.mxu0 %v7636
    %9807 = vmatpush.bf16.msra.mxu0 %v7628
    %9808 = vmatmul.bf16.gmra.mxu0 %v1838
    %v9809 = vpop.f32.mrf.mxu0
    %v9810 = vadd.f32 %v9796, %v9809
    %v9811 = vpop.f32.mrf.mxu0
    %v9812 = vadd.f32 %v9798, %v9811
    %9813 = vdwg.mxu0
    %9814 = vmatpush.bf16.msra.mxu0 %v7748
    %9815 = vmatpush.bf16.msra.mxu0 %v7740
    %9816 = vmatpush.bf16.msra.mxu0 %v7732
    %9817 = vmatpush.bf16.msra.mxu0 %v7724
    %9818 = vmatpush.bf16.msra.mxu0 %v7716
    %9819 = vmatpush.bf16.msra.mxu0 %v7708
    %9820 = vmatpush.bf16.msra.mxu0 %v7700
    %9821 = vmatpush.bf16.msra.mxu0 %v7692
    %9822 = vmatmul.bf16.gmra.mxu0 %v1839
    %v9823 = vpop.f32.mrf.mxu0
    %v9824 = vadd.f32 %v9810, %v9823
    %v9825 = vpop.f32.mrf.mxu0
    %v9826 = vadd.f32 %v9812, %v9825
    %9827 = vdwg.mxu0
    %9828 = vmatpush.bf16.msra.mxu0 %v7812
    %9829 = vmatpush.bf16.msra.mxu0 %v7804
    %9830 = vmatpush.bf16.msra.mxu0 %v7796
    %9831 = vmatpush.bf16.msra.mxu0 %v7788
    %9832 = vmatpush.bf16.msra.mxu0 %v7780
    %9833 = vmatpush.bf16.msra.mxu0 %v7772
    %9834 = vmatpush.bf16.msra.mxu0 %v7764
    %9835 = vmatpush.bf16.msra.mxu0 %v7756
    %9836 = vmatmul.bf16.gmra.mxu0 %v1840
    %v9837 = vpop.f32.mrf.mxu0
    %v9838 = vadd.f32 %v9824, %v9837
    %v9839 = vpop.f32.mrf.mxu0
    %v9840 = vadd.f32 %v9826, %v9839
    %9841 = vdwg.mxu0
    %9842 = vmatpush.bf16.msra.mxu0 %v7876
    %9843 = vmatpush.bf16.msra.mxu0 %v7868
    %9844 = vmatpush.bf16.msra.mxu0 %v7860
    %9845 = vmatpush.bf16.msra.mxu0 %v7852
    %9846 = vmatpush.bf16.msra.mxu0 %v7844
    %9847 = vmatpush.bf16.msra.mxu0 %v7836
    %9848 = vmatpush.bf16.msra.mxu0 %v7828
    %9849 = vmatpush.bf16.msra.mxu0 %v7820
    %9850 = vmatmul.bf16.gmra.mxu0 %v1841
    %v9851 = vpop.f32.mrf.mxu0
    %v9852 = vadd.f32 %v9838, %v9851
    %v9853 = vpop.f32.mrf.mxu0
    %v9854 = vadd.f32 %v9840, %v9853
    %9855 = vdwg.mxu0
    %9856 = vmatpush.bf16.msra.mxu0 %v7940
    %9857 = vmatpush.bf16.msra.mxu0 %v7932
    %9858 = vmatpush.bf16.msra.mxu0 %v7924
    %9859 = vmatpush.bf16.msra.mxu0 %v7916
    %9860 = vmatpush.bf16.msra.mxu0 %v7908
    %9861 = vmatpush.bf16.msra.mxu0 %v7900
    %9862 = vmatpush.bf16.msra.mxu0 %v7892
    %9863 = vmatpush.bf16.msra.mxu0 %v7884
    %9864 = vmatmul.bf16.gmra.mxu0 %v1842
    %v9865 = vpop.f32.mrf.mxu0
    %v9866 = vadd.f32 %v9852, %v9865
    %v9867 = vpop.f32.mrf.mxu0
    %v9868 = vadd.f32 %v9854, %v9867
    %9869 = vdwg.mxu0
    %9870 = vmatpush.bf16.msra.mxu0 %v8004
    %9871 = vmatpush.bf16.msra.mxu0 %v7996
    %9872 = vmatpush.bf16.msra.mxu0 %v7988
    %9873 = vmatpush.bf16.msra.mxu0 %v7980
    %9874 = vmatpush.bf16.msra.mxu0 %v7972
    %9875 = vmatpush.bf16.msra.mxu0 %v7964
    %9876 = vmatpush.bf16.msra.mxu0 %v7956
    %9877 = vmatpush.bf16.msra.mxu0 %v7948
    %9878 = vmatmul.bf16.gmra.mxu0 %v1843
    %v9879 = vpop.f32.mrf.mxu0
    %v9880 = vadd.f32 %v9866, %v9879
    %v9881 = vpop.f32.mrf.mxu0
    %v9882 = vadd.f32 %v9868, %v9881
    %9883 = vdwg.mxu0
    %9884 = vmatpush.bf16.msra.mxu0 %v6533
    %9885 = vmatpush.bf16.msra.mxu0 %v6525
    %9886 = vmatpush.bf16.msra.mxu0 %v6517
    %9887 = vmatpush.bf16.msra.mxu0 %v6509
    %9888 = vmatpush.bf16.msra.mxu0 %v6501
    %9889 = vmatpush.bf16.msra.mxu0 %v6493
    %9890 = vmatpush.bf16.msra.mxu0 %v6485
    %9891 = vmatpush.bf16.msra.mxu0 %v6477
    %9892 = vmatmul.bf16.gmra.mxu0 %v1820
    %v9893 = vpop.f32.mrf.mxu0
    %v9894 = vadd.f32 %v1733, %v9893
    %v9895 = vpop.f32.mrf.mxu0
    %v9896 = vadd.f32 %v1733, %v9895
    %9897 = vdwg.mxu0
    %9898 = vmatpush.bf16.msra.mxu0 %v6597
    %9899 = vmatpush.bf16.msra.mxu0 %v6589
    %9900 = vmatpush.bf16.msra.mxu0 %v6581
    %9901 = vmatpush.bf16.msra.mxu0 %v6573
    %9902 = vmatpush.bf16.msra.mxu0 %v6565
    %9903 = vmatpush.bf16.msra.mxu0 %v6557
    %9904 = vmatpush.bf16.msra.mxu0 %v6549
    %9905 = vmatpush.bf16.msra.mxu0 %v6541
    %9906 = vmatmul.bf16.gmra.mxu0 %v1821
    %v9907 = vpop.f32.mrf.mxu0
    %v9908 = vadd.f32 %v9894, %v9907
    %v9909 = vpop.f32.mrf.mxu0
    %v9910 = vadd.f32 %v9896, %v9909
    %9911 = vdwg.mxu0
    %9912 = vmatpush.bf16.msra.mxu0 %v6661
    %9913 = vmatpush.bf16.msra.mxu0 %v6653
    %9914 = vmatpush.bf16.msra.mxu0 %v6645
    %9915 = vmatpush.bf16.msra.mxu0 %v6637
    %9916 = vmatpush.bf16.msra.mxu0 %v6629
    %9917 = vmatpush.bf16.msra.mxu0 %v6621
    %9918 = vmatpush.bf16.msra.mxu0 %v6613
    %9919 = vmatpush.bf16.msra.mxu0 %v6605
    %9920 = vmatmul.bf16.gmra.mxu0 %v1822
    %v9921 = vpop.f32.mrf.mxu0
    %v9922 = vadd.f32 %v9908, %v9921
    %v9923 = vpop.f32.mrf.mxu0
    %v9924 = vadd.f32 %v9910, %v9923
    %9925 = vdwg.mxu0
    %9926 = vmatpush.bf16.msra.mxu0 %v6725
    %9927 = vmatpush.bf16.msra.mxu0 %v6717
    %9928 = vmatpush.bf16.msra.mxu0 %v6709
    %9929 = vmatpush.bf16.msra.mxu0 %v6701
    %9930 = vmatpush.bf16.msra.mxu0 %v6693
    %9931 = vmatpush.bf16.msra.mxu0 %v6685
    %9932 = vmatpush.bf16.msra.mxu0 %v6677
    %9933 = vmatpush.bf16.msra.mxu0 %v6669
    %9934 = vmatmul.bf16.gmra.mxu0 %v1823
    %v9935 = vpop.f32.mrf.mxu0
    %v9936 = vadd.f32 %v9922, %v9935
    %v9937 = vpop.f32.mrf.mxu0
    %v9938 = vadd.f32 %v9924, %v9937
    %9939 = vdwg.mxu0
    %9940 = vmatpush.bf16.msra.mxu0 %v6789
    %9941 = vmatpush.bf16.msra.mxu0 %v6781
    %9942 = vmatpush.bf16.msra.mxu0 %v6773
    %9943 = vmatpush.bf16.msra.mxu0 %v6765
    %9944 = vmatpush.bf16.msra.mxu0 %v6757
    %9945 = vmatpush.bf16.msra.mxu0 %v6749
    %9946 = vmatpush.bf16.msra.mxu0 %v6741
    %9947 = vmatpush.bf16.msra.mxu0 %v6733
    %9948 = vmatmul.bf16.gmra.mxu0 %v1824
    %v9949 = vpop.f32.mrf.mxu0
    %v9950 = vadd.f32 %v9936, %v9949
    %v9951 = vpop.f32.mrf.mxu0
    %v9952 = vadd.f32 %v9938, %v9951
    %9953 = vdwg.mxu0
    %9954 = vmatpush.bf16.msra.mxu0 %v6853
    %9955 = vmatpush.bf16.msra.mxu0 %v6845
    %9956 = vmatpush.bf16.msra.mxu0 %v6837
    %9957 = vmatpush.bf16.msra.mxu0 %v6829
    %9958 = vmatpush.bf16.msra.mxu0 %v6821
    %9959 = vmatpush.bf16.msra.mxu0 %v6813
    %9960 = vmatpush.bf16.msra.mxu0 %v6805
    %9961 = vmatpush.bf16.msra.mxu0 %v6797
    %9962 = vmatmul.bf16.gmra.mxu0 %v1825
    %v9963 = vpop.f32.mrf.mxu0
    %v9964 = vadd.f32 %v9950, %v9963
    %v9965 = vpop.f32.mrf.mxu0
    %v9966 = vadd.f32 %v9952, %v9965
    %9967 = vdwg.mxu0
    %9968 = vmatpush.bf16.msra.mxu0 %v6917
    %9969 = vmatpush.bf16.msra.mxu0 %v6909
    %9970 = vmatpush.bf16.msra.mxu0 %v6901
    %9971 = vmatpush.bf16.msra.mxu0 %v6893
    %9972 = vmatpush.bf16.msra.mxu0 %v6885
    %9973 = vmatpush.bf16.msra.mxu0 %v6877
    %9974 = vmatpush.bf16.msra.mxu0 %v6869
    %9975 = vmatpush.bf16.msra.mxu0 %v6861
    %9976 = vmatmul.bf16.gmra.mxu0 %v1826
    %v9977 = vpop.f32.mrf.mxu0
    %v9978 = vadd.f32 %v9964, %v9977
    %v9979 = vpop.f32.mrf.mxu0
    %v9980 = vadd.f32 %v9966, %v9979
    %9981 = vdwg.mxu0
    %9982 = vmatpush.bf16.msra.mxu0 %v6981
    %9983 = vmatpush.bf16.msra.mxu0 %v6973
    %9984 = vmatpush.bf16.msra.mxu0 %v6965
    %9985 = vmatpush.bf16.msra.mxu0 %v6957
    %9986 = vmatpush.bf16.msra.mxu0 %v6949
    %9987 = vmatpush.bf16.msra.mxu0 %v6941
    %9988 = vmatpush.bf16.msra.mxu0 %v6933
    %9989 = vmatpush.bf16.msra.mxu0 %v6925
    %9990 = vmatmul.bf16.gmra.mxu0 %v1827
    %v9991 = vpop.f32.mrf.mxu0
    %v9992 = vadd.f32 %v9978, %v9991
    %v9993 = vpop.f32.mrf.mxu0
    %v9994 = vadd.f32 %v9980, %v9993
    %9995 = vdwg.mxu0
    %9996 = vmatpush.bf16.msra.mxu0 %v7045
    %9997 = vmatpush.bf16.msra.mxu0 %v7037
    %9998 = vmatpush.bf16.msra.mxu0 %v7029
    %9999 = vmatpush.bf16.msra.mxu0 %v7021
    %10000 = vmatpush.bf16.msra.mxu0 %v7013
    %10001 = vmatpush.bf16.msra.mxu0 %v7005
    %10002 = vmatpush.bf16.msra.mxu0 %v6997
    %10003 = vmatpush.bf16.msra.mxu0 %v6989
    %10004 = vmatmul.bf16.gmra.mxu0 %v1828
    %v10005 = vpop.f32.mrf.mxu0
    %v10006 = vadd.f32 %v9992, %v10005
    %v10007 = vpop.f32.mrf.mxu0
    %v10008 = vadd.f32 %v9994, %v10007
    %10009 = vdwg.mxu0
    %10010 = vmatpush.bf16.msra.mxu0 %v7109
    %10011 = vmatpush.bf16.msra.mxu0 %v7101
    %10012 = vmatpush.bf16.msra.mxu0 %v7093
    %10013 = vmatpush.bf16.msra.mxu0 %v7085
    %10014 = vmatpush.bf16.msra.mxu0 %v7077
    %10015 = vmatpush.bf16.msra.mxu0 %v7069
    %10016 = vmatpush.bf16.msra.mxu0 %v7061
    %10017 = vmatpush.bf16.msra.mxu0 %v7053
    %10018 = vmatmul.bf16.gmra.mxu0 %v1829
    %v10019 = vpop.f32.mrf.mxu0
    %v10020 = vadd.f32 %v10006, %v10019
    %v10021 = vpop.f32.mrf.mxu0
    %v10022 = vadd.f32 %v10008, %v10021
    %10023 = vdwg.mxu0
    %10024 = vmatpush.bf16.msra.mxu0 %v7173
    %10025 = vmatpush.bf16.msra.mxu0 %v7165
    %10026 = vmatpush.bf16.msra.mxu0 %v7157
    %10027 = vmatpush.bf16.msra.mxu0 %v7149
    %10028 = vmatpush.bf16.msra.mxu0 %v7141
    %10029 = vmatpush.bf16.msra.mxu0 %v7133
    %10030 = vmatpush.bf16.msra.mxu0 %v7125
    %10031 = vmatpush.bf16.msra.mxu0 %v7117
    %10032 = vmatmul.bf16.gmra.mxu0 %v1830
    %v10033 = vpop.f32.mrf.mxu0
    %v10034 = vadd.f32 %v10020, %v10033
    %v10035 = vpop.f32.mrf.mxu0
    %v10036 = vadd.f32 %v10022, %v10035
    %10037 = vdwg.mxu0
    %10038 = vmatpush.bf16.msra.mxu0 %v7237
    %10039 = vmatpush.bf16.msra.mxu0 %v7229
    %10040 = vmatpush.bf16.msra.mxu0 %v7221
    %10041 = vmatpush.bf16.msra.mxu0 %v7213
    %10042 = vmatpush.bf16.msra.mxu0 %v7205
    %10043 = vmatpush.bf16.msra.mxu0 %v7197
    %10044 = vmatpush.bf16.msra.mxu0 %v7189
    %10045 = vmatpush.bf16.msra.mxu0 %v7181
    %10046 = vmatmul.bf16.gmra.mxu0 %v1831
    %v10047 = vpop.f32.mrf.mxu0
    %v10048 = vadd.f32 %v10034, %v10047
    %v10049 = vpop.f32.mrf.mxu0
    %v10050 = vadd.f32 %v10036, %v10049
    %10051 = vdwg.mxu0
    %10052 = vmatpush.bf16.msra.mxu0 %v7301
    %10053 = vmatpush.bf16.msra.mxu0 %v7293
    %10054 = vmatpush.bf16.msra.mxu0 %v7285
    %10055 = vmatpush.bf16.msra.mxu0 %v7277
    %10056 = vmatpush.bf16.msra.mxu0 %v7269
    %10057 = vmatpush.bf16.msra.mxu0 %v7261
    %10058 = vmatpush.bf16.msra.mxu0 %v7253
    %10059 = vmatpush.bf16.msra.mxu0 %v7245
    %10060 = vmatmul.bf16.gmra.mxu0 %v1832
    %v10061 = vpop.f32.mrf.mxu0
    %v10062 = vadd.f32 %v10048, %v10061
    %v10063 = vpop.f32.mrf.mxu0
    %v10064 = vadd.f32 %v10050, %v10063
    %10065 = vdwg.mxu0
    %10066 = vmatpush.bf16.msra.mxu0 %v7365
    %10067 = vmatpush.bf16.msra.mxu0 %v7357
    %10068 = vmatpush.bf16.msra.mxu0 %v7349
    %10069 = vmatpush.bf16.msra.mxu0 %v7341
    %10070 = vmatpush.bf16.msra.mxu0 %v7333
    %10071 = vmatpush.bf16.msra.mxu0 %v7325
    %10072 = vmatpush.bf16.msra.mxu0 %v7317
    %10073 = vmatpush.bf16.msra.mxu0 %v7309
    %10074 = vmatmul.bf16.gmra.mxu0 %v1833
    %v10075 = vpop.f32.mrf.mxu0
    %v10076 = vadd.f32 %v10062, %v10075
    %v10077 = vpop.f32.mrf.mxu0
    %v10078 = vadd.f32 %v10064, %v10077
    %10079 = vdwg.mxu0
    %10080 = vmatpush.bf16.msra.mxu0 %v7429
    %10081 = vmatpush.bf16.msra.mxu0 %v7421
    %10082 = vmatpush.bf16.msra.mxu0 %v7413
    %10083 = vmatpush.bf16.msra.mxu0 %v7405
    %10084 = vmatpush.bf16.msra.mxu0 %v7397
    %10085 = vmatpush.bf16.msra.mxu0 %v7389
    %10086 = vmatpush.bf16.msra.mxu0 %v7381
    %10087 = vmatpush.bf16.msra.mxu0 %v7373
    %10088 = vmatmul.bf16.gmra.mxu0 %v1834
    %v10089 = vpop.f32.mrf.mxu0
    %v10090 = vadd.f32 %v10076, %v10089
    %v10091 = vpop.f32.mrf.mxu0
    %v10092 = vadd.f32 %v10078, %v10091
    %10093 = vdwg.mxu0
    %10094 = vmatpush.bf16.msra.mxu0 %v7493
    %10095 = vmatpush.bf16.msra.mxu0 %v7485
    %10096 = vmatpush.bf16.msra.mxu0 %v7477
    %10097 = vmatpush.bf16.msra.mxu0 %v7469
    %10098 = vmatpush.bf16.msra.mxu0 %v7461
    %10099 = vmatpush.bf16.msra.mxu0 %v7453
    %10100 = vmatpush.bf16.msra.mxu0 %v7445
    %10101 = vmatpush.bf16.msra.mxu0 %v7437
    %10102 = vmatmul.bf16.gmra.mxu0 %v1835
    %v10103 = vpop.f32.mrf.mxu0
    %v10104 = vadd.f32 %v10090, %v10103
    %v10105 = vpop.f32.mrf.mxu0
    %v10106 = vadd.f32 %v10092, %v10105
    %10107 = vdwg.mxu0
    %10108 = vmatpush.bf16.msra.mxu0 %v7557
    %10109 = vmatpush.bf16.msra.mxu0 %v7549
    %10110 = vmatpush.bf16.msra.mxu0 %v7541
    %10111 = vmatpush.bf16.msra.mxu0 %v7533
    %10112 = vmatpush.bf16.msra.mxu0 %v7525
    %10113 = vmatpush.bf16.msra.mxu0 %v7517
    %10114 = vmatpush.bf16.msra.mxu0 %v7509
    %10115 = vmatpush.bf16.msra.mxu0 %v7501
    %10116 = vmatmul.bf16.gmra.mxu0 %v1836
    %v10117 = vpop.f32.mrf.mxu0
    %v10118 = vadd.f32 %v10104, %v10117
    %v10119 = vpop.f32.mrf.mxu0
    %v10120 = vadd.f32 %v10106, %v10119
    %10121 = vdwg.mxu0
    %10122 = vmatpush.bf16.msra.mxu0 %v7621
    %10123 = vmatpush.bf16.msra.mxu0 %v7613
    %10124 = vmatpush.bf16.msra.mxu0 %v7605
    %10125 = vmatpush.bf16.msra.mxu0 %v7597
    %10126 = vmatpush.bf16.msra.mxu0 %v7589
    %10127 = vmatpush.bf16.msra.mxu0 %v7581
    %10128 = vmatpush.bf16.msra.mxu0 %v7573
    %10129 = vmatpush.bf16.msra.mxu0 %v7565
    %10130 = vmatmul.bf16.gmra.mxu0 %v1837
    %v10131 = vpop.f32.mrf.mxu0
    %v10132 = vadd.f32 %v10118, %v10131
    %v10133 = vpop.f32.mrf.mxu0
    %v10134 = vadd.f32 %v10120, %v10133
    %10135 = vdwg.mxu0
    %10136 = vmatpush.bf16.msra.mxu0 %v7685
    %10137 = vmatpush.bf16.msra.mxu0 %v7677
    %10138 = vmatpush.bf16.msra.mxu0 %v7669
    %10139 = vmatpush.bf16.msra.mxu0 %v7661
    %10140 = vmatpush.bf16.msra.mxu0 %v7653
    %10141 = vmatpush.bf16.msra.mxu0 %v7645
    %10142 = vmatpush.bf16.msra.mxu0 %v7637
    %10143 = vmatpush.bf16.msra.mxu0 %v7629
    %10144 = vmatmul.bf16.gmra.mxu0 %v1838
    %v10145 = vpop.f32.mrf.mxu0
    %v10146 = vadd.f32 %v10132, %v10145
    %v10147 = vpop.f32.mrf.mxu0
    %v10148 = vadd.f32 %v10134, %v10147
    %10149 = vdwg.mxu0
    %10150 = vmatpush.bf16.msra.mxu0 %v7749
    %10151 = vmatpush.bf16.msra.mxu0 %v7741
    %10152 = vmatpush.bf16.msra.mxu0 %v7733
    %10153 = vmatpush.bf16.msra.mxu0 %v7725
    %10154 = vmatpush.bf16.msra.mxu0 %v7717
    %10155 = vmatpush.bf16.msra.mxu0 %v7709
    %10156 = vmatpush.bf16.msra.mxu0 %v7701
    %10157 = vmatpush.bf16.msra.mxu0 %v7693
    %10158 = vmatmul.bf16.gmra.mxu0 %v1839
    %v10159 = vpop.f32.mrf.mxu0
    %v10160 = vadd.f32 %v10146, %v10159
    %v10161 = vpop.f32.mrf.mxu0
    %v10162 = vadd.f32 %v10148, %v10161
    %10163 = vdwg.mxu0
    %10164 = vmatpush.bf16.msra.mxu0 %v7813
    %10165 = vmatpush.bf16.msra.mxu0 %v7805
    %10166 = vmatpush.bf16.msra.mxu0 %v7797
    %10167 = vmatpush.bf16.msra.mxu0 %v7789
    %10168 = vmatpush.bf16.msra.mxu0 %v7781
    %10169 = vmatpush.bf16.msra.mxu0 %v7773
    %10170 = vmatpush.bf16.msra.mxu0 %v7765
    %10171 = vmatpush.bf16.msra.mxu0 %v7757
    %10172 = vmatmul.bf16.gmra.mxu0 %v1840
    %v10173 = vpop.f32.mrf.mxu0
    %v10174 = vadd.f32 %v10160, %v10173
    %v10175 = vpop.f32.mrf.mxu0
    %v10176 = vadd.f32 %v10162, %v10175
    %10177 = vdwg.mxu0
    %10178 = vmatpush.bf16.msra.mxu0 %v7877
    %10179 = vmatpush.bf16.msra.mxu0 %v7869
    %10180 = vmatpush.bf16.msra.mxu0 %v7861
    %10181 = vmatpush.bf16.msra.mxu0 %v7853
    %10182 = vmatpush.bf16.msra.mxu0 %v7845
    %10183 = vmatpush.bf16.msra.mxu0 %v7837
    %10184 = vmatpush.bf16.msra.mxu0 %v7829
    %10185 = vmatpush.bf16.msra.mxu0 %v7821
    %10186 = vmatmul.bf16.gmra.mxu0 %v1841
    %v10187 = vpop.f32.mrf.mxu0
    %v10188 = vadd.f32 %v10174, %v10187
    %v10189 = vpop.f32.mrf.mxu0
    %v10190 = vadd.f32 %v10176, %v10189
    %10191 = vdwg.mxu0
    %10192 = vmatpush.bf16.msra.mxu0 %v7941
    %10193 = vmatpush.bf16.msra.mxu0 %v7933
    %10194 = vmatpush.bf16.msra.mxu0 %v7925
    %10195 = vmatpush.bf16.msra.mxu0 %v7917
    %10196 = vmatpush.bf16.msra.mxu0 %v7909
    %10197 = vmatpush.bf16.msra.mxu0 %v7901
    %10198 = vmatpush.bf16.msra.mxu0 %v7893
    %10199 = vmatpush.bf16.msra.mxu0 %v7885
    %10200 = vmatmul.bf16.gmra.mxu0 %v1842
    %v10201 = vpop.f32.mrf.mxu0
    %v10202 = vadd.f32 %v10188, %v10201
    %v10203 = vpop.f32.mrf.mxu0
    %v10204 = vadd.f32 %v10190, %v10203
    %10205 = vdwg.mxu0
    %10206 = vmatpush.bf16.msra.mxu0 %v8005
    %10207 = vmatpush.bf16.msra.mxu0 %v7997
    %10208 = vmatpush.bf16.msra.mxu0 %v7989
    %10209 = vmatpush.bf16.msra.mxu0 %v7981
    %10210 = vmatpush.bf16.msra.mxu0 %v7973
    %10211 = vmatpush.bf16.msra.mxu0 %v7965
    %10212 = vmatpush.bf16.msra.mxu0 %v7957
    %10213 = vmatpush.bf16.msra.mxu0 %v7949
    %10214 = vmatmul.bf16.gmra.mxu0 %v1843
    %v10215 = vpop.f32.mrf.mxu0
    %v10216 = vadd.f32 %v10202, %v10215
    %v10217 = vpop.f32.mrf.mxu0
    %v10218 = vadd.f32 %v10204, %v10217
    %10219 = vdwg.mxu0
    %10220 = vmatpush.bf16.msra.mxu0 %v6534
    %10221 = vmatpush.bf16.msra.mxu0 %v6526
    %10222 = vmatpush.bf16.msra.mxu0 %v6518
    %10223 = vmatpush.bf16.msra.mxu0 %v6510
    %10224 = vmatpush.bf16.msra.mxu0 %v6502
    %10225 = vmatpush.bf16.msra.mxu0 %v6494
    %10226 = vmatpush.bf16.msra.mxu0 %v6486
    %10227 = vmatpush.bf16.msra.mxu0 %v6478
    %10228 = vmatmul.bf16.gmra.mxu0 %v1820
    %v10229 = vpop.f32.mrf.mxu0
    %v10230 = vadd.f32 %v1734, %v10229
    %v10231 = vpop.f32.mrf.mxu0
    %v10232 = vadd.f32 %v1734, %v10231
    %10233 = vdwg.mxu0
    %10234 = vmatpush.bf16.msra.mxu0 %v6598
    %10235 = vmatpush.bf16.msra.mxu0 %v6590
    %10236 = vmatpush.bf16.msra.mxu0 %v6582
    %10237 = vmatpush.bf16.msra.mxu0 %v6574
    %10238 = vmatpush.bf16.msra.mxu0 %v6566
    %10239 = vmatpush.bf16.msra.mxu0 %v6558
    %10240 = vmatpush.bf16.msra.mxu0 %v6550
    %10241 = vmatpush.bf16.msra.mxu0 %v6542
    %10242 = vmatmul.bf16.gmra.mxu0 %v1821
    %v10243 = vpop.f32.mrf.mxu0
    %v10244 = vadd.f32 %v10230, %v10243
    %v10245 = vpop.f32.mrf.mxu0
    %v10246 = vadd.f32 %v10232, %v10245
    %10247 = vdwg.mxu0
    %10248 = vmatpush.bf16.msra.mxu0 %v6662
    %10249 = vmatpush.bf16.msra.mxu0 %v6654
    %10250 = vmatpush.bf16.msra.mxu0 %v6646
    %10251 = vmatpush.bf16.msra.mxu0 %v6638
    %10252 = vmatpush.bf16.msra.mxu0 %v6630
    %10253 = vmatpush.bf16.msra.mxu0 %v6622
    %10254 = vmatpush.bf16.msra.mxu0 %v6614
    %10255 = vmatpush.bf16.msra.mxu0 %v6606
    %10256 = vmatmul.bf16.gmra.mxu0 %v1822
    %v10257 = vpop.f32.mrf.mxu0
    %v10258 = vadd.f32 %v10244, %v10257
    %v10259 = vpop.f32.mrf.mxu0
    %v10260 = vadd.f32 %v10246, %v10259
    %10261 = vdwg.mxu0
    %10262 = vmatpush.bf16.msra.mxu0 %v6726
    %10263 = vmatpush.bf16.msra.mxu0 %v6718
    %10264 = vmatpush.bf16.msra.mxu0 %v6710
    %10265 = vmatpush.bf16.msra.mxu0 %v6702
    %10266 = vmatpush.bf16.msra.mxu0 %v6694
    %10267 = vmatpush.bf16.msra.mxu0 %v6686
    %10268 = vmatpush.bf16.msra.mxu0 %v6678
    %10269 = vmatpush.bf16.msra.mxu0 %v6670
    %10270 = vmatmul.bf16.gmra.mxu0 %v1823
    %v10271 = vpop.f32.mrf.mxu0
    %v10272 = vadd.f32 %v10258, %v10271
    %v10273 = vpop.f32.mrf.mxu0
    %v10274 = vadd.f32 %v10260, %v10273
    %10275 = vdwg.mxu0
    %10276 = vmatpush.bf16.msra.mxu0 %v6790
    %10277 = vmatpush.bf16.msra.mxu0 %v6782
    %10278 = vmatpush.bf16.msra.mxu0 %v6774
    %10279 = vmatpush.bf16.msra.mxu0 %v6766
    %10280 = vmatpush.bf16.msra.mxu0 %v6758
    %10281 = vmatpush.bf16.msra.mxu0 %v6750
    %10282 = vmatpush.bf16.msra.mxu0 %v6742
    %10283 = vmatpush.bf16.msra.mxu0 %v6734
    %10284 = vmatmul.bf16.gmra.mxu0 %v1824
    %v10285 = vpop.f32.mrf.mxu0
    %v10286 = vadd.f32 %v10272, %v10285
    %v10287 = vpop.f32.mrf.mxu0
    %v10288 = vadd.f32 %v10274, %v10287
    %10289 = vdwg.mxu0
    %10290 = vmatpush.bf16.msra.mxu0 %v6854
    %10291 = vmatpush.bf16.msra.mxu0 %v6846
    %10292 = vmatpush.bf16.msra.mxu0 %v6838
    %10293 = vmatpush.bf16.msra.mxu0 %v6830
    %10294 = vmatpush.bf16.msra.mxu0 %v6822
    %10295 = vmatpush.bf16.msra.mxu0 %v6814
    %10296 = vmatpush.bf16.msra.mxu0 %v6806
    %10297 = vmatpush.bf16.msra.mxu0 %v6798
    %10298 = vmatmul.bf16.gmra.mxu0 %v1825
    %v10299 = vpop.f32.mrf.mxu0
    %v10300 = vadd.f32 %v10286, %v10299
    %v10301 = vpop.f32.mrf.mxu0
    %v10302 = vadd.f32 %v10288, %v10301
    %10303 = vdwg.mxu0
    %10304 = vmatpush.bf16.msra.mxu0 %v6918
    %10305 = vmatpush.bf16.msra.mxu0 %v6910
    %10306 = vmatpush.bf16.msra.mxu0 %v6902
    %10307 = vmatpush.bf16.msra.mxu0 %v6894
    %10308 = vmatpush.bf16.msra.mxu0 %v6886
    %10309 = vmatpush.bf16.msra.mxu0 %v6878
    %10310 = vmatpush.bf16.msra.mxu0 %v6870
    %10311 = vmatpush.bf16.msra.mxu0 %v6862
    %10312 = vmatmul.bf16.gmra.mxu0 %v1826
    %v10313 = vpop.f32.mrf.mxu0
    %v10314 = vadd.f32 %v10300, %v10313
    %v10315 = vpop.f32.mrf.mxu0
    %v10316 = vadd.f32 %v10302, %v10315
    %10317 = vdwg.mxu0
    %10318 = vmatpush.bf16.msra.mxu0 %v6982
    %10319 = vmatpush.bf16.msra.mxu0 %v6974
    %10320 = vmatpush.bf16.msra.mxu0 %v6966
    %10321 = vmatpush.bf16.msra.mxu0 %v6958
    %10322 = vmatpush.bf16.msra.mxu0 %v6950
    %10323 = vmatpush.bf16.msra.mxu0 %v6942
    %10324 = vmatpush.bf16.msra.mxu0 %v6934
    %10325 = vmatpush.bf16.msra.mxu0 %v6926
    %10326 = vmatmul.bf16.gmra.mxu0 %v1827
    %v10327 = vpop.f32.mrf.mxu0
    %v10328 = vadd.f32 %v10314, %v10327
    %v10329 = vpop.f32.mrf.mxu0
    %v10330 = vadd.f32 %v10316, %v10329
    %10331 = vdwg.mxu0
    %10332 = vmatpush.bf16.msra.mxu0 %v7046
    %10333 = vmatpush.bf16.msra.mxu0 %v7038
    %10334 = vmatpush.bf16.msra.mxu0 %v7030
    %10335 = vmatpush.bf16.msra.mxu0 %v7022
    %10336 = vmatpush.bf16.msra.mxu0 %v7014
    %10337 = vmatpush.bf16.msra.mxu0 %v7006
    %10338 = vmatpush.bf16.msra.mxu0 %v6998
    %10339 = vmatpush.bf16.msra.mxu0 %v6990
    %10340 = vmatmul.bf16.gmra.mxu0 %v1828
    %v10341 = vpop.f32.mrf.mxu0
    %v10342 = vadd.f32 %v10328, %v10341
    %v10343 = vpop.f32.mrf.mxu0
    %v10344 = vadd.f32 %v10330, %v10343
    %10345 = vdwg.mxu0
    %10346 = vmatpush.bf16.msra.mxu0 %v7110
    %10347 = vmatpush.bf16.msra.mxu0 %v7102
    %10348 = vmatpush.bf16.msra.mxu0 %v7094
    %10349 = vmatpush.bf16.msra.mxu0 %v7086
    %10350 = vmatpush.bf16.msra.mxu0 %v7078
    %10351 = vmatpush.bf16.msra.mxu0 %v7070
    %10352 = vmatpush.bf16.msra.mxu0 %v7062
    %10353 = vmatpush.bf16.msra.mxu0 %v7054
    %10354 = vmatmul.bf16.gmra.mxu0 %v1829
    %v10355 = vpop.f32.mrf.mxu0
    %v10356 = vadd.f32 %v10342, %v10355
    %v10357 = vpop.f32.mrf.mxu0
    %v10358 = vadd.f32 %v10344, %v10357
    %10359 = vdwg.mxu0
    %10360 = vmatpush.bf16.msra.mxu0 %v7174
    %10361 = vmatpush.bf16.msra.mxu0 %v7166
    %10362 = vmatpush.bf16.msra.mxu0 %v7158
    %10363 = vmatpush.bf16.msra.mxu0 %v7150
    %10364 = vmatpush.bf16.msra.mxu0 %v7142
    %10365 = vmatpush.bf16.msra.mxu0 %v7134
    %10366 = vmatpush.bf16.msra.mxu0 %v7126
    %10367 = vmatpush.bf16.msra.mxu0 %v7118
    %10368 = vmatmul.bf16.gmra.mxu0 %v1830
    %v10369 = vpop.f32.mrf.mxu0
    %v10370 = vadd.f32 %v10356, %v10369
    %v10371 = vpop.f32.mrf.mxu0
    %v10372 = vadd.f32 %v10358, %v10371
    %10373 = vdwg.mxu0
    %10374 = vmatpush.bf16.msra.mxu0 %v7238
    %10375 = vmatpush.bf16.msra.mxu0 %v7230
    %10376 = vmatpush.bf16.msra.mxu0 %v7222
    %10377 = vmatpush.bf16.msra.mxu0 %v7214
    %10378 = vmatpush.bf16.msra.mxu0 %v7206
    %10379 = vmatpush.bf16.msra.mxu0 %v7198
    %10380 = vmatpush.bf16.msra.mxu0 %v7190
    %10381 = vmatpush.bf16.msra.mxu0 %v7182
    %10382 = vmatmul.bf16.gmra.mxu0 %v1831
    %v10383 = vpop.f32.mrf.mxu0
    %v10384 = vadd.f32 %v10370, %v10383
    %v10385 = vpop.f32.mrf.mxu0
    %v10386 = vadd.f32 %v10372, %v10385
    %10387 = vdwg.mxu0
    %10388 = vmatpush.bf16.msra.mxu0 %v7302
    %10389 = vmatpush.bf16.msra.mxu0 %v7294
    %10390 = vmatpush.bf16.msra.mxu0 %v7286
    %10391 = vmatpush.bf16.msra.mxu0 %v7278
    %10392 = vmatpush.bf16.msra.mxu0 %v7270
    %10393 = vmatpush.bf16.msra.mxu0 %v7262
    %10394 = vmatpush.bf16.msra.mxu0 %v7254
    %10395 = vmatpush.bf16.msra.mxu0 %v7246
    %10396 = vmatmul.bf16.gmra.mxu0 %v1832
    %v10397 = vpop.f32.mrf.mxu0
    %v10398 = vadd.f32 %v10384, %v10397
    %v10399 = vpop.f32.mrf.mxu0
    %v10400 = vadd.f32 %v10386, %v10399
    %10401 = vdwg.mxu0
    %10402 = vmatpush.bf16.msra.mxu0 %v7366
    %10403 = vmatpush.bf16.msra.mxu0 %v7358
    %10404 = vmatpush.bf16.msra.mxu0 %v7350
    %10405 = vmatpush.bf16.msra.mxu0 %v7342
    %10406 = vmatpush.bf16.msra.mxu0 %v7334
    %10407 = vmatpush.bf16.msra.mxu0 %v7326
    %10408 = vmatpush.bf16.msra.mxu0 %v7318
    %10409 = vmatpush.bf16.msra.mxu0 %v7310
    %10410 = vmatmul.bf16.gmra.mxu0 %v1833
    %v10411 = vpop.f32.mrf.mxu0
    %v10412 = vadd.f32 %v10398, %v10411
    %v10413 = vpop.f32.mrf.mxu0
    %v10414 = vadd.f32 %v10400, %v10413
    %10415 = vdwg.mxu0
    %10416 = vmatpush.bf16.msra.mxu0 %v7430
    %10417 = vmatpush.bf16.msra.mxu0 %v7422
    %10418 = vmatpush.bf16.msra.mxu0 %v7414
    %10419 = vmatpush.bf16.msra.mxu0 %v7406
    %10420 = vmatpush.bf16.msra.mxu0 %v7398
    %10421 = vmatpush.bf16.msra.mxu0 %v7390
    %10422 = vmatpush.bf16.msra.mxu0 %v7382
    %10423 = vmatpush.bf16.msra.mxu0 %v7374
    %10424 = vmatmul.bf16.gmra.mxu0 %v1834
    %v10425 = vpop.f32.mrf.mxu0
    %v10426 = vadd.f32 %v10412, %v10425
    %v10427 = vpop.f32.mrf.mxu0
    %v10428 = vadd.f32 %v10414, %v10427
    %10429 = vdwg.mxu0
    %10430 = vmatpush.bf16.msra.mxu0 %v7494
    %10431 = vmatpush.bf16.msra.mxu0 %v7486
    %10432 = vmatpush.bf16.msra.mxu0 %v7478
    %10433 = vmatpush.bf16.msra.mxu0 %v7470
    %10434 = vmatpush.bf16.msra.mxu0 %v7462
    %10435 = vmatpush.bf16.msra.mxu0 %v7454
    %10436 = vmatpush.bf16.msra.mxu0 %v7446
    %10437 = vmatpush.bf16.msra.mxu0 %v7438
    %10438 = vmatmul.bf16.gmra.mxu0 %v1835
    %v10439 = vpop.f32.mrf.mxu0
    %v10440 = vadd.f32 %v10426, %v10439
    %v10441 = vpop.f32.mrf.mxu0
    %v10442 = vadd.f32 %v10428, %v10441
    %10443 = vdwg.mxu0
    %10444 = vmatpush.bf16.msra.mxu0 %v7558
    %10445 = vmatpush.bf16.msra.mxu0 %v7550
    %10446 = vmatpush.bf16.msra.mxu0 %v7542
    %10447 = vmatpush.bf16.msra.mxu0 %v7534
    %10448 = vmatpush.bf16.msra.mxu0 %v7526
    %10449 = vmatpush.bf16.msra.mxu0 %v7518
    %10450 = vmatpush.bf16.msra.mxu0 %v7510
    %10451 = vmatpush.bf16.msra.mxu0 %v7502
    %10452 = vmatmul.bf16.gmra.mxu0 %v1836
    %v10453 = vpop.f32.mrf.mxu0
    %v10454 = vadd.f32 %v10440, %v10453
    %v10455 = vpop.f32.mrf.mxu0
    %v10456 = vadd.f32 %v10442, %v10455
    %10457 = vdwg.mxu0
    %10458 = vmatpush.bf16.msra.mxu0 %v7622
    %10459 = vmatpush.bf16.msra.mxu0 %v7614
    %10460 = vmatpush.bf16.msra.mxu0 %v7606
    %10461 = vmatpush.bf16.msra.mxu0 %v7598
    %10462 = vmatpush.bf16.msra.mxu0 %v7590
    %10463 = vmatpush.bf16.msra.mxu0 %v7582
    %10464 = vmatpush.bf16.msra.mxu0 %v7574
    %10465 = vmatpush.bf16.msra.mxu0 %v7566
    %10466 = vmatmul.bf16.gmra.mxu0 %v1837
    %v10467 = vpop.f32.mrf.mxu0
    %v10468 = vadd.f32 %v10454, %v10467
    %v10469 = vpop.f32.mrf.mxu0
    %v10470 = vadd.f32 %v10456, %v10469
    %10471 = vdwg.mxu0
    %10472 = vmatpush.bf16.msra.mxu0 %v7686
    %10473 = vmatpush.bf16.msra.mxu0 %v7678
    %10474 = vmatpush.bf16.msra.mxu0 %v7670
    %10475 = vmatpush.bf16.msra.mxu0 %v7662
    %10476 = vmatpush.bf16.msra.mxu0 %v7654
    %10477 = vmatpush.bf16.msra.mxu0 %v7646
    %10478 = vmatpush.bf16.msra.mxu0 %v7638
    %10479 = vmatpush.bf16.msra.mxu0 %v7630
    %10480 = vmatmul.bf16.gmra.mxu0 %v1838
    %v10481 = vpop.f32.mrf.mxu0
    %v10482 = vadd.f32 %v10468, %v10481
    %v10483 = vpop.f32.mrf.mxu0
    %v10484 = vadd.f32 %v10470, %v10483
    %10485 = vdwg.mxu0
    %10486 = vmatpush.bf16.msra.mxu0 %v7750
    %10487 = vmatpush.bf16.msra.mxu0 %v7742
    %10488 = vmatpush.bf16.msra.mxu0 %v7734
    %10489 = vmatpush.bf16.msra.mxu0 %v7726
    %10490 = vmatpush.bf16.msra.mxu0 %v7718
    %10491 = vmatpush.bf16.msra.mxu0 %v7710
    %10492 = vmatpush.bf16.msra.mxu0 %v7702
    %10493 = vmatpush.bf16.msra.mxu0 %v7694
    %10494 = vmatmul.bf16.gmra.mxu0 %v1839
    %v10495 = vpop.f32.mrf.mxu0
    %v10496 = vadd.f32 %v10482, %v10495
    %v10497 = vpop.f32.mrf.mxu0
    %v10498 = vadd.f32 %v10484, %v10497
    %10499 = vdwg.mxu0
    %10500 = vmatpush.bf16.msra.mxu0 %v7814
    %10501 = vmatpush.bf16.msra.mxu0 %v7806
    %10502 = vmatpush.bf16.msra.mxu0 %v7798
    %10503 = vmatpush.bf16.msra.mxu0 %v7790
    %10504 = vmatpush.bf16.msra.mxu0 %v7782
    %10505 = vmatpush.bf16.msra.mxu0 %v7774
    %10506 = vmatpush.bf16.msra.mxu0 %v7766
    %10507 = vmatpush.bf16.msra.mxu0 %v7758
    %10508 = vmatmul.bf16.gmra.mxu0 %v1840
    %v10509 = vpop.f32.mrf.mxu0
    %v10510 = vadd.f32 %v10496, %v10509
    %v10511 = vpop.f32.mrf.mxu0
    %v10512 = vadd.f32 %v10498, %v10511
    %10513 = vdwg.mxu0
    %10514 = vmatpush.bf16.msra.mxu0 %v7878
    %10515 = vmatpush.bf16.msra.mxu0 %v7870
    %10516 = vmatpush.bf16.msra.mxu0 %v7862
    %10517 = vmatpush.bf16.msra.mxu0 %v7854
    %10518 = vmatpush.bf16.msra.mxu0 %v7846
    %10519 = vmatpush.bf16.msra.mxu0 %v7838
    %10520 = vmatpush.bf16.msra.mxu0 %v7830
    %10521 = vmatpush.bf16.msra.mxu0 %v7822
    %10522 = vmatmul.bf16.gmra.mxu0 %v1841
    %v10523 = vpop.f32.mrf.mxu0
    %v10524 = vadd.f32 %v10510, %v10523
    %v10525 = vpop.f32.mrf.mxu0
    %v10526 = vadd.f32 %v10512, %v10525
    %10527 = vdwg.mxu0
    %10528 = vmatpush.bf16.msra.mxu0 %v7942
    %10529 = vmatpush.bf16.msra.mxu0 %v7934
    %10530 = vmatpush.bf16.msra.mxu0 %v7926
    %10531 = vmatpush.bf16.msra.mxu0 %v7918
    %10532 = vmatpush.bf16.msra.mxu0 %v7910
    %10533 = vmatpush.bf16.msra.mxu0 %v7902
    %10534 = vmatpush.bf16.msra.mxu0 %v7894
    %10535 = vmatpush.bf16.msra.mxu0 %v7886
    %10536 = vmatmul.bf16.gmra.mxu0 %v1842
    %v10537 = vpop.f32.mrf.mxu0
    %v10538 = vadd.f32 %v10524, %v10537
    %v10539 = vpop.f32.mrf.mxu0
    %v10540 = vadd.f32 %v10526, %v10539
    %10541 = vdwg.mxu0
    %10542 = vmatpush.bf16.msra.mxu0 %v8006
    %10543 = vmatpush.bf16.msra.mxu0 %v7998
    %10544 = vmatpush.bf16.msra.mxu0 %v7990
    %10545 = vmatpush.bf16.msra.mxu0 %v7982
    %10546 = vmatpush.bf16.msra.mxu0 %v7974
    %10547 = vmatpush.bf16.msra.mxu0 %v7966
    %10548 = vmatpush.bf16.msra.mxu0 %v7958
    %10549 = vmatpush.bf16.msra.mxu0 %v7950
    %10550 = vmatmul.bf16.gmra.mxu0 %v1843
    %v10551 = vpop.f32.mrf.mxu0
    %v10552 = vadd.f32 %v10538, %v10551
    %v10553 = vpop.f32.mrf.mxu0
    %v10554 = vadd.f32 %v10540, %v10553
    %10555 = vdwg.mxu0
    %10556 = vmatpush.bf16.msra.mxu0 %v6535
    %10557 = vmatpush.bf16.msra.mxu0 %v6527
    %10558 = vmatpush.bf16.msra.mxu0 %v6519
    %10559 = vmatpush.bf16.msra.mxu0 %v6511
    %10560 = vmatpush.bf16.msra.mxu0 %v6503
    %10561 = vmatpush.bf16.msra.mxu0 %v6495
    %10562 = vmatpush.bf16.msra.mxu0 %v6487
    %10563 = vmatpush.bf16.msra.mxu0 %v6479
    %10564 = vmatmul.bf16.gmra.mxu0 %v1820
    %v10565 = vpop.f32.mrf.mxu0
    %v10566 = vadd.f32 %v1735, %v10565
    %v10567 = vpop.f32.mrf.mxu0
    %v10568 = vadd.f32 %v1735, %v10567
    %10569 = vdwg.mxu0
    %10570 = vmatpush.bf16.msra.mxu0 %v6599
    %10571 = vmatpush.bf16.msra.mxu0 %v6591
    %10572 = vmatpush.bf16.msra.mxu0 %v6583
    %10573 = vmatpush.bf16.msra.mxu0 %v6575
    %10574 = vmatpush.bf16.msra.mxu0 %v6567
    %10575 = vmatpush.bf16.msra.mxu0 %v6559
    %10576 = vmatpush.bf16.msra.mxu0 %v6551
    %10577 = vmatpush.bf16.msra.mxu0 %v6543
    %10578 = vmatmul.bf16.gmra.mxu0 %v1821
    %v10579 = vpop.f32.mrf.mxu0
    %v10580 = vadd.f32 %v10566, %v10579
    %v10581 = vpop.f32.mrf.mxu0
    %v10582 = vadd.f32 %v10568, %v10581
    %10583 = vdwg.mxu0
    %10584 = vmatpush.bf16.msra.mxu0 %v6663
    %10585 = vmatpush.bf16.msra.mxu0 %v6655
    %10586 = vmatpush.bf16.msra.mxu0 %v6647
    %10587 = vmatpush.bf16.msra.mxu0 %v6639
    %10588 = vmatpush.bf16.msra.mxu0 %v6631
    %10589 = vmatpush.bf16.msra.mxu0 %v6623
    %10590 = vmatpush.bf16.msra.mxu0 %v6615
    %10591 = vmatpush.bf16.msra.mxu0 %v6607
    %10592 = vmatmul.bf16.gmra.mxu0 %v1822
    %v10593 = vpop.f32.mrf.mxu0
    %v10594 = vadd.f32 %v10580, %v10593
    %v10595 = vpop.f32.mrf.mxu0
    %v10596 = vadd.f32 %v10582, %v10595
    %10597 = vdwg.mxu0
    %10598 = vmatpush.bf16.msra.mxu0 %v6727
    %10599 = vmatpush.bf16.msra.mxu0 %v6719
    %10600 = vmatpush.bf16.msra.mxu0 %v6711
    %10601 = vmatpush.bf16.msra.mxu0 %v6703
    %10602 = vmatpush.bf16.msra.mxu0 %v6695
    %10603 = vmatpush.bf16.msra.mxu0 %v6687
    %10604 = vmatpush.bf16.msra.mxu0 %v6679
    %10605 = vmatpush.bf16.msra.mxu0 %v6671
    %10606 = vmatmul.bf16.gmra.mxu0 %v1823
    %v10607 = vpop.f32.mrf.mxu0
    %v10608 = vadd.f32 %v10594, %v10607
    %v10609 = vpop.f32.mrf.mxu0
    %v10610 = vadd.f32 %v10596, %v10609
    %10611 = vdwg.mxu0
    %10612 = vmatpush.bf16.msra.mxu0 %v6791
    %10613 = vmatpush.bf16.msra.mxu0 %v6783
    %10614 = vmatpush.bf16.msra.mxu0 %v6775
    %10615 = vmatpush.bf16.msra.mxu0 %v6767
    %10616 = vmatpush.bf16.msra.mxu0 %v6759
    %10617 = vmatpush.bf16.msra.mxu0 %v6751
    %10618 = vmatpush.bf16.msra.mxu0 %v6743
    %10619 = vmatpush.bf16.msra.mxu0 %v6735
    %10620 = vmatmul.bf16.gmra.mxu0 %v1824
    %v10621 = vpop.f32.mrf.mxu0
    %v10622 = vadd.f32 %v10608, %v10621
    %v10623 = vpop.f32.mrf.mxu0
    %v10624 = vadd.f32 %v10610, %v10623
    %10625 = vdwg.mxu0
    %10626 = vmatpush.bf16.msra.mxu0 %v6855
    %10627 = vmatpush.bf16.msra.mxu0 %v6847
    %10628 = vmatpush.bf16.msra.mxu0 %v6839
    %10629 = vmatpush.bf16.msra.mxu0 %v6831
    %10630 = vmatpush.bf16.msra.mxu0 %v6823
    %10631 = vmatpush.bf16.msra.mxu0 %v6815
    %10632 = vmatpush.bf16.msra.mxu0 %v6807
    %10633 = vmatpush.bf16.msra.mxu0 %v6799
    %10634 = vmatmul.bf16.gmra.mxu0 %v1825
    %v10635 = vpop.f32.mrf.mxu0
    %v10636 = vadd.f32 %v10622, %v10635
    %v10637 = vpop.f32.mrf.mxu0
    %v10638 = vadd.f32 %v10624, %v10637
    %10639 = vdwg.mxu0
    %10640 = vmatpush.bf16.msra.mxu0 %v6919
    %10641 = vmatpush.bf16.msra.mxu0 %v6911
    %10642 = vmatpush.bf16.msra.mxu0 %v6903
    %10643 = vmatpush.bf16.msra.mxu0 %v6895
    %10644 = vmatpush.bf16.msra.mxu0 %v6887
    %10645 = vmatpush.bf16.msra.mxu0 %v6879
    %10646 = vmatpush.bf16.msra.mxu0 %v6871
    %10647 = vmatpush.bf16.msra.mxu0 %v6863
    %10648 = vmatmul.bf16.gmra.mxu0 %v1826
    %v10649 = vpop.f32.mrf.mxu0
    %v10650 = vadd.f32 %v10636, %v10649
    %v10651 = vpop.f32.mrf.mxu0
    %v10652 = vadd.f32 %v10638, %v10651
    %10653 = vdwg.mxu0
    %10654 = vmatpush.bf16.msra.mxu0 %v6983
    %10655 = vmatpush.bf16.msra.mxu0 %v6975
    %10656 = vmatpush.bf16.msra.mxu0 %v6967
    %10657 = vmatpush.bf16.msra.mxu0 %v6959
    %10658 = vmatpush.bf16.msra.mxu0 %v6951
    %10659 = vmatpush.bf16.msra.mxu0 %v6943
    %10660 = vmatpush.bf16.msra.mxu0 %v6935
    %10661 = vmatpush.bf16.msra.mxu0 %v6927
    %10662 = vmatmul.bf16.gmra.mxu0 %v1827
    %v10663 = vpop.f32.mrf.mxu0
    %v10664 = vadd.f32 %v10650, %v10663
    %v10665 = vpop.f32.mrf.mxu0
    %v10666 = vadd.f32 %v10652, %v10665
    %10667 = vdwg.mxu0
    %10668 = vmatpush.bf16.msra.mxu0 %v7047
    %10669 = vmatpush.bf16.msra.mxu0 %v7039
    %10670 = vmatpush.bf16.msra.mxu0 %v7031
    %10671 = vmatpush.bf16.msra.mxu0 %v7023
    %10672 = vmatpush.bf16.msra.mxu0 %v7015
    %10673 = vmatpush.bf16.msra.mxu0 %v7007
    %10674 = vmatpush.bf16.msra.mxu0 %v6999
    %10675 = vmatpush.bf16.msra.mxu0 %v6991
    %10676 = vmatmul.bf16.gmra.mxu0 %v1828
    %v10677 = vpop.f32.mrf.mxu0
    %v10678 = vadd.f32 %v10664, %v10677
    %v10679 = vpop.f32.mrf.mxu0
    %v10680 = vadd.f32 %v10666, %v10679
    %10681 = vdwg.mxu0
    %10682 = vmatpush.bf16.msra.mxu0 %v7111
    %10683 = vmatpush.bf16.msra.mxu0 %v7103
    %10684 = vmatpush.bf16.msra.mxu0 %v7095
    %10685 = vmatpush.bf16.msra.mxu0 %v7087
    %10686 = vmatpush.bf16.msra.mxu0 %v7079
    %10687 = vmatpush.bf16.msra.mxu0 %v7071
    %10688 = vmatpush.bf16.msra.mxu0 %v7063
    %10689 = vmatpush.bf16.msra.mxu0 %v7055
    %10690 = vmatmul.bf16.gmra.mxu0 %v1829
    %v10691 = vpop.f32.mrf.mxu0
    %v10692 = vadd.f32 %v10678, %v10691
    %v10693 = vpop.f32.mrf.mxu0
    %v10694 = vadd.f32 %v10680, %v10693
    %10695 = vdwg.mxu0
    %10696 = vmatpush.bf16.msra.mxu0 %v7175
    %10697 = vmatpush.bf16.msra.mxu0 %v7167
    %10698 = vmatpush.bf16.msra.mxu0 %v7159
    %10699 = vmatpush.bf16.msra.mxu0 %v7151
    %10700 = vmatpush.bf16.msra.mxu0 %v7143
    %10701 = vmatpush.bf16.msra.mxu0 %v7135
    %10702 = vmatpush.bf16.msra.mxu0 %v7127
    %10703 = vmatpush.bf16.msra.mxu0 %v7119
    %10704 = vmatmul.bf16.gmra.mxu0 %v1830
    %v10705 = vpop.f32.mrf.mxu0
    %v10706 = vadd.f32 %v10692, %v10705
    %v10707 = vpop.f32.mrf.mxu0
    %v10708 = vadd.f32 %v10694, %v10707
    %10709 = vdwg.mxu0
    %10710 = vmatpush.bf16.msra.mxu0 %v7239
    %10711 = vmatpush.bf16.msra.mxu0 %v7231
    %10712 = vmatpush.bf16.msra.mxu0 %v7223
    %10713 = vmatpush.bf16.msra.mxu0 %v7215
    %10714 = vmatpush.bf16.msra.mxu0 %v7207
    %10715 = vmatpush.bf16.msra.mxu0 %v7199
    %10716 = vmatpush.bf16.msra.mxu0 %v7191
    %10717 = vmatpush.bf16.msra.mxu0 %v7183
    %10718 = vmatmul.bf16.gmra.mxu0 %v1831
    %v10719 = vpop.f32.mrf.mxu0
    %v10720 = vadd.f32 %v10706, %v10719
    %v10721 = vpop.f32.mrf.mxu0
    %v10722 = vadd.f32 %v10708, %v10721
    %10723 = vdwg.mxu0
    %10724 = vmatpush.bf16.msra.mxu0 %v7303
    %10725 = vmatpush.bf16.msra.mxu0 %v7295
    %10726 = vmatpush.bf16.msra.mxu0 %v7287
    %10727 = vmatpush.bf16.msra.mxu0 %v7279
    %10728 = vmatpush.bf16.msra.mxu0 %v7271
    %10729 = vmatpush.bf16.msra.mxu0 %v7263
    %10730 = vmatpush.bf16.msra.mxu0 %v7255
    %10731 = vmatpush.bf16.msra.mxu0 %v7247
    %10732 = vmatmul.bf16.gmra.mxu0 %v1832
    %v10733 = vpop.f32.mrf.mxu0
    %v10734 = vadd.f32 %v10720, %v10733
    %v10735 = vpop.f32.mrf.mxu0
    %v10736 = vadd.f32 %v10722, %v10735
    %10737 = vdwg.mxu0
    %10738 = vmatpush.bf16.msra.mxu0 %v7367
    %10739 = vmatpush.bf16.msra.mxu0 %v7359
    %10740 = vmatpush.bf16.msra.mxu0 %v7351
    %10741 = vmatpush.bf16.msra.mxu0 %v7343
    %10742 = vmatpush.bf16.msra.mxu0 %v7335
    %10743 = vmatpush.bf16.msra.mxu0 %v7327
    %10744 = vmatpush.bf16.msra.mxu0 %v7319
    %10745 = vmatpush.bf16.msra.mxu0 %v7311
    %10746 = vmatmul.bf16.gmra.mxu0 %v1833
    %v10747 = vpop.f32.mrf.mxu0
    %v10748 = vadd.f32 %v10734, %v10747
    %v10749 = vpop.f32.mrf.mxu0
    %v10750 = vadd.f32 %v10736, %v10749
    %10751 = vdwg.mxu0
    %10752 = vmatpush.bf16.msra.mxu0 %v7431
    %10753 = vmatpush.bf16.msra.mxu0 %v7423
    %10754 = vmatpush.bf16.msra.mxu0 %v7415
    %10755 = vmatpush.bf16.msra.mxu0 %v7407
    %10756 = vmatpush.bf16.msra.mxu0 %v7399
    %10757 = vmatpush.bf16.msra.mxu0 %v7391
    %10758 = vmatpush.bf16.msra.mxu0 %v7383
    %10759 = vmatpush.bf16.msra.mxu0 %v7375
    %10760 = vmatmul.bf16.gmra.mxu0 %v1834
    %v10761 = vpop.f32.mrf.mxu0
    %v10762 = vadd.f32 %v10748, %v10761
    %v10763 = vpop.f32.mrf.mxu0
    %v10764 = vadd.f32 %v10750, %v10763
    %10765 = vdwg.mxu0
    %10766 = vmatpush.bf16.msra.mxu0 %v7495
    %10767 = vmatpush.bf16.msra.mxu0 %v7487
    %10768 = vmatpush.bf16.msra.mxu0 %v7479
    %10769 = vmatpush.bf16.msra.mxu0 %v7471
    %10770 = vmatpush.bf16.msra.mxu0 %v7463
    %10771 = vmatpush.bf16.msra.mxu0 %v7455
    %10772 = vmatpush.bf16.msra.mxu0 %v7447
    %10773 = vmatpush.bf16.msra.mxu0 %v7439
    %10774 = vmatmul.bf16.gmra.mxu0 %v1835
    %v10775 = vpop.f32.mrf.mxu0
    %v10776 = vadd.f32 %v10762, %v10775
    %v10777 = vpop.f32.mrf.mxu0
    %v10778 = vadd.f32 %v10764, %v10777
    %10779 = vdwg.mxu0
    %10780 = vmatpush.bf16.msra.mxu0 %v7559
    %10781 = vmatpush.bf16.msra.mxu0 %v7551
    %10782 = vmatpush.bf16.msra.mxu0 %v7543
    %10783 = vmatpush.bf16.msra.mxu0 %v7535
    %10784 = vmatpush.bf16.msra.mxu0 %v7527
    %10785 = vmatpush.bf16.msra.mxu0 %v7519
    %10786 = vmatpush.bf16.msra.mxu0 %v7511
    %10787 = vmatpush.bf16.msra.mxu0 %v7503
    %10788 = vmatmul.bf16.gmra.mxu0 %v1836
    %v10789 = vpop.f32.mrf.mxu0
    %v10790 = vadd.f32 %v10776, %v10789
    %v10791 = vpop.f32.mrf.mxu0
    %v10792 = vadd.f32 %v10778, %v10791
    %10793 = vdwg.mxu0
    %10794 = vmatpush.bf16.msra.mxu0 %v7623
    %10795 = vmatpush.bf16.msra.mxu0 %v7615
    %10796 = vmatpush.bf16.msra.mxu0 %v7607
    %10797 = vmatpush.bf16.msra.mxu0 %v7599
    %10798 = vmatpush.bf16.msra.mxu0 %v7591
    %10799 = vmatpush.bf16.msra.mxu0 %v7583
    %10800 = vmatpush.bf16.msra.mxu0 %v7575
    %10801 = vmatpush.bf16.msra.mxu0 %v7567
    %10802 = vmatmul.bf16.gmra.mxu0 %v1837
    %v10803 = vpop.f32.mrf.mxu0
    %v10804 = vadd.f32 %v10790, %v10803
    %v10805 = vpop.f32.mrf.mxu0
    %v10806 = vadd.f32 %v10792, %v10805
    %10807 = vdwg.mxu0
    %10808 = vmatpush.bf16.msra.mxu0 %v7687
    %10809 = vmatpush.bf16.msra.mxu0 %v7679
    %10810 = vmatpush.bf16.msra.mxu0 %v7671
    %10811 = vmatpush.bf16.msra.mxu0 %v7663
    %10812 = vmatpush.bf16.msra.mxu0 %v7655
    %10813 = vmatpush.bf16.msra.mxu0 %v7647
    %10814 = vmatpush.bf16.msra.mxu0 %v7639
    %10815 = vmatpush.bf16.msra.mxu0 %v7631
    %10816 = vmatmul.bf16.gmra.mxu0 %v1838
    %v10817 = vpop.f32.mrf.mxu0
    %v10818 = vadd.f32 %v10804, %v10817
    %v10819 = vpop.f32.mrf.mxu0
    %v10820 = vadd.f32 %v10806, %v10819
    %10821 = vdwg.mxu0
    %10822 = vmatpush.bf16.msra.mxu0 %v7751
    %10823 = vmatpush.bf16.msra.mxu0 %v7743
    %10824 = vmatpush.bf16.msra.mxu0 %v7735
    %10825 = vmatpush.bf16.msra.mxu0 %v7727
    %10826 = vmatpush.bf16.msra.mxu0 %v7719
    %10827 = vmatpush.bf16.msra.mxu0 %v7711
    %10828 = vmatpush.bf16.msra.mxu0 %v7703
    %10829 = vmatpush.bf16.msra.mxu0 %v7695
    %10830 = vmatmul.bf16.gmra.mxu0 %v1839
    %v10831 = vpop.f32.mrf.mxu0
    %v10832 = vadd.f32 %v10818, %v10831
    %v10833 = vpop.f32.mrf.mxu0
    %v10834 = vadd.f32 %v10820, %v10833
    %10835 = vdwg.mxu0
    %10836 = vmatpush.bf16.msra.mxu0 %v7815
    %10837 = vmatpush.bf16.msra.mxu0 %v7807
    %10838 = vmatpush.bf16.msra.mxu0 %v7799
    %10839 = vmatpush.bf16.msra.mxu0 %v7791
    %10840 = vmatpush.bf16.msra.mxu0 %v7783
    %10841 = vmatpush.bf16.msra.mxu0 %v7775
    %10842 = vmatpush.bf16.msra.mxu0 %v7767
    %10843 = vmatpush.bf16.msra.mxu0 %v7759
    %10844 = vmatmul.bf16.gmra.mxu0 %v1840
    %v10845 = vpop.f32.mrf.mxu0
    %v10846 = vadd.f32 %v10832, %v10845
    %v10847 = vpop.f32.mrf.mxu0
    %v10848 = vadd.f32 %v10834, %v10847
    %10849 = vdwg.mxu0
    %10850 = vmatpush.bf16.msra.mxu0 %v7879
    %10851 = vmatpush.bf16.msra.mxu0 %v7871
    %10852 = vmatpush.bf16.msra.mxu0 %v7863
    %10853 = vmatpush.bf16.msra.mxu0 %v7855
    %10854 = vmatpush.bf16.msra.mxu0 %v7847
    %10855 = vmatpush.bf16.msra.mxu0 %v7839
    %10856 = vmatpush.bf16.msra.mxu0 %v7831
    %10857 = vmatpush.bf16.msra.mxu0 %v7823
    %10858 = vmatmul.bf16.gmra.mxu0 %v1841
    %v10859 = vpop.f32.mrf.mxu0
    %v10860 = vadd.f32 %v10846, %v10859
    %v10861 = vpop.f32.mrf.mxu0
    %v10862 = vadd.f32 %v10848, %v10861
    %10863 = vdwg.mxu0
    %10864 = vmatpush.bf16.msra.mxu0 %v7943
    %10865 = vmatpush.bf16.msra.mxu0 %v7935
    %10866 = vmatpush.bf16.msra.mxu0 %v7927
    %10867 = vmatpush.bf16.msra.mxu0 %v7919
    %10868 = vmatpush.bf16.msra.mxu0 %v7911
    %10869 = vmatpush.bf16.msra.mxu0 %v7903
    %10870 = vmatpush.bf16.msra.mxu0 %v7895
    %10871 = vmatpush.bf16.msra.mxu0 %v7887
    %10872 = vmatmul.bf16.gmra.mxu0 %v1842
    %v10873 = vpop.f32.mrf.mxu0
    %v10874 = vadd.f32 %v10860, %v10873
    %v10875 = vpop.f32.mrf.mxu0
    %v10876 = vadd.f32 %v10862, %v10875
    %10877 = vdwg.mxu0
    %10878 = vmatpush.bf16.msra.mxu0 %v8007
    %10879 = vmatpush.bf16.msra.mxu0 %v7999
    %10880 = vmatpush.bf16.msra.mxu0 %v7991
    %10881 = vmatpush.bf16.msra.mxu0 %v7983
    %10882 = vmatpush.bf16.msra.mxu0 %v7975
    %10883 = vmatpush.bf16.msra.mxu0 %v7967
    %10884 = vmatpush.bf16.msra.mxu0 %v7959
    %10885 = vmatpush.bf16.msra.mxu0 %v7951
    %10886 = vmatmul.bf16.gmra.mxu0 %v1843
    %v10887 = vpop.f32.mrf.mxu0
    %v10888 = vadd.f32 %v10874, %v10887
    %v10889 = vpop.f32.mrf.mxu0
    %v10890 = vadd.f32 %v10876, %v10889
    %10891 = vdwg.mxu0
    %10892 = vmatpush.bf16.msra.mxu0 %v6536
    %10893 = vmatpush.bf16.msra.mxu0 %v6528
    %10894 = vmatpush.bf16.msra.mxu0 %v6520
    %10895 = vmatpush.bf16.msra.mxu0 %v6512
    %10896 = vmatpush.bf16.msra.mxu0 %v6504
    %10897 = vmatpush.bf16.msra.mxu0 %v6496
    %10898 = vmatpush.bf16.msra.mxu0 %v6488
    %10899 = vmatpush.bf16.msra.mxu0 %v6480
    %10900 = vmatmul.bf16.gmra.mxu0 %v1820
    %v10901 = vpop.f32.mrf.mxu0
    %v10902 = vadd.f32 %v1736, %v10901
    %v10903 = vpop.f32.mrf.mxu0
    %v10904 = vadd.f32 %v1736, %v10903
    %10905 = vdwg.mxu0
    %10906 = vmatpush.bf16.msra.mxu0 %v6600
    %10907 = vmatpush.bf16.msra.mxu0 %v6592
    %10908 = vmatpush.bf16.msra.mxu0 %v6584
    %10909 = vmatpush.bf16.msra.mxu0 %v6576
    %10910 = vmatpush.bf16.msra.mxu0 %v6568
    %10911 = vmatpush.bf16.msra.mxu0 %v6560
    %10912 = vmatpush.bf16.msra.mxu0 %v6552
    %10913 = vmatpush.bf16.msra.mxu0 %v6544
    %10914 = vmatmul.bf16.gmra.mxu0 %v1821
    %v10915 = vpop.f32.mrf.mxu0
    %v10916 = vadd.f32 %v10902, %v10915
    %v10917 = vpop.f32.mrf.mxu0
    %v10918 = vadd.f32 %v10904, %v10917
    %10919 = vdwg.mxu0
    %10920 = vmatpush.bf16.msra.mxu0 %v6664
    %10921 = vmatpush.bf16.msra.mxu0 %v6656
    %10922 = vmatpush.bf16.msra.mxu0 %v6648
    %10923 = vmatpush.bf16.msra.mxu0 %v6640
    %10924 = vmatpush.bf16.msra.mxu0 %v6632
    %10925 = vmatpush.bf16.msra.mxu0 %v6624
    %10926 = vmatpush.bf16.msra.mxu0 %v6616
    %10927 = vmatpush.bf16.msra.mxu0 %v6608
    %10928 = vmatmul.bf16.gmra.mxu0 %v1822
    %v10929 = vpop.f32.mrf.mxu0
    %v10930 = vadd.f32 %v10916, %v10929
    %v10931 = vpop.f32.mrf.mxu0
    %v10932 = vadd.f32 %v10918, %v10931
    %10933 = vdwg.mxu0
    %10934 = vmatpush.bf16.msra.mxu0 %v6728
    %10935 = vmatpush.bf16.msra.mxu0 %v6720
    %10936 = vmatpush.bf16.msra.mxu0 %v6712
    %10937 = vmatpush.bf16.msra.mxu0 %v6704
    %10938 = vmatpush.bf16.msra.mxu0 %v6696
    %10939 = vmatpush.bf16.msra.mxu0 %v6688
    %10940 = vmatpush.bf16.msra.mxu0 %v6680
    %10941 = vmatpush.bf16.msra.mxu0 %v6672
    %10942 = vmatmul.bf16.gmra.mxu0 %v1823
    %v10943 = vpop.f32.mrf.mxu0
    %v10944 = vadd.f32 %v10930, %v10943
    %v10945 = vpop.f32.mrf.mxu0
    %v10946 = vadd.f32 %v10932, %v10945
    %10947 = vdwg.mxu0
    %10948 = vmatpush.bf16.msra.mxu0 %v6792
    %10949 = vmatpush.bf16.msra.mxu0 %v6784
    %10950 = vmatpush.bf16.msra.mxu0 %v6776
    %10951 = vmatpush.bf16.msra.mxu0 %v6768
    %10952 = vmatpush.bf16.msra.mxu0 %v6760
    %10953 = vmatpush.bf16.msra.mxu0 %v6752
    %10954 = vmatpush.bf16.msra.mxu0 %v6744
    %10955 = vmatpush.bf16.msra.mxu0 %v6736
    %10956 = vmatmul.bf16.gmra.mxu0 %v1824
    %v10957 = vpop.f32.mrf.mxu0
    %v10958 = vadd.f32 %v10944, %v10957
    %v10959 = vpop.f32.mrf.mxu0
    %v10960 = vadd.f32 %v10946, %v10959
    %10961 = vdwg.mxu0
    %10962 = vmatpush.bf16.msra.mxu0 %v6856
    %10963 = vmatpush.bf16.msra.mxu0 %v6848
    %10964 = vmatpush.bf16.msra.mxu0 %v6840
    %10965 = vmatpush.bf16.msra.mxu0 %v6832
    %10966 = vmatpush.bf16.msra.mxu0 %v6824
    %10967 = vmatpush.bf16.msra.mxu0 %v6816
    %10968 = vmatpush.bf16.msra.mxu0 %v6808
    %10969 = vmatpush.bf16.msra.mxu0 %v6800
    %10970 = vmatmul.bf16.gmra.mxu0 %v1825
    %v10971 = vpop.f32.mrf.mxu0
    %v10972 = vadd.f32 %v10958, %v10971
    %v10973 = vpop.f32.mrf.mxu0
    %v10974 = vadd.f32 %v10960, %v10973
    %10975 = vdwg.mxu0
    %10976 = vmatpush.bf16.msra.mxu0 %v6920
    %10977 = vmatpush.bf16.msra.mxu0 %v6912
    %10978 = vmatpush.bf16.msra.mxu0 %v6904
    %10979 = vmatpush.bf16.msra.mxu0 %v6896
    %10980 = vmatpush.bf16.msra.mxu0 %v6888
    %10981 = vmatpush.bf16.msra.mxu0 %v6880
    %10982 = vmatpush.bf16.msra.mxu0 %v6872
    %10983 = vmatpush.bf16.msra.mxu0 %v6864
    %10984 = vmatmul.bf16.gmra.mxu0 %v1826
    %v10985 = vpop.f32.mrf.mxu0
    %v10986 = vadd.f32 %v10972, %v10985
    %v10987 = vpop.f32.mrf.mxu0
    %v10988 = vadd.f32 %v10974, %v10987
    %10989 = vdwg.mxu0
    %10990 = vmatpush.bf16.msra.mxu0 %v6984
    %10991 = vmatpush.bf16.msra.mxu0 %v6976
    %10992 = vmatpush.bf16.msra.mxu0 %v6968
    %10993 = vmatpush.bf16.msra.mxu0 %v6960
    %10994 = vmatpush.bf16.msra.mxu0 %v6952
    %10995 = vmatpush.bf16.msra.mxu0 %v6944
    %10996 = vmatpush.bf16.msra.mxu0 %v6936
    %10997 = vmatpush.bf16.msra.mxu0 %v6928
    %10998 = vmatmul.bf16.gmra.mxu0 %v1827
    %v10999 = vpop.f32.mrf.mxu0
    %v11000 = vadd.f32 %v10986, %v10999
    %v11001 = vpop.f32.mrf.mxu0
    %v11002 = vadd.f32 %v10988, %v11001
    %11003 = vdwg.mxu0
    %11004 = vmatpush.bf16.msra.mxu0 %v7048
    %11005 = vmatpush.bf16.msra.mxu0 %v7040
    %11006 = vmatpush.bf16.msra.mxu0 %v7032
    %11007 = vmatpush.bf16.msra.mxu0 %v7024
    %11008 = vmatpush.bf16.msra.mxu0 %v7016
    %11009 = vmatpush.bf16.msra.mxu0 %v7008
    %11010 = vmatpush.bf16.msra.mxu0 %v7000
    %11011 = vmatpush.bf16.msra.mxu0 %v6992
    %11012 = vmatmul.bf16.gmra.mxu0 %v1828
    %v11013 = vpop.f32.mrf.mxu0
    %v11014 = vadd.f32 %v11000, %v11013
    %v11015 = vpop.f32.mrf.mxu0
    %v11016 = vadd.f32 %v11002, %v11015
    %11017 = vdwg.mxu0
    %11018 = vmatpush.bf16.msra.mxu0 %v7112
    %11019 = vmatpush.bf16.msra.mxu0 %v7104
    %11020 = vmatpush.bf16.msra.mxu0 %v7096
    %11021 = vmatpush.bf16.msra.mxu0 %v7088
    %11022 = vmatpush.bf16.msra.mxu0 %v7080
    %11023 = vmatpush.bf16.msra.mxu0 %v7072
    %11024 = vmatpush.bf16.msra.mxu0 %v7064
    %11025 = vmatpush.bf16.msra.mxu0 %v7056
    %11026 = vmatmul.bf16.gmra.mxu0 %v1829
    %v11027 = vpop.f32.mrf.mxu0
    %v11028 = vadd.f32 %v11014, %v11027
    %v11029 = vpop.f32.mrf.mxu0
    %v11030 = vadd.f32 %v11016, %v11029
    %11031 = vdwg.mxu0
    %11032 = vmatpush.bf16.msra.mxu0 %v7176
    %11033 = vmatpush.bf16.msra.mxu0 %v7168
    %11034 = vmatpush.bf16.msra.mxu0 %v7160
    %11035 = vmatpush.bf16.msra.mxu0 %v7152
    %11036 = vmatpush.bf16.msra.mxu0 %v7144
    %11037 = vmatpush.bf16.msra.mxu0 %v7136
    %11038 = vmatpush.bf16.msra.mxu0 %v7128
    %11039 = vmatpush.bf16.msra.mxu0 %v7120
    %11040 = vmatmul.bf16.gmra.mxu0 %v1830
    %v11041 = vpop.f32.mrf.mxu0
    %v11042 = vadd.f32 %v11028, %v11041
    %v11043 = vpop.f32.mrf.mxu0
    %v11044 = vadd.f32 %v11030, %v11043
    %11045 = vdwg.mxu0
    %11046 = vmatpush.bf16.msra.mxu0 %v7240
    %11047 = vmatpush.bf16.msra.mxu0 %v7232
    %11048 = vmatpush.bf16.msra.mxu0 %v7224
    %11049 = vmatpush.bf16.msra.mxu0 %v7216
    %11050 = vmatpush.bf16.msra.mxu0 %v7208
    %11051 = vmatpush.bf16.msra.mxu0 %v7200
    %11052 = vmatpush.bf16.msra.mxu0 %v7192
    %11053 = vmatpush.bf16.msra.mxu0 %v7184
    %11054 = vmatmul.bf16.gmra.mxu0 %v1831
    %v11055 = vpop.f32.mrf.mxu0
    %v11056 = vadd.f32 %v11042, %v11055
    %v11057 = vpop.f32.mrf.mxu0
    %v11058 = vadd.f32 %v11044, %v11057
    %11059 = vdwg.mxu0
    %11060 = vmatpush.bf16.msra.mxu0 %v7304
    %11061 = vmatpush.bf16.msra.mxu0 %v7296
    %11062 = vmatpush.bf16.msra.mxu0 %v7288
    %11063 = vmatpush.bf16.msra.mxu0 %v7280
    %11064 = vmatpush.bf16.msra.mxu0 %v7272
    %11065 = vmatpush.bf16.msra.mxu0 %v7264
    %11066 = vmatpush.bf16.msra.mxu0 %v7256
    %11067 = vmatpush.bf16.msra.mxu0 %v7248
    %11068 = vmatmul.bf16.gmra.mxu0 %v1832
    %v11069 = vpop.f32.mrf.mxu0
    %v11070 = vadd.f32 %v11056, %v11069
    %v11071 = vpop.f32.mrf.mxu0
    %v11072 = vadd.f32 %v11058, %v11071
    %11073 = vdwg.mxu0
    %11074 = vmatpush.bf16.msra.mxu0 %v7368
    %11075 = vmatpush.bf16.msra.mxu0 %v7360
    %11076 = vmatpush.bf16.msra.mxu0 %v7352
    %11077 = vmatpush.bf16.msra.mxu0 %v7344
    %11078 = vmatpush.bf16.msra.mxu0 %v7336
    %11079 = vmatpush.bf16.msra.mxu0 %v7328
    %11080 = vmatpush.bf16.msra.mxu0 %v7320
    %11081 = vmatpush.bf16.msra.mxu0 %v7312
    %11082 = vmatmul.bf16.gmra.mxu0 %v1833
    %v11083 = vpop.f32.mrf.mxu0
    %v11084 = vadd.f32 %v11070, %v11083
    %v11085 = vpop.f32.mrf.mxu0
    %v11086 = vadd.f32 %v11072, %v11085
    %11087 = vdwg.mxu0
    %11088 = vmatpush.bf16.msra.mxu0 %v7432
    %11089 = vmatpush.bf16.msra.mxu0 %v7424
    %11090 = vmatpush.bf16.msra.mxu0 %v7416
    %11091 = vmatpush.bf16.msra.mxu0 %v7408
    %11092 = vmatpush.bf16.msra.mxu0 %v7400
    %11093 = vmatpush.bf16.msra.mxu0 %v7392
    %11094 = vmatpush.bf16.msra.mxu0 %v7384
    %11095 = vmatpush.bf16.msra.mxu0 %v7376
    %11096 = vmatmul.bf16.gmra.mxu0 %v1834
    %v11097 = vpop.f32.mrf.mxu0
    %v11098 = vadd.f32 %v11084, %v11097
    %v11099 = vpop.f32.mrf.mxu0
    %v11100 = vadd.f32 %v11086, %v11099
    %11101 = vdwg.mxu0
    %11102 = vmatpush.bf16.msra.mxu0 %v7496
    %11103 = vmatpush.bf16.msra.mxu0 %v7488
    %11104 = vmatpush.bf16.msra.mxu0 %v7480
    %11105 = vmatpush.bf16.msra.mxu0 %v7472
    %11106 = vmatpush.bf16.msra.mxu0 %v7464
    %11107 = vmatpush.bf16.msra.mxu0 %v7456
    %11108 = vmatpush.bf16.msra.mxu0 %v7448
    %11109 = vmatpush.bf16.msra.mxu0 %v7440
    %11110 = vmatmul.bf16.gmra.mxu0 %v1835
    %v11111 = vpop.f32.mrf.mxu0
    %v11112 = vadd.f32 %v11098, %v11111
    %v11113 = vpop.f32.mrf.mxu0
    %v11114 = vadd.f32 %v11100, %v11113
    %11115 = vdwg.mxu0
    %11116 = vmatpush.bf16.msra.mxu0 %v7560
    %11117 = vmatpush.bf16.msra.mxu0 %v7552
    %11118 = vmatpush.bf16.msra.mxu0 %v7544
    %11119 = vmatpush.bf16.msra.mxu0 %v7536
    %11120 = vmatpush.bf16.msra.mxu0 %v7528
    %11121 = vmatpush.bf16.msra.mxu0 %v7520
    %11122 = vmatpush.bf16.msra.mxu0 %v7512
    %11123 = vmatpush.bf16.msra.mxu0 %v7504
    %11124 = vmatmul.bf16.gmra.mxu0 %v1836
    %v11125 = vpop.f32.mrf.mxu0
    %v11126 = vadd.f32 %v11112, %v11125
    %v11127 = vpop.f32.mrf.mxu0
    %v11128 = vadd.f32 %v11114, %v11127
    %11129 = vdwg.mxu0
    %11130 = vmatpush.bf16.msra.mxu0 %v7624
    %11131 = vmatpush.bf16.msra.mxu0 %v7616
    %11132 = vmatpush.bf16.msra.mxu0 %v7608
    %11133 = vmatpush.bf16.msra.mxu0 %v7600
    %11134 = vmatpush.bf16.msra.mxu0 %v7592
    %11135 = vmatpush.bf16.msra.mxu0 %v7584
    %11136 = vmatpush.bf16.msra.mxu0 %v7576
    %11137 = vmatpush.bf16.msra.mxu0 %v7568
    %11138 = vmatmul.bf16.gmra.mxu0 %v1837
    %v11139 = vpop.f32.mrf.mxu0
    %v11140 = vadd.f32 %v11126, %v11139
    %v11141 = vpop.f32.mrf.mxu0
    %v11142 = vadd.f32 %v11128, %v11141
    %11143 = vdwg.mxu0
    %11144 = vmatpush.bf16.msra.mxu0 %v7688
    %11145 = vmatpush.bf16.msra.mxu0 %v7680
    %11146 = vmatpush.bf16.msra.mxu0 %v7672
    %11147 = vmatpush.bf16.msra.mxu0 %v7664
    %11148 = vmatpush.bf16.msra.mxu0 %v7656
    %11149 = vmatpush.bf16.msra.mxu0 %v7648
    %11150 = vmatpush.bf16.msra.mxu0 %v7640
    %11151 = vmatpush.bf16.msra.mxu0 %v7632
    %11152 = vmatmul.bf16.gmra.mxu0 %v1838
    %v11153 = vpop.f32.mrf.mxu0
    %v11154 = vadd.f32 %v11140, %v11153
    %v11155 = vpop.f32.mrf.mxu0
    %v11156 = vadd.f32 %v11142, %v11155
    %11157 = vdwg.mxu0
    %11158 = vmatpush.bf16.msra.mxu0 %v7752
    %11159 = vmatpush.bf16.msra.mxu0 %v7744
    %11160 = vmatpush.bf16.msra.mxu0 %v7736
    %11161 = vmatpush.bf16.msra.mxu0 %v7728
    %11162 = vmatpush.bf16.msra.mxu0 %v7720
    %11163 = vmatpush.bf16.msra.mxu0 %v7712
    %11164 = vmatpush.bf16.msra.mxu0 %v7704
    %11165 = vmatpush.bf16.msra.mxu0 %v7696
    %11166 = vmatmul.bf16.gmra.mxu0 %v1839
    %v11167 = vpop.f32.mrf.mxu0
    %v11168 = vadd.f32 %v11154, %v11167
    %v11169 = vpop.f32.mrf.mxu0
    %v11170 = vadd.f32 %v11156, %v11169
    %11171 = vdwg.mxu0
    %11172 = vmatpush.bf16.msra.mxu0 %v7816
    %11173 = vmatpush.bf16.msra.mxu0 %v7808
    %11174 = vmatpush.bf16.msra.mxu0 %v7800
    %11175 = vmatpush.bf16.msra.mxu0 %v7792
    %11176 = vmatpush.bf16.msra.mxu0 %v7784
    %11177 = vmatpush.bf16.msra.mxu0 %v7776
    %11178 = vmatpush.bf16.msra.mxu0 %v7768
    %11179 = vmatpush.bf16.msra.mxu0 %v7760
    %11180 = vmatmul.bf16.gmra.mxu0 %v1840
    %v11181 = vpop.f32.mrf.mxu0
    %v11182 = vadd.f32 %v11168, %v11181
    %v11183 = vpop.f32.mrf.mxu0
    %v11184 = vadd.f32 %v11170, %v11183
    %11185 = vdwg.mxu0
    %11186 = vmatpush.bf16.msra.mxu0 %v7880
    %11187 = vmatpush.bf16.msra.mxu0 %v7872
    %11188 = vmatpush.bf16.msra.mxu0 %v7864
    %11189 = vmatpush.bf16.msra.mxu0 %v7856
    %11190 = vmatpush.bf16.msra.mxu0 %v7848
    %11191 = vmatpush.bf16.msra.mxu0 %v7840
    %11192 = vmatpush.bf16.msra.mxu0 %v7832
    %11193 = vmatpush.bf16.msra.mxu0 %v7824
    %11194 = vmatmul.bf16.gmra.mxu0 %v1841
    %v11195 = vpop.f32.mrf.mxu0
    %v11196 = vadd.f32 %v11182, %v11195
    %v11197 = vpop.f32.mrf.mxu0
    %v11198 = vadd.f32 %v11184, %v11197
    %11199 = vdwg.mxu0
    %11200 = vmatpush.bf16.msra.mxu0 %v7944
    %11201 = vmatpush.bf16.msra.mxu0 %v7936
    %11202 = vmatpush.bf16.msra.mxu0 %v7928
    %11203 = vmatpush.bf16.msra.mxu0 %v7920
    %11204 = vmatpush.bf16.msra.mxu0 %v7912
    %11205 = vmatpush.bf16.msra.mxu0 %v7904
    %11206 = vmatpush.bf16.msra.mxu0 %v7896
    %11207 = vmatpush.bf16.msra.mxu0 %v7888
    %11208 = vmatmul.bf16.gmra.mxu0 %v1842
    %v11209 = vpop.f32.mrf.mxu0
    %v11210 = vadd.f32 %v11196, %v11209
    %v11211 = vpop.f32.mrf.mxu0
    %v11212 = vadd.f32 %v11198, %v11211
    %11213 = vdwg.mxu0
    %11214 = vmatpush.bf16.msra.mxu0 %v8008
    %11215 = vmatpush.bf16.msra.mxu0 %v8000
    %11216 = vmatpush.bf16.msra.mxu0 %v7992
    %11217 = vmatpush.bf16.msra.mxu0 %v7984
    %11218 = vmatpush.bf16.msra.mxu0 %v7976
    %11219 = vmatpush.bf16.msra.mxu0 %v7968
    %11220 = vmatpush.bf16.msra.mxu0 %v7960
    %11221 = vmatpush.bf16.msra.mxu0 %v7952
    %11222 = vmatmul.bf16.gmra.mxu0 %v1843
    %v11223 = vpop.f32.mrf.mxu0
    %v11224 = vadd.f32 %v11210, %v11223
    %v11225 = vpop.f32.mrf.mxu0
    %v11226 = vadd.f32 %v11212, %v11225
    %11227 = vdwg.mxu0
    %11228 = vmatpush.bf16.msra.mxu0 %v6537
    %11229 = vmatpush.bf16.msra.mxu0 %v6529
    %11230 = vmatpush.bf16.msra.mxu0 %v6521
    %11231 = vmatpush.bf16.msra.mxu0 %v6513
    %11232 = vmatpush.bf16.msra.mxu0 %v6505
    %11233 = vmatpush.bf16.msra.mxu0 %v6497
    %11234 = vmatpush.bf16.msra.mxu0 %v6489
    %11235 = vmatpush.bf16.msra.mxu0 %v6481
    %11236 = vmatmul.bf16.gmra.mxu0 %v1820
    %v11237 = vpop.f32.mrf.mxu0
    %v11238 = vadd.f32 %v1737, %v11237
    %v11239 = vpop.f32.mrf.mxu0
    %v11240 = vadd.f32 %v1737, %v11239
    %11241 = vdwg.mxu0
    %11242 = vmatpush.bf16.msra.mxu0 %v6601
    %11243 = vmatpush.bf16.msra.mxu0 %v6593
    %11244 = vmatpush.bf16.msra.mxu0 %v6585
    %11245 = vmatpush.bf16.msra.mxu0 %v6577
    %11246 = vmatpush.bf16.msra.mxu0 %v6569
    %11247 = vmatpush.bf16.msra.mxu0 %v6561
    %11248 = vmatpush.bf16.msra.mxu0 %v6553
    %11249 = vmatpush.bf16.msra.mxu0 %v6545
    %11250 = vmatmul.bf16.gmra.mxu0 %v1821
    %v11251 = vpop.f32.mrf.mxu0
    %v11252 = vadd.f32 %v11238, %v11251
    %v11253 = vpop.f32.mrf.mxu0
    %v11254 = vadd.f32 %v11240, %v11253
    %11255 = vdwg.mxu0
    %11256 = vmatpush.bf16.msra.mxu0 %v6665
    %11257 = vmatpush.bf16.msra.mxu0 %v6657
    %11258 = vmatpush.bf16.msra.mxu0 %v6649
    %11259 = vmatpush.bf16.msra.mxu0 %v6641
    %11260 = vmatpush.bf16.msra.mxu0 %v6633
    %11261 = vmatpush.bf16.msra.mxu0 %v6625
    %11262 = vmatpush.bf16.msra.mxu0 %v6617
    %11263 = vmatpush.bf16.msra.mxu0 %v6609
    %11264 = vmatmul.bf16.gmra.mxu0 %v1822
    %v11265 = vpop.f32.mrf.mxu0
    %v11266 = vadd.f32 %v11252, %v11265
    %v11267 = vpop.f32.mrf.mxu0
    %v11268 = vadd.f32 %v11254, %v11267
    %11269 = vdwg.mxu0
    %11270 = vmatpush.bf16.msra.mxu0 %v6729
    %11271 = vmatpush.bf16.msra.mxu0 %v6721
    %11272 = vmatpush.bf16.msra.mxu0 %v6713
    %11273 = vmatpush.bf16.msra.mxu0 %v6705
    %11274 = vmatpush.bf16.msra.mxu0 %v6697
    %11275 = vmatpush.bf16.msra.mxu0 %v6689
    %11276 = vmatpush.bf16.msra.mxu0 %v6681
    %11277 = vmatpush.bf16.msra.mxu0 %v6673
    %11278 = vmatmul.bf16.gmra.mxu0 %v1823
    %v11279 = vpop.f32.mrf.mxu0
    %v11280 = vadd.f32 %v11266, %v11279
    %v11281 = vpop.f32.mrf.mxu0
    %v11282 = vadd.f32 %v11268, %v11281
    %11283 = vdwg.mxu0
    %11284 = vmatpush.bf16.msra.mxu0 %v6793
    %11285 = vmatpush.bf16.msra.mxu0 %v6785
    %11286 = vmatpush.bf16.msra.mxu0 %v6777
    %11287 = vmatpush.bf16.msra.mxu0 %v6769
    %11288 = vmatpush.bf16.msra.mxu0 %v6761
    %11289 = vmatpush.bf16.msra.mxu0 %v6753
    %11290 = vmatpush.bf16.msra.mxu0 %v6745
    %11291 = vmatpush.bf16.msra.mxu0 %v6737
    %11292 = vmatmul.bf16.gmra.mxu0 %v1824
    %v11293 = vpop.f32.mrf.mxu0
    %v11294 = vadd.f32 %v11280, %v11293
    %v11295 = vpop.f32.mrf.mxu0
    %v11296 = vadd.f32 %v11282, %v11295
    %11297 = vdwg.mxu0
    %11298 = vmatpush.bf16.msra.mxu0 %v6857
    %11299 = vmatpush.bf16.msra.mxu0 %v6849
    %11300 = vmatpush.bf16.msra.mxu0 %v6841
    %11301 = vmatpush.bf16.msra.mxu0 %v6833
    %11302 = vmatpush.bf16.msra.mxu0 %v6825
    %11303 = vmatpush.bf16.msra.mxu0 %v6817
    %11304 = vmatpush.bf16.msra.mxu0 %v6809
    %11305 = vmatpush.bf16.msra.mxu0 %v6801
    %11306 = vmatmul.bf16.gmra.mxu0 %v1825
    %v11307 = vpop.f32.mrf.mxu0
    %v11308 = vadd.f32 %v11294, %v11307
    %v11309 = vpop.f32.mrf.mxu0
    %v11310 = vadd.f32 %v11296, %v11309
    %11311 = vdwg.mxu0
    %11312 = vmatpush.bf16.msra.mxu0 %v6921
    %11313 = vmatpush.bf16.msra.mxu0 %v6913
    %11314 = vmatpush.bf16.msra.mxu0 %v6905
    %11315 = vmatpush.bf16.msra.mxu0 %v6897
    %11316 = vmatpush.bf16.msra.mxu0 %v6889
    %11317 = vmatpush.bf16.msra.mxu0 %v6881
    %11318 = vmatpush.bf16.msra.mxu0 %v6873
    %11319 = vmatpush.bf16.msra.mxu0 %v6865
    %11320 = vmatmul.bf16.gmra.mxu0 %v1826
    %v11321 = vpop.f32.mrf.mxu0
    %v11322 = vadd.f32 %v11308, %v11321
    %v11323 = vpop.f32.mrf.mxu0
    %v11324 = vadd.f32 %v11310, %v11323
    %11325 = vdwg.mxu0
    %11326 = vmatpush.bf16.msra.mxu0 %v6985
    %11327 = vmatpush.bf16.msra.mxu0 %v6977
    %11328 = vmatpush.bf16.msra.mxu0 %v6969
    %11329 = vmatpush.bf16.msra.mxu0 %v6961
    %11330 = vmatpush.bf16.msra.mxu0 %v6953
    %11331 = vmatpush.bf16.msra.mxu0 %v6945
    %11332 = vmatpush.bf16.msra.mxu0 %v6937
    %11333 = vmatpush.bf16.msra.mxu0 %v6929
    %11334 = vmatmul.bf16.gmra.mxu0 %v1827
    %v11335 = vpop.f32.mrf.mxu0
    %v11336 = vadd.f32 %v11322, %v11335
    %v11337 = vpop.f32.mrf.mxu0
    %v11338 = vadd.f32 %v11324, %v11337
    %11339 = vdwg.mxu0
    %11340 = vmatpush.bf16.msra.mxu0 %v7049
    %11341 = vmatpush.bf16.msra.mxu0 %v7041
    %11342 = vmatpush.bf16.msra.mxu0 %v7033
    %11343 = vmatpush.bf16.msra.mxu0 %v7025
    %11344 = vmatpush.bf16.msra.mxu0 %v7017
    %11345 = vmatpush.bf16.msra.mxu0 %v7009
    %11346 = vmatpush.bf16.msra.mxu0 %v7001
    %11347 = vmatpush.bf16.msra.mxu0 %v6993
    %11348 = vmatmul.bf16.gmra.mxu0 %v1828
    %v11349 = vpop.f32.mrf.mxu0
    %v11350 = vadd.f32 %v11336, %v11349
    %v11351 = vpop.f32.mrf.mxu0
    %v11352 = vadd.f32 %v11338, %v11351
    %11353 = vdwg.mxu0
    %11354 = vmatpush.bf16.msra.mxu0 %v7113
    %11355 = vmatpush.bf16.msra.mxu0 %v7105
    %11356 = vmatpush.bf16.msra.mxu0 %v7097
    %11357 = vmatpush.bf16.msra.mxu0 %v7089
    %11358 = vmatpush.bf16.msra.mxu0 %v7081
    %11359 = vmatpush.bf16.msra.mxu0 %v7073
    %11360 = vmatpush.bf16.msra.mxu0 %v7065
    %11361 = vmatpush.bf16.msra.mxu0 %v7057
    %11362 = vmatmul.bf16.gmra.mxu0 %v1829
    %v11363 = vpop.f32.mrf.mxu0
    %v11364 = vadd.f32 %v11350, %v11363
    %v11365 = vpop.f32.mrf.mxu0
    %v11366 = vadd.f32 %v11352, %v11365
    %11367 = vdwg.mxu0
    %11368 = vmatpush.bf16.msra.mxu0 %v7177
    %11369 = vmatpush.bf16.msra.mxu0 %v7169
    %11370 = vmatpush.bf16.msra.mxu0 %v7161
    %11371 = vmatpush.bf16.msra.mxu0 %v7153
    %11372 = vmatpush.bf16.msra.mxu0 %v7145
    %11373 = vmatpush.bf16.msra.mxu0 %v7137
    %11374 = vmatpush.bf16.msra.mxu0 %v7129
    %11375 = vmatpush.bf16.msra.mxu0 %v7121
    %11376 = vmatmul.bf16.gmra.mxu0 %v1830
    %v11377 = vpop.f32.mrf.mxu0
    %v11378 = vadd.f32 %v11364, %v11377
    %v11379 = vpop.f32.mrf.mxu0
    %v11380 = vadd.f32 %v11366, %v11379
    %11381 = vdwg.mxu0
    %11382 = vmatpush.bf16.msra.mxu0 %v7241
    %11383 = vmatpush.bf16.msra.mxu0 %v7233
    %11384 = vmatpush.bf16.msra.mxu0 %v7225
    %11385 = vmatpush.bf16.msra.mxu0 %v7217
    %11386 = vmatpush.bf16.msra.mxu0 %v7209
    %11387 = vmatpush.bf16.msra.mxu0 %v7201
    %11388 = vmatpush.bf16.msra.mxu0 %v7193
    %11389 = vmatpush.bf16.msra.mxu0 %v7185
    %11390 = vmatmul.bf16.gmra.mxu0 %v1831
    %v11391 = vpop.f32.mrf.mxu0
    %v11392 = vadd.f32 %v11378, %v11391
    %v11393 = vpop.f32.mrf.mxu0
    %v11394 = vadd.f32 %v11380, %v11393
    %11395 = vdwg.mxu0
    %11396 = vmatpush.bf16.msra.mxu0 %v7305
    %11397 = vmatpush.bf16.msra.mxu0 %v7297
    %11398 = vmatpush.bf16.msra.mxu0 %v7289
    %11399 = vmatpush.bf16.msra.mxu0 %v7281
    %11400 = vmatpush.bf16.msra.mxu0 %v7273
    %11401 = vmatpush.bf16.msra.mxu0 %v7265
    %11402 = vmatpush.bf16.msra.mxu0 %v7257
    %11403 = vmatpush.bf16.msra.mxu0 %v7249
    %11404 = vmatmul.bf16.gmra.mxu0 %v1832
    %v11405 = vpop.f32.mrf.mxu0
    %v11406 = vadd.f32 %v11392, %v11405
    %v11407 = vpop.f32.mrf.mxu0
    %v11408 = vadd.f32 %v11394, %v11407
    %11409 = vdwg.mxu0
    %11410 = vmatpush.bf16.msra.mxu0 %v7369
    %11411 = vmatpush.bf16.msra.mxu0 %v7361
    %11412 = vmatpush.bf16.msra.mxu0 %v7353
    %11413 = vmatpush.bf16.msra.mxu0 %v7345
    %11414 = vmatpush.bf16.msra.mxu0 %v7337
    %11415 = vmatpush.bf16.msra.mxu0 %v7329
    %11416 = vmatpush.bf16.msra.mxu0 %v7321
    %11417 = vmatpush.bf16.msra.mxu0 %v7313
    %11418 = vmatmul.bf16.gmra.mxu0 %v1833
    %v11419 = vpop.f32.mrf.mxu0
    %v11420 = vadd.f32 %v11406, %v11419
    %v11421 = vpop.f32.mrf.mxu0
    %v11422 = vadd.f32 %v11408, %v11421
    %11423 = vdwg.mxu0
    %11424 = vmatpush.bf16.msra.mxu0 %v7433
    %11425 = vmatpush.bf16.msra.mxu0 %v7425
    %11426 = vmatpush.bf16.msra.mxu0 %v7417
    %11427 = vmatpush.bf16.msra.mxu0 %v7409
    %11428 = vmatpush.bf16.msra.mxu0 %v7401
    %11429 = vmatpush.bf16.msra.mxu0 %v7393
    %11430 = vmatpush.bf16.msra.mxu0 %v7385
    %11431 = vmatpush.bf16.msra.mxu0 %v7377
    %11432 = vmatmul.bf16.gmra.mxu0 %v1834
    %v11433 = vpop.f32.mrf.mxu0
    %v11434 = vadd.f32 %v11420, %v11433
    %v11435 = vpop.f32.mrf.mxu0
    %v11436 = vadd.f32 %v11422, %v11435
    %11437 = vdwg.mxu0
    %11438 = vmatpush.bf16.msra.mxu0 %v7497
    %11439 = vmatpush.bf16.msra.mxu0 %v7489
    %11440 = vmatpush.bf16.msra.mxu0 %v7481
    %11441 = vmatpush.bf16.msra.mxu0 %v7473
    %11442 = vmatpush.bf16.msra.mxu0 %v7465
    %11443 = vmatpush.bf16.msra.mxu0 %v7457
    %11444 = vmatpush.bf16.msra.mxu0 %v7449
    %11445 = vmatpush.bf16.msra.mxu0 %v7441
    %11446 = vmatmul.bf16.gmra.mxu0 %v1835
    %v11447 = vpop.f32.mrf.mxu0
    %v11448 = vadd.f32 %v11434, %v11447
    %v11449 = vpop.f32.mrf.mxu0
    %v11450 = vadd.f32 %v11436, %v11449
    %11451 = vdwg.mxu0
    %11452 = vmatpush.bf16.msra.mxu0 %v7561
    %11453 = vmatpush.bf16.msra.mxu0 %v7553
    %11454 = vmatpush.bf16.msra.mxu0 %v7545
    %11455 = vmatpush.bf16.msra.mxu0 %v7537
    %11456 = vmatpush.bf16.msra.mxu0 %v7529
    %11457 = vmatpush.bf16.msra.mxu0 %v7521
    %11458 = vmatpush.bf16.msra.mxu0 %v7513
    %11459 = vmatpush.bf16.msra.mxu0 %v7505
    %11460 = vmatmul.bf16.gmra.mxu0 %v1836
    %v11461 = vpop.f32.mrf.mxu0
    %v11462 = vadd.f32 %v11448, %v11461
    %v11463 = vpop.f32.mrf.mxu0
    %v11464 = vadd.f32 %v11450, %v11463
    %11465 = vdwg.mxu0
    %11466 = vmatpush.bf16.msra.mxu0 %v7625
    %11467 = vmatpush.bf16.msra.mxu0 %v7617
    %11468 = vmatpush.bf16.msra.mxu0 %v7609
    %11469 = vmatpush.bf16.msra.mxu0 %v7601
    %11470 = vmatpush.bf16.msra.mxu0 %v7593
    %11471 = vmatpush.bf16.msra.mxu0 %v7585
    %11472 = vmatpush.bf16.msra.mxu0 %v7577
    %11473 = vmatpush.bf16.msra.mxu0 %v7569
    %11474 = vmatmul.bf16.gmra.mxu0 %v1837
    %v11475 = vpop.f32.mrf.mxu0
    %v11476 = vadd.f32 %v11462, %v11475
    %v11477 = vpop.f32.mrf.mxu0
    %v11478 = vadd.f32 %v11464, %v11477
    %11479 = vdwg.mxu0
    %11480 = vmatpush.bf16.msra.mxu0 %v7689
    %11481 = vmatpush.bf16.msra.mxu0 %v7681
    %11482 = vmatpush.bf16.msra.mxu0 %v7673
    %11483 = vmatpush.bf16.msra.mxu0 %v7665
    %11484 = vmatpush.bf16.msra.mxu0 %v7657
    %11485 = vmatpush.bf16.msra.mxu0 %v7649
    %11486 = vmatpush.bf16.msra.mxu0 %v7641
    %11487 = vmatpush.bf16.msra.mxu0 %v7633
    %11488 = vmatmul.bf16.gmra.mxu0 %v1838
    %v11489 = vpop.f32.mrf.mxu0
    %v11490 = vadd.f32 %v11476, %v11489
    %v11491 = vpop.f32.mrf.mxu0
    %v11492 = vadd.f32 %v11478, %v11491
    %11493 = vdwg.mxu0
    %11494 = vmatpush.bf16.msra.mxu0 %v7753
    %11495 = vmatpush.bf16.msra.mxu0 %v7745
    %11496 = vmatpush.bf16.msra.mxu0 %v7737
    %11497 = vmatpush.bf16.msra.mxu0 %v7729
    %11498 = vmatpush.bf16.msra.mxu0 %v7721
    %11499 = vmatpush.bf16.msra.mxu0 %v7713
    %11500 = vmatpush.bf16.msra.mxu0 %v7705
    %11501 = vmatpush.bf16.msra.mxu0 %v7697
    %11502 = vmatmul.bf16.gmra.mxu0 %v1839
    %v11503 = vpop.f32.mrf.mxu0
    %v11504 = vadd.f32 %v11490, %v11503
    %v11505 = vpop.f32.mrf.mxu0
    %v11506 = vadd.f32 %v11492, %v11505
    %11507 = vdwg.mxu0
    %11508 = vmatpush.bf16.msra.mxu0 %v7817
    %11509 = vmatpush.bf16.msra.mxu0 %v7809
    %11510 = vmatpush.bf16.msra.mxu0 %v7801
    %11511 = vmatpush.bf16.msra.mxu0 %v7793
    %11512 = vmatpush.bf16.msra.mxu0 %v7785
    %11513 = vmatpush.bf16.msra.mxu0 %v7777
    %11514 = vmatpush.bf16.msra.mxu0 %v7769
    %11515 = vmatpush.bf16.msra.mxu0 %v7761
    %11516 = vmatmul.bf16.gmra.mxu0 %v1840
    %v11517 = vpop.f32.mrf.mxu0
    %v11518 = vadd.f32 %v11504, %v11517
    %v11519 = vpop.f32.mrf.mxu0
    %v11520 = vadd.f32 %v11506, %v11519
    %11521 = vdwg.mxu0
    %11522 = vmatpush.bf16.msra.mxu0 %v7881
    %11523 = vmatpush.bf16.msra.mxu0 %v7873
    %11524 = vmatpush.bf16.msra.mxu0 %v7865
    %11525 = vmatpush.bf16.msra.mxu0 %v7857
    %11526 = vmatpush.bf16.msra.mxu0 %v7849
    %11527 = vmatpush.bf16.msra.mxu0 %v7841
    %11528 = vmatpush.bf16.msra.mxu0 %v7833
    %11529 = vmatpush.bf16.msra.mxu0 %v7825
    %11530 = vmatmul.bf16.gmra.mxu0 %v1841
    %v11531 = vpop.f32.mrf.mxu0
    %v11532 = vadd.f32 %v11518, %v11531
    %v11533 = vpop.f32.mrf.mxu0
    %v11534 = vadd.f32 %v11520, %v11533
    %11535 = vdwg.mxu0
    %11536 = vmatpush.bf16.msra.mxu0 %v7945
    %11537 = vmatpush.bf16.msra.mxu0 %v7937
    %11538 = vmatpush.bf16.msra.mxu0 %v7929
    %11539 = vmatpush.bf16.msra.mxu0 %v7921
    %11540 = vmatpush.bf16.msra.mxu0 %v7913
    %11541 = vmatpush.bf16.msra.mxu0 %v7905
    %11542 = vmatpush.bf16.msra.mxu0 %v7897
    %11543 = vmatpush.bf16.msra.mxu0 %v7889
    %11544 = vmatmul.bf16.gmra.mxu0 %v1842
    %v11545 = vpop.f32.mrf.mxu0
    %v11546 = vadd.f32 %v11532, %v11545
    %v11547 = vpop.f32.mrf.mxu0
    %v11548 = vadd.f32 %v11534, %v11547
    %11549 = vdwg.mxu0
    %11550 = vmatpush.bf16.msra.mxu0 %v8009
    %11551 = vmatpush.bf16.msra.mxu0 %v8001
    %11552 = vmatpush.bf16.msra.mxu0 %v7993
    %11553 = vmatpush.bf16.msra.mxu0 %v7985
    %11554 = vmatpush.bf16.msra.mxu0 %v7977
    %11555 = vmatpush.bf16.msra.mxu0 %v7969
    %11556 = vmatpush.bf16.msra.mxu0 %v7961
    %11557 = vmatpush.bf16.msra.mxu0 %v7953
    %11558 = vmatmul.bf16.gmra.mxu0 %v1843
    %v11559 = vpop.f32.mrf.mxu0
    %v11560 = vadd.f32 %v11546, %v11559
    %v11561 = vpop.f32.mrf.mxu0
    %v11562 = vadd.f32 %v11548, %v11561
    %11563 = vdwg.mxu0
    %11564 = vmatpush.bf16.msra.mxu0 %v6538
    %11565 = vmatpush.bf16.msra.mxu0 %v6530
    %11566 = vmatpush.bf16.msra.mxu0 %v6522
    %11567 = vmatpush.bf16.msra.mxu0 %v6514
    %11568 = vmatpush.bf16.msra.mxu0 %v6506
    %11569 = vmatpush.bf16.msra.mxu0 %v6498
    %11570 = vmatpush.bf16.msra.mxu0 %v6490
    %11571 = vmatpush.bf16.msra.mxu0 %v6482
    %11572 = vmatmul.bf16.gmra.mxu0 %v1820
    %v11573 = vpop.f32.mrf.mxu0
    %v11574 = vadd.f32 %v1738, %v11573
    %v11575 = vpop.f32.mrf.mxu0
    %v11576 = vadd.f32 %v1738, %v11575
    %11577 = vdwg.mxu0
    %11578 = vmatpush.bf16.msra.mxu0 %v6602
    %11579 = vmatpush.bf16.msra.mxu0 %v6594
    %11580 = vmatpush.bf16.msra.mxu0 %v6586
    %11581 = vmatpush.bf16.msra.mxu0 %v6578
    %11582 = vmatpush.bf16.msra.mxu0 %v6570
    %11583 = vmatpush.bf16.msra.mxu0 %v6562
    %11584 = vmatpush.bf16.msra.mxu0 %v6554
    %11585 = vmatpush.bf16.msra.mxu0 %v6546
    %11586 = vmatmul.bf16.gmra.mxu0 %v1821
    %v11587 = vpop.f32.mrf.mxu0
    %v11588 = vadd.f32 %v11574, %v11587
    %v11589 = vpop.f32.mrf.mxu0
    %v11590 = vadd.f32 %v11576, %v11589
    %11591 = vdwg.mxu0
    %11592 = vmatpush.bf16.msra.mxu0 %v6666
    %11593 = vmatpush.bf16.msra.mxu0 %v6658
    %11594 = vmatpush.bf16.msra.mxu0 %v6650
    %11595 = vmatpush.bf16.msra.mxu0 %v6642
    %11596 = vmatpush.bf16.msra.mxu0 %v6634
    %11597 = vmatpush.bf16.msra.mxu0 %v6626
    %11598 = vmatpush.bf16.msra.mxu0 %v6618
    %11599 = vmatpush.bf16.msra.mxu0 %v6610
    %11600 = vmatmul.bf16.gmra.mxu0 %v1822
    %v11601 = vpop.f32.mrf.mxu0
    %v11602 = vadd.f32 %v11588, %v11601
    %v11603 = vpop.f32.mrf.mxu0
    %v11604 = vadd.f32 %v11590, %v11603
    %11605 = vdwg.mxu0
    %11606 = vmatpush.bf16.msra.mxu0 %v6730
    %11607 = vmatpush.bf16.msra.mxu0 %v6722
    %11608 = vmatpush.bf16.msra.mxu0 %v6714
    %11609 = vmatpush.bf16.msra.mxu0 %v6706
    %11610 = vmatpush.bf16.msra.mxu0 %v6698
    %11611 = vmatpush.bf16.msra.mxu0 %v6690
    %11612 = vmatpush.bf16.msra.mxu0 %v6682
    %11613 = vmatpush.bf16.msra.mxu0 %v6674
    %11614 = vmatmul.bf16.gmra.mxu0 %v1823
    %v11615 = vpop.f32.mrf.mxu0
    %v11616 = vadd.f32 %v11602, %v11615
    %v11617 = vpop.f32.mrf.mxu0
    %v11618 = vadd.f32 %v11604, %v11617
    %11619 = vdwg.mxu0
    %11620 = vmatpush.bf16.msra.mxu0 %v6794
    %11621 = vmatpush.bf16.msra.mxu0 %v6786
    %11622 = vmatpush.bf16.msra.mxu0 %v6778
    %11623 = vmatpush.bf16.msra.mxu0 %v6770
    %11624 = vmatpush.bf16.msra.mxu0 %v6762
    %11625 = vmatpush.bf16.msra.mxu0 %v6754
    %11626 = vmatpush.bf16.msra.mxu0 %v6746
    %11627 = vmatpush.bf16.msra.mxu0 %v6738
    %11628 = vmatmul.bf16.gmra.mxu0 %v1824
    %v11629 = vpop.f32.mrf.mxu0
    %v11630 = vadd.f32 %v11616, %v11629
    %v11631 = vpop.f32.mrf.mxu0
    %v11632 = vadd.f32 %v11618, %v11631
    %11633 = vdwg.mxu0
    %11634 = vmatpush.bf16.msra.mxu0 %v6858
    %11635 = vmatpush.bf16.msra.mxu0 %v6850
    %11636 = vmatpush.bf16.msra.mxu0 %v6842
    %11637 = vmatpush.bf16.msra.mxu0 %v6834
    %11638 = vmatpush.bf16.msra.mxu0 %v6826
    %11639 = vmatpush.bf16.msra.mxu0 %v6818
    %11640 = vmatpush.bf16.msra.mxu0 %v6810
    %11641 = vmatpush.bf16.msra.mxu0 %v6802
    %11642 = vmatmul.bf16.gmra.mxu0 %v1825
    %v11643 = vpop.f32.mrf.mxu0
    %v11644 = vadd.f32 %v11630, %v11643
    %v11645 = vpop.f32.mrf.mxu0
    %v11646 = vadd.f32 %v11632, %v11645
    %11647 = vdwg.mxu0
    %11648 = vmatpush.bf16.msra.mxu0 %v6922
    %11649 = vmatpush.bf16.msra.mxu0 %v6914
    %11650 = vmatpush.bf16.msra.mxu0 %v6906
    %11651 = vmatpush.bf16.msra.mxu0 %v6898
    %11652 = vmatpush.bf16.msra.mxu0 %v6890
    %11653 = vmatpush.bf16.msra.mxu0 %v6882
    %11654 = vmatpush.bf16.msra.mxu0 %v6874
    %11655 = vmatpush.bf16.msra.mxu0 %v6866
    %11656 = vmatmul.bf16.gmra.mxu0 %v1826
    %v11657 = vpop.f32.mrf.mxu0
    %v11658 = vadd.f32 %v11644, %v11657
    %v11659 = vpop.f32.mrf.mxu0
    %v11660 = vadd.f32 %v11646, %v11659
    %11661 = vdwg.mxu0
    %11662 = vmatpush.bf16.msra.mxu0 %v6986
    %11663 = vmatpush.bf16.msra.mxu0 %v6978
    %11664 = vmatpush.bf16.msra.mxu0 %v6970
    %11665 = vmatpush.bf16.msra.mxu0 %v6962
    %11666 = vmatpush.bf16.msra.mxu0 %v6954
    %11667 = vmatpush.bf16.msra.mxu0 %v6946
    %11668 = vmatpush.bf16.msra.mxu0 %v6938
    %11669 = vmatpush.bf16.msra.mxu0 %v6930
    %11670 = vmatmul.bf16.gmra.mxu0 %v1827
    %v11671 = vpop.f32.mrf.mxu0
    %v11672 = vadd.f32 %v11658, %v11671
    %v11673 = vpop.f32.mrf.mxu0
    %v11674 = vadd.f32 %v11660, %v11673
    %11675 = vdwg.mxu0
    %11676 = vmatpush.bf16.msra.mxu0 %v7050
    %11677 = vmatpush.bf16.msra.mxu0 %v7042
    %11678 = vmatpush.bf16.msra.mxu0 %v7034
    %11679 = vmatpush.bf16.msra.mxu0 %v7026
    %11680 = vmatpush.bf16.msra.mxu0 %v7018
    %11681 = vmatpush.bf16.msra.mxu0 %v7010
    %11682 = vmatpush.bf16.msra.mxu0 %v7002
    %11683 = vmatpush.bf16.msra.mxu0 %v6994
    %11684 = vmatmul.bf16.gmra.mxu0 %v1828
    %v11685 = vpop.f32.mrf.mxu0
    %v11686 = vadd.f32 %v11672, %v11685
    %v11687 = vpop.f32.mrf.mxu0
    %v11688 = vadd.f32 %v11674, %v11687
    %11689 = vdwg.mxu0
    %11690 = vmatpush.bf16.msra.mxu0 %v7114
    %11691 = vmatpush.bf16.msra.mxu0 %v7106
    %11692 = vmatpush.bf16.msra.mxu0 %v7098
    %11693 = vmatpush.bf16.msra.mxu0 %v7090
    %11694 = vmatpush.bf16.msra.mxu0 %v7082
    %11695 = vmatpush.bf16.msra.mxu0 %v7074
    %11696 = vmatpush.bf16.msra.mxu0 %v7066
    %11697 = vmatpush.bf16.msra.mxu0 %v7058
    %11698 = vmatmul.bf16.gmra.mxu0 %v1829
    %v11699 = vpop.f32.mrf.mxu0
    %v11700 = vadd.f32 %v11686, %v11699
    %v11701 = vpop.f32.mrf.mxu0
    %v11702 = vadd.f32 %v11688, %v11701
    %11703 = vdwg.mxu0
    %11704 = vmatpush.bf16.msra.mxu0 %v7178
    %11705 = vmatpush.bf16.msra.mxu0 %v7170
    %11706 = vmatpush.bf16.msra.mxu0 %v7162
    %11707 = vmatpush.bf16.msra.mxu0 %v7154
    %11708 = vmatpush.bf16.msra.mxu0 %v7146
    %11709 = vmatpush.bf16.msra.mxu0 %v7138
    %11710 = vmatpush.bf16.msra.mxu0 %v7130
    %11711 = vmatpush.bf16.msra.mxu0 %v7122
    %11712 = vmatmul.bf16.gmra.mxu0 %v1830
    %v11713 = vpop.f32.mrf.mxu0
    %v11714 = vadd.f32 %v11700, %v11713
    %v11715 = vpop.f32.mrf.mxu0
    %v11716 = vadd.f32 %v11702, %v11715
    %11717 = vdwg.mxu0
    %11718 = vmatpush.bf16.msra.mxu0 %v7242
    %11719 = vmatpush.bf16.msra.mxu0 %v7234
    %11720 = vmatpush.bf16.msra.mxu0 %v7226
    %11721 = vmatpush.bf16.msra.mxu0 %v7218
    %11722 = vmatpush.bf16.msra.mxu0 %v7210
    %11723 = vmatpush.bf16.msra.mxu0 %v7202
    %11724 = vmatpush.bf16.msra.mxu0 %v7194
    %11725 = vmatpush.bf16.msra.mxu0 %v7186
    %11726 = vmatmul.bf16.gmra.mxu0 %v1831
    %v11727 = vpop.f32.mrf.mxu0
    %v11728 = vadd.f32 %v11714, %v11727
    %v11729 = vpop.f32.mrf.mxu0
    %v11730 = vadd.f32 %v11716, %v11729
    %11731 = vdwg.mxu0
    %11732 = vmatpush.bf16.msra.mxu0 %v7306
    %11733 = vmatpush.bf16.msra.mxu0 %v7298
    %11734 = vmatpush.bf16.msra.mxu0 %v7290
    %11735 = vmatpush.bf16.msra.mxu0 %v7282
    %11736 = vmatpush.bf16.msra.mxu0 %v7274
    %11737 = vmatpush.bf16.msra.mxu0 %v7266
    %11738 = vmatpush.bf16.msra.mxu0 %v7258
    %11739 = vmatpush.bf16.msra.mxu0 %v7250
    %11740 = vmatmul.bf16.gmra.mxu0 %v1832
    %v11741 = vpop.f32.mrf.mxu0
    %v11742 = vadd.f32 %v11728, %v11741
    %v11743 = vpop.f32.mrf.mxu0
    %v11744 = vadd.f32 %v11730, %v11743
    %11745 = vdwg.mxu0
    %11746 = vmatpush.bf16.msra.mxu0 %v7370
    %11747 = vmatpush.bf16.msra.mxu0 %v7362
    %11748 = vmatpush.bf16.msra.mxu0 %v7354
    %11749 = vmatpush.bf16.msra.mxu0 %v7346
    %11750 = vmatpush.bf16.msra.mxu0 %v7338
    %11751 = vmatpush.bf16.msra.mxu0 %v7330
    %11752 = vmatpush.bf16.msra.mxu0 %v7322
    %11753 = vmatpush.bf16.msra.mxu0 %v7314
    %11754 = vmatmul.bf16.gmra.mxu0 %v1833
    %v11755 = vpop.f32.mrf.mxu0
    %v11756 = vadd.f32 %v11742, %v11755
    %v11757 = vpop.f32.mrf.mxu0
    %v11758 = vadd.f32 %v11744, %v11757
    %11759 = vdwg.mxu0
    %11760 = vmatpush.bf16.msra.mxu0 %v7434
    %11761 = vmatpush.bf16.msra.mxu0 %v7426
    %11762 = vmatpush.bf16.msra.mxu0 %v7418
    %11763 = vmatpush.bf16.msra.mxu0 %v7410
    %11764 = vmatpush.bf16.msra.mxu0 %v7402
    %11765 = vmatpush.bf16.msra.mxu0 %v7394
    %11766 = vmatpush.bf16.msra.mxu0 %v7386
    %11767 = vmatpush.bf16.msra.mxu0 %v7378
    %11768 = vmatmul.bf16.gmra.mxu0 %v1834
    %v11769 = vpop.f32.mrf.mxu0
    %v11770 = vadd.f32 %v11756, %v11769
    %v11771 = vpop.f32.mrf.mxu0
    %v11772 = vadd.f32 %v11758, %v11771
    %11773 = vdwg.mxu0
    %11774 = vmatpush.bf16.msra.mxu0 %v7498
    %11775 = vmatpush.bf16.msra.mxu0 %v7490
    %11776 = vmatpush.bf16.msra.mxu0 %v7482
    %11777 = vmatpush.bf16.msra.mxu0 %v7474
    %11778 = vmatpush.bf16.msra.mxu0 %v7466
    %11779 = vmatpush.bf16.msra.mxu0 %v7458
    %11780 = vmatpush.bf16.msra.mxu0 %v7450
    %11781 = vmatpush.bf16.msra.mxu0 %v7442
    %11782 = vmatmul.bf16.gmra.mxu0 %v1835
    %v11783 = vpop.f32.mrf.mxu0
    %v11784 = vadd.f32 %v11770, %v11783
    %v11785 = vpop.f32.mrf.mxu0
    %v11786 = vadd.f32 %v11772, %v11785
    %11787 = vdwg.mxu0
    %11788 = vmatpush.bf16.msra.mxu0 %v7562
    %11789 = vmatpush.bf16.msra.mxu0 %v7554
    %11790 = vmatpush.bf16.msra.mxu0 %v7546
    %11791 = vmatpush.bf16.msra.mxu0 %v7538
    %11792 = vmatpush.bf16.msra.mxu0 %v7530
    %11793 = vmatpush.bf16.msra.mxu0 %v7522
    %11794 = vmatpush.bf16.msra.mxu0 %v7514
    %11795 = vmatpush.bf16.msra.mxu0 %v7506
    %11796 = vmatmul.bf16.gmra.mxu0 %v1836
    %v11797 = vpop.f32.mrf.mxu0
    %v11798 = vadd.f32 %v11784, %v11797
    %v11799 = vpop.f32.mrf.mxu0
    %v11800 = vadd.f32 %v11786, %v11799
    %11801 = vdwg.mxu0
    %11802 = vmatpush.bf16.msra.mxu0 %v7626
    %11803 = vmatpush.bf16.msra.mxu0 %v7618
    %11804 = vmatpush.bf16.msra.mxu0 %v7610
    %11805 = vmatpush.bf16.msra.mxu0 %v7602
    %11806 = vmatpush.bf16.msra.mxu0 %v7594
    %11807 = vmatpush.bf16.msra.mxu0 %v7586
    %11808 = vmatpush.bf16.msra.mxu0 %v7578
    %11809 = vmatpush.bf16.msra.mxu0 %v7570
    %11810 = vmatmul.bf16.gmra.mxu0 %v1837
    %v11811 = vpop.f32.mrf.mxu0
    %v11812 = vadd.f32 %v11798, %v11811
    %v11813 = vpop.f32.mrf.mxu0
    %v11814 = vadd.f32 %v11800, %v11813
    %11815 = vdwg.mxu0
    %11816 = vmatpush.bf16.msra.mxu0 %v7690
    %11817 = vmatpush.bf16.msra.mxu0 %v7682
    %11818 = vmatpush.bf16.msra.mxu0 %v7674
    %11819 = vmatpush.bf16.msra.mxu0 %v7666
    %11820 = vmatpush.bf16.msra.mxu0 %v7658
    %11821 = vmatpush.bf16.msra.mxu0 %v7650
    %11822 = vmatpush.bf16.msra.mxu0 %v7642
    %11823 = vmatpush.bf16.msra.mxu0 %v7634
    %11824 = vmatmul.bf16.gmra.mxu0 %v1838
    %v11825 = vpop.f32.mrf.mxu0
    %v11826 = vadd.f32 %v11812, %v11825
    %v11827 = vpop.f32.mrf.mxu0
    %v11828 = vadd.f32 %v11814, %v11827
    %11829 = vdwg.mxu0
    %11830 = vmatpush.bf16.msra.mxu0 %v7754
    %11831 = vmatpush.bf16.msra.mxu0 %v7746
    %11832 = vmatpush.bf16.msra.mxu0 %v7738
    %11833 = vmatpush.bf16.msra.mxu0 %v7730
    %11834 = vmatpush.bf16.msra.mxu0 %v7722
    %11835 = vmatpush.bf16.msra.mxu0 %v7714
    %11836 = vmatpush.bf16.msra.mxu0 %v7706
    %11837 = vmatpush.bf16.msra.mxu0 %v7698
    %11838 = vmatmul.bf16.gmra.mxu0 %v1839
    %v11839 = vpop.f32.mrf.mxu0
    %v11840 = vadd.f32 %v11826, %v11839
    %v11841 = vpop.f32.mrf.mxu0
    %v11842 = vadd.f32 %v11828, %v11841
    %11843 = vdwg.mxu0
    %11844 = vmatpush.bf16.msra.mxu0 %v7818
    %11845 = vmatpush.bf16.msra.mxu0 %v7810
    %11846 = vmatpush.bf16.msra.mxu0 %v7802
    %11847 = vmatpush.bf16.msra.mxu0 %v7794
    %11848 = vmatpush.bf16.msra.mxu0 %v7786
    %11849 = vmatpush.bf16.msra.mxu0 %v7778
    %11850 = vmatpush.bf16.msra.mxu0 %v7770
    %11851 = vmatpush.bf16.msra.mxu0 %v7762
    %11852 = vmatmul.bf16.gmra.mxu0 %v1840
    %v11853 = vpop.f32.mrf.mxu0
    %v11854 = vadd.f32 %v11840, %v11853
    %v11855 = vpop.f32.mrf.mxu0
    %v11856 = vadd.f32 %v11842, %v11855
    %11857 = vdwg.mxu0
    %11858 = vmatpush.bf16.msra.mxu0 %v7882
    %11859 = vmatpush.bf16.msra.mxu0 %v7874
    %11860 = vmatpush.bf16.msra.mxu0 %v7866
    %11861 = vmatpush.bf16.msra.mxu0 %v7858
    %11862 = vmatpush.bf16.msra.mxu0 %v7850
    %11863 = vmatpush.bf16.msra.mxu0 %v7842
    %11864 = vmatpush.bf16.msra.mxu0 %v7834
    %11865 = vmatpush.bf16.msra.mxu0 %v7826
    %11866 = vmatmul.bf16.gmra.mxu0 %v1841
    %v11867 = vpop.f32.mrf.mxu0
    %v11868 = vadd.f32 %v11854, %v11867
    %v11869 = vpop.f32.mrf.mxu0
    %v11870 = vadd.f32 %v11856, %v11869
    %11871 = vdwg.mxu0
    %11872 = vmatpush.bf16.msra.mxu0 %v7946
    %11873 = vmatpush.bf16.msra.mxu0 %v7938
    %11874 = vmatpush.bf16.msra.mxu0 %v7930
    %11875 = vmatpush.bf16.msra.mxu0 %v7922
    %11876 = vmatpush.bf16.msra.mxu0 %v7914
    %11877 = vmatpush.bf16.msra.mxu0 %v7906
    %11878 = vmatpush.bf16.msra.mxu0 %v7898
    %11879 = vmatpush.bf16.msra.mxu0 %v7890
    %11880 = vmatmul.bf16.gmra.mxu0 %v1842
    %v11881 = vpop.f32.mrf.mxu0
    %v11882 = vadd.f32 %v11868, %v11881
    %v11883 = vpop.f32.mrf.mxu0
    %v11884 = vadd.f32 %v11870, %v11883
    %11885 = vdwg.mxu0
    %11886 = vmatpush.bf16.msra.mxu0 %v8010
    %11887 = vmatpush.bf16.msra.mxu0 %v8002
    %11888 = vmatpush.bf16.msra.mxu0 %v7994
    %11889 = vmatpush.bf16.msra.mxu0 %v7986
    %11890 = vmatpush.bf16.msra.mxu0 %v7978
    %11891 = vmatpush.bf16.msra.mxu0 %v7970
    %11892 = vmatpush.bf16.msra.mxu0 %v7962
    %11893 = vmatpush.bf16.msra.mxu0 %v7954
    %11894 = vmatmul.bf16.gmra.mxu0 %v1843
    %v11895 = vpop.f32.mrf.mxu0
    %v11896 = vadd.f32 %v11882, %v11895
    %v11897 = vpop.f32.mrf.mxu0
    %v11898 = vadd.f32 %v11884, %v11897
    %11899 = vdwg.mxu0
    %11900 = vmatpush.bf16.msra.mxu0 %v6539
    %11901 = vmatpush.bf16.msra.mxu0 %v6531
    %11902 = vmatpush.bf16.msra.mxu0 %v6523
    %11903 = vmatpush.bf16.msra.mxu0 %v6515
    %11904 = vmatpush.bf16.msra.mxu0 %v6507
    %11905 = vmatpush.bf16.msra.mxu0 %v6499
    %11906 = vmatpush.bf16.msra.mxu0 %v6491
    %11907 = vmatpush.bf16.msra.mxu0 %v6483
    %11908 = vmatmul.bf16.gmra.mxu0 %v1820
    %v11909 = vpop.f32.mrf.mxu0
    %v11910 = vadd.f32 %v1739, %v11909
    %v11911 = vpop.f32.mrf.mxu0
    %v11912 = vadd.f32 %v1739, %v11911
    %11913 = vdwg.mxu0
    %11914 = vmatpush.bf16.msra.mxu0 %v6603
    %11915 = vmatpush.bf16.msra.mxu0 %v6595
    %11916 = vmatpush.bf16.msra.mxu0 %v6587
    %11917 = vmatpush.bf16.msra.mxu0 %v6579
    %11918 = vmatpush.bf16.msra.mxu0 %v6571
    %11919 = vmatpush.bf16.msra.mxu0 %v6563
    %11920 = vmatpush.bf16.msra.mxu0 %v6555
    %11921 = vmatpush.bf16.msra.mxu0 %v6547
    %11922 = vmatmul.bf16.gmra.mxu0 %v1821
    %v11923 = vpop.f32.mrf.mxu0
    %v11924 = vadd.f32 %v11910, %v11923
    %v11925 = vpop.f32.mrf.mxu0
    %v11926 = vadd.f32 %v11912, %v11925
    %11927 = vdwg.mxu0
    %11928 = vmatpush.bf16.msra.mxu0 %v6667
    %11929 = vmatpush.bf16.msra.mxu0 %v6659
    %11930 = vmatpush.bf16.msra.mxu0 %v6651
    %11931 = vmatpush.bf16.msra.mxu0 %v6643
    %11932 = vmatpush.bf16.msra.mxu0 %v6635
    %11933 = vmatpush.bf16.msra.mxu0 %v6627
    %11934 = vmatpush.bf16.msra.mxu0 %v6619
    %11935 = vmatpush.bf16.msra.mxu0 %v6611
    %11936 = vmatmul.bf16.gmra.mxu0 %v1822
    %v11937 = vpop.f32.mrf.mxu0
    %v11938 = vadd.f32 %v11924, %v11937
    %v11939 = vpop.f32.mrf.mxu0
    %v11940 = vadd.f32 %v11926, %v11939
    %11941 = vdwg.mxu0
    %11942 = vmatpush.bf16.msra.mxu0 %v6731
    %11943 = vmatpush.bf16.msra.mxu0 %v6723
    %11944 = vmatpush.bf16.msra.mxu0 %v6715
    %11945 = vmatpush.bf16.msra.mxu0 %v6707
    %11946 = vmatpush.bf16.msra.mxu0 %v6699
    %11947 = vmatpush.bf16.msra.mxu0 %v6691
    %11948 = vmatpush.bf16.msra.mxu0 %v6683
    %11949 = vmatpush.bf16.msra.mxu0 %v6675
    %11950 = vmatmul.bf16.gmra.mxu0 %v1823
    %v11951 = vpop.f32.mrf.mxu0
    %v11952 = vadd.f32 %v11938, %v11951
    %v11953 = vpop.f32.mrf.mxu0
    %v11954 = vadd.f32 %v11940, %v11953
    %11955 = vdwg.mxu0
    %11956 = vmatpush.bf16.msra.mxu0 %v6795
    %11957 = vmatpush.bf16.msra.mxu0 %v6787
    %11958 = vmatpush.bf16.msra.mxu0 %v6779
    %11959 = vmatpush.bf16.msra.mxu0 %v6771
    %11960 = vmatpush.bf16.msra.mxu0 %v6763
    %11961 = vmatpush.bf16.msra.mxu0 %v6755
    %11962 = vmatpush.bf16.msra.mxu0 %v6747
    %11963 = vmatpush.bf16.msra.mxu0 %v6739
    %11964 = vmatmul.bf16.gmra.mxu0 %v1824
    %v11965 = vpop.f32.mrf.mxu0
    %v11966 = vadd.f32 %v11952, %v11965
    %v11967 = vpop.f32.mrf.mxu0
    %v11968 = vadd.f32 %v11954, %v11967
    %11969 = vdwg.mxu0
    %11970 = vmatpush.bf16.msra.mxu0 %v6859
    %11971 = vmatpush.bf16.msra.mxu0 %v6851
    %11972 = vmatpush.bf16.msra.mxu0 %v6843
    %11973 = vmatpush.bf16.msra.mxu0 %v6835
    %11974 = vmatpush.bf16.msra.mxu0 %v6827
    %11975 = vmatpush.bf16.msra.mxu0 %v6819
    %11976 = vmatpush.bf16.msra.mxu0 %v6811
    %11977 = vmatpush.bf16.msra.mxu0 %v6803
    %11978 = vmatmul.bf16.gmra.mxu0 %v1825
    %v11979 = vpop.f32.mrf.mxu0
    %v11980 = vadd.f32 %v11966, %v11979
    %v11981 = vpop.f32.mrf.mxu0
    %v11982 = vadd.f32 %v11968, %v11981
    %11983 = vdwg.mxu0
    %11984 = vmatpush.bf16.msra.mxu0 %v6923
    %11985 = vmatpush.bf16.msra.mxu0 %v6915
    %11986 = vmatpush.bf16.msra.mxu0 %v6907
    %11987 = vmatpush.bf16.msra.mxu0 %v6899
    %11988 = vmatpush.bf16.msra.mxu0 %v6891
    %11989 = vmatpush.bf16.msra.mxu0 %v6883
    %11990 = vmatpush.bf16.msra.mxu0 %v6875
    %11991 = vmatpush.bf16.msra.mxu0 %v6867
    %11992 = vmatmul.bf16.gmra.mxu0 %v1826
    %v11993 = vpop.f32.mrf.mxu0
    %v11994 = vadd.f32 %v11980, %v11993
    %v11995 = vpop.f32.mrf.mxu0
    %v11996 = vadd.f32 %v11982, %v11995
    %11997 = vdwg.mxu0
    %11998 = vmatpush.bf16.msra.mxu0 %v6987
    %11999 = vmatpush.bf16.msra.mxu0 %v6979
    %12000 = vmatpush.bf16.msra.mxu0 %v6971
    %12001 = vmatpush.bf16.msra.mxu0 %v6963
    %12002 = vmatpush.bf16.msra.mxu0 %v6955
    %12003 = vmatpush.bf16.msra.mxu0 %v6947
    %12004 = vmatpush.bf16.msra.mxu0 %v6939
    %12005 = vmatpush.bf16.msra.mxu0 %v6931
    %12006 = vmatmul.bf16.gmra.mxu0 %v1827
    %v12007 = vpop.f32.mrf.mxu0
    %v12008 = vadd.f32 %v11994, %v12007
    %v12009 = vpop.f32.mrf.mxu0
    %v12010 = vadd.f32 %v11996, %v12009
    %12011 = vdwg.mxu0
    %12012 = vmatpush.bf16.msra.mxu0 %v7051
    %12013 = vmatpush.bf16.msra.mxu0 %v7043
    %12014 = vmatpush.bf16.msra.mxu0 %v7035
    %12015 = vmatpush.bf16.msra.mxu0 %v7027
    %12016 = vmatpush.bf16.msra.mxu0 %v7019
    %12017 = vmatpush.bf16.msra.mxu0 %v7011
    %12018 = vmatpush.bf16.msra.mxu0 %v7003
    %12019 = vmatpush.bf16.msra.mxu0 %v6995
    %12020 = vmatmul.bf16.gmra.mxu0 %v1828
    %v12021 = vpop.f32.mrf.mxu0
    %v12022 = vadd.f32 %v12008, %v12021
    %v12023 = vpop.f32.mrf.mxu0
    %v12024 = vadd.f32 %v12010, %v12023
    %12025 = vdwg.mxu0
    %12026 = vmatpush.bf16.msra.mxu0 %v7115
    %12027 = vmatpush.bf16.msra.mxu0 %v7107
    %12028 = vmatpush.bf16.msra.mxu0 %v7099
    %12029 = vmatpush.bf16.msra.mxu0 %v7091
    %12030 = vmatpush.bf16.msra.mxu0 %v7083
    %12031 = vmatpush.bf16.msra.mxu0 %v7075
    %12032 = vmatpush.bf16.msra.mxu0 %v7067
    %12033 = vmatpush.bf16.msra.mxu0 %v7059
    %12034 = vmatmul.bf16.gmra.mxu0 %v1829
    %v12035 = vpop.f32.mrf.mxu0
    %v12036 = vadd.f32 %v12022, %v12035
    %v12037 = vpop.f32.mrf.mxu0
    %v12038 = vadd.f32 %v12024, %v12037
    %12039 = vdwg.mxu0
    %12040 = vmatpush.bf16.msra.mxu0 %v7179
    %12041 = vmatpush.bf16.msra.mxu0 %v7171
    %12042 = vmatpush.bf16.msra.mxu0 %v7163
    %12043 = vmatpush.bf16.msra.mxu0 %v7155
    %12044 = vmatpush.bf16.msra.mxu0 %v7147
    %12045 = vmatpush.bf16.msra.mxu0 %v7139
    %12046 = vmatpush.bf16.msra.mxu0 %v7131
    %12047 = vmatpush.bf16.msra.mxu0 %v7123
    %12048 = vmatmul.bf16.gmra.mxu0 %v1830
    %v12049 = vpop.f32.mrf.mxu0
    %v12050 = vadd.f32 %v12036, %v12049
    %v12051 = vpop.f32.mrf.mxu0
    %v12052 = vadd.f32 %v12038, %v12051
    %12053 = vdwg.mxu0
    %12054 = vmatpush.bf16.msra.mxu0 %v7243
    %12055 = vmatpush.bf16.msra.mxu0 %v7235
    %12056 = vmatpush.bf16.msra.mxu0 %v7227
    %12057 = vmatpush.bf16.msra.mxu0 %v7219
    %12058 = vmatpush.bf16.msra.mxu0 %v7211
    %12059 = vmatpush.bf16.msra.mxu0 %v7203
    %12060 = vmatpush.bf16.msra.mxu0 %v7195
    %12061 = vmatpush.bf16.msra.mxu0 %v7187
    %12062 = vmatmul.bf16.gmra.mxu0 %v1831
    %v12063 = vpop.f32.mrf.mxu0
    %v12064 = vadd.f32 %v12050, %v12063
    %v12065 = vpop.f32.mrf.mxu0
    %v12066 = vadd.f32 %v12052, %v12065
    %12067 = vdwg.mxu0
    %12068 = vmatpush.bf16.msra.mxu0 %v7307
    %12069 = vmatpush.bf16.msra.mxu0 %v7299
    %12070 = vmatpush.bf16.msra.mxu0 %v7291
    %12071 = vmatpush.bf16.msra.mxu0 %v7283
    %12072 = vmatpush.bf16.msra.mxu0 %v7275
    %12073 = vmatpush.bf16.msra.mxu0 %v7267
    %12074 = vmatpush.bf16.msra.mxu0 %v7259
    %12075 = vmatpush.bf16.msra.mxu0 %v7251
    %12076 = vmatmul.bf16.gmra.mxu0 %v1832
    %v12077 = vpop.f32.mrf.mxu0
    %v12078 = vadd.f32 %v12064, %v12077
    %v12079 = vpop.f32.mrf.mxu0
    %v12080 = vadd.f32 %v12066, %v12079
    %12081 = vdwg.mxu0
    %12082 = vmatpush.bf16.msra.mxu0 %v7371
    %12083 = vmatpush.bf16.msra.mxu0 %v7363
    %12084 = vmatpush.bf16.msra.mxu0 %v7355
    %12085 = vmatpush.bf16.msra.mxu0 %v7347
    %12086 = vmatpush.bf16.msra.mxu0 %v7339
    %12087 = vmatpush.bf16.msra.mxu0 %v7331
    %12088 = vmatpush.bf16.msra.mxu0 %v7323
    %12089 = vmatpush.bf16.msra.mxu0 %v7315
    %12090 = vmatmul.bf16.gmra.mxu0 %v1833
    %v12091 = vpop.f32.mrf.mxu0
    %v12092 = vadd.f32 %v12078, %v12091
    %v12093 = vpop.f32.mrf.mxu0
    %v12094 = vadd.f32 %v12080, %v12093
    %12095 = vdwg.mxu0
    %12096 = vmatpush.bf16.msra.mxu0 %v7435
    %12097 = vmatpush.bf16.msra.mxu0 %v7427
    %12098 = vmatpush.bf16.msra.mxu0 %v7419
    %12099 = vmatpush.bf16.msra.mxu0 %v7411
    %12100 = vmatpush.bf16.msra.mxu0 %v7403
    %12101 = vmatpush.bf16.msra.mxu0 %v7395
    %12102 = vmatpush.bf16.msra.mxu0 %v7387
    %12103 = vmatpush.bf16.msra.mxu0 %v7379
    %12104 = vmatmul.bf16.gmra.mxu0 %v1834
    %v12105 = vpop.f32.mrf.mxu0
    %v12106 = vadd.f32 %v12092, %v12105
    %v12107 = vpop.f32.mrf.mxu0
    %v12108 = vadd.f32 %v12094, %v12107
    %12109 = vdwg.mxu0
    %12110 = vmatpush.bf16.msra.mxu0 %v7499
    %12111 = vmatpush.bf16.msra.mxu0 %v7491
    %12112 = vmatpush.bf16.msra.mxu0 %v7483
    %12113 = vmatpush.bf16.msra.mxu0 %v7475
    %12114 = vmatpush.bf16.msra.mxu0 %v7467
    %12115 = vmatpush.bf16.msra.mxu0 %v7459
    %12116 = vmatpush.bf16.msra.mxu0 %v7451
    %12117 = vmatpush.bf16.msra.mxu0 %v7443
    %12118 = vmatmul.bf16.gmra.mxu0 %v1835
    %v12119 = vpop.f32.mrf.mxu0
    %v12120 = vadd.f32 %v12106, %v12119
    %v12121 = vpop.f32.mrf.mxu0
    %v12122 = vadd.f32 %v12108, %v12121
    %12123 = vdwg.mxu0
    %12124 = vmatpush.bf16.msra.mxu0 %v7563
    %12125 = vmatpush.bf16.msra.mxu0 %v7555
    %12126 = vmatpush.bf16.msra.mxu0 %v7547
    %12127 = vmatpush.bf16.msra.mxu0 %v7539
    %12128 = vmatpush.bf16.msra.mxu0 %v7531
    %12129 = vmatpush.bf16.msra.mxu0 %v7523
    %12130 = vmatpush.bf16.msra.mxu0 %v7515
    %12131 = vmatpush.bf16.msra.mxu0 %v7507
    %12132 = vmatmul.bf16.gmra.mxu0 %v1836
    %v12133 = vpop.f32.mrf.mxu0
    %v12134 = vadd.f32 %v12120, %v12133
    %v12135 = vpop.f32.mrf.mxu0
    %v12136 = vadd.f32 %v12122, %v12135
    %12137 = vdwg.mxu0
    %12138 = vmatpush.bf16.msra.mxu0 %v7627
    %12139 = vmatpush.bf16.msra.mxu0 %v7619
    %12140 = vmatpush.bf16.msra.mxu0 %v7611
    %12141 = vmatpush.bf16.msra.mxu0 %v7603
    %12142 = vmatpush.bf16.msra.mxu0 %v7595
    %12143 = vmatpush.bf16.msra.mxu0 %v7587
    %12144 = vmatpush.bf16.msra.mxu0 %v7579
    %12145 = vmatpush.bf16.msra.mxu0 %v7571
    %12146 = vmatmul.bf16.gmra.mxu0 %v1837
    %v12147 = vpop.f32.mrf.mxu0
    %v12148 = vadd.f32 %v12134, %v12147
    %v12149 = vpop.f32.mrf.mxu0
    %v12150 = vadd.f32 %v12136, %v12149
    %12151 = vdwg.mxu0
    %12152 = vmatpush.bf16.msra.mxu0 %v7691
    %12153 = vmatpush.bf16.msra.mxu0 %v7683
    %12154 = vmatpush.bf16.msra.mxu0 %v7675
    %12155 = vmatpush.bf16.msra.mxu0 %v7667
    %12156 = vmatpush.bf16.msra.mxu0 %v7659
    %12157 = vmatpush.bf16.msra.mxu0 %v7651
    %12158 = vmatpush.bf16.msra.mxu0 %v7643
    %12159 = vmatpush.bf16.msra.mxu0 %v7635
    %12160 = vmatmul.bf16.gmra.mxu0 %v1838
    %v12161 = vpop.f32.mrf.mxu0
    %v12162 = vadd.f32 %v12148, %v12161
    %v12163 = vpop.f32.mrf.mxu0
    %v12164 = vadd.f32 %v12150, %v12163
    %12165 = vdwg.mxu0
    %12166 = vmatpush.bf16.msra.mxu0 %v7755
    %12167 = vmatpush.bf16.msra.mxu0 %v7747
    %12168 = vmatpush.bf16.msra.mxu0 %v7739
    %12169 = vmatpush.bf16.msra.mxu0 %v7731
    %12170 = vmatpush.bf16.msra.mxu0 %v7723
    %12171 = vmatpush.bf16.msra.mxu0 %v7715
    %12172 = vmatpush.bf16.msra.mxu0 %v7707
    %12173 = vmatpush.bf16.msra.mxu0 %v7699
    %12174 = vmatmul.bf16.gmra.mxu0 %v1839
    %v12175 = vpop.f32.mrf.mxu0
    %v12176 = vadd.f32 %v12162, %v12175
    %v12177 = vpop.f32.mrf.mxu0
    %v12178 = vadd.f32 %v12164, %v12177
    %12179 = vdwg.mxu0
    %12180 = vmatpush.bf16.msra.mxu0 %v7819
    %12181 = vmatpush.bf16.msra.mxu0 %v7811
    %12182 = vmatpush.bf16.msra.mxu0 %v7803
    %12183 = vmatpush.bf16.msra.mxu0 %v7795
    %12184 = vmatpush.bf16.msra.mxu0 %v7787
    %12185 = vmatpush.bf16.msra.mxu0 %v7779
    %12186 = vmatpush.bf16.msra.mxu0 %v7771
    %12187 = vmatpush.bf16.msra.mxu0 %v7763
    %12188 = vmatmul.bf16.gmra.mxu0 %v1840
    %v12189 = vpop.f32.mrf.mxu0
    %v12190 = vadd.f32 %v12176, %v12189
    %v12191 = vpop.f32.mrf.mxu0
    %v12192 = vadd.f32 %v12178, %v12191
    %12193 = vdwg.mxu0
    %12194 = vmatpush.bf16.msra.mxu0 %v7883
    %12195 = vmatpush.bf16.msra.mxu0 %v7875
    %12196 = vmatpush.bf16.msra.mxu0 %v7867
    %12197 = vmatpush.bf16.msra.mxu0 %v7859
    %12198 = vmatpush.bf16.msra.mxu0 %v7851
    %12199 = vmatpush.bf16.msra.mxu0 %v7843
    %12200 = vmatpush.bf16.msra.mxu0 %v7835
    %12201 = vmatpush.bf16.msra.mxu0 %v7827
    %12202 = vmatmul.bf16.gmra.mxu0 %v1841
    %v12203 = vpop.f32.mrf.mxu0
    %v12204 = vadd.f32 %v12190, %v12203
    %v12205 = vpop.f32.mrf.mxu0
    %v12206 = vadd.f32 %v12192, %v12205
    %12207 = vdwg.mxu0
    %12208 = vmatpush.bf16.msra.mxu0 %v7947
    %12209 = vmatpush.bf16.msra.mxu0 %v7939
    %12210 = vmatpush.bf16.msra.mxu0 %v7931
    %12211 = vmatpush.bf16.msra.mxu0 %v7923
    %12212 = vmatpush.bf16.msra.mxu0 %v7915
    %12213 = vmatpush.bf16.msra.mxu0 %v7907
    %12214 = vmatpush.bf16.msra.mxu0 %v7899
    %12215 = vmatpush.bf16.msra.mxu0 %v7891
    %12216 = vmatmul.bf16.gmra.mxu0 %v1842
    %v12217 = vpop.f32.mrf.mxu0
    %v12218 = vadd.f32 %v12204, %v12217
    %v12219 = vpop.f32.mrf.mxu0
    %v12220 = vadd.f32 %v12206, %v12219
    %12221 = vdwg.mxu0
    %12222 = vmatpush.bf16.msra.mxu0 %v8011
    %12223 = vmatpush.bf16.msra.mxu0 %v8003
    %12224 = vmatpush.bf16.msra.mxu0 %v7995
    %12225 = vmatpush.bf16.msra.mxu0 %v7987
    %12226 = vmatpush.bf16.msra.mxu0 %v7979
    %12227 = vmatpush.bf16.msra.mxu0 %v7971
    %12228 = vmatpush.bf16.msra.mxu0 %v7963
    %12229 = vmatpush.bf16.msra.mxu0 %v7955
    %12230 = vmatmul.bf16.gmra.mxu0 %v1843
    %v12231 = vpop.f32.mrf.mxu0
    %v12232 = vadd.f32 %v12218, %v12231
    %v12233 = vpop.f32.mrf.mxu0
    %v12234 = vadd.f32 %v12220, %v12233
    %12235 = vdwg.mxu0
    %v12236 = vmax.f32 %v9880, 0.0
    %v12237 = vmax.f32 %v10216, 0.0
    %v12238 = vmax.f32 %v10552, 0.0
    %v12239 = vmax.f32 %v10888, 0.0
    %v12240 = vmax.f32 %v11224, 0.0
    %v12241 = vmax.f32 %v11560, 0.0
    %v12242 = vmax.f32 %v11896, 0.0
    %v12243 = vmax.f32 %v12232, 0.0
    %v12244 = vmax.f32 %v9882, 0.0
    %v12245 = vmax.f32 %v10218, 0.0
    %v12246 = vmax.f32 %v10554, 0.0
    %v12247 = vmax.f32 %v10890, 0.0
    %v12248 = vmax.f32 %v11226, 0.0
    %v12249 = vmax.f32 %v11562, 0.0
    %v12250 = vmax.f32 %v11898, 0.0
    %v12251 = vmax.f32 %v12234, 0.0
    %v12252 = vpack.c.bf16 %v12244, %v12236
    %v12253 = vpack.c.bf16 %v12245, %v12237
    %v12254 = vpack.c.bf16 %v12246, %v12238
    %v12255 = vpack.c.bf16 %v12247, %v12239
    %v12256 = vpack.c.bf16 %v12248, %v12240
    %v12257 = vpack.c.bf16 %v12249, %v12241
    %v12258 = vpack.c.bf16 %v12250, %v12242
    %v12259 = vpack.c.bf16 %v12251, %v12243
    %v12260 = vld [vmem:[#allocation6] sm:$0xff]
    %v12261 = vld [vmem:[#allocation6 + $0x8] sm:$0xff]
    %v12262 = vld [vmem:[#allocation6 + $0x10] sm:$0xff]
    %v12263 = vld [vmem:[#allocation6 + $0x18] sm:$0xff]
    %v12264 = vld [vmem:[#allocation6 + $0x20] sm:$0xff]
    %v12265 = vld [vmem:[#allocation6 + $0x28] sm:$0xff]
    %v12266 = vld [vmem:[#allocation6 + $0x30] sm:$0xff]
    %v12267 = vld [vmem:[#allocation6 + $0x38] sm:$0xff]
    %v12268 = vld [vmem:[#allocation6 + $0x40] sm:$0xff]
    %v12269 = vld [vmem:[#allocation6 + $0x48] sm:$0xff]
    %v12270 = vld [vmem:[#allocation6 + $0x50] sm:$0xff]
    %v12271 = vld [vmem:[#allocation6 + $0x58] sm:$0xff]
    %v12272 = vld [vmem:[#allocation6 + $0x60] sm:$0xff]
    %v12273 = vld [vmem:[#allocation6 + $0x68] sm:$0xff]
    %v12274 = vld [vmem:[#allocation6 + $0x70] sm:$0xff]
    %v12275 = vld [vmem:[#allocation6 + $0x78] sm:$0xff]
    %v12276 = vld [vmem:[#allocation6 + $0x80] sm:$0xff]
    %v12277 = vld [vmem:[#allocation6 + $0x88] sm:$0xff]
    %v12278 = vld [vmem:[#allocation6 + $0x90] sm:$0xff]
    %v12279 = vld [vmem:[#allocation6 + $0x98] sm:$0xff]
    %v12280 = vld [vmem:[#allocation6 + $0xa0] sm:$0xff]
    %v12281 = vld [vmem:[#allocation6 + $0xa8] sm:$0xff]
    %v12282 = vld [vmem:[#allocation6 + $0xb0] sm:$0xff]
    %v12283 = vld [vmem:[#allocation6 + $0xb8] sm:$0xff]
    %v12284 = vld [vmem:[#allocation6 + $0xc0] sm:$0xff]
    %v12285 = vld [vmem:[#allocation6 + $0xc8] sm:$0xff]
    %v12286 = vld [vmem:[#allocation6 + $0xd0] sm:$0xff]
    %v12287 = vld [vmem:[#allocation6 + $0xd8] sm:$0xff]
    %v12288 = vld [vmem:[#allocation6 + $0xe0] sm:$0xff]
    %v12289 = vld [vmem:[#allocation6 + $0xe8] sm:$0xff]
    %v12290 = vld [vmem:[#allocation6 + $0xf0] sm:$0xff]
    %v12291 = vld [vmem:[#allocation6 + $0xf8] sm:$0xff]
    %v12292 = vld [vmem:[#allocation6 + $0x100] sm:$0xff]
    %v12293 = vld [vmem:[#allocation6 + $0x108] sm:$0xff]
    %v12294 = vld [vmem:[#allocation6 + $0x110] sm:$0xff]
    %v12295 = vld [vmem:[#allocation6 + $0x118] sm:$0xff]
    %v12296 = vld [vmem:[#allocation6 + $0x120] sm:$0xff]
    %v12297 = vld [vmem:[#allocation6 + $0x128] sm:$0xff]
    %v12298 = vld [vmem:[#allocation6 + $0x130] sm:$0xff]
    %v12299 = vld [vmem:[#allocation6 + $0x138] sm:$0xff]
    %v12300 = vld [vmem:[#allocation6 + $0x140] sm:$0xff]
    %v12301 = vld [vmem:[#allocation6 + $0x148] sm:$0xff]
    %v12302 = vld [vmem:[#allocation6 + $0x150] sm:$0xff]
    %v12303 = vld [vmem:[#allocation6 + $0x158] sm:$0xff]
    %v12304 = vld [vmem:[#allocation6 + $0x160] sm:$0xff]
    %v12305 = vld [vmem:[#allocation6 + $0x168] sm:$0xff]
    %v12306 = vld [vmem:[#allocation6 + $0x170] sm:$0xff]
    %v12307 = vld [vmem:[#allocation6 + $0x178] sm:$0xff]
    %v12308 = vld [vmem:[#allocation6 + $0x180] sm:$0xff]
    %v12309 = vld [vmem:[#allocation6 + $0x188] sm:$0xff]
    %v12310 = vld [vmem:[#allocation6 + $0x190] sm:$0xff]
    %v12311 = vld [vmem:[#allocation6 + $0x198] sm:$0xff]
    %v12312 = vld [vmem:[#allocation6 + $0x1a0] sm:$0xff]
    %v12313 = vld [vmem:[#allocation6 + $0x1a8] sm:$0xff]
    %v12314 = vld [vmem:[#allocation6 + $0x1b0] sm:$0xff]
    %v12315 = vld [vmem:[#allocation6 + $0x1b8] sm:$0xff]
    %v12316 = vld [vmem:[#allocation6 + $0x1c0] sm:$0xff]
    %v12317 = vld [vmem:[#allocation6 + $0x1c8] sm:$0xff]
    %v12318 = vld [vmem:[#allocation6 + $0x1d0] sm:$0xff]
    %v12319 = vld [vmem:[#allocation6 + $0x1d8] sm:$0xff]
    %v12320 = vld [vmem:[#allocation6 + $0x1e0] sm:$0xff]
    %v12321 = vld [vmem:[#allocation6 + $0x1e8] sm:$0xff]
    %v12322 = vld [vmem:[#allocation6 + $0x1f0] sm:$0xff]
    %v12323 = vld [vmem:[#allocation6 + $0x1f8] sm:$0xff]
    %v12324 = vld [vmem:[#allocation6 + $0x200] sm:$0xff]
    %v12325 = vld [vmem:[#allocation6 + $0x208] sm:$0xff]
    %v12326 = vld [vmem:[#allocation6 + $0x210] sm:$0xff]
    %v12327 = vld [vmem:[#allocation6 + $0x218] sm:$0xff]
    %v12328 = vld [vmem:[#allocation6 + $0x220] sm:$0xff]
    %v12329 = vld [vmem:[#allocation6 + $0x228] sm:$0xff]
    %v12330 = vld [vmem:[#allocation6 + $0x230] sm:$0xff]
    %v12331 = vld [vmem:[#allocation6 + $0x238] sm:$0xff]
    %v12332 = vld [vmem:[#allocation6 + $0x240] sm:$0xff]
    %v12333 = vld [vmem:[#allocation6 + $0x248] sm:$0xff]
    %v12334 = vld [vmem:[#allocation6 + $0x250] sm:$0xff]
    %v12335 = vld [vmem:[#allocation6 + $0x258] sm:$0xff]
    %v12336 = vld [vmem:[#allocation6 + $0x260] sm:$0xff]
    %v12337 = vld [vmem:[#allocation6 + $0x268] sm:$0xff]
    %v12338 = vld [vmem:[#allocation6 + $0x270] sm:$0xff]
    %v12339 = vld [vmem:[#allocation6 + $0x278] sm:$0xff]
    %v12340 = vld [vmem:[#allocation6 + $0x280] sm:$0xff]
    %v12341 = vld [vmem:[#allocation6 + $0x288] sm:$0xff]
    %v12342 = vld [vmem:[#allocation6 + $0x290] sm:$0xff]
    %v12343 = vld [vmem:[#allocation6 + $0x298] sm:$0xff]
    %v12344 = vld [vmem:[#allocation6 + $0x2a0] sm:$0xff]
    %v12345 = vld [vmem:[#allocation6 + $0x2a8] sm:$0xff]
    %v12346 = vld [vmem:[#allocation6 + $0x2b0] sm:$0xff]
    %v12347 = vld [vmem:[#allocation6 + $0x2b8] sm:$0xff]
    %v12348 = vld [vmem:[#allocation6 + $0x2c0] sm:$0xff]
    %v12349 = vld [vmem:[#allocation6 + $0x2c8] sm:$0xff]
    %v12350 = vld [vmem:[#allocation6 + $0x2d0] sm:$0xff]
    %v12351 = vld [vmem:[#allocation6 + $0x2d8] sm:$0xff]
    %v12352 = vld [vmem:[#allocation6 + $0x2e0] sm:$0xff]
    %v12353 = vld [vmem:[#allocation6 + $0x2e8] sm:$0xff]
    %v12354 = vld [vmem:[#allocation6 + $0x2f0] sm:$0xff]
    %v12355 = vld [vmem:[#allocation6 + $0x2f8] sm:$0xff]
    %v12356 = vld [vmem:[#allocation6 + $0x300] sm:$0xff]
    %v12357 = vld [vmem:[#allocation6 + $0x308] sm:$0xff]
    %v12358 = vld [vmem:[#allocation6 + $0x310] sm:$0xff]
    %v12359 = vld [vmem:[#allocation6 + $0x318] sm:$0xff]
    %v12360 = vld [vmem:[#allocation6 + $0x320] sm:$0xff]
    %v12361 = vld [vmem:[#allocation6 + $0x328] sm:$0xff]
    %v12362 = vld [vmem:[#allocation6 + $0x330] sm:$0xff]
    %v12363 = vld [vmem:[#allocation6 + $0x338] sm:$0xff]
    %v12364 = vld [vmem:[#allocation6 + $0x340] sm:$0xff]
    %v12365 = vld [vmem:[#allocation6 + $0x348] sm:$0xff]
    %v12366 = vld [vmem:[#allocation6 + $0x350] sm:$0xff]
    %v12367 = vld [vmem:[#allocation6 + $0x358] sm:$0xff]
    %v12368 = vld [vmem:[#allocation6 + $0x360] sm:$0xff]
    %v12369 = vld [vmem:[#allocation6 + $0x368] sm:$0xff]
    %v12370 = vld [vmem:[#allocation6 + $0x370] sm:$0xff]
    %v12371 = vld [vmem:[#allocation6 + $0x378] sm:$0xff]
    %v12372 = vld [vmem:[#allocation6 + $0x380] sm:$0xff]
    %v12373 = vld [vmem:[#allocation6 + $0x388] sm:$0xff]
    %v12374 = vld [vmem:[#allocation6 + $0x390] sm:$0xff]
    %v12375 = vld [vmem:[#allocation6 + $0x398] sm:$0xff]
    %v12376 = vld [vmem:[#allocation6 + $0x3a0] sm:$0xff]
    %v12377 = vld [vmem:[#allocation6 + $0x3a8] sm:$0xff]
    %v12378 = vld [vmem:[#allocation6 + $0x3b0] sm:$0xff]
    %v12379 = vld [vmem:[#allocation6 + $0x3b8] sm:$0xff]
    %v12380 = vld [vmem:[#allocation6 + $0x3c0] sm:$0xff]
    %v12381 = vld [vmem:[#allocation6 + $0x3c8] sm:$0xff]
    %v12382 = vld [vmem:[#allocation6 + $0x3d0] sm:$0xff]
    %v12383 = vld [vmem:[#allocation6 + $0x3d8] sm:$0xff]
    %v12384 = vld [vmem:[#allocation6 + $0x3e0] sm:$0xff]
    %v12385 = vld [vmem:[#allocation6 + $0x3e8] sm:$0xff]
    %v12386 = vld [vmem:[#allocation6 + $0x3f0] sm:$0xff]
    %v12387 = vld [vmem:[#allocation6 + $0x3f8] sm:$0xff]
    %v12388 = vld [vmem:[#allocation6 + $0x400] sm:$0xff]
    %v12389 = vld [vmem:[#allocation6 + $0x408] sm:$0xff]
    %v12390 = vld [vmem:[#allocation6 + $0x410] sm:$0xff]
    %v12391 = vld [vmem:[#allocation6 + $0x418] sm:$0xff]
    %v12392 = vld [vmem:[#allocation6 + $0x420] sm:$0xff]
    %v12393 = vld [vmem:[#allocation6 + $0x428] sm:$0xff]
    %v12394 = vld [vmem:[#allocation6 + $0x430] sm:$0xff]
    %v12395 = vld [vmem:[#allocation6 + $0x438] sm:$0xff]
    %v12396 = vld [vmem:[#allocation6 + $0x440] sm:$0xff]
    %v12397 = vld [vmem:[#allocation6 + $0x448] sm:$0xff]
    %v12398 = vld [vmem:[#allocation6 + $0x450] sm:$0xff]
    %v12399 = vld [vmem:[#allocation6 + $0x458] sm:$0xff]
    %v12400 = vld [vmem:[#allocation6 + $0x460] sm:$0xff]
    %v12401 = vld [vmem:[#allocation6 + $0x468] sm:$0xff]
    %v12402 = vld [vmem:[#allocation6 + $0x470] sm:$0xff]
    %v12403 = vld [vmem:[#allocation6 + $0x478] sm:$0xff]
    %v12404 = vld [vmem:[#allocation6 + $0x480] sm:$0xff]
    %v12405 = vld [vmem:[#allocation6 + $0x488] sm:$0xff]
    %v12406 = vld [vmem:[#allocation6 + $0x490] sm:$0xff]
    %v12407 = vld [vmem:[#allocation6 + $0x498] sm:$0xff]
    %v12408 = vld [vmem:[#allocation6 + $0x4a0] sm:$0xff]
    %v12409 = vld [vmem:[#allocation6 + $0x4a8] sm:$0xff]
    %v12410 = vld [vmem:[#allocation6 + $0x4b0] sm:$0xff]
    %v12411 = vld [vmem:[#allocation6 + $0x4b8] sm:$0xff]
    %v12412 = vld [vmem:[#allocation6 + $0x4c0] sm:$0xff]
    %v12413 = vld [vmem:[#allocation6 + $0x4c8] sm:$0xff]
    %v12414 = vld [vmem:[#allocation6 + $0x4d0] sm:$0xff]
    %v12415 = vld [vmem:[#allocation6 + $0x4d8] sm:$0xff]
    %v12416 = vld [vmem:[#allocation6 + $0x4e0] sm:$0xff]
    %v12417 = vld [vmem:[#allocation6 + $0x4e8] sm:$0xff]
    %v12418 = vld [vmem:[#allocation6 + $0x4f0] sm:$0xff]
    %v12419 = vld [vmem:[#allocation6 + $0x4f8] sm:$0xff]
    %v12420 = vld [vmem:[#allocation6 + $0x500] sm:$0xff]
    %v12421 = vld [vmem:[#allocation6 + $0x508] sm:$0xff]
    %v12422 = vld [vmem:[#allocation6 + $0x510] sm:$0xff]
    %v12423 = vld [vmem:[#allocation6 + $0x518] sm:$0xff]
    %v12424 = vld [vmem:[#allocation6 + $0x520] sm:$0xff]
    %v12425 = vld [vmem:[#allocation6 + $0x528] sm:$0xff]
    %v12426 = vld [vmem:[#allocation6 + $0x530] sm:$0xff]
    %v12427 = vld [vmem:[#allocation6 + $0x538] sm:$0xff]
    %v12428 = vld [vmem:[#allocation6 + $0x540] sm:$0xff]
    %v12429 = vld [vmem:[#allocation6 + $0x548] sm:$0xff]
    %v12430 = vld [vmem:[#allocation6 + $0x550] sm:$0xff]
    %v12431 = vld [vmem:[#allocation6 + $0x558] sm:$0xff]
    %v12432 = vld [vmem:[#allocation6 + $0x560] sm:$0xff]
    %v12433 = vld [vmem:[#allocation6 + $0x568] sm:$0xff]
    %v12434 = vld [vmem:[#allocation6 + $0x570] sm:$0xff]
    %v12435 = vld [vmem:[#allocation6 + $0x578] sm:$0xff]
    %v12436 = vld [vmem:[#allocation6 + $0x580] sm:$0xff]
    %v12437 = vld [vmem:[#allocation6 + $0x588] sm:$0xff]
    %v12438 = vld [vmem:[#allocation6 + $0x590] sm:$0xff]
    %v12439 = vld [vmem:[#allocation6 + $0x598] sm:$0xff]
    %v12440 = vld [vmem:[#allocation6 + $0x5a0] sm:$0xff]
    %v12441 = vld [vmem:[#allocation6 + $0x5a8] sm:$0xff]
    %v12442 = vld [vmem:[#allocation6 + $0x5b0] sm:$0xff]
    %v12443 = vld [vmem:[#allocation6 + $0x5b8] sm:$0xff]
    %v12444 = vld [vmem:[#allocation6 + $0x5c0] sm:$0xff]
    %v12445 = vld [vmem:[#allocation6 + $0x5c8] sm:$0xff]
    %v12446 = vld [vmem:[#allocation6 + $0x5d0] sm:$0xff]
    %v12447 = vld [vmem:[#allocation6 + $0x5d8] sm:$0xff]
    %v12448 = vld [vmem:[#allocation6 + $0x5e0] sm:$0xff]
    %v12449 = vld [vmem:[#allocation6 + $0x5e8] sm:$0xff]
    %v12450 = vld [vmem:[#allocation6 + $0x5f0] sm:$0xff]
    %v12451 = vld [vmem:[#allocation6 + $0x5f8] sm:$0xff]
    %v12452 = vld [vmem:[#allocation6 + $0x600] sm:$0xff]
    %v12453 = vld [vmem:[#allocation6 + $0x608] sm:$0xff]
    %v12454 = vld [vmem:[#allocation6 + $0x610] sm:$0xff]
    %v12455 = vld [vmem:[#allocation6 + $0x618] sm:$0xff]
    %v12456 = vld [vmem:[#allocation6 + $0x620] sm:$0xff]
    %v12457 = vld [vmem:[#allocation6 + $0x628] sm:$0xff]
    %v12458 = vld [vmem:[#allocation6 + $0x630] sm:$0xff]
    %v12459 = vld [vmem:[#allocation6 + $0x638] sm:$0xff]
    %v12460 = vld [vmem:[#allocation6 + $0x640] sm:$0xff]
    %v12461 = vld [vmem:[#allocation6 + $0x648] sm:$0xff]
    %v12462 = vld [vmem:[#allocation6 + $0x650] sm:$0xff]
    %v12463 = vld [vmem:[#allocation6 + $0x658] sm:$0xff]
    %v12464 = vld [vmem:[#allocation6 + $0x660] sm:$0xff]
    %v12465 = vld [vmem:[#allocation6 + $0x668] sm:$0xff]
    %v12466 = vld [vmem:[#allocation6 + $0x670] sm:$0xff]
    %v12467 = vld [vmem:[#allocation6 + $0x678] sm:$0xff]
    %v12468 = vld [vmem:[#allocation6 + $0x680] sm:$0xff]
    %v12469 = vld [vmem:[#allocation6 + $0x688] sm:$0xff]
    %v12470 = vld [vmem:[#allocation6 + $0x690] sm:$0xff]
    %v12471 = vld [vmem:[#allocation6 + $0x698] sm:$0xff]
    %v12472 = vld [vmem:[#allocation6 + $0x6a0] sm:$0xff]
    %v12473 = vld [vmem:[#allocation6 + $0x6a8] sm:$0xff]
    %v12474 = vld [vmem:[#allocation6 + $0x6b0] sm:$0xff]
    %v12475 = vld [vmem:[#allocation6 + $0x6b8] sm:$0xff]
    %v12476 = vld [vmem:[#allocation6 + $0x6c0] sm:$0xff]
    %v12477 = vld [vmem:[#allocation6 + $0x6c8] sm:$0xff]
    %v12478 = vld [vmem:[#allocation6 + $0x6d0] sm:$0xff]
    %v12479 = vld [vmem:[#allocation6 + $0x6d8] sm:$0xff]
    %v12480 = vld [vmem:[#allocation6 + $0x6e0] sm:$0xff]
    %v12481 = vld [vmem:[#allocation6 + $0x6e8] sm:$0xff]
    %v12482 = vld [vmem:[#allocation6 + $0x6f0] sm:$0xff]
    %v12483 = vld [vmem:[#allocation6 + $0x6f8] sm:$0xff]
    %v12484 = vld [vmem:[#allocation6 + $0x700] sm:$0xff]
    %v12485 = vld [vmem:[#allocation6 + $0x708] sm:$0xff]
    %v12486 = vld [vmem:[#allocation6 + $0x710] sm:$0xff]
    %v12487 = vld [vmem:[#allocation6 + $0x718] sm:$0xff]
    %v12488 = vld [vmem:[#allocation6 + $0x720] sm:$0xff]
    %v12489 = vld [vmem:[#allocation6 + $0x728] sm:$0xff]
    %v12490 = vld [vmem:[#allocation6 + $0x730] sm:$0xff]
    %v12491 = vld [vmem:[#allocation6 + $0x738] sm:$0xff]
    %v12492 = vld [vmem:[#allocation6 + $0x740] sm:$0xff]
    %v12493 = vld [vmem:[#allocation6 + $0x748] sm:$0xff]
    %v12494 = vld [vmem:[#allocation6 + $0x750] sm:$0xff]
    %v12495 = vld [vmem:[#allocation6 + $0x758] sm:$0xff]
    %v12496 = vld [vmem:[#allocation6 + $0x760] sm:$0xff]
    %v12497 = vld [vmem:[#allocation6 + $0x768] sm:$0xff]
    %v12498 = vld [vmem:[#allocation6 + $0x770] sm:$0xff]
    %v12499 = vld [vmem:[#allocation6 + $0x778] sm:$0xff]
    %v12500 = vld [vmem:[#allocation6 + $0x780] sm:$0xff]
    %v12501 = vld [vmem:[#allocation6 + $0x788] sm:$0xff]
    %v12502 = vld [vmem:[#allocation6 + $0x790] sm:$0xff]
    %v12503 = vld [vmem:[#allocation6 + $0x798] sm:$0xff]
    %v12504 = vld [vmem:[#allocation6 + $0x7a0] sm:$0xff]
    %v12505 = vld [vmem:[#allocation6 + $0x7a8] sm:$0xff]
    %v12506 = vld [vmem:[#allocation6 + $0x7b0] sm:$0xff]
    %v12507 = vld [vmem:[#allocation6 + $0x7b8] sm:$0xff]
    %v12508 = vld [vmem:[#allocation6 + $0x7c0] sm:$0xff]
    %v12509 = vld [vmem:[#allocation6 + $0x7c8] sm:$0xff]
    %v12510 = vld [vmem:[#allocation6 + $0x7d0] sm:$0xff]
    %v12511 = vld [vmem:[#allocation6 + $0x7d8] sm:$0xff]
    %v12512 = vld [vmem:[#allocation6 + $0x7e0] sm:$0xff]
    %v12513 = vld [vmem:[#allocation6 + $0x7e8] sm:$0xff]
    %v12514 = vld [vmem:[#allocation6 + $0x7f0] sm:$0xff]
    %v12515 = vld [vmem:[#allocation6 + $0x7f8] sm:$0xff]
    %v12516 = vld [vmem:[#allocation7] sm:$0xf]
    %v12518 = vperm.slane %v12516, 0
    %v12519 = vperm.slane %v12516, 1
    %v12520 = vperm.slane %v12516, 2
    %v12521 = vperm.slane %v12516, 3
    %v12782 = vunpack.c.l.b16 %v12260
    %v12783 = vunpack.c.h.b16 %v12260
    %v12784 = vunpack.c.l.b16 %v12261
    %v12785 = vunpack.c.h.b16 %v12261
    %v12786 = vunpack.c.l.b16 %v12262
    %v12787 = vunpack.c.h.b16 %v12262
    %v12788 = vunpack.c.l.b16 %v12263
    %v12789 = vunpack.c.h.b16 %v12263
    %v12790 = vunpack.c.l.b16 %v12264
    %v12791 = vunpack.c.h.b16 %v12264
    %v12792 = vunpack.c.l.b16 %v12265
    %v12793 = vunpack.c.h.b16 %v12265
    %v12794 = vunpack.c.l.b16 %v12266
    %v12795 = vunpack.c.h.b16 %v12266
    %v12796 = vunpack.c.l.b16 %v12267
    %v12797 = vunpack.c.h.b16 %v12267
    %v12798 = vunpack.c.l.b16 %v12268
    %v12799 = vunpack.c.h.b16 %v12268
    %v12800 = vunpack.c.l.b16 %v12269
    %v12801 = vunpack.c.h.b16 %v12269
    %v12802 = vunpack.c.l.b16 %v12270
    %v12803 = vunpack.c.h.b16 %v12270
    %v12804 = vunpack.c.l.b16 %v12271
    %v12805 = vunpack.c.h.b16 %v12271
    %v12806 = vunpack.c.l.b16 %v12272
    %v12807 = vunpack.c.h.b16 %v12272
    %v12808 = vunpack.c.l.b16 %v12273
    %v12809 = vunpack.c.h.b16 %v12273
    %v12810 = vunpack.c.l.b16 %v12274
    %v12811 = vunpack.c.h.b16 %v12274
    %v12812 = vunpack.c.l.b16 %v12275
    %v12813 = vunpack.c.h.b16 %v12275
    %v12814 = vunpack.c.l.b16 %v12276
    %v12815 = vunpack.c.h.b16 %v12276
    %v12816 = vunpack.c.l.b16 %v12277
    %v12817 = vunpack.c.h.b16 %v12277
    %v12818 = vunpack.c.l.b16 %v12278
    %v12819 = vunpack.c.h.b16 %v12278
    %v12820 = vunpack.c.l.b16 %v12279
    %v12821 = vunpack.c.h.b16 %v12279
    %v12822 = vunpack.c.l.b16 %v12280
    %v12823 = vunpack.c.h.b16 %v12280
    %v12824 = vunpack.c.l.b16 %v12281
    %v12825 = vunpack.c.h.b16 %v12281
    %v12826 = vunpack.c.l.b16 %v12282
    %v12827 = vunpack.c.h.b16 %v12282
    %v12828 = vunpack.c.l.b16 %v12283
    %v12829 = vunpack.c.h.b16 %v12283
    %v12830 = vunpack.c.l.b16 %v12284
    %v12831 = vunpack.c.h.b16 %v12284
    %v12832 = vunpack.c.l.b16 %v12285
    %v12833 = vunpack.c.h.b16 %v12285
    %v12834 = vunpack.c.l.b16 %v12286
    %v12835 = vunpack.c.h.b16 %v12286
    %v12836 = vunpack.c.l.b16 %v12287
    %v12837 = vunpack.c.h.b16 %v12287
    %v12838 = vunpack.c.l.b16 %v12288
    %v12839 = vunpack.c.h.b16 %v12288
    %v12840 = vunpack.c.l.b16 %v12289
    %v12841 = vunpack.c.h.b16 %v12289
    %v12842 = vunpack.c.l.b16 %v12290
    %v12843 = vunpack.c.h.b16 %v12290
    %v12844 = vunpack.c.l.b16 %v12291
    %v12845 = vunpack.c.h.b16 %v12291
    %v12846 = vunpack.c.l.b16 %v12292
    %v12847 = vunpack.c.h.b16 %v12292
    %v12848 = vunpack.c.l.b16 %v12293
    %v12849 = vunpack.c.h.b16 %v12293
    %v12850 = vunpack.c.l.b16 %v12294
    %v12851 = vunpack.c.h.b16 %v12294
    %v12852 = vunpack.c.l.b16 %v12295
    %v12853 = vunpack.c.h.b16 %v12295
    %v12854 = vunpack.c.l.b16 %v12296
    %v12855 = vunpack.c.h.b16 %v12296
    %v12856 = vunpack.c.l.b16 %v12297
    %v12857 = vunpack.c.h.b16 %v12297
    %v12858 = vunpack.c.l.b16 %v12298
    %v12859 = vunpack.c.h.b16 %v12298
    %v12860 = vunpack.c.l.b16 %v12299
    %v12861 = vunpack.c.h.b16 %v12299
    %v12862 = vunpack.c.l.b16 %v12300
    %v12863 = vunpack.c.h.b16 %v12300
    %v12864 = vunpack.c.l.b16 %v12301
    %v12865 = vunpack.c.h.b16 %v12301
    %v12866 = vunpack.c.l.b16 %v12302
    %v12867 = vunpack.c.h.b16 %v12302
    %v12868 = vunpack.c.l.b16 %v12303
    %v12869 = vunpack.c.h.b16 %v12303
    %v12870 = vunpack.c.l.b16 %v12304
    %v12871 = vunpack.c.h.b16 %v12304
    %v12872 = vunpack.c.l.b16 %v12305
    %v12873 = vunpack.c.h.b16 %v12305
    %v12874 = vunpack.c.l.b16 %v12306
    %v12875 = vunpack.c.h.b16 %v12306
    %v12876 = vunpack.c.l.b16 %v12307
    %v12877 = vunpack.c.h.b16 %v12307
    %v12878 = vunpack.c.l.b16 %v12308
    %v12879 = vunpack.c.h.b16 %v12308
    %v12880 = vunpack.c.l.b16 %v12309
    %v12881 = vunpack.c.h.b16 %v12309
    %v12882 = vunpack.c.l.b16 %v12310
    %v12883 = vunpack.c.h.b16 %v12310
    %v12884 = vunpack.c.l.b16 %v12311
    %v12885 = vunpack.c.h.b16 %v12311
    %v12886 = vunpack.c.l.b16 %v12312
    %v12887 = vunpack.c.h.b16 %v12312
    %v12888 = vunpack.c.l.b16 %v12313
    %v12889 = vunpack.c.h.b16 %v12313
    %v12890 = vunpack.c.l.b16 %v12314
    %v12891 = vunpack.c.h.b16 %v12314
    %v12892 = vunpack.c.l.b16 %v12315
    %v12893 = vunpack.c.h.b16 %v12315
    %v12894 = vunpack.c.l.b16 %v12316
    %v12895 = vunpack.c.h.b16 %v12316
    %v12896 = vunpack.c.l.b16 %v12317
    %v12897 = vunpack.c.h.b16 %v12317
    %v12898 = vunpack.c.l.b16 %v12318
    %v12899 = vunpack.c.h.b16 %v12318
    %v12900 = vunpack.c.l.b16 %v12319
    %v12901 = vunpack.c.h.b16 %v12319
    %v12902 = vunpack.c.l.b16 %v12320
    %v12903 = vunpack.c.h.b16 %v12320
    %v12904 = vunpack.c.l.b16 %v12321
    %v12905 = vunpack.c.h.b16 %v12321
    %v12906 = vunpack.c.l.b16 %v12322
    %v12907 = vunpack.c.h.b16 %v12322
    %v12908 = vunpack.c.l.b16 %v12323
    %v12909 = vunpack.c.h.b16 %v12323
    %v12910 = vunpack.c.l.b16 %v12324
    %v12911 = vunpack.c.h.b16 %v12324
    %v12912 = vunpack.c.l.b16 %v12325
    %v12913 = vunpack.c.h.b16 %v12325
    %v12914 = vunpack.c.l.b16 %v12326
    %v12915 = vunpack.c.h.b16 %v12326
    %v12916 = vunpack.c.l.b16 %v12327
    %v12917 = vunpack.c.h.b16 %v12327
    %v12918 = vunpack.c.l.b16 %v12328
    %v12919 = vunpack.c.h.b16 %v12328
    %v12920 = vunpack.c.l.b16 %v12329
    %v12921 = vunpack.c.h.b16 %v12329
    %v12922 = vunpack.c.l.b16 %v12330
    %v12923 = vunpack.c.h.b16 %v12330
    %v12924 = vunpack.c.l.b16 %v12331
    %v12925 = vunpack.c.h.b16 %v12331
    %v12926 = vunpack.c.l.b16 %v12332
    %v12927 = vunpack.c.h.b16 %v12332
    %v12928 = vunpack.c.l.b16 %v12333
    %v12929 = vunpack.c.h.b16 %v12333
    %v12930 = vunpack.c.l.b16 %v12334
    %v12931 = vunpack.c.h.b16 %v12334
    %v12932 = vunpack.c.l.b16 %v12335
    %v12933 = vunpack.c.h.b16 %v12335
    %v12934 = vunpack.c.l.b16 %v12336
    %v12935 = vunpack.c.h.b16 %v12336
    %v12936 = vunpack.c.l.b16 %v12337
    %v12937 = vunpack.c.h.b16 %v12337
    %v12938 = vunpack.c.l.b16 %v12338
    %v12939 = vunpack.c.h.b16 %v12338
    %v12940 = vunpack.c.l.b16 %v12339
    %v12941 = vunpack.c.h.b16 %v12339
    %v12942 = vunpack.c.l.b16 %v12340
    %v12943 = vunpack.c.h.b16 %v12340
    %v12944 = vunpack.c.l.b16 %v12341
    %v12945 = vunpack.c.h.b16 %v12341
    %v12946 = vunpack.c.l.b16 %v12342
    %v12947 = vunpack.c.h.b16 %v12342
    %v12948 = vunpack.c.l.b16 %v12343
    %v12949 = vunpack.c.h.b16 %v12343
    %v12950 = vunpack.c.l.b16 %v12344
    %v12951 = vunpack.c.h.b16 %v12344
    %v12952 = vunpack.c.l.b16 %v12345
    %v12953 = vunpack.c.h.b16 %v12345
    %v12954 = vunpack.c.l.b16 %v12346
    %v12955 = vunpack.c.h.b16 %v12346
    %v12956 = vunpack.c.l.b16 %v12347
    %v12957 = vunpack.c.h.b16 %v12347
    %v12958 = vunpack.c.l.b16 %v12348
    %v12959 = vunpack.c.h.b16 %v12348
    %v12960 = vunpack.c.l.b16 %v12349
    %v12961 = vunpack.c.h.b16 %v12349
    %v12962 = vunpack.c.l.b16 %v12350
    %v12963 = vunpack.c.h.b16 %v12350
    %v12964 = vunpack.c.l.b16 %v12351
    %v12965 = vunpack.c.h.b16 %v12351
    %v12966 = vunpack.c.l.b16 %v12352
    %v12967 = vunpack.c.h.b16 %v12352
    %v12968 = vunpack.c.l.b16 %v12353
    %v12969 = vunpack.c.h.b16 %v12353
    %v12970 = vunpack.c.l.b16 %v12354
    %v12971 = vunpack.c.h.b16 %v12354
    %v12972 = vunpack.c.l.b16 %v12355
    %v12973 = vunpack.c.h.b16 %v12355
    %v12974 = vunpack.c.l.b16 %v12356
    %v12975 = vunpack.c.h.b16 %v12356
    %v12976 = vunpack.c.l.b16 %v12357
    %v12977 = vunpack.c.h.b16 %v12357
    %v12978 = vunpack.c.l.b16 %v12358
    %v12979 = vunpack.c.h.b16 %v12358
    %v12980 = vunpack.c.l.b16 %v12359
    %v12981 = vunpack.c.h.b16 %v12359
    %v12982 = vunpack.c.l.b16 %v12360
    %v12983 = vunpack.c.h.b16 %v12360
    %v12984 = vunpack.c.l.b16 %v12361
    %v12985 = vunpack.c.h.b16 %v12361
    %v12986 = vunpack.c.l.b16 %v12362
    %v12987 = vunpack.c.h.b16 %v12362
    %v12988 = vunpack.c.l.b16 %v12363
    %v12989 = vunpack.c.h.b16 %v12363
    %v12990 = vunpack.c.l.b16 %v12364
    %v12991 = vunpack.c.h.b16 %v12364
    %v12992 = vunpack.c.l.b16 %v12365
    %v12993 = vunpack.c.h.b16 %v12365
    %v12994 = vunpack.c.l.b16 %v12366
    %v12995 = vunpack.c.h.b16 %v12366
    %v12996 = vunpack.c.l.b16 %v12367
    %v12997 = vunpack.c.h.b16 %v12367
    %v12998 = vunpack.c.l.b16 %v12368
    %v12999 = vunpack.c.h.b16 %v12368
    %v13000 = vunpack.c.l.b16 %v12369
    %v13001 = vunpack.c.h.b16 %v12369
    %v13002 = vunpack.c.l.b16 %v12370
    %v13003 = vunpack.c.h.b16 %v12370
    %v13004 = vunpack.c.l.b16 %v12371
    %v13005 = vunpack.c.h.b16 %v12371
    %v13006 = vunpack.c.l.b16 %v12372
    %v13007 = vunpack.c.h.b16 %v12372
    %v13008 = vunpack.c.l.b16 %v12373
    %v13009 = vunpack.c.h.b16 %v12373
    %v13010 = vunpack.c.l.b16 %v12374
    %v13011 = vunpack.c.h.b16 %v12374
    %v13012 = vunpack.c.l.b16 %v12375
    %v13013 = vunpack.c.h.b16 %v12375
    %v13014 = vunpack.c.l.b16 %v12376
    %v13015 = vunpack.c.h.b16 %v12376
    %v13016 = vunpack.c.l.b16 %v12377
    %v13017 = vunpack.c.h.b16 %v12377
    %v13018 = vunpack.c.l.b16 %v12378
    %v13019 = vunpack.c.h.b16 %v12378
    %v13020 = vunpack.c.l.b16 %v12379
    %v13021 = vunpack.c.h.b16 %v12379
    %v13022 = vunpack.c.l.b16 %v12380
    %v13023 = vunpack.c.h.b16 %v12380
    %v13024 = vunpack.c.l.b16 %v12381
    %v13025 = vunpack.c.h.b16 %v12381
    %v13026 = vunpack.c.l.b16 %v12382
    %v13027 = vunpack.c.h.b16 %v12382
    %v13028 = vunpack.c.l.b16 %v12383
    %v13029 = vunpack.c.h.b16 %v12383
    %v13030 = vunpack.c.l.b16 %v12384
    %v13031 = vunpack.c.h.b16 %v12384
    %v13032 = vunpack.c.l.b16 %v12385
    %v13033 = vunpack.c.h.b16 %v12385
    %v13034 = vunpack.c.l.b16 %v12386
    %v13035 = vunpack.c.h.b16 %v12386
    %v13036 = vunpack.c.l.b16 %v12387
    %v13037 = vunpack.c.h.b16 %v12387
    %v13038 = vunpack.c.l.b16 %v12388
    %v13039 = vunpack.c.h.b16 %v12388
    %v13040 = vunpack.c.l.b16 %v12389
    %v13041 = vunpack.c.h.b16 %v12389
    %v13042 = vunpack.c.l.b16 %v12390
    %v13043 = vunpack.c.h.b16 %v12390
    %v13044 = vunpack.c.l.b16 %v12391
    %v13045 = vunpack.c.h.b16 %v12391
    %v13046 = vunpack.c.l.b16 %v12392
    %v13047 = vunpack.c.h.b16 %v12392
    %v13048 = vunpack.c.l.b16 %v12393
    %v13049 = vunpack.c.h.b16 %v12393
    %v13050 = vunpack.c.l.b16 %v12394
    %v13051 = vunpack.c.h.b16 %v12394
    %v13052 = vunpack.c.l.b16 %v12395
    %v13053 = vunpack.c.h.b16 %v12395
    %v13054 = vunpack.c.l.b16 %v12396
    %v13055 = vunpack.c.h.b16 %v12396
    %v13056 = vunpack.c.l.b16 %v12397
    %v13057 = vunpack.c.h.b16 %v12397
    %v13058 = vunpack.c.l.b16 %v12398
    %v13059 = vunpack.c.h.b16 %v12398
    %v13060 = vunpack.c.l.b16 %v12399
    %v13061 = vunpack.c.h.b16 %v12399
    %v13062 = vunpack.c.l.b16 %v12400
    %v13063 = vunpack.c.h.b16 %v12400
    %v13064 = vunpack.c.l.b16 %v12401
    %v13065 = vunpack.c.h.b16 %v12401
    %v13066 = vunpack.c.l.b16 %v12402
    %v13067 = vunpack.c.h.b16 %v12402
    %v13068 = vunpack.c.l.b16 %v12403
    %v13069 = vunpack.c.h.b16 %v12403
    %v13070 = vunpack.c.l.b16 %v12404
    %v13071 = vunpack.c.h.b16 %v12404
    %v13072 = vunpack.c.l.b16 %v12405
    %v13073 = vunpack.c.h.b16 %v12405
    %v13074 = vunpack.c.l.b16 %v12406
    %v13075 = vunpack.c.h.b16 %v12406
    %v13076 = vunpack.c.l.b16 %v12407
    %v13077 = vunpack.c.h.b16 %v12407
    %v13078 = vunpack.c.l.b16 %v12408
    %v13079 = vunpack.c.h.b16 %v12408
    %v13080 = vunpack.c.l.b16 %v12409
    %v13081 = vunpack.c.h.b16 %v12409
    %v13082 = vunpack.c.l.b16 %v12410
    %v13083 = vunpack.c.h.b16 %v12410
    %v13084 = vunpack.c.l.b16 %v12411
    %v13085 = vunpack.c.h.b16 %v12411
    %v13086 = vunpack.c.l.b16 %v12412
    %v13087 = vunpack.c.h.b16 %v12412
    %v13088 = vunpack.c.l.b16 %v12413
    %v13089 = vunpack.c.h.b16 %v12413
    %v13090 = vunpack.c.l.b16 %v12414
    %v13091 = vunpack.c.h.b16 %v12414
    %v13092 = vunpack.c.l.b16 %v12415
    %v13093 = vunpack.c.h.b16 %v12415
    %v13094 = vunpack.c.l.b16 %v12416
    %v13095 = vunpack.c.h.b16 %v12416
    %v13096 = vunpack.c.l.b16 %v12417
    %v13097 = vunpack.c.h.b16 %v12417
    %v13098 = vunpack.c.l.b16 %v12418
    %v13099 = vunpack.c.h.b16 %v12418
    %v13100 = vunpack.c.l.b16 %v12419
    %v13101 = vunpack.c.h.b16 %v12419
    %v13102 = vunpack.c.l.b16 %v12420
    %v13103 = vunpack.c.h.b16 %v12420
    %v13104 = vunpack.c.l.b16 %v12421
    %v13105 = vunpack.c.h.b16 %v12421
    %v13106 = vunpack.c.l.b16 %v12422
    %v13107 = vunpack.c.h.b16 %v12422
    %v13108 = vunpack.c.l.b16 %v12423
    %v13109 = vunpack.c.h.b16 %v12423
    %v13110 = vunpack.c.l.b16 %v12424
    %v13111 = vunpack.c.h.b16 %v12424
    %v13112 = vunpack.c.l.b16 %v12425
    %v13113 = vunpack.c.h.b16 %v12425
    %v13114 = vunpack.c.l.b16 %v12426
    %v13115 = vunpack.c.h.b16 %v12426
    %v13116 = vunpack.c.l.b16 %v12427
    %v13117 = vunpack.c.h.b16 %v12427
    %v13118 = vunpack.c.l.b16 %v12428
    %v13119 = vunpack.c.h.b16 %v12428
    %v13120 = vunpack.c.l.b16 %v12429
    %v13121 = vunpack.c.h.b16 %v12429
    %v13122 = vunpack.c.l.b16 %v12430
    %v13123 = vunpack.c.h.b16 %v12430
    %v13124 = vunpack.c.l.b16 %v12431
    %v13125 = vunpack.c.h.b16 %v12431
    %v13126 = vunpack.c.l.b16 %v12432
    %v13127 = vunpack.c.h.b16 %v12432
    %v13128 = vunpack.c.l.b16 %v12433
    %v13129 = vunpack.c.h.b16 %v12433
    %v13130 = vunpack.c.l.b16 %v12434
    %v13131 = vunpack.c.h.b16 %v12434
    %v13132 = vunpack.c.l.b16 %v12435
    %v13133 = vunpack.c.h.b16 %v12435
    %v13134 = vunpack.c.l.b16 %v12436
    %v13135 = vunpack.c.h.b16 %v12436
    %v13136 = vunpack.c.l.b16 %v12437
    %v13137 = vunpack.c.h.b16 %v12437
    %v13138 = vunpack.c.l.b16 %v12438
    %v13139 = vunpack.c.h.b16 %v12438
    %v13140 = vunpack.c.l.b16 %v12439
    %v13141 = vunpack.c.h.b16 %v12439
    %v13142 = vunpack.c.l.b16 %v12440
    %v13143 = vunpack.c.h.b16 %v12440
    %v13144 = vunpack.c.l.b16 %v12441
    %v13145 = vunpack.c.h.b16 %v12441
    %v13146 = vunpack.c.l.b16 %v12442
    %v13147 = vunpack.c.h.b16 %v12442
    %v13148 = vunpack.c.l.b16 %v12443
    %v13149 = vunpack.c.h.b16 %v12443
    %v13150 = vunpack.c.l.b16 %v12444
    %v13151 = vunpack.c.h.b16 %v12444
    %v13152 = vunpack.c.l.b16 %v12445
    %v13153 = vunpack.c.h.b16 %v12445
    %v13154 = vunpack.c.l.b16 %v12446
    %v13155 = vunpack.c.h.b16 %v12446
    %v13156 = vunpack.c.l.b16 %v12447
    %v13157 = vunpack.c.h.b16 %v12447
    %v13158 = vunpack.c.l.b16 %v12448
    %v13159 = vunpack.c.h.b16 %v12448
    %v13160 = vunpack.c.l.b16 %v12449
    %v13161 = vunpack.c.h.b16 %v12449
    %v13162 = vunpack.c.l.b16 %v12450
    %v13163 = vunpack.c.h.b16 %v12450
    %v13164 = vunpack.c.l.b16 %v12451
    %v13165 = vunpack.c.h.b16 %v12451
    %v13166 = vunpack.c.l.b16 %v12452
    %v13167 = vunpack.c.h.b16 %v12452
    %v13168 = vunpack.c.l.b16 %v12453
    %v13169 = vunpack.c.h.b16 %v12453
    %v13170 = vunpack.c.l.b16 %v12454
    %v13171 = vunpack.c.h.b16 %v12454
    %v13172 = vunpack.c.l.b16 %v12455
    %v13173 = vunpack.c.h.b16 %v12455
    %v13174 = vunpack.c.l.b16 %v12456
    %v13175 = vunpack.c.h.b16 %v12456
    %v13176 = vunpack.c.l.b16 %v12457
    %v13177 = vunpack.c.h.b16 %v12457
    %v13178 = vunpack.c.l.b16 %v12458
    %v13179 = vunpack.c.h.b16 %v12458
    %v13180 = vunpack.c.l.b16 %v12459
    %v13181 = vunpack.c.h.b16 %v12459
    %v13182 = vunpack.c.l.b16 %v12460
    %v13183 = vunpack.c.h.b16 %v12460
    %v13184 = vunpack.c.l.b16 %v12461
    %v13185 = vunpack.c.h.b16 %v12461
    %v13186 = vunpack.c.l.b16 %v12462
    %v13187 = vunpack.c.h.b16 %v12462
    %v13188 = vunpack.c.l.b16 %v12463
    %v13189 = vunpack.c.h.b16 %v12463
    %v13190 = vunpack.c.l.b16 %v12464
    %v13191 = vunpack.c.h.b16 %v12464
    %v13192 = vunpack.c.l.b16 %v12465
    %v13193 = vunpack.c.h.b16 %v12465
    %v13194 = vunpack.c.l.b16 %v12466
    %v13195 = vunpack.c.h.b16 %v12466
    %v13196 = vunpack.c.l.b16 %v12467
    %v13197 = vunpack.c.h.b16 %v12467
    %v13198 = vunpack.c.l.b16 %v12468
    %v13199 = vunpack.c.h.b16 %v12468
    %v13200 = vunpack.c.l.b16 %v12469
    %v13201 = vunpack.c.h.b16 %v12469
    %v13202 = vunpack.c.l.b16 %v12470
    %v13203 = vunpack.c.h.b16 %v12470
    %v13204 = vunpack.c.l.b16 %v12471
    %v13205 = vunpack.c.h.b16 %v12471
    %v13206 = vunpack.c.l.b16 %v12472
    %v13207 = vunpack.c.h.b16 %v12472
    %v13208 = vunpack.c.l.b16 %v12473
    %v13209 = vunpack.c.h.b16 %v12473
    %v13210 = vunpack.c.l.b16 %v12474
    %v13211 = vunpack.c.h.b16 %v12474
    %v13212 = vunpack.c.l.b16 %v12475
    %v13213 = vunpack.c.h.b16 %v12475
    %v13214 = vunpack.c.l.b16 %v12476
    %v13215 = vunpack.c.h.b16 %v12476
    %v13216 = vunpack.c.l.b16 %v12477
    %v13217 = vunpack.c.h.b16 %v12477
    %v13218 = vunpack.c.l.b16 %v12478
    %v13219 = vunpack.c.h.b16 %v12478
    %v13220 = vunpack.c.l.b16 %v12479
    %v13221 = vunpack.c.h.b16 %v12479
    %v13222 = vunpack.c.l.b16 %v12480
    %v13223 = vunpack.c.h.b16 %v12480
    %v13224 = vunpack.c.l.b16 %v12481
    %v13225 = vunpack.c.h.b16 %v12481
    %v13226 = vunpack.c.l.b16 %v12482
    %v13227 = vunpack.c.h.b16 %v12482
    %v13228 = vunpack.c.l.b16 %v12483
    %v13229 = vunpack.c.h.b16 %v12483
    %v13230 = vunpack.c.l.b16 %v12484
    %v13231 = vunpack.c.h.b16 %v12484
    %v13232 = vunpack.c.l.b16 %v12485
    %v13233 = vunpack.c.h.b16 %v12485
    %v13234 = vunpack.c.l.b16 %v12486
    %v13235 = vunpack.c.h.b16 %v12486
    %v13236 = vunpack.c.l.b16 %v12487
    %v13237 = vunpack.c.h.b16 %v12487
    %v13238 = vunpack.c.l.b16 %v12488
    %v13239 = vunpack.c.h.b16 %v12488
    %v13240 = vunpack.c.l.b16 %v12489
    %v13241 = vunpack.c.h.b16 %v12489
    %v13242 = vunpack.c.l.b16 %v12490
    %v13243 = vunpack.c.h.b16 %v12490
    %v13244 = vunpack.c.l.b16 %v12491
    %v13245 = vunpack.c.h.b16 %v12491
    %v13246 = vunpack.c.l.b16 %v12492
    %v13247 = vunpack.c.h.b16 %v12492
    %v13248 = vunpack.c.l.b16 %v12493
    %v13249 = vunpack.c.h.b16 %v12493
    %v13250 = vunpack.c.l.b16 %v12494
    %v13251 = vunpack.c.h.b16 %v12494
    %v13252 = vunpack.c.l.b16 %v12495
    %v13253 = vunpack.c.h.b16 %v12495
    %v13254 = vunpack.c.l.b16 %v12496
    %v13255 = vunpack.c.h.b16 %v12496
    %v13256 = vunpack.c.l.b16 %v12497
    %v13257 = vunpack.c.h.b16 %v12497
    %v13258 = vunpack.c.l.b16 %v12498
    %v13259 = vunpack.c.h.b16 %v12498
    %v13260 = vunpack.c.l.b16 %v12499
    %v13261 = vunpack.c.h.b16 %v12499
    %v13262 = vunpack.c.l.b16 %v12500
    %v13263 = vunpack.c.h.b16 %v12500
    %v13264 = vunpack.c.l.b16 %v12501
    %v13265 = vunpack.c.h.b16 %v12501
    %v13266 = vunpack.c.l.b16 %v12502
    %v13267 = vunpack.c.h.b16 %v12502
    %v13268 = vunpack.c.l.b16 %v12503
    %v13269 = vunpack.c.h.b16 %v12503
    %v13270 = vunpack.c.l.b16 %v12504
    %v13271 = vunpack.c.h.b16 %v12504
    %v13272 = vunpack.c.l.b16 %v12505
    %v13273 = vunpack.c.h.b16 %v12505
    %v13274 = vunpack.c.l.b16 %v12506
    %v13275 = vunpack.c.h.b16 %v12506
    %v13276 = vunpack.c.l.b16 %v12507
    %v13277 = vunpack.c.h.b16 %v12507
    %v13278 = vunpack.c.l.b16 %v12508
    %v13279 = vunpack.c.h.b16 %v12508
    %v13280 = vunpack.c.l.b16 %v12509
    %v13281 = vunpack.c.h.b16 %v12509
    %v13282 = vunpack.c.l.b16 %v12510
    %v13283 = vunpack.c.h.b16 %v12510
    %v13284 = vunpack.c.l.b16 %v12511
    %v13285 = vunpack.c.h.b16 %v12511
    %v13286 = vunpack.c.l.b16 %v12512
    %v13287 = vunpack.c.h.b16 %v12512
    %v13288 = vunpack.c.l.b16 %v12513
    %v13289 = vunpack.c.h.b16 %v12513
    %v13290 = vunpack.c.l.b16 %v12514
    %v13291 = vunpack.c.h.b16 %v12514
    %v13292 = vunpack.c.l.b16 %v12515
    %v13293 = vunpack.c.h.b16 %v12515
    %v13294 = vpack.c.b16 %v12786, %v12782
    %v13295 = vpack.c.b16 %v12787, %v12783
    %v13296 = vpack.c.b16 %v12788, %v12784
    %v13297 = vpack.c.b16 %v12789, %v12785
    %v13298 = vpack.c.b16 %v12794, %v12790
    %v13299 = vpack.c.b16 %v12795, %v12791
    %v13300 = vpack.c.b16 %v12796, %v12792
    %v13301 = vpack.c.b16 %v12797, %v12793
    %v13302 = vpack.c.b16 %v12802, %v12798
    %v13303 = vpack.c.b16 %v12803, %v12799
    %v13304 = vpack.c.b16 %v12804, %v12800
    %v13305 = vpack.c.b16 %v12805, %v12801
    %v13306 = vpack.c.b16 %v12810, %v12806
    %v13307 = vpack.c.b16 %v12811, %v12807
    %v13308 = vpack.c.b16 %v12812, %v12808
    %v13309 = vpack.c.b16 %v12813, %v12809
    %v13310 = vpack.c.b16 %v12818, %v12814
    %v13311 = vpack.c.b16 %v12819, %v12815
    %v13312 = vpack.c.b16 %v12820, %v12816
    %v13313 = vpack.c.b16 %v12821, %v12817
    %v13314 = vpack.c.b16 %v12826, %v12822
    %v13315 = vpack.c.b16 %v12827, %v12823
    %v13316 = vpack.c.b16 %v12828, %v12824
    %v13317 = vpack.c.b16 %v12829, %v12825
    %v13318 = vpack.c.b16 %v12834, %v12830
    %v13319 = vpack.c.b16 %v12835, %v12831
    %v13320 = vpack.c.b16 %v12836, %v12832
    %v13321 = vpack.c.b16 %v12837, %v12833
    %v13322 = vpack.c.b16 %v12842, %v12838
    %v13323 = vpack.c.b16 %v12843, %v12839
    %v13324 = vpack.c.b16 %v12844, %v12840
    %v13325 = vpack.c.b16 %v12845, %v12841
    %v13326 = vpack.c.b16 %v12850, %v12846
    %v13327 = vpack.c.b16 %v12851, %v12847
    %v13328 = vpack.c.b16 %v12852, %v12848
    %v13329 = vpack.c.b16 %v12853, %v12849
    %v13330 = vpack.c.b16 %v12858, %v12854
    %v13331 = vpack.c.b16 %v12859, %v12855
    %v13332 = vpack.c.b16 %v12860, %v12856
    %v13333 = vpack.c.b16 %v12861, %v12857
    %v13334 = vpack.c.b16 %v12866, %v12862
    %v13335 = vpack.c.b16 %v12867, %v12863
    %v13336 = vpack.c.b16 %v12868, %v12864
    %v13337 = vpack.c.b16 %v12869, %v12865
    %v13338 = vpack.c.b16 %v12874, %v12870
    %v13339 = vpack.c.b16 %v12875, %v12871
    %v13340 = vpack.c.b16 %v12876, %v12872
    %v13341 = vpack.c.b16 %v12877, %v12873
    %v13342 = vpack.c.b16 %v12882, %v12878
    %v13343 = vpack.c.b16 %v12883, %v12879
    %v13344 = vpack.c.b16 %v12884, %v12880
    %v13345 = vpack.c.b16 %v12885, %v12881
    %v13346 = vpack.c.b16 %v12890, %v12886
    %v13347 = vpack.c.b16 %v12891, %v12887
    %v13348 = vpack.c.b16 %v12892, %v12888
    %v13349 = vpack.c.b16 %v12893, %v12889
    %v13350 = vpack.c.b16 %v12898, %v12894
    %v13351 = vpack.c.b16 %v12899, %v12895
    %v13352 = vpack.c.b16 %v12900, %v12896
    %v13353 = vpack.c.b16 %v12901, %v12897
    %v13354 = vpack.c.b16 %v12906, %v12902
    %v13355 = vpack.c.b16 %v12907, %v12903
    %v13356 = vpack.c.b16 %v12908, %v12904
    %v13357 = vpack.c.b16 %v12909, %v12905
    %v13358 = vpack.c.b16 %v12914, %v12910
    %v13359 = vpack.c.b16 %v12915, %v12911
    %v13360 = vpack.c.b16 %v12916, %v12912
    %v13361 = vpack.c.b16 %v12917, %v12913
    %v13362 = vpack.c.b16 %v12922, %v12918
    %v13363 = vpack.c.b16 %v12923, %v12919
    %v13364 = vpack.c.b16 %v12924, %v12920
    %v13365 = vpack.c.b16 %v12925, %v12921
    %v13366 = vpack.c.b16 %v12930, %v12926
    %v13367 = vpack.c.b16 %v12931, %v12927
    %v13368 = vpack.c.b16 %v12932, %v12928
    %v13369 = vpack.c.b16 %v12933, %v12929
    %v13370 = vpack.c.b16 %v12938, %v12934
    %v13371 = vpack.c.b16 %v12939, %v12935
    %v13372 = vpack.c.b16 %v12940, %v12936
    %v13373 = vpack.c.b16 %v12941, %v12937
    %v13374 = vpack.c.b16 %v12946, %v12942
    %v13375 = vpack.c.b16 %v12947, %v12943
    %v13376 = vpack.c.b16 %v12948, %v12944
    %v13377 = vpack.c.b16 %v12949, %v12945
    %v13378 = vpack.c.b16 %v12954, %v12950
    %v13379 = vpack.c.b16 %v12955, %v12951
    %v13380 = vpack.c.b16 %v12956, %v12952
    %v13381 = vpack.c.b16 %v12957, %v12953
    %v13382 = vpack.c.b16 %v12962, %v12958
    %v13383 = vpack.c.b16 %v12963, %v12959
    %v13384 = vpack.c.b16 %v12964, %v12960
    %v13385 = vpack.c.b16 %v12965, %v12961
    %v13386 = vpack.c.b16 %v12970, %v12966
    %v13387 = vpack.c.b16 %v12971, %v12967
    %v13388 = vpack.c.b16 %v12972, %v12968
    %v13389 = vpack.c.b16 %v12973, %v12969
    %v13390 = vpack.c.b16 %v12978, %v12974
    %v13391 = vpack.c.b16 %v12979, %v12975
    %v13392 = vpack.c.b16 %v12980, %v12976
    %v13393 = vpack.c.b16 %v12981, %v12977
    %v13394 = vpack.c.b16 %v12986, %v12982
    %v13395 = vpack.c.b16 %v12987, %v12983
    %v13396 = vpack.c.b16 %v12988, %v12984
    %v13397 = vpack.c.b16 %v12989, %v12985
    %v13398 = vpack.c.b16 %v12994, %v12990
    %v13399 = vpack.c.b16 %v12995, %v12991
    %v13400 = vpack.c.b16 %v12996, %v12992
    %v13401 = vpack.c.b16 %v12997, %v12993
    %v13402 = vpack.c.b16 %v13002, %v12998
    %v13403 = vpack.c.b16 %v13003, %v12999
    %v13404 = vpack.c.b16 %v13004, %v13000
    %v13405 = vpack.c.b16 %v13005, %v13001
    %v13406 = vpack.c.b16 %v13010, %v13006
    %v13407 = vpack.c.b16 %v13011, %v13007
    %v13408 = vpack.c.b16 %v13012, %v13008
    %v13409 = vpack.c.b16 %v13013, %v13009
    %v13410 = vpack.c.b16 %v13018, %v13014
    %v13411 = vpack.c.b16 %v13019, %v13015
    %v13412 = vpack.c.b16 %v13020, %v13016
    %v13413 = vpack.c.b16 %v13021, %v13017
    %v13414 = vpack.c.b16 %v13026, %v13022
    %v13415 = vpack.c.b16 %v13027, %v13023
    %v13416 = vpack.c.b16 %v13028, %v13024
    %v13417 = vpack.c.b16 %v13029, %v13025
    %v13418 = vpack.c.b16 %v13034, %v13030
    %v13419 = vpack.c.b16 %v13035, %v13031
    %v13420 = vpack.c.b16 %v13036, %v13032
    %v13421 = vpack.c.b16 %v13037, %v13033
    %v13422 = vpack.c.b16 %v13042, %v13038
    %v13423 = vpack.c.b16 %v13043, %v13039
    %v13424 = vpack.c.b16 %v13044, %v13040
    %v13425 = vpack.c.b16 %v13045, %v13041
    %v13426 = vpack.c.b16 %v13050, %v13046
    %v13427 = vpack.c.b16 %v13051, %v13047
    %v13428 = vpack.c.b16 %v13052, %v13048
    %v13429 = vpack.c.b16 %v13053, %v13049
    %v13430 = vpack.c.b16 %v13058, %v13054
    %v13431 = vpack.c.b16 %v13059, %v13055
    %v13432 = vpack.c.b16 %v13060, %v13056
    %v13433 = vpack.c.b16 %v13061, %v13057
    %v13434 = vpack.c.b16 %v13066, %v13062
    %v13435 = vpack.c.b16 %v13067, %v13063
    %v13436 = vpack.c.b16 %v13068, %v13064
    %v13437 = vpack.c.b16 %v13069, %v13065
    %v13438 = vpack.c.b16 %v13074, %v13070
    %v13439 = vpack.c.b16 %v13075, %v13071
    %v13440 = vpack.c.b16 %v13076, %v13072
    %v13441 = vpack.c.b16 %v13077, %v13073
    %v13442 = vpack.c.b16 %v13082, %v13078
    %v13443 = vpack.c.b16 %v13083, %v13079
    %v13444 = vpack.c.b16 %v13084, %v13080
    %v13445 = vpack.c.b16 %v13085, %v13081
    %v13446 = vpack.c.b16 %v13090, %v13086
    %v13447 = vpack.c.b16 %v13091, %v13087
    %v13448 = vpack.c.b16 %v13092, %v13088
    %v13449 = vpack.c.b16 %v13093, %v13089
    %v13450 = vpack.c.b16 %v13098, %v13094
    %v13451 = vpack.c.b16 %v13099, %v13095
    %v13452 = vpack.c.b16 %v13100, %v13096
    %v13453 = vpack.c.b16 %v13101, %v13097
    %v13454 = vpack.c.b16 %v13106, %v13102
    %v13455 = vpack.c.b16 %v13107, %v13103
    %v13456 = vpack.c.b16 %v13108, %v13104
    %v13457 = vpack.c.b16 %v13109, %v13105
    %v13458 = vpack.c.b16 %v13114, %v13110
    %v13459 = vpack.c.b16 %v13115, %v13111
    %v13460 = vpack.c.b16 %v13116, %v13112
    %v13461 = vpack.c.b16 %v13117, %v13113
    %v13462 = vpack.c.b16 %v13122, %v13118
    %v13463 = vpack.c.b16 %v13123, %v13119
    %v13464 = vpack.c.b16 %v13124, %v13120
    %v13465 = vpack.c.b16 %v13125, %v13121
    %v13466 = vpack.c.b16 %v13130, %v13126
    %v13467 = vpack.c.b16 %v13131, %v13127
    %v13468 = vpack.c.b16 %v13132, %v13128
    %v13469 = vpack.c.b16 %v13133, %v13129
    %v13470 = vpack.c.b16 %v13138, %v13134
    %v13471 = vpack.c.b16 %v13139, %v13135
    %v13472 = vpack.c.b16 %v13140, %v13136
    %v13473 = vpack.c.b16 %v13141, %v13137
    %v13474 = vpack.c.b16 %v13146, %v13142
    %v13475 = vpack.c.b16 %v13147, %v13143
    %v13476 = vpack.c.b16 %v13148, %v13144
    %v13477 = vpack.c.b16 %v13149, %v13145
    %v13478 = vpack.c.b16 %v13154, %v13150
    %v13479 = vpack.c.b16 %v13155, %v13151
    %v13480 = vpack.c.b16 %v13156, %v13152
    %v13481 = vpack.c.b16 %v13157, %v13153
    %v13482 = vpack.c.b16 %v13162, %v13158
    %v13483 = vpack.c.b16 %v13163, %v13159
    %v13484 = vpack.c.b16 %v13164, %v13160
    %v13485 = vpack.c.b16 %v13165, %v13161
    %v13486 = vpack.c.b16 %v13170, %v13166
    %v13487 = vpack.c.b16 %v13171, %v13167
    %v13488 = vpack.c.b16 %v13172, %v13168
    %v13489 = vpack.c.b16 %v13173, %v13169
    %v13490 = vpack.c.b16 %v13178, %v13174
    %v13491 = vpack.c.b16 %v13179, %v13175
    %v13492 = vpack.c.b16 %v13180, %v13176
    %v13493 = vpack.c.b16 %v13181, %v13177
    %v13494 = vpack.c.b16 %v13186, %v13182
    %v13495 = vpack.c.b16 %v13187, %v13183
    %v13496 = vpack.c.b16 %v13188, %v13184
    %v13497 = vpack.c.b16 %v13189, %v13185
    %v13498 = vpack.c.b16 %v13194, %v13190
    %v13499 = vpack.c.b16 %v13195, %v13191
    %v13500 = vpack.c.b16 %v13196, %v13192
    %v13501 = vpack.c.b16 %v13197, %v13193
    %v13502 = vpack.c.b16 %v13202, %v13198
    %v13503 = vpack.c.b16 %v13203, %v13199
    %v13504 = vpack.c.b16 %v13204, %v13200
    %v13505 = vpack.c.b16 %v13205, %v13201
    %v13506 = vpack.c.b16 %v13210, %v13206
    %v13507 = vpack.c.b16 %v13211, %v13207
    %v13508 = vpack.c.b16 %v13212, %v13208
    %v13509 = vpack.c.b16 %v13213, %v13209
    %v13510 = vpack.c.b16 %v13218, %v13214
    %v13511 = vpack.c.b16 %v13219, %v13215
    %v13512 = vpack.c.b16 %v13220, %v13216
    %v13513 = vpack.c.b16 %v13221, %v13217
    %v13514 = vpack.c.b16 %v13226, %v13222
    %v13515 = vpack.c.b16 %v13227, %v13223
    %v13516 = vpack.c.b16 %v13228, %v13224
    %v13517 = vpack.c.b16 %v13229, %v13225
    %v13518 = vpack.c.b16 %v13234, %v13230
    %v13519 = vpack.c.b16 %v13235, %v13231
    %v13520 = vpack.c.b16 %v13236, %v13232
    %v13521 = vpack.c.b16 %v13237, %v13233
    %v13522 = vpack.c.b16 %v13242, %v13238
    %v13523 = vpack.c.b16 %v13243, %v13239
    %v13524 = vpack.c.b16 %v13244, %v13240
    %v13525 = vpack.c.b16 %v13245, %v13241
    %v13526 = vpack.c.b16 %v13250, %v13246
    %v13527 = vpack.c.b16 %v13251, %v13247
    %v13528 = vpack.c.b16 %v13252, %v13248
    %v13529 = vpack.c.b16 %v13253, %v13249
    %v13530 = vpack.c.b16 %v13258, %v13254
    %v13531 = vpack.c.b16 %v13259, %v13255
    %v13532 = vpack.c.b16 %v13260, %v13256
    %v13533 = vpack.c.b16 %v13261, %v13257
    %v13534 = vpack.c.b16 %v13266, %v13262
    %v13535 = vpack.c.b16 %v13267, %v13263
    %v13536 = vpack.c.b16 %v13268, %v13264
    %v13537 = vpack.c.b16 %v13269, %v13265
    %v13538 = vpack.c.b16 %v13274, %v13270
    %v13539 = vpack.c.b16 %v13275, %v13271
    %v13540 = vpack.c.b16 %v13276, %v13272
    %v13541 = vpack.c.b16 %v13277, %v13273
    %v13542 = vpack.c.b16 %v13282, %v13278
    %v13543 = vpack.c.b16 %v13283, %v13279
    %v13544 = vpack.c.b16 %v13284, %v13280
    %v13545 = vpack.c.b16 %v13285, %v13281
    %v13546 = vpack.c.b16 %v13290, %v13286
    %v13547 = vpack.c.b16 %v13291, %v13287
    %v13548 = vpack.c.b16 %v13292, %v13288
    %v13549 = vpack.c.b16 %v13293, %v13289
    %13806 = vmatpush.bf16.msra.mxu0 %v13322
    %13807 = vmatpush.bf16.msra.mxu0 %v13318
    %13808 = vmatpush.bf16.msra.mxu0 %v13314
    %13809 = vmatpush.bf16.msra.mxu0 %v13310
    %13810 = vmatpush.bf16.msra.mxu0 %v13306
    %13811 = vmatpush.bf16.msra.mxu0 %v13302
    %13812 = vmatpush.bf16.msra.mxu0 %v13298
    %13813 = vmatpush.bf16.msra.mxu0 %v13294
    %13814 = vmatmul.bf16.gmra.mxu0 %v12252
    %v13815 = vpop.f32.mrf.mxu0
    %v13816 = vadd.f32 %v12518, %v13815
    %v13817 = vpop.f32.mrf.mxu0
    %v13818 = vadd.f32 %v12518, %v13817
    %13819 = vdwg.mxu0
    %13820 = vmatpush.bf16.msra.mxu0 %v13354
    %13821 = vmatpush.bf16.msra.mxu0 %v13350
    %13822 = vmatpush.bf16.msra.mxu0 %v13346
    %13823 = vmatpush.bf16.msra.mxu0 %v13342
    %13824 = vmatpush.bf16.msra.mxu0 %v13338
    %13825 = vmatpush.bf16.msra.mxu0 %v13334
    %13826 = vmatpush.bf16.msra.mxu0 %v13330
    %13827 = vmatpush.bf16.msra.mxu0 %v13326
    %13828 = vmatmul.bf16.gmra.mxu0 %v12253
    %v13829 = vpop.f32.mrf.mxu0
    %v13830 = vadd.f32 %v13816, %v13829
    %v13831 = vpop.f32.mrf.mxu0
    %v13832 = vadd.f32 %v13818, %v13831
    %13833 = vdwg.mxu0
    %13834 = vmatpush.bf16.msra.mxu0 %v13386
    %13835 = vmatpush.bf16.msra.mxu0 %v13382
    %13836 = vmatpush.bf16.msra.mxu0 %v13378
    %13837 = vmatpush.bf16.msra.mxu0 %v13374
    %13838 = vmatpush.bf16.msra.mxu0 %v13370
    %13839 = vmatpush.bf16.msra.mxu0 %v13366
    %13840 = vmatpush.bf16.msra.mxu0 %v13362
    %13841 = vmatpush.bf16.msra.mxu0 %v13358
    %13842 = vmatmul.bf16.gmra.mxu0 %v12254
    %v13843 = vpop.f32.mrf.mxu0
    %v13844 = vadd.f32 %v13830, %v13843
    %v13845 = vpop.f32.mrf.mxu0
    %v13846 = vadd.f32 %v13832, %v13845
    %13847 = vdwg.mxu0
    %13848 = vmatpush.bf16.msra.mxu0 %v13418
    %13849 = vmatpush.bf16.msra.mxu0 %v13414
    %13850 = vmatpush.bf16.msra.mxu0 %v13410
    %13851 = vmatpush.bf16.msra.mxu0 %v13406
    %13852 = vmatpush.bf16.msra.mxu0 %v13402
    %13853 = vmatpush.bf16.msra.mxu0 %v13398
    %13854 = vmatpush.bf16.msra.mxu0 %v13394
    %13855 = vmatpush.bf16.msra.mxu0 %v13390
    %13856 = vmatmul.bf16.gmra.mxu0 %v12255
    %v13857 = vpop.f32.mrf.mxu0
    %v13858 = vadd.f32 %v13844, %v13857
    %v13859 = vpop.f32.mrf.mxu0
    %v13860 = vadd.f32 %v13846, %v13859
    %13861 = vdwg.mxu0
    %13862 = vmatpush.bf16.msra.mxu0 %v13450
    %13863 = vmatpush.bf16.msra.mxu0 %v13446
    %13864 = vmatpush.bf16.msra.mxu0 %v13442
    %13865 = vmatpush.bf16.msra.mxu0 %v13438
    %13866 = vmatpush.bf16.msra.mxu0 %v13434
    %13867 = vmatpush.bf16.msra.mxu0 %v13430
    %13868 = vmatpush.bf16.msra.mxu0 %v13426
    %13869 = vmatpush.bf16.msra.mxu0 %v13422
    %13870 = vmatmul.bf16.gmra.mxu0 %v12256
    %v13871 = vpop.f32.mrf.mxu0
    %v13872 = vadd.f32 %v13858, %v13871
    %v13873 = vpop.f32.mrf.mxu0
    %v13874 = vadd.f32 %v13860, %v13873
    %13875 = vdwg.mxu0
    %13876 = vmatpush.bf16.msra.mxu0 %v13482
    %13877 = vmatpush.bf16.msra.mxu0 %v13478
    %13878 = vmatpush.bf16.msra.mxu0 %v13474
    %13879 = vmatpush.bf16.msra.mxu0 %v13470
    %13880 = vmatpush.bf16.msra.mxu0 %v13466
    %13881 = vmatpush.bf16.msra.mxu0 %v13462
    %13882 = vmatpush.bf16.msra.mxu0 %v13458
    %13883 = vmatpush.bf16.msra.mxu0 %v13454
    %13884 = vmatmul.bf16.gmra.mxu0 %v12257
    %v13885 = vpop.f32.mrf.mxu0
    %v13886 = vadd.f32 %v13872, %v13885
    %v13887 = vpop.f32.mrf.mxu0
    %v13888 = vadd.f32 %v13874, %v13887
    %13889 = vdwg.mxu0
    %13890 = vmatpush.bf16.msra.mxu0 %v13514
    %13891 = vmatpush.bf16.msra.mxu0 %v13510
    %13892 = vmatpush.bf16.msra.mxu0 %v13506
    %13893 = vmatpush.bf16.msra.mxu0 %v13502
    %13894 = vmatpush.bf16.msra.mxu0 %v13498
    %13895 = vmatpush.bf16.msra.mxu0 %v13494
    %13896 = vmatpush.bf16.msra.mxu0 %v13490
    %13897 = vmatpush.bf16.msra.mxu0 %v13486
    %13898 = vmatmul.bf16.gmra.mxu0 %v12258
    %v13899 = vpop.f32.mrf.mxu0
    %v13900 = vadd.f32 %v13886, %v13899
    %v13901 = vpop.f32.mrf.mxu0
    %v13902 = vadd.f32 %v13888, %v13901
    %13903 = vdwg.mxu0
    %13904 = vmatpush.bf16.msra.mxu0 %v13546
    %13905 = vmatpush.bf16.msra.mxu0 %v13542
    %13906 = vmatpush.bf16.msra.mxu0 %v13538
    %13907 = vmatpush.bf16.msra.mxu0 %v13534
    %13908 = vmatpush.bf16.msra.mxu0 %v13530
    %13909 = vmatpush.bf16.msra.mxu0 %v13526
    %13910 = vmatpush.bf16.msra.mxu0 %v13522
    %13911 = vmatpush.bf16.msra.mxu0 %v13518
    %13912 = vmatmul.bf16.gmra.mxu0 %v12259
    %v13913 = vpop.f32.mrf.mxu0
    %v13914 = vadd.f32 %v13900, %v13913
    %v13915 = vpop.f32.mrf.mxu0
    %v13916 = vadd.f32 %v13902, %v13915
    %13917 = vdwg.mxu0
    %13918 = vmatpush.bf16.msra.mxu0 %v13323
    %13919 = vmatpush.bf16.msra.mxu0 %v13319
    %13920 = vmatpush.bf16.msra.mxu0 %v13315
    %13921 = vmatpush.bf16.msra.mxu0 %v13311
    %13922 = vmatpush.bf16.msra.mxu0 %v13307
    %13923 = vmatpush.bf16.msra.mxu0 %v13303
    %13924 = vmatpush.bf16.msra.mxu0 %v13299
    %13925 = vmatpush.bf16.msra.mxu0 %v13295
    %13926 = vmatmul.bf16.gmra.mxu0 %v12252
    %v13927 = vpop.f32.mrf.mxu0
    %v13928 = vadd.f32 %v12519, %v13927
    %v13929 = vpop.f32.mrf.mxu0
    %v13930 = vadd.f32 %v12519, %v13929
    %13931 = vdwg.mxu0
    %13932 = vmatpush.bf16.msra.mxu0 %v13355
    %13933 = vmatpush.bf16.msra.mxu0 %v13351
    %13934 = vmatpush.bf16.msra.mxu0 %v13347
    %13935 = vmatpush.bf16.msra.mxu0 %v13343
    %13936 = vmatpush.bf16.msra.mxu0 %v13339
    %13937 = vmatpush.bf16.msra.mxu0 %v13335
    %13938 = vmatpush.bf16.msra.mxu0 %v13331
    %13939 = vmatpush.bf16.msra.mxu0 %v13327
    %13940 = vmatmul.bf16.gmra.mxu0 %v12253
    %v13941 = vpop.f32.mrf.mxu0
    %v13942 = vadd.f32 %v13928, %v13941
    %v13943 = vpop.f32.mrf.mxu0
    %v13944 = vadd.f32 %v13930, %v13943
    %13945 = vdwg.mxu0
    %13946 = vmatpush.bf16.msra.mxu0 %v13387
    %13947 = vmatpush.bf16.msra.mxu0 %v13383
    %13948 = vmatpush.bf16.msra.mxu0 %v13379
    %13949 = vmatpush.bf16.msra.mxu0 %v13375
    %13950 = vmatpush.bf16.msra.mxu0 %v13371
    %13951 = vmatpush.bf16.msra.mxu0 %v13367
    %13952 = vmatpush.bf16.msra.mxu0 %v13363
    %13953 = vmatpush.bf16.msra.mxu0 %v13359
    %13954 = vmatmul.bf16.gmra.mxu0 %v12254
    %v13955 = vpop.f32.mrf.mxu0
    %v13956 = vadd.f32 %v13942, %v13955
    %v13957 = vpop.f32.mrf.mxu0
    %v13958 = vadd.f32 %v13944, %v13957
    %13959 = vdwg.mxu0
    %13960 = vmatpush.bf16.msra.mxu0 %v13419
    %13961 = vmatpush.bf16.msra.mxu0 %v13415
    %13962 = vmatpush.bf16.msra.mxu0 %v13411
    %13963 = vmatpush.bf16.msra.mxu0 %v13407
    %13964 = vmatpush.bf16.msra.mxu0 %v13403
    %13965 = vmatpush.bf16.msra.mxu0 %v13399
    %13966 = vmatpush.bf16.msra.mxu0 %v13395
    %13967 = vmatpush.bf16.msra.mxu0 %v13391
    %13968 = vmatmul.bf16.gmra.mxu0 %v12255
    %v13969 = vpop.f32.mrf.mxu0
    %v13970 = vadd.f32 %v13956, %v13969
    %v13971 = vpop.f32.mrf.mxu0
    %v13972 = vadd.f32 %v13958, %v13971
    %13973 = vdwg.mxu0
    %13974 = vmatpush.bf16.msra.mxu0 %v13451
    %13975 = vmatpush.bf16.msra.mxu0 %v13447
    %13976 = vmatpush.bf16.msra.mxu0 %v13443
    %13977 = vmatpush.bf16.msra.mxu0 %v13439
    %13978 = vmatpush.bf16.msra.mxu0 %v13435
    %13979 = vmatpush.bf16.msra.mxu0 %v13431
    %13980 = vmatpush.bf16.msra.mxu0 %v13427
    %13981 = vmatpush.bf16.msra.mxu0 %v13423
    %13982 = vmatmul.bf16.gmra.mxu0 %v12256
    %v13983 = vpop.f32.mrf.mxu0
    %v13984 = vadd.f32 %v13970, %v13983
    %v13985 = vpop.f32.mrf.mxu0
    %v13986 = vadd.f32 %v13972, %v13985
    %13987 = vdwg.mxu0
    %13988 = vmatpush.bf16.msra.mxu0 %v13483
    %13989 = vmatpush.bf16.msra.mxu0 %v13479
    %13990 = vmatpush.bf16.msra.mxu0 %v13475
    %13991 = vmatpush.bf16.msra.mxu0 %v13471
    %13992 = vmatpush.bf16.msra.mxu0 %v13467
    %13993 = vmatpush.bf16.msra.mxu0 %v13463
    %13994 = vmatpush.bf16.msra.mxu0 %v13459
    %13995 = vmatpush.bf16.msra.mxu0 %v13455
    %13996 = vmatmul.bf16.gmra.mxu0 %v12257
    %v13997 = vpop.f32.mrf.mxu0
    %v13998 = vadd.f32 %v13984, %v13997
    %v13999 = vpop.f32.mrf.mxu0
    %v14000 = vadd.f32 %v13986, %v13999
    %14001 = vdwg.mxu0
    %14002 = vmatpush.bf16.msra.mxu0 %v13515
    %14003 = vmatpush.bf16.msra.mxu0 %v13511
    %14004 = vmatpush.bf16.msra.mxu0 %v13507
    %14005 = vmatpush.bf16.msra.mxu0 %v13503
    %14006 = vmatpush.bf16.msra.mxu0 %v13499
    %14007 = vmatpush.bf16.msra.mxu0 %v13495
    %14008 = vmatpush.bf16.msra.mxu0 %v13491
    %14009 = vmatpush.bf16.msra.mxu0 %v13487
    %14010 = vmatmul.bf16.gmra.mxu0 %v12258
    %v14011 = vpop.f32.mrf.mxu0
    %v14012 = vadd.f32 %v13998, %v14011
    %v14013 = vpop.f32.mrf.mxu0
    %v14014 = vadd.f32 %v14000, %v14013
    %14015 = vdwg.mxu0
    %14016 = vmatpush.bf16.msra.mxu0 %v13547
    %14017 = vmatpush.bf16.msra.mxu0 %v13543
    %14018 = vmatpush.bf16.msra.mxu0 %v13539
    %14019 = vmatpush.bf16.msra.mxu0 %v13535
    %14020 = vmatpush.bf16.msra.mxu0 %v13531
    %14021 = vmatpush.bf16.msra.mxu0 %v13527
    %14022 = vmatpush.bf16.msra.mxu0 %v13523
    %14023 = vmatpush.bf16.msra.mxu0 %v13519
    %14024 = vmatmul.bf16.gmra.mxu0 %v12259
    %v14025 = vpop.f32.mrf.mxu0
    %v14026 = vadd.f32 %v14012, %v14025
    %v14027 = vpop.f32.mrf.mxu0
    %v14028 = vadd.f32 %v14014, %v14027
    %14029 = vdwg.mxu0
    %14030 = vmatpush.bf16.msra.mxu0 %v13324
    %14031 = vmatpush.bf16.msra.mxu0 %v13320
    %14032 = vmatpush.bf16.msra.mxu0 %v13316
    %14033 = vmatpush.bf16.msra.mxu0 %v13312
    %14034 = vmatpush.bf16.msra.mxu0 %v13308
    %14035 = vmatpush.bf16.msra.mxu0 %v13304
    %14036 = vmatpush.bf16.msra.mxu0 %v13300
    %14037 = vmatpush.bf16.msra.mxu0 %v13296
    %14038 = vmatmul.bf16.gmra.mxu0 %v12252
    %v14039 = vpop.f32.mrf.mxu0
    %v14040 = vadd.f32 %v12520, %v14039
    %v14041 = vpop.f32.mrf.mxu0
    %v14042 = vadd.f32 %v12520, %v14041
    %14043 = vdwg.mxu0
    %14044 = vmatpush.bf16.msra.mxu0 %v13356
    %14045 = vmatpush.bf16.msra.mxu0 %v13352
    %14046 = vmatpush.bf16.msra.mxu0 %v13348
    %14047 = vmatpush.bf16.msra.mxu0 %v13344
    %14048 = vmatpush.bf16.msra.mxu0 %v13340
    %14049 = vmatpush.bf16.msra.mxu0 %v13336
    %14050 = vmatpush.bf16.msra.mxu0 %v13332
    %14051 = vmatpush.bf16.msra.mxu0 %v13328
    %14052 = vmatmul.bf16.gmra.mxu0 %v12253
    %v14053 = vpop.f32.mrf.mxu0
    %v14054 = vadd.f32 %v14040, %v14053
    %v14055 = vpop.f32.mrf.mxu0
    %v14056 = vadd.f32 %v14042, %v14055
    %14057 = vdwg.mxu0
    %14058 = vmatpush.bf16.msra.mxu0 %v13388
    %14059 = vmatpush.bf16.msra.mxu0 %v13384
    %14060 = vmatpush.bf16.msra.mxu0 %v13380
    %14061 = vmatpush.bf16.msra.mxu0 %v13376
    %14062 = vmatpush.bf16.msra.mxu0 %v13372
    %14063 = vmatpush.bf16.msra.mxu0 %v13368
    %14064 = vmatpush.bf16.msra.mxu0 %v13364
    %14065 = vmatpush.bf16.msra.mxu0 %v13360
    %14066 = vmatmul.bf16.gmra.mxu0 %v12254
    %v14067 = vpop.f32.mrf.mxu0
    %v14068 = vadd.f32 %v14054, %v14067
    %v14069 = vpop.f32.mrf.mxu0
    %v14070 = vadd.f32 %v14056, %v14069
    %14071 = vdwg.mxu0
    %14072 = vmatpush.bf16.msra.mxu0 %v13420
    %14073 = vmatpush.bf16.msra.mxu0 %v13416
    %14074 = vmatpush.bf16.msra.mxu0 %v13412
    %14075 = vmatpush.bf16.msra.mxu0 %v13408
    %14076 = vmatpush.bf16.msra.mxu0 %v13404
    %14077 = vmatpush.bf16.msra.mxu0 %v13400
    %14078 = vmatpush.bf16.msra.mxu0 %v13396
    %14079 = vmatpush.bf16.msra.mxu0 %v13392
    %14080 = vmatmul.bf16.gmra.mxu0 %v12255
    %v14081 = vpop.f32.mrf.mxu0
    %v14082 = vadd.f32 %v14068, %v14081
    %v14083 = vpop.f32.mrf.mxu0
    %v14084 = vadd.f32 %v14070, %v14083
    %14085 = vdwg.mxu0
    %14086 = vmatpush.bf16.msra.mxu0 %v13452
    %14087 = vmatpush.bf16.msra.mxu0 %v13448
    %14088 = vmatpush.bf16.msra.mxu0 %v13444
    %14089 = vmatpush.bf16.msra.mxu0 %v13440
    %14090 = vmatpush.bf16.msra.mxu0 %v13436
    %14091 = vmatpush.bf16.msra.mxu0 %v13432
    %14092 = vmatpush.bf16.msra.mxu0 %v13428
    %14093 = vmatpush.bf16.msra.mxu0 %v13424
    %14094 = vmatmul.bf16.gmra.mxu0 %v12256
    %v14095 = vpop.f32.mrf.mxu0
    %v14096 = vadd.f32 %v14082, %v14095
    %v14097 = vpop.f32.mrf.mxu0
    %v14098 = vadd.f32 %v14084, %v14097
    %14099 = vdwg.mxu0
    %14100 = vmatpush.bf16.msra.mxu0 %v13484
    %14101 = vmatpush.bf16.msra.mxu0 %v13480
    %14102 = vmatpush.bf16.msra.mxu0 %v13476
    %14103 = vmatpush.bf16.msra.mxu0 %v13472
    %14104 = vmatpush.bf16.msra.mxu0 %v13468
    %14105 = vmatpush.bf16.msra.mxu0 %v13464
    %14106 = vmatpush.bf16.msra.mxu0 %v13460
    %14107 = vmatpush.bf16.msra.mxu0 %v13456
    %14108 = vmatmul.bf16.gmra.mxu0 %v12257
    %v14109 = vpop.f32.mrf.mxu0
    %v14110 = vadd.f32 %v14096, %v14109
    %v14111 = vpop.f32.mrf.mxu0
    %v14112 = vadd.f32 %v14098, %v14111
    %14113 = vdwg.mxu0
    %14114 = vmatpush.bf16.msra.mxu0 %v13516
    %14115 = vmatpush.bf16.msra.mxu0 %v13512
    %14116 = vmatpush.bf16.msra.mxu0 %v13508
    %14117 = vmatpush.bf16.msra.mxu0 %v13504
    %14118 = vmatpush.bf16.msra.mxu0 %v13500
    %14119 = vmatpush.bf16.msra.mxu0 %v13496
    %14120 = vmatpush.bf16.msra.mxu0 %v13492
    %14121 = vmatpush.bf16.msra.mxu0 %v13488
    %14122 = vmatmul.bf16.gmra.mxu0 %v12258
    %v14123 = vpop.f32.mrf.mxu0
    %v14124 = vadd.f32 %v14110, %v14123
    %v14125 = vpop.f32.mrf.mxu0
    %v14126 = vadd.f32 %v14112, %v14125
    %14127 = vdwg.mxu0
    %14128 = vmatpush.bf16.msra.mxu0 %v13548
    %14129 = vmatpush.bf16.msra.mxu0 %v13544
    %14130 = vmatpush.bf16.msra.mxu0 %v13540
    %14131 = vmatpush.bf16.msra.mxu0 %v13536
    %14132 = vmatpush.bf16.msra.mxu0 %v13532
    %14133 = vmatpush.bf16.msra.mxu0 %v13528
    %14134 = vmatpush.bf16.msra.mxu0 %v13524
    %14135 = vmatpush.bf16.msra.mxu0 %v13520
    %14136 = vmatmul.bf16.gmra.mxu0 %v12259
    %v14137 = vpop.f32.mrf.mxu0
    %v14138 = vadd.f32 %v14124, %v14137
    %v14139 = vpop.f32.mrf.mxu0
    %v14140 = vadd.f32 %v14126, %v14139
    %14141 = vdwg.mxu0
    %14142 = vmatpush.bf16.msra.mxu0 %v13325
    %14143 = vmatpush.bf16.msra.mxu0 %v13321
    %14144 = vmatpush.bf16.msra.mxu0 %v13317
    %14145 = vmatpush.bf16.msra.mxu0 %v13313
    %14146 = vmatpush.bf16.msra.mxu0 %v13309
    %14147 = vmatpush.bf16.msra.mxu0 %v13305
    %14148 = vmatpush.bf16.msra.mxu0 %v13301
    %14149 = vmatpush.bf16.msra.mxu0 %v13297
    %14150 = vmatmul.bf16.gmra.mxu0 %v12252
    %v14151 = vpop.f32.mrf.mxu0
    %v14152 = vadd.f32 %v12521, %v14151
    %v14153 = vpop.f32.mrf.mxu0
    %v14154 = vadd.f32 %v12521, %v14153
    %14155 = vdwg.mxu0
    %14156 = vmatpush.bf16.msra.mxu0 %v13357
    %14157 = vmatpush.bf16.msra.mxu0 %v13353
    %14158 = vmatpush.bf16.msra.mxu0 %v13349
    %14159 = vmatpush.bf16.msra.mxu0 %v13345
    %14160 = vmatpush.bf16.msra.mxu0 %v13341
    %14161 = vmatpush.bf16.msra.mxu0 %v13337
    %14162 = vmatpush.bf16.msra.mxu0 %v13333
    %14163 = vmatpush.bf16.msra.mxu0 %v13329
    %14164 = vmatmul.bf16.gmra.mxu0 %v12253
    %v14165 = vpop.f32.mrf.mxu0
    %v14166 = vadd.f32 %v14152, %v14165
    %v14167 = vpop.f32.mrf.mxu0
    %v14168 = vadd.f32 %v14154, %v14167
    %14169 = vdwg.mxu0
    %14170 = vmatpush.bf16.msra.mxu0 %v13389
    %14171 = vmatpush.bf16.msra.mxu0 %v13385
    %14172 = vmatpush.bf16.msra.mxu0 %v13381
    %14173 = vmatpush.bf16.msra.mxu0 %v13377
    %14174 = vmatpush.bf16.msra.mxu0 %v13373
    %14175 = vmatpush.bf16.msra.mxu0 %v13369
    %14176 = vmatpush.bf16.msra.mxu0 %v13365
    %14177 = vmatpush.bf16.msra.mxu0 %v13361
    %14178 = vmatmul.bf16.gmra.mxu0 %v12254
    %v14179 = vpop.f32.mrf.mxu0
    %v14180 = vadd.f32 %v14166, %v14179
    %v14181 = vpop.f32.mrf.mxu0
    %v14182 = vadd.f32 %v14168, %v14181
    %14183 = vdwg.mxu0
    %14184 = vmatpush.bf16.msra.mxu0 %v13421
    %14185 = vmatpush.bf16.msra.mxu0 %v13417
    %14186 = vmatpush.bf16.msra.mxu0 %v13413
    %14187 = vmatpush.bf16.msra.mxu0 %v13409
    %14188 = vmatpush.bf16.msra.mxu0 %v13405
    %14189 = vmatpush.bf16.msra.mxu0 %v13401
    %14190 = vmatpush.bf16.msra.mxu0 %v13397
    %14191 = vmatpush.bf16.msra.mxu0 %v13393
    %14192 = vmatmul.bf16.gmra.mxu0 %v12255
    %v14193 = vpop.f32.mrf.mxu0
    %v14194 = vadd.f32 %v14180, %v14193
    %v14195 = vpop.f32.mrf.mxu0
    %v14196 = vadd.f32 %v14182, %v14195
    %14197 = vdwg.mxu0
    %14198 = vmatpush.bf16.msra.mxu0 %v13453
    %14199 = vmatpush.bf16.msra.mxu0 %v13449
    %14200 = vmatpush.bf16.msra.mxu0 %v13445
    %14201 = vmatpush.bf16.msra.mxu0 %v13441
    %14202 = vmatpush.bf16.msra.mxu0 %v13437
    %14203 = vmatpush.bf16.msra.mxu0 %v13433
    %14204 = vmatpush.bf16.msra.mxu0 %v13429
    %14205 = vmatpush.bf16.msra.mxu0 %v13425
    %14206 = vmatmul.bf16.gmra.mxu0 %v12256
    %v14207 = vpop.f32.mrf.mxu0
    %v14208 = vadd.f32 %v14194, %v14207
    %v14209 = vpop.f32.mrf.mxu0
    %v14210 = vadd.f32 %v14196, %v14209
    %14211 = vdwg.mxu0
    %14212 = vmatpush.bf16.msra.mxu0 %v13485
    %14213 = vmatpush.bf16.msra.mxu0 %v13481
    %14214 = vmatpush.bf16.msra.mxu0 %v13477
    %14215 = vmatpush.bf16.msra.mxu0 %v13473
    %14216 = vmatpush.bf16.msra.mxu0 %v13469
    %14217 = vmatpush.bf16.msra.mxu0 %v13465
    %14218 = vmatpush.bf16.msra.mxu0 %v13461
    %14219 = vmatpush.bf16.msra.mxu0 %v13457
    %14220 = vmatmul.bf16.gmra.mxu0 %v12257
    %v14221 = vpop.f32.mrf.mxu0
    %v14222 = vadd.f32 %v14208, %v14221
    %v14223 = vpop.f32.mrf.mxu0
    %v14224 = vadd.f32 %v14210, %v14223
    %14225 = vdwg.mxu0
    %14226 = vmatpush.bf16.msra.mxu0 %v13517
    %14227 = vmatpush.bf16.msra.mxu0 %v13513
    %14228 = vmatpush.bf16.msra.mxu0 %v13509
    %14229 = vmatpush.bf16.msra.mxu0 %v13505
    %14230 = vmatpush.bf16.msra.mxu0 %v13501
    %14231 = vmatpush.bf16.msra.mxu0 %v13497
    %14232 = vmatpush.bf16.msra.mxu0 %v13493
    %14233 = vmatpush.bf16.msra.mxu0 %v13489
    %14234 = vmatmul.bf16.gmra.mxu0 %v12258
    %v14235 = vpop.f32.mrf.mxu0
    %v14236 = vadd.f32 %v14222, %v14235
    %v14237 = vpop.f32.mrf.mxu0
    %v14238 = vadd.f32 %v14224, %v14237
    %14239 = vdwg.mxu0
    %14240 = vmatpush.bf16.msra.mxu0 %v13549
    %14241 = vmatpush.bf16.msra.mxu0 %v13545
    %14242 = vmatpush.bf16.msra.mxu0 %v13541
    %14243 = vmatpush.bf16.msra.mxu0 %v13537
    %14244 = vmatpush.bf16.msra.mxu0 %v13533
    %14245 = vmatpush.bf16.msra.mxu0 %v13529
    %14246 = vmatpush.bf16.msra.mxu0 %v13525
    %14247 = vmatpush.bf16.msra.mxu0 %v13521
    %14248 = vmatmul.bf16.gmra.mxu0 %v12259
    %v14249 = vpop.f32.mrf.mxu0
    %v14250 = vadd.f32 %v14236, %v14249
    %v14251 = vpop.f32.mrf.mxu0
    %v14252 = vadd.f32 %v14238, %v14251
    %14253 = vdwg.mxu0
    %v14254 = vmax.f32 %v13914, 0.0
    %v14255 = vmax.f32 %v14026, 0.0
    %v14256 = vmax.f32 %v14138, 0.0
    %v14257 = vmax.f32 %v14250, 0.0
    %v14258 = vmax.f32 %v13916, 0.0
    %v14259 = vmax.f32 %v14028, 0.0
    %v14260 = vmax.f32 %v14140, 0.0
    %v14261 = vmax.f32 %v14252, 0.0
    %v14262 = vpack.c.bf16 %v14258, %v14254
    %v14263 = vpack.c.bf16 %v14259, %v14255
    %v14264 = vpack.c.bf16 %v14260, %v14256
    %v14265 = vpack.c.bf16 %v14261, %v14257
    %v14266 = vld [vmem:[#allocation9] sm:$0xff]
    %v14267 = vld [vmem:[#allocation9 + $0x8] sm:$0xff]
    %v14268 = vld [vmem:[#allocation9 + $0x10] sm:$0xff]
    %v14269 = vld [vmem:[#allocation9 + $0x18] sm:$0xff]
    %v14270 = vld [vmem:[#allocation9 + $0x20] sm:$0xff]
    %v14271 = vld [vmem:[#allocation9 + $0x28] sm:$0xff]
    %v14272 = vld [vmem:[#allocation9 + $0x30] sm:$0xff]
    %v14273 = vld [vmem:[#allocation9 + $0x38] sm:$0xff]
    %v14274 = vld [vmem:[#allocation9 + $0x40] sm:$0xff]
    %v14275 = vld [vmem:[#allocation9 + $0x48] sm:$0xff]
    %v14276 = vld [vmem:[#allocation9 + $0x50] sm:$0xff]
    %v14277 = vld [vmem:[#allocation9 + $0x58] sm:$0xff]
    %v14278 = vld [vmem:[#allocation9 + $0x60] sm:$0xff]
    %v14279 = vld [vmem:[#allocation9 + $0x68] sm:$0xff]
    %v14280 = vld [vmem:[#allocation9 + $0x70] sm:$0xff]
    %v14281 = vld [vmem:[#allocation9 + $0x78] sm:$0xff]
    %v14282 = vld [vmem:[#allocation9 + $0x80] sm:$0xff]
    %v14283 = vld [vmem:[#allocation9 + $0x88] sm:$0xff]
    %v14284 = vld [vmem:[#allocation9 + $0x90] sm:$0xff]
    %v14285 = vld [vmem:[#allocation9 + $0x98] sm:$0xff]
    %v14286 = vld [vmem:[#allocation9 + $0xa0] sm:$0xff]
    %v14287 = vld [vmem:[#allocation9 + $0xa8] sm:$0xff]
    %v14288 = vld [vmem:[#allocation9 + $0xb0] sm:$0xff]
    %v14289 = vld [vmem:[#allocation9 + $0xb8] sm:$0xff]
    %v14290 = vld [vmem:[#allocation9 + $0xc0] sm:$0xff]
    %v14291 = vld [vmem:[#allocation9 + $0xc8] sm:$0xff]
    %v14292 = vld [vmem:[#allocation9 + $0xd0] sm:$0xff]
    %v14293 = vld [vmem:[#allocation9 + $0xd8] sm:$0xff]
    %v14294 = vld [vmem:[#allocation9 + $0xe0] sm:$0xff]
    %v14295 = vld [vmem:[#allocation9 + $0xe8] sm:$0xff]
    %v14296 = vld [vmem:[#allocation9 + $0xf0] sm:$0xff]
    %v14297 = vld [vmem:[#allocation9 + $0xf8] sm:$0xff]
    %v14298 = vld [vmem:[#allocation9 + $0x100] sm:$0xff]
    %v14299 = vld [vmem:[#allocation9 + $0x108] sm:$0xff]
    %v14300 = vld [vmem:[#allocation9 + $0x110] sm:$0xff]
    %v14301 = vld [vmem:[#allocation9 + $0x118] sm:$0xff]
    %v14302 = vld [vmem:[#allocation9 + $0x120] sm:$0xff]
    %v14303 = vld [vmem:[#allocation9 + $0x128] sm:$0xff]
    %v14304 = vld [vmem:[#allocation9 + $0x130] sm:$0xff]
    %v14305 = vld [vmem:[#allocation9 + $0x138] sm:$0xff]
    %v14306 = vld [vmem:[#allocation9 + $0x140] sm:$0xff]
    %v14307 = vld [vmem:[#allocation9 + $0x148] sm:$0xff]
    %v14308 = vld [vmem:[#allocation9 + $0x150] sm:$0xff]
    %v14309 = vld [vmem:[#allocation9 + $0x158] sm:$0xff]
    %v14310 = vld [vmem:[#allocation9 + $0x160] sm:$0xff]
    %v14311 = vld [vmem:[#allocation9 + $0x168] sm:$0xff]
    %v14312 = vld [vmem:[#allocation9 + $0x170] sm:$0xff]
    %v14313 = vld [vmem:[#allocation9 + $0x178] sm:$0xff]
    %v14314 = vld [vmem:[#allocation9 + $0x180] sm:$0xff]
    %v14315 = vld [vmem:[#allocation9 + $0x188] sm:$0xff]
    %v14316 = vld [vmem:[#allocation9 + $0x190] sm:$0xff]
    %v14317 = vld [vmem:[#allocation9 + $0x198] sm:$0xff]
    %v14318 = vld [vmem:[#allocation9 + $0x1a0] sm:$0xff]
    %v14319 = vld [vmem:[#allocation9 + $0x1a8] sm:$0xff]
    %v14320 = vld [vmem:[#allocation9 + $0x1b0] sm:$0xff]
    %v14321 = vld [vmem:[#allocation9 + $0x1b8] sm:$0xff]
    %v14322 = vld [vmem:[#allocation9 + $0x1c0] sm:$0xff]
    %v14323 = vld [vmem:[#allocation9 + $0x1c8] sm:$0xff]
    %v14324 = vld [vmem:[#allocation9 + $0x1d0] sm:$0xff]
    %v14325 = vld [vmem:[#allocation9 + $0x1d8] sm:$0xff]
    %v14326 = vld [vmem:[#allocation9 + $0x1e0] sm:$0xff]
    %v14327 = vld [vmem:[#allocation9 + $0x1e8] sm:$0xff]
    %v14328 = vld [vmem:[#allocation9 + $0x1f0] sm:$0xff]
    %v14329 = vld [vmem:[#allocation9 + $0x1f8] sm:$0xff]
    %v14330 = vld [vmem:[#allocation10] sm:$0x3]
    %v14332 = vperm.slane %v14330, 0
    %v14333 = vperm.slane %v14330, 1
    %v14400 = vunpack.c.l.b16 %v14266
    %v14401 = vunpack.c.h.b16 %v14266
    %v14402 = vunpack.c.l.b16 %v14267
    %v14403 = vunpack.c.h.b16 %v14267
    %v14404 = vunpack.c.l.b16 %v14268
    %v14405 = vunpack.c.h.b16 %v14268
    %v14406 = vunpack.c.l.b16 %v14269
    %v14407 = vunpack.c.h.b16 %v14269
    %v14408 = vunpack.c.l.b16 %v14270
    %v14409 = vunpack.c.h.b16 %v14270
    %v14410 = vunpack.c.l.b16 %v14271
    %v14411 = vunpack.c.h.b16 %v14271
    %v14412 = vunpack.c.l.b16 %v14272
    %v14413 = vunpack.c.h.b16 %v14272
    %v14414 = vunpack.c.l.b16 %v14273
    %v14415 = vunpack.c.h.b16 %v14273
    %v14416 = vunpack.c.l.b16 %v14274
    %v14417 = vunpack.c.h.b16 %v14274
    %v14418 = vunpack.c.l.b16 %v14275
    %v14419 = vunpack.c.h.b16 %v14275
    %v14420 = vunpack.c.l.b16 %v14276
    %v14421 = vunpack.c.h.b16 %v14276
    %v14422 = vunpack.c.l.b16 %v14277
    %v14423 = vunpack.c.h.b16 %v14277
    %v14424 = vunpack.c.l.b16 %v14278
    %v14425 = vunpack.c.h.b16 %v14278
    %v14426 = vunpack.c.l.b16 %v14279
    %v14427 = vunpack.c.h.b16 %v14279
    %v14428 = vunpack.c.l.b16 %v14280
    %v14429 = vunpack.c.h.b16 %v14280
    %v14430 = vunpack.c.l.b16 %v14281
    %v14431 = vunpack.c.h.b16 %v14281
    %v14432 = vunpack.c.l.b16 %v14282
    %v14433 = vunpack.c.h.b16 %v14282
    %v14434 = vunpack.c.l.b16 %v14283
    %v14435 = vunpack.c.h.b16 %v14283
    %v14436 = vunpack.c.l.b16 %v14284
    %v14437 = vunpack.c.h.b16 %v14284
    %v14438 = vunpack.c.l.b16 %v14285
    %v14439 = vunpack.c.h.b16 %v14285
    %v14440 = vunpack.c.l.b16 %v14286
    %v14441 = vunpack.c.h.b16 %v14286
    %v14442 = vunpack.c.l.b16 %v14287
    %v14443 = vunpack.c.h.b16 %v14287
    %v14444 = vunpack.c.l.b16 %v14288
    %v14445 = vunpack.c.h.b16 %v14288
    %v14446 = vunpack.c.l.b16 %v14289
    %v14447 = vunpack.c.h.b16 %v14289
    %v14448 = vunpack.c.l.b16 %v14290
    %v14449 = vunpack.c.h.b16 %v14290
    %v14450 = vunpack.c.l.b16 %v14291
    %v14451 = vunpack.c.h.b16 %v14291
    %v14452 = vunpack.c.l.b16 %v14292
    %v14453 = vunpack.c.h.b16 %v14292
    %v14454 = vunpack.c.l.b16 %v14293
    %v14455 = vunpack.c.h.b16 %v14293
    %v14456 = vunpack.c.l.b16 %v14294
    %v14457 = vunpack.c.h.b16 %v14294
    %v14458 = vunpack.c.l.b16 %v14295
    %v14459 = vunpack.c.h.b16 %v14295
    %v14460 = vunpack.c.l.b16 %v14296
    %v14461 = vunpack.c.h.b16 %v14296
    %v14462 = vunpack.c.l.b16 %v14297
    %v14463 = vunpack.c.h.b16 %v14297
    %v14464 = vunpack.c.l.b16 %v14298
    %v14465 = vunpack.c.h.b16 %v14298
    %v14466 = vunpack.c.l.b16 %v14299
    %v14467 = vunpack.c.h.b16 %v14299
    %v14468 = vunpack.c.l.b16 %v14300
    %v14469 = vunpack.c.h.b16 %v14300
    %v14470 = vunpack.c.l.b16 %v14301
    %v14471 = vunpack.c.h.b16 %v14301
    %v14472 = vunpack.c.l.b16 %v14302
    %v14473 = vunpack.c.h.b16 %v14302
    %v14474 = vunpack.c.l.b16 %v14303
    %v14475 = vunpack.c.h.b16 %v14303
    %v14476 = vunpack.c.l.b16 %v14304
    %v14477 = vunpack.c.h.b16 %v14304
    %v14478 = vunpack.c.l.b16 %v14305
    %v14479 = vunpack.c.h.b16 %v14305
    %v14480 = vunpack.c.l.b16 %v14306
    %v14481 = vunpack.c.h.b16 %v14306
    %v14482 = vunpack.c.l.b16 %v14307
    %v14483 = vunpack.c.h.b16 %v14307
    %v14484 = vunpack.c.l.b16 %v14308
    %v14485 = vunpack.c.h.b16 %v14308
    %v14486 = vunpack.c.l.b16 %v14309
    %v14487 = vunpack.c.h.b16 %v14309
    %v14488 = vunpack.c.l.b16 %v14310
    %v14489 = vunpack.c.h.b16 %v14310
    %v14490 = vunpack.c.l.b16 %v14311
    %v14491 = vunpack.c.h.b16 %v14311
    %v14492 = vunpack.c.l.b16 %v14312
    %v14493 = vunpack.c.h.b16 %v14312
    %v14494 = vunpack.c.l.b16 %v14313
    %v14495 = vunpack.c.h.b16 %v14313
    %v14496 = vunpack.c.l.b16 %v14314
    %v14497 = vunpack.c.h.b16 %v14314
    %v14498 = vunpack.c.l.b16 %v14315
    %v14499 = vunpack.c.h.b16 %v14315
    %v14500 = vunpack.c.l.b16 %v14316
    %v14501 = vunpack.c.h.b16 %v14316
    %v14502 = vunpack.c.l.b16 %v14317
    %v14503 = vunpack.c.h.b16 %v14317
    %v14504 = vunpack.c.l.b16 %v14318
    %v14505 = vunpack.c.h.b16 %v14318
    %v14506 = vunpack.c.l.b16 %v14319
    %v14507 = vunpack.c.h.b16 %v14319
    %v14508 = vunpack.c.l.b16 %v14320
    %v14509 = vunpack.c.h.b16 %v14320
    %v14510 = vunpack.c.l.b16 %v14321
    %v14511 = vunpack.c.h.b16 %v14321
    %v14512 = vunpack.c.l.b16 %v14322
    %v14513 = vunpack.c.h.b16 %v14322
    %v14514 = vunpack.c.l.b16 %v14323
    %v14515 = vunpack.c.h.b16 %v14323
    %v14516 = vunpack.c.l.b16 %v14324
    %v14517 = vunpack.c.h.b16 %v14324
    %v14518 = vunpack.c.l.b16 %v14325
    %v14519 = vunpack.c.h.b16 %v14325
    %v14520 = vunpack.c.l.b16 %v14326
    %v14521 = vunpack.c.h.b16 %v14326
    %v14522 = vunpack.c.l.b16 %v14327
    %v14523 = vunpack.c.h.b16 %v14327
    %v14524 = vunpack.c.l.b16 %v14328
    %v14525 = vunpack.c.h.b16 %v14328
    %v14526 = vunpack.c.l.b16 %v14329
    %v14527 = vunpack.c.h.b16 %v14329
    %v14528 = vpack.c.b16 %v14402, %v14400
    %v14529 = vpack.c.b16 %v14403, %v14401
    %v14530 = vpack.c.b16 %v14406, %v14404
    %v14531 = vpack.c.b16 %v14407, %v14405
    %v14532 = vpack.c.b16 %v14410, %v14408
    %v14533 = vpack.c.b16 %v14411, %v14409
    %v14534 = vpack.c.b16 %v14414, %v14412
    %v14535 = vpack.c.b16 %v14415, %v14413
    %v14536 = vpack.c.b16 %v14418, %v14416
    %v14537 = vpack.c.b16 %v14419, %v14417
    %v14538 = vpack.c.b16 %v14422, %v14420
    %v14539 = vpack.c.b16 %v14423, %v14421
    %v14540 = vpack.c.b16 %v14426, %v14424
    %v14541 = vpack.c.b16 %v14427, %v14425
    %v14542 = vpack.c.b16 %v14430, %v14428
    %v14543 = vpack.c.b16 %v14431, %v14429
    %v14544 = vpack.c.b16 %v14434, %v14432
    %v14545 = vpack.c.b16 %v14435, %v14433
    %v14546 = vpack.c.b16 %v14438, %v14436
    %v14547 = vpack.c.b16 %v14439, %v14437
    %v14548 = vpack.c.b16 %v14442, %v14440
    %v14549 = vpack.c.b16 %v14443, %v14441
    %v14550 = vpack.c.b16 %v14446, %v14444
    %v14551 = vpack.c.b16 %v14447, %v14445
    %v14552 = vpack.c.b16 %v14450, %v14448
    %v14553 = vpack.c.b16 %v14451, %v14449
    %v14554 = vpack.c.b16 %v14454, %v14452
    %v14555 = vpack.c.b16 %v14455, %v14453
    %v14556 = vpack.c.b16 %v14458, %v14456
    %v14557 = vpack.c.b16 %v14459, %v14457
    %v14558 = vpack.c.b16 %v14462, %v14460
    %v14559 = vpack.c.b16 %v14463, %v14461
    %v14560 = vpack.c.b16 %v14466, %v14464
    %v14561 = vpack.c.b16 %v14467, %v14465
    %v14562 = vpack.c.b16 %v14470, %v14468
    %v14563 = vpack.c.b16 %v14471, %v14469
    %v14564 = vpack.c.b16 %v14474, %v14472
    %v14565 = vpack.c.b16 %v14475, %v14473
    %v14566 = vpack.c.b16 %v14478, %v14476
    %v14567 = vpack.c.b16 %v14479, %v14477
    %v14568 = vpack.c.b16 %v14482, %v14480
    %v14569 = vpack.c.b16 %v14483, %v14481
    %v14570 = vpack.c.b16 %v14486, %v14484
    %v14571 = vpack.c.b16 %v14487, %v14485
    %v14572 = vpack.c.b16 %v14490, %v14488
    %v14573 = vpack.c.b16 %v14491, %v14489
    %v14574 = vpack.c.b16 %v14494, %v14492
    %v14575 = vpack.c.b16 %v14495, %v14493
    %v14576 = vpack.c.b16 %v14498, %v14496
    %v14577 = vpack.c.b16 %v14499, %v14497
    %v14578 = vpack.c.b16 %v14502, %v14500
    %v14579 = vpack.c.b16 %v14503, %v14501
    %v14580 = vpack.c.b16 %v14506, %v14504
    %v14581 = vpack.c.b16 %v14507, %v14505
    %v14582 = vpack.c.b16 %v14510, %v14508
    %v14583 = vpack.c.b16 %v14511, %v14509
    %v14584 = vpack.c.b16 %v14514, %v14512
    %v14585 = vpack.c.b16 %v14515, %v14513
    %v14586 = vpack.c.b16 %v14518, %v14516
    %v14587 = vpack.c.b16 %v14519, %v14517
    %v14588 = vpack.c.b16 %v14522, %v14520
    %v14589 = vpack.c.b16 %v14523, %v14521
    %v14590 = vpack.c.b16 %v14526, %v14524
    %v14591 = vpack.c.b16 %v14527, %v14525
    %14656 = vmatpush.bf16.msra.mxu0 %v14542
    %14657 = vmatpush.bf16.msra.mxu0 %v14540
    %14658 = vmatpush.bf16.msra.mxu0 %v14538
    %14659 = vmatpush.bf16.msra.mxu0 %v14536
    %14660 = vmatpush.bf16.msra.mxu0 %v14534
    %14661 = vmatpush.bf16.msra.mxu0 %v14532
    %14662 = vmatpush.bf16.msra.mxu0 %v14530
    %14663 = vmatpush.bf16.msra.mxu0 %v14528
    %14664 = vmatmul.bf16.gmra.mxu0 %v14262
    %v14665 = vpop.f32.mrf.mxu0
    %v14666 = vadd.f32 %v14332, %v14665
    %v14667 = vpop.f32.mrf.mxu0
    %v14668 = vadd.f32 %v14332, %v14667
    %14669 = vdwg.mxu0
    %14670 = vmatpush.bf16.msra.mxu0 %v14558
    %14671 = vmatpush.bf16.msra.mxu0 %v14556
    %14672 = vmatpush.bf16.msra.mxu0 %v14554
    %14673 = vmatpush.bf16.msra.mxu0 %v14552
    %14674 = vmatpush.bf16.msra.mxu0 %v14550
    %14675 = vmatpush.bf16.msra.mxu0 %v14548
    %14676 = vmatpush.bf16.msra.mxu0 %v14546
    %14677 = vmatpush.bf16.msra.mxu0 %v14544
    %14678 = vmatmul.bf16.gmra.mxu0 %v14263
    %v14679 = vpop.f32.mrf.mxu0
    %v14680 = vadd.f32 %v14666, %v14679
    %v14681 = vpop.f32.mrf.mxu0
    %v14682 = vadd.f32 %v14668, %v14681
    %14683 = vdwg.mxu0
    %14684 = vmatpush.bf16.msra.mxu0 %v14574
    %14685 = vmatpush.bf16.msra.mxu0 %v14572
    %14686 = vmatpush.bf16.msra.mxu0 %v14570
    %14687 = vmatpush.bf16.msra.mxu0 %v14568
    %14688 = vmatpush.bf16.msra.mxu0 %v14566
    %14689 = vmatpush.bf16.msra.mxu0 %v14564
    %14690 = vmatpush.bf16.msra.mxu0 %v14562
    %14691 = vmatpush.bf16.msra.mxu0 %v14560
    %14692 = vmatmul.bf16.gmra.mxu0 %v14264
    %v14693 = vpop.f32.mrf.mxu0
    %v14694 = vadd.f32 %v14680, %v14693
    %v14695 = vpop.f32.mrf.mxu0
    %v14696 = vadd.f32 %v14682, %v14695
    %14697 = vdwg.mxu0
    %14698 = vmatpush.bf16.msra.mxu0 %v14590
    %14699 = vmatpush.bf16.msra.mxu0 %v14588
    %14700 = vmatpush.bf16.msra.mxu0 %v14586
    %14701 = vmatpush.bf16.msra.mxu0 %v14584
    %14702 = vmatpush.bf16.msra.mxu0 %v14582
    %14703 = vmatpush.bf16.msra.mxu0 %v14580
    %14704 = vmatpush.bf16.msra.mxu0 %v14578
    %14705 = vmatpush.bf16.msra.mxu0 %v14576
    %14706 = vmatmul.bf16.gmra.mxu0 %v14265
    %v14707 = vpop.f32.mrf.mxu0
    %v14708 = vadd.f32 %v14694, %v14707
    %v14709 = vpop.f32.mrf.mxu0
    %v14710 = vadd.f32 %v14696, %v14709
    %14711 = vdwg.mxu0
    %14712 = vmatpush.bf16.msra.mxu0 %v14543
    %14713 = vmatpush.bf16.msra.mxu0 %v14541
    %14714 = vmatpush.bf16.msra.mxu0 %v14539
    %14715 = vmatpush.bf16.msra.mxu0 %v14537
    %14716 = vmatpush.bf16.msra.mxu0 %v14535
    %14717 = vmatpush.bf16.msra.mxu0 %v14533
    %14718 = vmatpush.bf16.msra.mxu0 %v14531
    %14719 = vmatpush.bf16.msra.mxu0 %v14529
    %14720 = vmatmul.bf16.gmra.mxu0 %v14262
    %v14721 = vpop.f32.mrf.mxu0
    %v14722 = vadd.f32 %v14333, %v14721
    %v14723 = vpop.f32.mrf.mxu0
    %v14724 = vadd.f32 %v14333, %v14723
    %14725 = vdwg.mxu0
    %14726 = vmatpush.bf16.msra.mxu0 %v14559
    %14727 = vmatpush.bf16.msra.mxu0 %v14557
    %14728 = vmatpush.bf16.msra.mxu0 %v14555
    %14729 = vmatpush.bf16.msra.mxu0 %v14553
    %14730 = vmatpush.bf16.msra.mxu0 %v14551
    %14731 = vmatpush.bf16.msra.mxu0 %v14549
    %14732 = vmatpush.bf16.msra.mxu0 %v14547
    %14733 = vmatpush.bf16.msra.mxu0 %v14545
    %14734 = vmatmul.bf16.gmra.mxu0 %v14263
    %v14735 = vpop.f32.mrf.mxu0
    %v14736 = vadd.f32 %v14722, %v14735
    %v14737 = vpop.f32.mrf.mxu0
    %v14738 = vadd.f32 %v14724, %v14737
    %14739 = vdwg.mxu0
    %14740 = vmatpush.bf16.msra.mxu0 %v14575
    %14741 = vmatpush.bf16.msra.mxu0 %v14573
    %14742 = vmatpush.bf16.msra.mxu0 %v14571
    %14743 = vmatpush.bf16.msra.mxu0 %v14569
    %14744 = vmatpush.bf16.msra.mxu0 %v14567
    %14745 = vmatpush.bf16.msra.mxu0 %v14565
    %14746 = vmatpush.bf16.msra.mxu0 %v14563
    %14747 = vmatpush.bf16.msra.mxu0 %v14561
    %14748 = vmatmul.bf16.gmra.mxu0 %v14264
    %v14749 = vpop.f32.mrf.mxu0
    %v14750 = vadd.f32 %v14736, %v14749
    %v14751 = vpop.f32.mrf.mxu0
    %v14752 = vadd.f32 %v14738, %v14751
    %14753 = vdwg.mxu0
    %14754 = vmatpush.bf16.msra.mxu0 %v14591
    %14755 = vmatpush.bf16.msra.mxu0 %v14589
    %14756 = vmatpush.bf16.msra.mxu0 %v14587
    %14757 = vmatpush.bf16.msra.mxu0 %v14585
    %14758 = vmatpush.bf16.msra.mxu0 %v14583
    %14759 = vmatpush.bf16.msra.mxu0 %v14581
    %14760 = vmatpush.bf16.msra.mxu0 %v14579
    %14761 = vmatpush.bf16.msra.mxu0 %v14577
    %14762 = vmatmul.bf16.gmra.mxu0 %v14265
    %v14763 = vpop.f32.mrf.mxu0
    %v14764 = vadd.f32 %v14750, %v14763
    %v14765 = vpop.f32.mrf.mxu0
    %v14766 = vadd.f32 %v14752, %v14765
    %14767 = vdwg.mxu0
    %v14768 = vmax.f32 %v14708, 0.0
    %v14769 = vmax.f32 %v14764, 0.0
    %v14770 = vmax.f32 %v14710, 0.0
    %v14771 = vmax.f32 %v14766, 0.0
    %v14772 = vpack.c.bf16 %v14770, %v14768
    %v14773 = vpack.c.bf16 %v14771, %v14769
    %v14774 = vld [vmem:[#allocation12] sm:$0xf]
    %v14775 = vld [vmem:[#allocation12 + $0x4] sm:$0xf]
    %v14776 = vld [vmem:[#allocation12 + $0x8] sm:$0xf]
    %v14777 = vld [vmem:[#allocation12 + $0xc] sm:$0xf]
    %v14778 = vld [vmem:[#allocation12 + $0x10] sm:$0xf]
    %v14779 = vld [vmem:[#allocation12 + $0x14] sm:$0xf]
    %v14780 = vld [vmem:[#allocation12 + $0x18] sm:$0xf]
    %v14781 = vld [vmem:[#allocation12 + $0x1c] sm:$0xf]
    %v14782 = vld [vmem:[#allocation12 + $0x20] sm:$0xf]
    %v14783 = vld [vmem:[#allocation12 + $0x24] sm:$0xf]
    %v14784 = vld [vmem:[#allocation12 + $0x28] sm:$0xf]
    %v14785 = vld [vmem:[#allocation12 + $0x2c] sm:$0xf]
    %v14786 = vld [vmem:[#allocation12 + $0x30] sm:$0xf]
    %v14787 = vld [vmem:[#allocation12 + $0x34] sm:$0xf]
    %v14788 = vld [vmem:[#allocation12 + $0x38] sm:$0xf]
    %v14789 = vld [vmem:[#allocation12 + $0x3c] sm:$0xf]
    %v14790 = vld [vmem:[#allocation12 + $0x40] sm:$0xf]
    %v14791 = vld [vmem:[#allocation12 + $0x44] sm:$0xf]
    %v14792 = vld [vmem:[#allocation12 + $0x48] sm:$0xf]
    %v14793 = vld [vmem:[#allocation12 + $0x4c] sm:$0xf]
    %v14794 = vld [vmem:[#allocation12 + $0x50] sm:$0xf]
    %v14795 = vld [vmem:[#allocation12 + $0x54] sm:$0xf]
    %v14796 = vld [vmem:[#allocation12 + $0x58] sm:$0xf]
    %v14797 = vld [vmem:[#allocation12 + $0x5c] sm:$0xf]
    %v14798 = vld [vmem:[#allocation12 + $0x60] sm:$0xf]
    %v14799 = vld [vmem:[#allocation12 + $0x64] sm:$0xf]
    %v14800 = vld [vmem:[#allocation12 + $0x68] sm:$0xf]
    %v14801 = vld [vmem:[#allocation12 + $0x6c] sm:$0xf]
    %v14802 = vld [vmem:[#allocation12 + $0x70] sm:$0xf]
    %v14803 = vld [vmem:[#allocation12 + $0x74] sm:$0xf]
    %v14804 = vld [vmem:[#allocation12 + $0x78] sm:$0xf]
    %v14805 = vld [vmem:[#allocation12 + $0x7c] sm:$0xf]
    %v14806 = vld [vmem:[#allocation13] sm:$0x1]
    %v14808 = vperm.slane %v14806, 0
    %v14842 = vunpack.c.l.b16 %v14774
    %v14843 = vunpack.c.l.b16 %v14775
    %v14844 = vunpack.c.l.b16 %v14776
    %v14845 = vunpack.c.l.b16 %v14777
    %v14846 = vunpack.c.l.b16 %v14778
    %v14847 = vunpack.c.l.b16 %v14779
    %v14848 = vunpack.c.l.b16 %v14780
    %v14849 = vunpack.c.l.b16 %v14781
    %v14850 = vunpack.c.l.b16 %v14782
    %v14851 = vunpack.c.l.b16 %v14783
    %v14852 = vunpack.c.l.b16 %v14784
    %v14853 = vunpack.c.l.b16 %v14785
    %v14854 = vunpack.c.l.b16 %v14786
    %v14855 = vunpack.c.l.b16 %v14787
    %v14856 = vunpack.c.l.b16 %v14788
    %v14857 = vunpack.c.l.b16 %v14789
    %v14858 = vunpack.c.l.b16 %v14790
    %v14859 = vunpack.c.l.b16 %v14791
    %v14860 = vunpack.c.l.b16 %v14792
    %v14861 = vunpack.c.l.b16 %v14793
    %v14862 = vunpack.c.l.b16 %v14794
    %v14863 = vunpack.c.l.b16 %v14795
    %v14864 = vunpack.c.l.b16 %v14796
    %v14865 = vunpack.c.l.b16 %v14797
    %v14866 = vunpack.c.l.b16 %v14798
    %v14867 = vunpack.c.l.b16 %v14799
    %v14868 = vunpack.c.l.b16 %v14800
    %v14869 = vunpack.c.l.b16 %v14801
    %v14870 = vunpack.c.l.b16 %v14802
    %v14871 = vunpack.c.l.b16 %v14803
    %v14872 = vunpack.c.l.b16 %v14804
    %v14873 = vunpack.c.l.b16 %v14805
    %v14874 = vpack.c.b16 %v14843, %v14842
    %v14875 = vpack.c.b16 %v14845, %v14844
    %v14876 = vpack.c.b16 %v14847, %v14846
    %v14877 = vpack.c.b16 %v14849, %v14848
    %v14878 = vpack.c.b16 %v14851, %v14850
    %v14879 = vpack.c.b16 %v14853, %v14852
    %v14880 = vpack.c.b16 %v14855, %v14854
    %v14881 = vpack.c.b16 %v14857, %v14856
    %v14882 = vpack.c.b16 %v14859, %v14858
    %v14883 = vpack.c.b16 %v14861, %v14860
    %v14884 = vpack.c.b16 %v14863, %v14862
    %v14885 = vpack.c.b16 %v14865, %v14864
    %v14886 = vpack.c.b16 %v14867, %v14866
    %v14887 = vpack.c.b16 %v14869, %v14868
    %v14888 = vpack.c.b16 %v14871, %v14870
    %v14889 = vpack.c.b16 %v14873, %v14872
    %14906 = vmatpush.bf16.msra.mxu0 %v14881
    %14907 = vmatpush.bf16.msra.mxu0 %v14880
    %14908 = vmatpush.bf16.msra.mxu0 %v14879
    %14909 = vmatpush.bf16.msra.mxu0 %v14878
    %14910 = vmatpush.bf16.msra.mxu0 %v14877
    %14911 = vmatpush.bf16.msra.mxu0 %v14876
    %14912 = vmatpush.bf16.msra.mxu0 %v14875
    %14913 = vmatpush.bf16.msra.mxu0 %v14874
    %14914 = vmatmul.bf16.gmra.mxu0 %v14772
    %v14915 = vpop.f32.mrf.mxu0
    %v14916 = vadd.f32 %v14808, %v14915
    %v14917 = vpop.f32.mrf.mxu0
    %v14918 = vadd.f32 %v14808, %v14917
    %14919 = vdwg.mxu0
    %14920 = vmatpush.bf16.msra.mxu0 %v14889
    %14921 = vmatpush.bf16.msra.mxu0 %v14888
    %14922 = vmatpush.bf16.msra.mxu0 %v14887
    %14923 = vmatpush.bf16.msra.mxu0 %v14886
    %14924 = vmatpush.bf16.msra.mxu0 %v14885
    %14925 = vmatpush.bf16.msra.mxu0 %v14884
    %14926 = vmatpush.bf16.msra.mxu0 %v14883
    %14927 = vmatpush.bf16.msra.mxu0 %v14882
    %14928 = vmatmul.bf16.gmra.mxu0 %v14773
    %v14929 = vpop.f32.mrf.mxu0
    %v14930 = vadd.f32 %v14916, %v14929
    %v14931 = vpop.f32.mrf.mxu0
    %v14932 = vadd.f32 %v14918, %v14931
    %14933 = vdwg.mxu0
    %v14934 = vmax.f32 %v14930, 0.0
    %v14935 = vmax.f32 %v14932, 0.0
    %v14936 = vpack.c.bf16 %v14935, %v14934
    %v14937 = vld [vmem:[%s9] sm:$0xf]
    %v14938 = vld [vmem:[%s9 + $0x4] sm:$0xf]
    %v14939 = vld [vmem:[%s9 + $0x8] sm:$0xf]
    %v14940 = vld [vmem:[%s9 + $0xc] sm:$0xf]
    %v14941 = vld [vmem:[%s9 + $0x10] sm:$0xf]
    %v14942 = vld [vmem:[%s9 + $0x14] sm:$0xf]
    %v14943 = vld [vmem:[%s9 + $0x18] sm:$0xf]
    %v14944 = vld [vmem:[%s9 + $0x1c] sm:$0xf]
    %v14945 = vld [vmem:[%s9 + $0x20] sm:$0xf]
    %v14946 = vld [vmem:[%s9 + $0x24] sm:$0xf]
    %v14947 = vld [vmem:[%s9 + $0x28] sm:$0xf]
    %v14948 = vld [vmem:[%s9 + $0x2c] sm:$0xf]
    %v14949 = vld [vmem:[%s9 + $0x30] sm:$0xf]
    %v14950 = vld [vmem:[%s9 + $0x34] sm:$0xf]
    %v14951 = vld [vmem:[%s9 + $0x38] sm:$0xf]
    %v14952 = vld [vmem:[%s9 + $0x3c] sm:$0xf]
    %v14953 = vld [vmem:[#allocation15] sm:$0x1]
    %v14955 = vperm.slane %v14953, 0
    %v14973 = vunpack.c.l.b16 %v14937
    %v14974 = vunpack.c.l.b16 %v14938
    %v14975 = vunpack.c.l.b16 %v14939
    %v14976 = vunpack.c.l.b16 %v14940
    %v14977 = vunpack.c.l.b16 %v14941
    %v14978 = vunpack.c.l.b16 %v14942
    %v14979 = vunpack.c.l.b16 %v14943
    %v14980 = vunpack.c.l.b16 %v14944
    %v14981 = vunpack.c.l.b16 %v14945
    %v14982 = vunpack.c.l.b16 %v14946
    %v14983 = vunpack.c.l.b16 %v14947
    %v14984 = vunpack.c.l.b16 %v14948
    %v14985 = vunpack.c.l.b16 %v14949
    %v14986 = vunpack.c.l.b16 %v14950
    %v14987 = vunpack.c.l.b16 %v14951
    %v14988 = vunpack.c.l.b16 %v14952
    %v14989 = vpack.c.b16 %v14974, %v14973
    %v14990 = vpack.c.b16 %v14976, %v14975
    %v14991 = vpack.c.b16 %v14978, %v14977
    %v14992 = vpack.c.b16 %v14980, %v14979
    %v14993 = vpack.c.b16 %v14982, %v14981
    %v14994 = vpack.c.b16 %v14984, %v14983
    %v14995 = vpack.c.b16 %v14986, %v14985
    %v14996 = vpack.c.b16 %v14988, %v14987
    %15005 = vmatpush.bf16.msra.mxu0 %v14996
    %15006 = vmatpush.bf16.msra.mxu0 %v14995
    %15007 = vmatpush.bf16.msra.mxu0 %v14994
    %15008 = vmatpush.bf16.msra.mxu0 %v14993
    %15009 = vmatpush.bf16.msra.mxu0 %v14992
    %15010 = vmatpush.bf16.msra.mxu0 %v14991
    %15011 = vmatpush.bf16.msra.mxu0 %v14990
    %15012 = vmatpush.bf16.msra.mxu0 %v14989
    %15013 = vmatmul.bf16.gmra.mxu0 %v14936
    %v15014 = vpop.f32.mrf.mxu0
    %v15015 = vadd.f32 %v14955, %v15014
    %v15016 = vpop.f32.mrf.mxu0
    %v15017 = vadd.f32 %v14955, %v15016
    %15018 = vdwg.mxu0
    %vm15019 = vcmask 15360
    %15020 = vst.msk [vmem:[%s11] sm:$0xff] %vm15019, %v15015
    %15021 = vst.msk [vmem:[%s11 + $0x8] sm:$0xff] %vm15019, %v15017
    %v15022 = vsel %vm15019, %v15015, -inf
    %15023 = vmax.xlane.f32.xlu0 %v15022
    %v15024 = vpop.xlane.xlu0 %15023
    %v15025 = vsel %vm15019, %v15017, -inf
    %15026 = vmax.xlane.f32.xlu0 %v15025
    %v15027 = vpop.xlane.xlu0 %15026
    %v15028 = vsub.f32 %v15015, %v15024
    %v15029 = vsub.f32 %v15017, %v15027
    %v15030 = vmul.f32 %v15028, 1.442695
    %v15031 = vpow.pop %v15030
    %v15032 = vmul.f32 %v15029, 1.442695
    %v15033 = vpow.pop %v15032
    %v15034 = vsel %vm15019, %v15031, 0.0
    %15035 = vadd.xlane.f32.xlu0 %v15034
    %v15036 = vpop.xlane.xlu0 %15035
    %v15037 = vsel %vm15019, %v15033, 0.0
    %15038 = vadd.xlane.f32.xlu0 %v15037
    %v15039 = vpop.xlane.xlu0 %15038
    %v15040 = vrcp.pop %v15036
    %v15041 = vrcp.pop %v15039
    %v15042 = vmul.f32 %v15031, %v15040
    %v15043 = vmul.f32 %v15033, %v15041
    %15044 = vst.msk [vmem:[%s12] sm:$0xff] %vm15019, %v15042
    %15045 = vst.msk [vmem:[%s12 + $0x8] sm:$0xff] %vm15019, %v15043
    // Predicated region
    $region82: #{mlp_forward.1} parent=1 // pred_check
      _
    $region83: #{mlp_forward.1} parent=1 // pred_check_branch
      %15047 = sbr.rel (0) target = $region85
    $region84: #{mlp_forward.1} parent=1 // pred_region
      _
    $region85: #{mlp_forward.1} parent=1 // pred_fallthru
      _
    // Predicated region
    $region86: #{mlp_forward.1} parent=1 // pred_check
      _
    $region87: #{mlp_forward.1} parent=1 // pred_check_branch
      %15049 = sbr.rel (0) target = $region89
    $region88: #{mlp_forward.1} parent=1 // pred_region
      _
    $region89: #{mlp_forward.1} parent=1 // pred_fallthru
      _
    // Predicated region
    $region90: #{mlp_forward.1} parent=1 // pred_check
      _
    $region91: #{mlp_forward.1} parent=1 // pred_check_branch
      %15051 = sbr.rel (0) target = $region93
    $region92: #{mlp_forward.1} parent=1 // pred_region
      _
    $region93: #{mlp_forward.1} parent=1 // pred_fallthru
      _
    // Predicated region
    $region94: #{mlp_forward.1} parent=1 // pred_check
      _
    $region95: #{mlp_forward.1} parent=1 // pred_check_branch
      %15053 = sbr.rel (0) target = $region97
    $region96: #{mlp_forward.1} parent=1 // pred_region
      _
    $region97: #{mlp_forward.1} parent=1 // pred_fallthru
      _
    %15054 = vsyncpa [#allocation3], 1
    %15055 = vsyncpa [#allocation5], 1
    %15056 = vsyncpa [#allocation8], 1
    %15057 = vsyncpa [#allocation11], 1
    %15058 = vsyncpa [#allocation14], 1

</llo_original>
